<compile_context>
chip_gen: v7x
topology: tpu7x:2x2x1
jax: 0.10.0
libtpu: 0.0.40
codegen_flags: <defaults>
</compile_context>

<pallas_src>
import functools

import numpy as np

import jax
import jax.numpy as jnp
from jax import lax
from jax.experimental import pallas as pl
from jax.experimental.pallas import tpu as pltpu

BN_EPS = 1e-5


# ---------------------------------------------------------------------------
# Fused Pallas kernel: full forward pass, ONE sample per grid step.
# ---------------------------------------------------------------------------
def _fused_forward_kernel(
        x_ref,
        s1_ref, w1_ref, sc1_ref, sh1_ref,
        s2_ref, w2_ref, sc2_ref, sh2_ref,
        s3_ref, w3_ref, sc3_ref, sh3_ref,
        se_ref, we_ref, sce_ref, she_ref,
        hw1_ref, hb1_ref,
        bw2_ref, bb2_ref, aw2_ref, ab2_ref,
        pw1a_ref, pw1b_ref, pb1_ref, pw2_ref, pb2_ref,
        out_ref,
        *, h3, w3):
    f32 = jnp.float32
    bf16 = jnp.bfloat16

    def conv3x3(x_bf, s_ref, w_ref, sc_ref, sh_ref):
        """3x3 conv (+ folded BN + ReLU) on an (H, W*C) lane-flattened map.

        The 3 vertical taps are gathered with tiny one-hot row-select matmuls
        (boundary rows are all-zero == zero padding); the horizontal taps and
        the stride are folded into w_ref, so the conv itself is ONE wide-K dot.
        """
        taps = [
            jnp.dot(s_ref[kh], x_bf, preferred_element_type=f32).astype(bf16)
            for kh in range(3)
        ]
        patches = jnp.concatenate(taps, axis=1)            # (Ho, 3*W*C)
        acc = jnp.dot(patches, w_ref[...], preferred_element_type=f32)
        # folded eval-mode BatchNorm + ReLU epilogue (f32)
        return jnp.maximum(acc * sc_ref[...] + sh_ref[...], 0.0)

    # ---- feature extractor: three stride-2 convs --------------------------
    f = conv3x3(x_ref[0].astype(bf16), s1_ref, w1_ref, sc1_ref, sh1_ref)
    f = conv3x3(f.astype(bf16), s2_ref, w2_ref, sc2_ref, sh2_ref)
    f = conv3x3(f.astype(bf16), s3_ref, w3_ref, sc3_ref, sh3_ref)

    # ---- merged block/ball/position encoders (one 384-wide stride-1 conv) -
    enc = conv3x3(f.astype(bf16), se_ref, we_ref, sce_ref, she_ref)  # (h3, w3*384)

    # ---- AdaptiveAvgPool2d((1,1)) + Flatten: per-sample spatial mean -------
    pooled = jnp.zeros((1, 384), f32)
    for i in range(h3):                                    # static, tiny
        row = enc[i:i + 1, :]
        for j in range(w3):
            pooled = pooled + row[:, j * 384:(j + 1) * 384]
    pooled = pooled * (1.0 / (h3 * w3))                    # (1, 384)
    pos_p = pooled[:, 256:384]                             # (1, 128)

    # ---- block + ball heads (first Linear layers merged into 512 lanes) ---
    hid = jnp.maximum(
        jnp.dot(pooled.astype(bf16), hw1_ref[...],
                preferred_element_type=f32) + hb1_ref[...], 0.0)       # (1,512)
    block_sig = jax.nn.sigmoid(
        jnp.dot(hid[:, 0:256], bw2_ref[...], preferred_element_type=f32)
        + bb2_ref[...])                                                # (1,3)
    ball_sig = jax.nn.sigmoid(
        jnp.dot(hid[:, 256:512], aw2_ref[...], preferred_element_type=f32)
        + ab2_ref[...])                                                # (1,1)

    # ---- position MLP on concat([pos_features, ball_sig]) -----------------
    # Linear(129,256) split into a (128,256) part and a (1,256) part so no
    # 129-lane concatenation is needed inside the kernel.
    ph = jnp.maximum(
        jnp.dot(pos_p, pw1a_ref[...], preferred_element_type=f32)
        + ball_sig * pw1b_ref[...] + pb1_ref[...], 0.0)                # (1,256)
    pos_out = (jnp.dot(ph, pw2_ref[...], preferred_element_type=f32)
               + pb2_ref[...]) * ball_sig                              # (1,2)

    # ---- final concat([block_sig, pos_out, ball_sig]): ONE store ----------
    # Lane placement via tiny dots against eye(6): robust substitute for an
    # unaligned 3/2/1-lane concatenate, single (1,6) store per sample.
    eye6 = jnp.eye(6, dtype=f32)
    out6 = (jnp.dot(block_sig, eye6[0:3, :], preferred_element_type=f32)
            + jnp.dot(pos_out, eye6[3:5, :], preferred_element_type=f32)
            + ball_sig * eye6[5:6, :])
    out_ref[0] = out6.astype(out_ref.dtype)


# ---------------------------------------------------------------------------
# Host-side, ONE-TIME packing / folding (call OUTSIDE jit)
# ---------------------------------------------------------------------------
def _conv_out_size(s, stride):
    return (s + 2 - 3) // stride + 1


def pack_params(p, img_h, img_w):
    """Fold BN, merge encoders/heads and pre-fold the horizontal conv taps."""
    bf16 = jnp.bfloat16

    def fold(w_hwio, w_in, stride):
        """(3,3,Ci,Co) -> (3*W_in*Ci, Wo*Co): kw taps + stride + zero-pad folded."""
        w_np = np.asarray(w_hwio, np.float32)
        ci, co = w_np.shape[2], w_np.shape[3]
        wo = _conv_out_size(w_in, stride)
        wc = np.zeros((3 * w_in * ci, wo * co), np.float32)
        for kh in range(3):
            for j in range(wo):
                for kw in range(3):
                    wq = stride * j + kw - 1
                    if 0 <= wq < w_in:
                        r0 = kh * w_in * ci + wq * ci
                        wc[r0:r0 + ci, j * co:(j + 1) * co] = w_np[kh, kw]
        return jnp.asarray(wc, bf16), wo

    def row_select(h_in, stride):
        """One-hot (3, Ho, H_in) vertical-tap selectors; border rows all-zero."""
        ho = _conv_out_size(h_in, stride)
        s = np.zeros((3, ho, h_in), np.float32)
        for kh in range(3):
            for i in range(ho):
                r = stride * i + kh - 1
                if 0 <= r < h_in:
                    s[kh, i, r] = 1.0
        return jnp.asarray(s, bf16), ho

    def tile_cs(scale, shift, wo):
        sc = np.tile(np.asarray(scale, np.float32).reshape(-1), wo)[None, :]
        sh = np.tile(np.asarray(shift, np.float32).reshape(-1), wo)[None, :]
        return jnp.asarray(sc), jnp.asarray(sh)

    # pad input channels so W*Cin is lane-dense (4 -> 8: 16*8 = 128 lanes)
    c1w = np.asarray(p["c1_w"], np.float32)
    cin = c1w.shape[2]
    cin_pad = ((cin + 7) // 8) * 8
    if cin_pad != cin:
        c1w = np.pad(c1w, ((0, 0), (0, 0), (0, cin_pad - cin), (0, 0)))

    s1, h1 = row_select(img_h, 2)
    w1c, w1o = fold(c1w, img_w, 2)
    sc1, sh1 = tile_cs(p["c1_scale"], p["c1_shift"], w1o)

    s2, h2 = row_select(h1, 2)
    w2c, w2o = fold(p["c2_w"], w1o, 2)
    sc2, sh2 = tile_cs(p["c2_scale"], p["c2_shift"], w2o)

    s3, h3 = row_select(h2, 2)
    w3c, w3o = fold(p["c3_w"], w2o, 2)
    sc3, sh3 = tile_cs(p["c3_scale"], p["c3_shift"], w3o)

    # merge the three per-task encoders along Cout -> one 384-wide conv
    we_cat = jnp.concatenate([p["be_w"], p["ae_w"], p["pe_w"]], axis=3)
    se, _ = row_select(h3, 1)
    wec, weo = fold(we_cat, w3o, 1)
    sce_full = jnp.concatenate([p["be_scale"], p["ae_scale"], p["pe_scale"]], axis=1)
    she_full = jnp.concatenate([p["be_shift"], p["ae_shift"], p["pe_shift"]], axis=1)
    sce, she = tile_cs(sce_full, she_full, weo)

    # merge block/ball first Linear layers into one (384,512) block matrix
    hw1 = np.zeros((384, 512), np.float32)
    hw1[0:128, 0:256] = np.asarray(p["bw1"])
    hw1[128:256, 256:512] = np.asarray(p["aw1"])
    hb1 = jnp.concatenate([p["bb1"], p["ab1"]], axis=1)

    return dict(
        s1=s1, w1=w1c, sc1=sc1, sh1=sh1,
        s2=s2, w2=w2c, sc2=sc2, sh2=sh2,
        s3=s3, w3=w3c, sc3=sc3, sh3=sh3,
        se=se, we=wec, sce=sce, she=she,
        hw1=jnp.asarray(hw1, bf16), hb1=hb1,
        bw2=p["bw2"], bb2=p["bb2"], aw2=p["aw2"], ab2=p["ab2"],
        pw1a=p["pw1a"], pw1b=p["pw1b"], pb1=p["pb1"],
        pw2=p["pw2"], pb2=p["pb2"])


_ARG_ORDER = ("s1", "w1", "sc1", "sh1",
              "s2", "w2", "sc2", "sh2",
              "s3", "w3", "sc3", "sh3",
              "se", "we", "sce", "she",
              "hw1", "hb1",
              "bw2", "bb2", "aw2", "ab2",
              "pw1a", "pw1b", "pb1", "pw2", "pb2")


# ---------------------------------------------------------------------------
# pallas_call wrapper (jit this; packing stays outside)
# ---------------------------------------------------------------------------
def two_stage_forward(x_nchw, packed):
    n, cin, h, w = x_nchw.shape
    cin_pad = ((cin + 7) // 8) * 8

    # NCHW -> NHWC -> lane-flattened (N, H, W*Cin_pad); channels fastest.
    x_nhwc = jnp.transpose(x_nchw, (0, 2, 3, 1)).astype(jnp.float32)
    if cin_pad != cin:
        x_nhwc = jnp.pad(x_nhwc, ((0, 0), (0, 0), (0, 0), (0, cin_pad - cin)))
    x2d = x_nhwc.reshape(n, h, w * cin_pad)

    # static output sizes of the three stride-2 convs
    h1, w1 = _conv_out_size(h, 2), _conv_out_size(w, 2)
    h2, w2 = _conv_out_size(h1, 2), _conv_out_size(w1, 2)
    h3, w3 = _conv_out_size(h2, 2), _conv_out_size(w2, 2)

    args = (x2d,) + tuple(packed[k] for k in _ARG_ORDER)

    def const_spec(a):
        nd = a.ndim
        return pl.BlockSpec(a.shape, lambda i, _nd=nd: (0,) * _nd)

    in_specs = [pl.BlockSpec((1, h, w * cin_pad), lambda i: (i, 0, 0))]
    in_specs += [const_spec(packed[k]) for k in _ARG_ORDER]

    kernel = functools.partial(_fused_forward_kernel, h3=h3, w3=w3)

    out = pl.pallas_call(
        kernel,
        out_shape=jax.ShapeDtypeStruct((n, 1, 6), jnp.float32),
        grid=(n,),
        in_specs=in_specs,
        out_specs=pl.BlockSpec((1, 1, 6), lambda i: (i, 0, 0)),
        compiler_params=pltpu.CompilerParams(
            dimension_semantics=("parallel",)),
    )(*args)
    return out.reshape(n, 6)


# ---------------------------------------------------------------------------
# parameters (deterministic, Kaiming-fan_out style)
# ---------------------------------------------------------------------------
def _fold_bn(gamma, beta, mean, var, conv_bias):
    scale = gamma / jnp.sqrt(var + BN_EPS)
    shift = beta + scale * (conv_bias - mean)
    return scale[None, :], shift[None, :]          # (1, Cout)


def make_params(key, num_channels):
    keys = iter(jax.random.split(key, 32))
    p = {}

    def conv_block(name, cin, cout):
        w = jax.random.normal(next(keys), (3, 3, cin, cout),
                              jnp.float32) * jnp.sqrt(2.0 / (9 * cout))
        b = jnp.zeros((cout,), jnp.float32)
        gamma = jnp.ones((cout,), jnp.float32)
        beta = jnp.zeros((cout,), jnp.float32)
        mean = jnp.zeros((cout,), jnp.float32)
        var = jnp.ones((cout,), jnp.float32)
        scale, shift = _fold_bn(gamma, beta, mean, var, b)
        p[name + "_w"], p[name + "_scale"], p[name + "_shift"] = w, scale, shift

    # feature extractor
    conv_block("c1", num_channels, 32)
    conv_block("c2", 32, 64)
    conv_block("c3", 64, 128)
    # per-task encoders
    conv_block("be", 128, 128)
    conv_block("ae", 128, 128)
    conv_block("pe", 128, 128)

    def linear(cin, cout):
        return jax.random.normal(next(keys), (cin, cout),
                                 jnp.float32) * jnp.sqrt(2.0 / cout)

    # block detection head
    p["bw1"], p["bb1"] = linear(128, 256), jnp.zeros((1, 256), jnp.float32)
    p["bw2"], p["bb2"] = linear(256, 3), jnp.full((1, 3), 0.5, jnp.float32)
    # ball detection head
    p["aw1"], p["ab1"] = linear(128, 256), jnp.zeros((1, 256), jnp.float32)
    p["aw2"], p["ab2"] = linear(256, 1), jnp.zeros((1, 1), jnp.float32)
    # position MLP (Linear(129,256) split into 128-part and 1-part)
    p["pw1a"], p["pw1b"] = linear(128, 256), linear(1, 256)
    p["pb1"] = jnp.zeros((1, 256), jnp.float32)
    p["pw2"], p["pb2"] = linear(256, 2), jnp.zeros((1, 2), jnp.float32)
    return p


# ---------------------------------------------------------------------------
# pure-JAX reference (f32, XLA conv) for a sanity check
# ---------------------------------------------------------------------------
def reference_forward(x_nchw, p):
    x = jnp.transpose(x_nchw, (0, 2, 3, 1)).astype(jnp.float32)

    def conv(x, w, s, b, stride):
        y = lax.conv_general_dilated(
            x, w, (stride, stride), [(1, 1), (1, 1)],
            dimension_numbers=("NHWC", "HWIO", "NHWC"))
        return jnp.maximum(y * s + b, 0.0)

    f = conv(x, p["c1_w"], p["c1_scale"], p["c1_shift"], 2)
    f = conv(f, p["c2_w"], p["c2_scale"], p["c2_shift"], 2)
    f = conv(f, p["c3_w"], p["c3_scale"], p["c3_shift"], 2)
    bf = conv(f, p["be_w"], p["be_scale"], p["be_shift"], 1)
    af = conv(f, p["ae_w"], p["ae_scale"], p["ae_shift"], 1)
    pf = conv(f, p["pe_w"], p["pe_scale"], p["pe_shift"], 1)

    bp = jnp.mean(bf, axis=(1, 2))
    ap = jnp.mean(af, axis=(1, 2))
    pp = jnp.mean(pf, axis=(1, 2))

    bh = jnp.maximum(bp @ p["bw1"] + p["bb1"], 0.0)
    block_sig = jax.nn.sigmoid(bh @ p["bw2"] + p["bb2"])
    ah = jnp.maximum(ap @ p["aw1"] + p["ab1"], 0.0)
    ball_sig = jax.nn.sigmoid(ah @ p["aw2"] + p["ab2"])
    ph = jnp.maximum(pp @ p["pw1a"] + ball_sig @ p["pw1b"] + p["pb1"], 0.0)
    pos_out = (ph @ p["pw2"] + p["pb2"]) * ball_sig
    return jnp.concatenate([block_sig, pos_out, ball_sig], axis=1)


# ---------------------------------------------------------------------------
if __name__ == "__main__":
    key = jax.random.PRNGKey(0)
    k_x, k_p = jax.random.split(key)

    # batch=2, channels=4, 16x16 image (matches TwoStageDetectCNN(4, 16, 16))
    x = jax.random.normal(k_x, (2, 4, 16, 16), jnp.float32)
    params = make_params(k_p, num_channels=4)

    # one-time host-side packing (outside jit)
    packed = pack_params(params, img_h=16, img_w=16)

    fwd = jax.jit(two_stage_forward)
    out = jax.block_until_ready(fwd(x, packed))
    ref = jax.block_until_ready(reference_forward(x, params))

    assert out.shape == (2, 6), out.shape
    assert bool(jnp.all(jnp.isfinite(out)))
    # conv / hw1 matmuls use bf16 MXU operands (f32 accumulate/epilogue), so
    # compare against the pure-f32 reference with a relaxed tolerance.
    assert jnp.allclose(out, ref, rtol=2e-2, atol=2e-2), (out, ref)
    print("KERNEL_OK")
</pallas_src>

<mosaic_0001>
module attributes {stable_mosaic.version = 11 : i64} {
  func.func @_fused_forward_kernel(%arg0: i32, %arg1: memref<1x16x128xf32, #tpu.memory_space<vmem>>, %arg2: memref<3x8x16xbf16, #tpu.memory_space<vmem>>, %arg3: memref<384x256xbf16, #tpu.memory_space<vmem>>, %arg4: memref<1x256xf32, #tpu.memory_space<vmem>>, %arg5: memref<1x256xf32, #tpu.memory_space<vmem>>, %arg6: memref<3x4x8xbf16, #tpu.memory_space<vmem>>, %arg7: memref<768x256xbf16, #tpu.memory_space<vmem>>, %arg8: memref<1x256xf32, #tpu.memory_space<vmem>>, %arg9: memref<1x256xf32, #tpu.memory_space<vmem>>, %arg10: memref<3x2x4xbf16, #tpu.memory_space<vmem>>, %arg11: memref<768x256xbf16, #tpu.memory_space<vmem>>, %arg12: memref<1x256xf32, #tpu.memory_space<vmem>>, %arg13: memref<1x256xf32, #tpu.memory_space<vmem>>, %arg14: memref<3x2x2xbf16, #tpu.memory_space<vmem>>, %arg15: memref<768x768xbf16, #tpu.memory_space<vmem>>, %arg16: memref<1x768xf32, #tpu.memory_space<vmem>>, %arg17: memref<1x768xf32, #tpu.memory_space<vmem>>, %arg18: memref<384x512xbf16, #tpu.memory_space<vmem>>, %arg19: memref<1x512xf32, #tpu.memory_space<vmem>>, %arg20: memref<256x3xf32, #tpu.memory_space<vmem>>, %arg21: memref<1x3xf32, #tpu.memory_space<vmem>>, %arg22: memref<256x1xf32, #tpu.memory_space<vmem>>, %arg23: memref<1x1xf32, #tpu.memory_space<vmem>>, %arg24: memref<128x256xf32, #tpu.memory_space<vmem>>, %arg25: memref<1x256xf32, #tpu.memory_space<vmem>>, %arg26: memref<1x256xf32, #tpu.memory_space<vmem>>, %arg27: memref<256x2xf32, #tpu.memory_space<vmem>>, %arg28: memref<1x2xf32, #tpu.memory_space<vmem>>, %arg29: memref<1x1x6xf32, #tpu.memory_space<vmem>>) attributes {dimension_semantics = [#tpu.dimension_semantics<parallel>], iteration_bounds = array<i64: 2>, scalar_prefetch = 0 : i64, scratch_operands = 0 : i64, tpu.core_type = #tpu.core_type<tc>, window_params = [{transform_indices = @transform_0, window_bounds = array<i64: 1, 16, 128>}, {pipeline_mode = #tpu.pipeline_mode<synchronous>, transform_indices = @transform_1, window_bounds = array<i64: 3, 8, 16>}, {pipeline_mode = #tpu.pipeline_mode<synchronous>, transform_indices = @transform_2, window_bounds = array<i64: 384, 256>}, {pipeline_mode = #tpu.pipeline_mode<synchronous>, transform_indices = @transform_3, window_bounds = array<i64: 1, 256>}, {pipeline_mode = #tpu.pipeline_mode<synchronous>, transform_indices = @transform_4, window_bounds = array<i64: 1, 256>}, {pipeline_mode = #tpu.pipeline_mode<synchronous>, transform_indices = @transform_5, window_bounds = array<i64: 3, 4, 8>}, {pipeline_mode = #tpu.pipeline_mode<synchronous>, transform_indices = @transform_6, window_bounds = array<i64: 768, 256>}, {pipeline_mode = #tpu.pipeline_mode<synchronous>, transform_indices = @transform_7, window_bounds = array<i64: 1, 256>}, {pipeline_mode = #tpu.pipeline_mode<synchronous>, transform_indices = @transform_8, window_bounds = array<i64: 1, 256>}, {pipeline_mode = #tpu.pipeline_mode<synchronous>, transform_indices = @transform_9, window_bounds = array<i64: 3, 2, 4>}, {pipeline_mode = #tpu.pipeline_mode<synchronous>, transform_indices = @transform_10, window_bounds = array<i64: 768, 256>}, {pipeline_mode = #tpu.pipeline_mode<synchronous>, transform_indices = @transform_11, window_bounds = array<i64: 1, 256>}, {pipeline_mode = #tpu.pipeline_mode<synchronous>, transform_indices = @transform_12, window_bounds = array<i64: 1, 256>}, {pipeline_mode = #tpu.pipeline_mode<synchronous>, transform_indices = @transform_13, window_bounds = array<i64: 3, 2, 2>}, {pipeline_mode = #tpu.pipeline_mode<synchronous>, transform_indices = @transform_14, window_bounds = array<i64: 768, 768>}, {pipeline_mode = #tpu.pipeline_mode<synchronous>, transform_indices = @transform_15, window_bounds = array<i64: 1, 768>}, {pipeline_mode = #tpu.pipeline_mode<synchronous>, transform_indices = @transform_16, window_bounds = array<i64: 1, 768>}, {pipeline_mode = #tpu.pipeline_mode<synchronous>, transform_indices = @transform_17, window_bounds = array<i64: 384, 512>}, {pipeline_mode = #tpu.pipeline_mode<synchronous>, transform_indices = @transform_18, window_bounds = array<i64: 1, 512>}, {pipeline_mode = #tpu.pipeline_mode<synchronous>, transform_indices = @transform_19, window_bounds = array<i64: 256, 3>}, {pipeline_mode = #tpu.pipeline_mode<synchronous>, transform_indices = @transform_20, window_bounds = array<i64: 1, 3>}, {pipeline_mode = #tpu.pipeline_mode<synchronous>, transform_indices = @transform_21, window_bounds = array<i64: 256, 1>}, {pipeline_mode = #tpu.pipeline_mode<synchronous>, transform_indices = @transform_22, window_bounds = array<i64: 1, 1>}, {pipeline_mode = #tpu.pipeline_mode<synchronous>, transform_indices = @transform_23, window_bounds = array<i64: 128, 256>}, {pipeline_mode = #tpu.pipeline_mode<synchronous>, transform_indices = @transform_24, window_bounds = array<i64: 1, 256>}, {pipeline_mode = #tpu.pipeline_mode<synchronous>, transform_indices = @transform_25, window_bounds = array<i64: 1, 256>}, {pipeline_mode = #tpu.pipeline_mode<synchronous>, transform_indices = @transform_26, window_bounds = array<i64: 256, 2>}, {pipeline_mode = #tpu.pipeline_mode<synchronous>, transform_indices = @transform_27, window_bounds = array<i64: 1, 2>}, {transform_indices = @transform_28, window_bounds = array<i64: 1, 1, 6>}]} {
    %c0 = arith.constant 0 : index
    %c0_0 = arith.constant 0 : index
    %c0_1 = arith.constant 0 : index
    %0 = vector.load %arg1[%c0, %c0_0, %c0_1] : memref<1x16x128xf32, #tpu.memory_space<vmem>>, vector<1x16x128xf32>
    %1 = vector.shape_cast %0 : vector<1x16x128xf32> to vector<16x128xf32>
    %2 = arith.truncf %1 : vector<16x128xf32> to vector<16x128xbf16>
    %c0_2 = arith.constant 0 : index
    %c0_3 = arith.constant 0 : index
    %c0_4 = arith.constant 0 : index
    %3 = vector.load %arg2[%c0_2, %c0_3, %c0_4] : memref<3x8x16xbf16, #tpu.memory_space<vmem>>, vector<1x8x16xbf16>
    %4 = vector.shape_cast %3 : vector<1x8x16xbf16> to vector<8x16xbf16>
    %cst = arith.constant dense<0.000000e+00> : vector<8x128xf32>
    %5 = tpu.matmul %4, %2, %cst {dimension_numbers = #tpu.dot_dimension_numbers<[1], [0], [0], [1], [0, 0, 1, 1], [], []>} : vector<8x16xbf16>, vector<16x128xbf16>, vector<8x128xf32> -> vector<8x128xf32>
    %6 = arith.truncf %5 : vector<8x128xf32> to vector<8x128xbf16>
    %c1 = arith.constant 1 : index
    %c0_5 = arith.constant 0 : index
    %c0_6 = arith.constant 0 : index
    %7 = vector.load %arg2[%c1, %c0_5, %c0_6] : memref<3x8x16xbf16, #tpu.memory_space<vmem>>, vector<1x8x16xbf16>
    %8 = vector.shape_cast %7 : vector<1x8x16xbf16> to vector<8x16xbf16>
    %cst_7 = arith.constant dense<0.000000e+00> : vector<8x128xf32>
    %9 = tpu.matmul %8, %2, %cst_7 {dimension_numbers = #tpu.dot_dimension_numbers<[1], [0], [0], [1], [0, 0, 1, 1], [], []>} : vector<8x16xbf16>, vector<16x128xbf16>, vector<8x128xf32> -> vector<8x128xf32>
    %10 = arith.truncf %9 : vector<8x128xf32> to vector<8x128xbf16>
    %c2 = arith.constant 2 : index
    %c0_8 = arith.constant 0 : index
    %c0_9 = arith.constant 0 : index
    %11 = vector.load %arg2[%c2, %c0_8, %c0_9] : memref<3x8x16xbf16, #tpu.memory_space<vmem>>, vector<1x8x16xbf16>
    %12 = vector.shape_cast %11 : vector<1x8x16xbf16> to vector<8x16xbf16>
    %cst_10 = arith.constant dense<0.000000e+00> : vector<8x128xf32>
    %13 = tpu.matmul %12, %2, %cst_10 {dimension_numbers = #tpu.dot_dimension_numbers<[1], [0], [0], [1], [0, 0, 1, 1], [], []>} : vector<8x16xbf16>, vector<16x128xbf16>, vector<8x128xf32> -> vector<8x128xf32>
    %14 = arith.truncf %13 : vector<8x128xf32> to vector<8x128xbf16>
    %15 = tpu.concatenate %6, %10, %14 in 1 : vector<8x128xbf16>, vector<8x128xbf16>, vector<8x128xbf16> -> vector<8x384xbf16>
    %c0_11 = arith.constant 0 : index
    %c0_12 = arith.constant 0 : index
    %16 = vector.load %arg3[%c0_11, %c0_12] : memref<384x256xbf16, #tpu.memory_space<vmem>>, vector<384x256xbf16>
    %cst_13 = arith.constant dense<0.000000e+00> : vector<8x256xf32>
    %17 = tpu.matmul %15, %16, %cst_13 {dimension_numbers = #tpu.dot_dimension_numbers<[1], [0], [0], [1], [0, 0, 1, 1], [], []>} : vector<8x384xbf16>, vector<384x256xbf16>, vector<8x256xf32> -> vector<8x256xf32>
    %c0_14 = arith.constant 0 : index
    %c0_15 = arith.constant 0 : index
    %18 = vector.load %arg4[%c0_14, %c0_15] : memref<1x256xf32, #tpu.memory_space<vmem>>, vector<1x256xf32>
    %19 = vector.broadcast %18 : vector<1x256xf32> to vector<8x256xf32>
    %20 = arith.mulf %17, %19 : vector<8x256xf32>
    %c0_16 = arith.constant 0 : index
    %c0_17 = arith.constant 0 : index
    %21 = vector.load %arg5[%c0_16, %c0_17] : memref<1x256xf32, #tpu.memory_space<vmem>>, vector<1x256xf32>
    %22 = vector.broadcast %21 : vector<1x256xf32> to vector<8x256xf32>
    %23 = arith.addf %20, %22 : vector<8x256xf32>
    %cst_18 = arith.constant 0.000000e+00 : f32
    %24 = vector.broadcast %cst_18 : f32 to vector<8x256xf32>
    %25 = arith.maximumf %23, %24 : vector<8x256xf32>
    %26 = arith.truncf %25 : vector<8x256xf32> to vector<8x256xbf16>
    %c0_19 = arith.constant 0 : index
    %c0_20 = arith.constant 0 : index
    %c0_21 = arith.constant 0 : index
    %27 = vector.load %arg6[%c0_19, %c0_20, %c0_21] : memref<3x4x8xbf16, #tpu.memory_space<vmem>>, vector<1x4x8xbf16>
    %28 = vector.shape_cast %27 : vector<1x4x8xbf16> to vector<4x8xbf16>
    %cst_22 = arith.constant dense<0.000000e+00> : vector<4x256xf32>
    %29 = tpu.matmul %28, %26, %cst_22 {dimension_numbers = #tpu.dot_dimension_numbers<[1], [0], [0], [1], [0, 0, 1, 1], [], []>} : vector<4x8xbf16>, vector<8x256xbf16>, vector<4x256xf32> -> vector<4x256xf32>
    %30 = arith.truncf %29 : vector<4x256xf32> to vector<4x256xbf16>
    %c1_23 = arith.constant 1 : index
    %c0_24 = arith.constant 0 : index
    %c0_25 = arith.constant 0 : index
    %31 = vector.load %arg6[%c1_23, %c0_24, %c0_25] : memref<3x4x8xbf16, #tpu.memory_space<vmem>>, vector<1x4x8xbf16>
    %32 = vector.shape_cast %31 : vector<1x4x8xbf16> to vector<4x8xbf16>
    %cst_26 = arith.constant dense<0.000000e+00> : vector<4x256xf32>
    %33 = tpu.matmul %32, %26, %cst_26 {dimension_numbers = #tpu.dot_dimension_numbers<[1], [0], [0], [1], [0, 0, 1, 1], [], []>} : vector<4x8xbf16>, vector<8x256xbf16>, vector<4x256xf32> -> vector<4x256xf32>
    %34 = arith.truncf %33 : vector<4x256xf32> to vector<4x256xbf16>
    %c2_27 = arith.constant 2 : index
    %c0_28 = arith.constant 0 : index
    %c0_29 = arith.constant 0 : index
    %35 = vector.load %arg6[%c2_27, %c0_28, %c0_29] : memref<3x4x8xbf16, #tpu.memory_space<vmem>>, vector<1x4x8xbf16>
    %36 = vector.shape_cast %35 : vector<1x4x8xbf16> to vector<4x8xbf16>
    %cst_30 = arith.constant dense<0.000000e+00> : vector<4x256xf32>
    %37 = tpu.matmul %36, %26, %cst_30 {dimension_numbers = #tpu.dot_dimension_numbers<[1], [0], [0], [1], [0, 0, 1, 1], [], []>} : vector<4x8xbf16>, vector<8x256xbf16>, vector<4x256xf32> -> vector<4x256xf32>
    %38 = arith.truncf %37 : vector<4x256xf32> to vector<4x256xbf16>
    %39 = tpu.concatenate %30, %34, %38 in 1 : vector<4x256xbf16>, vector<4x256xbf16>, vector<4x256xbf16> -> vector<4x768xbf16>
    %c0_31 = arith.constant 0 : index
    %c0_32 = arith.constant 0 : index
    %40 = vector.load %arg7[%c0_31, %c0_32] : memref<768x256xbf16, #tpu.memory_space<vmem>>, vector<768x256xbf16>
    %cst_33 = arith.constant dense<0.000000e+00> : vector<4x256xf32>
    %41 = tpu.matmul %39, %40, %cst_33 {dimension_numbers = #tpu.dot_dimension_numbers<[1], [0], [0], [1], [0, 0, 1, 1], [], []>} : vector<4x768xbf16>, vector<768x256xbf16>, vector<4x256xf32> -> vector<4x256xf32>
    %c0_34 = arith.constant 0 : index
    %c0_35 = arith.constant 0 : index
    %42 = vector.load %arg8[%c0_34, %c0_35] : memref<1x256xf32, #tpu.memory_space<vmem>>, vector<1x256xf32>
    %43 = vector.broadcast %42 : vector<1x256xf32> to vector<4x256xf32>
    %44 = arith.mulf %41, %43 : vector<4x256xf32>
    %c0_36 = arith.constant 0 : index
    %c0_37 = arith.constant 0 : index
    %45 = vector.load %arg9[%c0_36, %c0_37] : memref<1x256xf32, #tpu.memory_space<vmem>>, vector<1x256xf32>
    %46 = vector.broadcast %45 : vector<1x256xf32> to vector<4x256xf32>
    %47 = arith.addf %44, %46 : vector<4x256xf32>
    %cst_38 = arith.constant 0.000000e+00 : f32
    %48 = vector.broadcast %cst_38 : f32 to vector<4x256xf32>
    %49 = arith.maximumf %47, %48 : vector<4x256xf32>
    %50 = arith.truncf %49 : vector<4x256xf32> to vector<4x256xbf16>
    %c0_39 = arith.constant 0 : index
    %c0_40 = arith.constant 0 : index
    %c0_41 = arith.constant 0 : index
    %51 = vector.load %arg10[%c0_39, %c0_40, %c0_41] : memref<3x2x4xbf16, #tpu.memory_space<vmem>>, vector<1x2x4xbf16>
    %52 = vector.shape_cast %51 : vector<1x2x4xbf16> to vector<2x4xbf16>
    %cst_42 = arith.constant dense<0.000000e+00> : vector<2x256xf32>
    %53 = tpu.matmul %52, %50, %cst_42 {dimension_numbers = #tpu.dot_dimension_numbers<[1], [0], [0], [1], [0, 0, 1, 1], [], []>} : vector<2x4xbf16>, vector<4x256xbf16>, vector<2x256xf32> -> vector<2x256xf32>
    %54 = arith.truncf %53 : vector<2x256xf32> to vector<2x256xbf16>
    %c1_43 = arith.constant 1 : index
    %c0_44 = arith.constant 0 : index
    %c0_45 = arith.constant 0 : index
    %55 = vector.load %arg10[%c1_43, %c0_44, %c0_45] : memref<3x2x4xbf16, #tpu.memory_space<vmem>>, vector<1x2x4xbf16>
    %56 = vector.shape_cast %55 : vector<1x2x4xbf16> to vector<2x4xbf16>
    %cst_46 = arith.constant dense<0.000000e+00> : vector<2x256xf32>
    %57 = tpu.matmul %56, %50, %cst_46 {dimension_numbers = #tpu.dot_dimension_numbers<[1], [0], [0], [1], [0, 0, 1, 1], [], []>} : vector<2x4xbf16>, vector<4x256xbf16>, vector<2x256xf32> -> vector<2x256xf32>
    %58 = arith.truncf %57 : vector<2x256xf32> to vector<2x256xbf16>
    %c2_47 = arith.constant 2 : index
    %c0_48 = arith.constant 0 : index
    %c0_49 = arith.constant 0 : index
    %59 = vector.load %arg10[%c2_47, %c0_48, %c0_49] : memref<3x2x4xbf16, #tpu.memory_space<vmem>>, vector<1x2x4xbf16>
    %60 = vector.shape_cast %59 : vector<1x2x4xbf16> to vector<2x4xbf16>
    %cst_50 = arith.constant dense<0.000000e+00> : vector<2x256xf32>
    %61 = tpu.matmul %60, %50, %cst_50 {dimension_numbers = #tpu.dot_dimension_numbers<[1], [0], [0], [1], [0, 0, 1, 1], [], []>} : vector<2x4xbf16>, vector<4x256xbf16>, vector<2x256xf32> -> vector<2x256xf32>
    %62 = arith.truncf %61 : vector<2x256xf32> to vector<2x256xbf16>
    %63 = tpu.concatenate %54, %58, %62 in 1 : vector<2x256xbf16>, vector<2x256xbf16>, vector<2x256xbf16> -> vector<2x768xbf16>
    %c0_51 = arith.constant 0 : index
    %c0_52 = arith.constant 0 : index
    %64 = vector.load %arg11[%c0_51, %c0_52] : memref<768x256xbf16, #tpu.memory_space<vmem>>, vector<768x256xbf16>
    %cst_53 = arith.constant dense<0.000000e+00> : vector<2x256xf32>
    %65 = tpu.matmul %63, %64, %cst_53 {dimension_numbers = #tpu.dot_dimension_numbers<[1], [0], [0], [1], [0, 0, 1, 1], [], []>} : vector<2x768xbf16>, vector<768x256xbf16>, vector<2x256xf32> -> vector<2x256xf32>
    %c0_54 = arith.constant 0 : index
    %c0_55 = arith.constant 0 : index
    %66 = vector.load %arg12[%c0_54, %c0_55] : memref<1x256xf32, #tpu.memory_space<vmem>>, vector<1x256xf32>
    %67 = vector.broadcast %66 : vector<1x256xf32> to vector<2x256xf32>
    %68 = arith.mulf %65, %67 : vector<2x256xf32>
    %c0_56 = arith.constant 0 : index
    %c0_57 = arith.constant 0 : index
    %69 = vector.load %arg13[%c0_56, %c0_57] : memref<1x256xf32, #tpu.memory_space<vmem>>, vector<1x256xf32>
    %70 = vector.broadcast %69 : vector<1x256xf32> to vector<2x256xf32>
    %71 = arith.addf %68, %70 : vector<2x256xf32>
    %cst_58 = arith.constant 0.000000e+00 : f32
    %72 = vector.broadcast %cst_58 : f32 to vector<2x256xf32>
    %73 = arith.maximumf %71, %72 : vector<2x256xf32>
    %74 = arith.truncf %73 : vector<2x256xf32> to vector<2x256xbf16>
    %c0_59 = arith.constant 0 : index
    %c0_60 = arith.constant 0 : index
    %c0_61 = arith.constant 0 : index
    %75 = vector.load %arg14[%c0_59, %c0_60, %c0_61] : memref<3x2x2xbf16, #tpu.memory_space<vmem>>, vector<1x2x2xbf16>
    %76 = vector.shape_cast %75 : vector<1x2x2xbf16> to vector<2x2xbf16>
    %cst_62 = arith.constant dense<0.000000e+00> : vector<2x256xf32>
    %77 = tpu.matmul %76, %74, %cst_62 {dimension_numbers = #tpu.dot_dimension_numbers<[1], [0], [0], [1], [0, 0, 1, 1], [], []>} : vector<2x2xbf16>, vector<2x256xbf16>, vector<2x256xf32> -> vector<2x256xf32>
    %78 = arith.truncf %77 : vector<2x256xf32> to vector<2x256xbf16>
    %c1_63 = arith.constant 1 : index
    %c0_64 = arith.constant 0 : index
    %c0_65 = arith.constant 0 : index
    %79 = vector.load %arg14[%c1_63, %c0_64, %c0_65] : memref<3x2x2xbf16, #tpu.memory_space<vmem>>, vector<1x2x2xbf16>
    %80 = vector.shape_cast %79 : vector<1x2x2xbf16> to vector<2x2xbf16>
    %cst_66 = arith.constant dense<0.000000e+00> : vector<2x256xf32>
    %81 = tpu.matmul %80, %74, %cst_66 {dimension_numbers = #tpu.dot_dimension_numbers<[1], [0], [0], [1], [0, 0, 1, 1], [], []>} : vector<2x2xbf16>, vector<2x256xbf16>, vector<2x256xf32> -> vector<2x256xf32>
    %82 = arith.truncf %81 : vector<2x256xf32> to vector<2x256xbf16>
    %c2_67 = arith.constant 2 : index
    %c0_68 = arith.constant 0 : index
    %c0_69 = arith.constant 0 : index
    %83 = vector.load %arg14[%c2_67, %c0_68, %c0_69] : memref<3x2x2xbf16, #tpu.memory_space<vmem>>, vector<1x2x2xbf16>
    %84 = vector.shape_cast %83 : vector<1x2x2xbf16> to vector<2x2xbf16>
    %cst_70 = arith.constant dense<0.000000e+00> : vector<2x256xf32>
    %85 = tpu.matmul %84, %74, %cst_70 {dimension_numbers = #tpu.dot_dimension_numbers<[1], [0], [0], [1], [0, 0, 1, 1], [], []>} : vector<2x2xbf16>, vector<2x256xbf16>, vector<2x256xf32> -> vector<2x256xf32>
    %86 = arith.truncf %85 : vector<2x256xf32> to vector<2x256xbf16>
    %87 = tpu.concatenate %78, %82, %86 in 1 : vector<2x256xbf16>, vector<2x256xbf16>, vector<2x256xbf16> -> vector<2x768xbf16>
    %c0_71 = arith.constant 0 : index
    %c0_72 = arith.constant 0 : index
    %88 = vector.load %arg15[%c0_71, %c0_72] : memref<768x768xbf16, #tpu.memory_space<vmem>>, vector<768x768xbf16>
    %cst_73 = arith.constant dense<0.000000e+00> : vector<2x768xf32>
    %89 = tpu.matmul %87, %88, %cst_73 {dimension_numbers = #tpu.dot_dimension_numbers<[1], [0], [0], [1], [0, 0, 1, 1], [], []>} : vector<2x768xbf16>, vector<768x768xbf16>, vector<2x768xf32> -> vector<2x768xf32>
    %c0_74 = arith.constant 0 : index
    %c0_75 = arith.constant 0 : index
    %90 = vector.load %arg16[%c0_74, %c0_75] : memref<1x768xf32, #tpu.memory_space<vmem>>, vector<1x768xf32>
    %91 = vector.broadcast %90 : vector<1x768xf32> to vector<2x768xf32>
    %92 = arith.mulf %89, %91 : vector<2x768xf32>
    %c0_76 = arith.constant 0 : index
    %c0_77 = arith.constant 0 : index
    %93 = vector.load %arg17[%c0_76, %c0_77] : memref<1x768xf32, #tpu.memory_space<vmem>>, vector<1x768xf32>
    %94 = vector.broadcast %93 : vector<1x768xf32> to vector<2x768xf32>
    %95 = arith.addf %92, %94 : vector<2x768xf32>
    %cst_78 = arith.constant 0.000000e+00 : f32
    %96 = vector.broadcast %cst_78 : f32 to vector<2x768xf32>
    %97 = arith.maximumf %95, %96 : vector<2x768xf32>
    %cst_79 = arith.constant 0.000000e+00 : f32
    %98 = vector.broadcast %cst_79 : f32 to vector<1x384xf32>
    %99 = vector.extract_strided_slice %97 {offsets = [0, 0], sizes = [1, 768], strides = [1, 1]} : vector<2x768xf32> to vector<1x768xf32>
    %100 = vector.extract_strided_slice %99 {offsets = [0, 0], sizes = [1, 384], strides = [1, 1]} : vector<1x768xf32> to vector<1x384xf32>
    %101 = arith.addf %98, %100 : vector<1x384xf32>
    %102 = vector.extract_strided_slice %99 {offsets = [0, 384], sizes = [1, 384], strides = [1, 1]} : vector<1x768xf32> to vector<1x384xf32>
    %103 = arith.addf %101, %102 : vector<1x384xf32>
    %104 = vector.extract_strided_slice %97 {offsets = [1, 0], sizes = [1, 768], strides = [1, 1]} : vector<2x768xf32> to vector<1x768xf32>
    %105 = vector.extract_strided_slice %104 {offsets = [0, 0], sizes = [1, 384], strides = [1, 1]} : vector<1x768xf32> to vector<1x384xf32>
    %106 = arith.addf %103, %105 : vector<1x384xf32>
    %107 = vector.extract_strided_slice %104 {offsets = [0, 384], sizes = [1, 384], strides = [1, 1]} : vector<1x768xf32> to vector<1x384xf32>
    %108 = arith.addf %106, %107 : vector<1x384xf32>
    %cst_80 = arith.constant 2.500000e-01 : f32
    %109 = vector.broadcast %cst_80 : f32 to vector<1x384xf32>
    %110 = arith.mulf %108, %109 : vector<1x384xf32>
    %111 = vector.extract_strided_slice %110 {offsets = [0, 256], sizes = [1, 128], strides = [1, 1]} : vector<1x384xf32> to vector<1x128xf32>
    %112 = arith.truncf %110 : vector<1x384xf32> to vector<1x384xbf16>
    %c0_81 = arith.constant 0 : index
    %c0_82 = arith.constant 0 : index
    %113 = vector.load %arg18[%c0_81, %c0_82] : memref<384x512xbf16, #tpu.memory_space<vmem>>, vector<384x512xbf16>
    %cst_83 = arith.constant dense<0.000000e+00> : vector<1x512xf32>
    %114 = tpu.matmul %112, %113, %cst_83 {dimension_numbers = #tpu.dot_dimension_numbers<[1], [0], [0], [1], [0, 0, 1, 1], [], []>} : vector<1x384xbf16>, vector<384x512xbf16>, vector<1x512xf32> -> vector<1x512xf32>
    %c0_84 = arith.constant 0 : index
    %c0_85 = arith.constant 0 : index
    %115 = vector.load %arg19[%c0_84, %c0_85] : memref<1x512xf32, #tpu.memory_space<vmem>>, vector<1x512xf32>
    %116 = arith.addf %114, %115 : vector<1x512xf32>
    %cst_86 = arith.constant 0.000000e+00 : f32
    %117 = vector.broadcast %cst_86 : f32 to vector<1x512xf32>
    %118 = arith.maximumf %116, %117 : vector<1x512xf32>
    %119 = vector.extract_strided_slice %118 {offsets = [0, 0], sizes = [1, 256], strides = [1, 1]} : vector<1x512xf32> to vector<1x256xf32>
    %c0_87 = arith.constant 0 : index
    %c0_88 = arith.constant 0 : index
    %120 = vector.load %arg20[%c0_87, %c0_88] : memref<256x3xf32, #tpu.memory_space<vmem>>, vector<256x3xf32>
    %cst_89 = arith.constant dense<0.000000e+00> : vector<1x3xf32>
    %121 = tpu.matmul %119, %120, %cst_89 {dimension_numbers = #tpu.dot_dimension_numbers<[1], [0], [0], [1], [0, 0, 1, 1], [], []>} : vector<1x256xf32>, vector<256x3xf32>, vector<1x3xf32> -> vector<1x3xf32>
    %c0_90 = arith.constant 0 : index
    %c0_91 = arith.constant 0 : index
    %122 = vector.load %arg21[%c0_90, %c0_91] : memref<1x3xf32, #tpu.memory_space<vmem>>, vector<1x3xf32>
    %123 = arith.addf %121, %122 : vector<1x3xf32>
    %124 = arith.negf %123 : vector<1x3xf32>
    %125 = math.exp %124 : vector<1x3xf32>
    %cst_92 = arith.constant 1.000000e+00 : f32
    %126 = vector.broadcast %cst_92 : f32 to vector<1x3xf32>
    %127 = arith.addf %126, %125 : vector<1x3xf32>
    %128 = arith.divf %126, %127 : vector<1x3xf32>
    %129 = vector.extract_strided_slice %118 {offsets = [0, 256], sizes = [1, 256], strides = [1, 1]} : vector<1x512xf32> to vector<1x256xf32>
    %c0_93 = arith.constant 0 : index
    %c0_94 = arith.constant 0 : index
    %130 = vector.load %arg22[%c0_93, %c0_94] : memref<256x1xf32, #tpu.memory_space<vmem>>, vector<256x1xf32>
    %cst_95 = arith.constant dense<0.000000e+00> : vector<1x1xf32>
    %131 = tpu.matmul %129, %130, %cst_95 {dimension_numbers = #tpu.dot_dimension_numbers<[1], [0], [0], [1], [0, 0, 1, 1], [], []>} : vector<1x256xf32>, vector<256x1xf32>, vector<1x1xf32> -> vector<1x1xf32>
    %c0_96 = arith.constant 0 : index
    %c0_97 = arith.constant 0 : index
    %132 = vector.load %arg23[%c0_96, %c0_97] : memref<1x1xf32, #tpu.memory_space<vmem>>, vector<1x1xf32>
    %133 = arith.addf %131, %132 : vector<1x1xf32>
    %134 = arith.negf %133 : vector<1x1xf32>
    %135 = math.exp %134 : vector<1x1xf32>
    %cst_98 = arith.constant 1.000000e+00 : f32
    %136 = vector.broadcast %cst_98 : f32 to vector<1x1xf32>
    %137 = arith.addf %136, %135 : vector<1x1xf32>
    %138 = arith.divf %136, %137 : vector<1x1xf32>
    %c0_99 = arith.constant 0 : index
    %c0_100 = arith.constant 0 : index
    %139 = vector.load %arg24[%c0_99, %c0_100] : memref<128x256xf32, #tpu.memory_space<vmem>>, vector<128x256xf32>
    %cst_101 = arith.constant dense<0.000000e+00> : vector<1x256xf32>
    %140 = tpu.matmul %111, %139, %cst_101 {dimension_numbers = #tpu.dot_dimension_numbers<[1], [0], [0], [1], [0, 0, 1, 1], [], []>} : vector<1x128xf32>, vector<128x256xf32>, vector<1x256xf32> -> vector<1x256xf32>
    %c0_102 = arith.constant 0 : index
    %c0_103 = arith.constant 0 : index
    %141 = vector.load %arg25[%c0_102, %c0_103] : memref<1x256xf32, #tpu.memory_space<vmem>>, vector<1x256xf32>
    %142 = vector.broadcast %138 : vector<1x1xf32> to vector<1x256xf32>
    %143 = arith.mulf %142, %141 : vector<1x256xf32>
    %144 = arith.addf %140, %143 : vector<1x256xf32>
    %c0_104 = arith.constant 0 : index
    %c0_105 = arith.constant 0 : index
    %145 = vector.load %arg26[%c0_104, %c0_105] : memref<1x256xf32, #tpu.memory_space<vmem>>, vector<1x256xf32>
    %146 = arith.addf %144, %145 : vector<1x256xf32>
    %cst_106 = arith.constant 0.000000e+00 : f32
    %147 = vector.broadcast %cst_106 : f32 to vector<1x256xf32>
    %148 = arith.maximumf %146, %147 : vector<1x256xf32>
    %c0_107 = arith.constant 0 : index
    %c0_108 = arith.constant 0 : index
    %149 = vector.load %arg27[%c0_107, %c0_108] : memref<256x2xf32, #tpu.memory_space<vmem>>, vector<256x2xf32>
    %cst_109 = arith.constant dense<0.000000e+00> : vector<1x2xf32>
    %150 = tpu.matmul %148, %149, %cst_109 {dimension_numbers = #tpu.dot_dimension_numbers<[1], [0], [0], [1], [0, 0, 1, 1], [], []>} : vector<1x256xf32>, vector<256x2xf32>, vector<1x2xf32> -> vector<1x2xf32>
    %c0_110 = arith.constant 0 : index
    %c0_111 = arith.constant 0 : index
    %151 = vector.load %arg28[%c0_110, %c0_111] : memref<1x2xf32, #tpu.memory_space<vmem>>, vector<1x2xf32>
    %152 = arith.addf %150, %151 : vector<1x2xf32>
    %153 = vector.broadcast %138 : vector<1x1xf32> to vector<1x2xf32>
    %154 = arith.mulf %152, %153 : vector<1x2xf32>
    %155 = tpu.iota {dimensions = array<i32: 0>} : vector<6x6xi32>
    %156 = tpu.iota {dimensions = array<i32: 1>} : vector<6x6xi32>
    %c0_i32 = arith.constant 0 : i32
    %157 = vector.broadcast %c0_i32 : i32 to vector<6x6xi32>
    %158 = arith.addi %155, %157 : vector<6x6xi32>
    %159 = arith.cmpi eq, %158, %156 : vector<6x6xi32>
    %160 = arith.extui %159 : vector<6x6xi1> to vector<6x6xi32>
    %161 = arith.sitofp %160 : vector<6x6xi32> to vector<6x6xf32>
    %162 = vector.extract_strided_slice %161 {offsets = [0, 0], sizes = [3, 6], strides = [1, 1]} : vector<6x6xf32> to vector<3x6xf32>
    %cst_112 = arith.constant dense<0.000000e+00> : vector<1x6xf32>
    %163 = tpu.matmul %128, %162, %cst_112 {dimension_numbers = #tpu.dot_dimension_numbers<[1], [0], [0], [1], [0, 0, 1, 1], [], []>} : vector<1x3xf32>, vector<3x6xf32>, vector<1x6xf32> -> vector<1x6xf32>
    %164 = vector.extract_strided_slice %161 {offsets = [3, 0], sizes = [2, 6], strides = [1, 1]} : vector<6x6xf32> to vector<2x6xf32>
    %cst_113 = arith.constant dense<0.000000e+00> : vector<1x6xf32>
    %165 = tpu.matmul %154, %164, %cst_113 {dimension_numbers = #tpu.dot_dimension_numbers<[1], [0], [0], [1], [0, 0, 1, 1], [], []>} : vector<1x2xf32>, vector<2x6xf32>, vector<1x6xf32> -> vector<1x6xf32>
    %166 = arith.addf %163, %165 : vector<1x6xf32>
    %167 = vector.extract_strided_slice %161 {offsets = [5, 0], sizes = [1, 6], strides = [1, 1]} : vector<6x6xf32> to vector<1x6xf32>
    %168 = vector.broadcast %138 : vector<1x1xf32> to vector<1x6xf32>
    %169 = arith.mulf %168, %167 : vector<1x6xf32>
    %170 = arith.addf %166, %169 : vector<1x6xf32>
    %c0_114 = arith.constant 0 : index
    %c0_115 = arith.constant 0 : index
    %c0_116 = arith.constant 0 : index
    %171 = vector.load %arg29[%c0_114, %c0_115, %c0_116] : memref<1x1x6xf32, #tpu.memory_space<vmem>>, vector<1x1x6xf32>
    %172 = vector.shape_cast %171 : vector<1x1x6xf32> to vector<1x6xf32>
    %173 = vector.shape_cast %170 : vector<1x6xf32> to vector<1x1x6xf32>
    tpu.vector_store %arg29[%c0_114, %c0_115, %c0_116], %173 {strides = array<i32>} : memref<1x1x6xf32, #tpu.memory_space<vmem>>, vector<1x1x6xf32>,
    return
  }
  func.func @transform_0(%arg0: i32) -> (i32, i32, i32) {
    %c0_i32 = arith.constant 0 : i32
    %c0_i32_0 = arith.constant 0 : i32
    %c0_i32_1 = arith.constant 0 : i32
    return %arg0, %c0_i32, %c0_i32_0 : i32, i32, i32
  }
  func.func @transform_1(%arg0: i32) -> (i32, i32, i32) {
    %c0_i32 = arith.constant 0 : i32
    %c0_i32_0 = arith.constant 0 : i32
    %c0_i32_1 = arith.constant 0 : i32
    %c0_i32_2 = arith.constant 0 : i32
    return %c0_i32, %c0_i32_0, %c0_i32_1 : i32, i32, i32
  }
  func.func @transform_2(%arg0: i32) -> (i32, i32) {
    %c0_i32 = arith.constant 0 : i32
    %c0_i32_0 = arith.constant 0 : i32
    %c0_i32_1 = arith.constant 0 : i32
    return %c0_i32, %c0_i32_0 : i32, i32
  }
  func.func @transform_3(%arg0: i32) -> (i32, i32) {
    %c0_i32 = arith.constant 0 : i32
    %c0_i32_0 = arith.constant 0 : i32
    %c0_i32_1 = arith.constant 0 : i32
    return %c0_i32, %c0_i32_0 : i32, i32
  }
  func.func @transform_4(%arg0: i32) -> (i32, i32) {
    %c0_i32 = arith.constant 0 : i32
    %c0_i32_0 = arith.constant 0 : i32
    %c0_i32_1 = arith.constant 0 : i32
    return %c0_i32, %c0_i32_0 : i32, i32
  }
  func.func @transform_5(%arg0: i32) -> (i32, i32, i32) {
    %c0_i32 = arith.constant 0 : i32
    %c0_i32_0 = arith.constant 0 : i32
    %c0_i32_1 = arith.constant 0 : i32
    %c0_i32_2 = arith.constant 0 : i32
    return %c0_i32, %c0_i32_0, %c0_i32_1 : i32, i32, i32
  }
  func.func @transform_6(%arg0: i32) -> (i32, i32) {
    %c0_i32 = arith.constant 0 : i32
    %c0_i32_0 = arith.constant 0 : i32
    %c0_i32_1 = arith.constant 0 : i32
    return %c0_i32, %c0_i32_0 : i32, i32
  }
  func.func @transform_7(%arg0: i32) -> (i32, i32) {
    %c0_i32 = arith.constant 0 : i32
    %c0_i32_0 = arith.constant 0 : i32
    %c0_i32_1 = arith.constant 0 : i32
    return %c0_i32, %c0_i32_0 : i32, i32
  }
  func.func @transform_8(%arg0: i32) -> (i32, i32) {
    %c0_i32 = arith.constant 0 : i32
    %c0_i32_0 = arith.constant 0 : i32
    %c0_i32_1 = arith.constant 0 : i32
    return %c0_i32, %c0_i32_0 : i32, i32
  }
  func.func @transform_9(%arg0: i32) -> (i32, i32, i32) {
    %c0_i32 = arith.constant 0 : i32
    %c0_i32_0 = arith.constant 0 : i32
    %c0_i32_1 = arith.constant 0 : i32
    %c0_i32_2 = arith.constant 0 : i32
    return %c0_i32, %c0_i32_0, %c0_i32_1 : i32, i32, i32
  }
  func.func @transform_10(%arg0: i32) -> (i32, i32) {
    %c0_i32 = arith.constant 0 : i32
    %c0_i32_0 = arith.constant 0 : i32
    %c0_i32_1 = arith.constant 0 : i32
    return %c0_i32, %c0_i32_0 : i32, i32
  }
  func.func @transform_11(%arg0: i32) -> (i32, i32) {
    %c0_i32 = arith.constant 0 : i32
    %c0_i32_0 = arith.constant 0 : i32
    %c0_i32_1 = arith.constant 0 : i32
    return %c0_i32, %c0_i32_0 : i32, i32
  }
  func.func @transform_12(%arg0: i32) -> (i32, i32) {
    %c0_i32 = arith.constant 0 : i32
    %c0_i32_0 = arith.constant 0 : i32
    %c0_i32_1 = arith.constant 0 : i32
    return %c0_i32, %c0_i32_0 : i32, i32
  }
  func.func @transform_13(%arg0: i32) -> (i32, i32, i32) {
    %c0_i32 = arith.constant 0 : i32
    %c0_i32_0 = arith.constant 0 : i32
    %c0_i32_1 = arith.constant 0 : i32
    %c0_i32_2 = arith.constant 0 : i32
    return %c0_i32, %c0_i32_0, %c0_i32_1 : i32, i32, i32
  }
  func.func @transform_14(%arg0: i32) -> (i32, i32) {
    %c0_i32 = arith.constant 0 : i32
    %c0_i32_0 = arith.constant 0 : i32
    %c0_i32_1 = arith.constant 0 : i32
    return %c0_i32, %c0_i32_0 : i32, i32
  }
  func.func @transform_15(%arg0: i32) -> (i32, i32) {
    %c0_i32 = arith.constant 0 : i32
    %c0_i32_0 = arith.constant 0 : i32
    %c0_i32_1 = arith.constant 0 : i32
    return %c0_i32, %c0_i32_0 : i32, i32
  }
  func.func @transform_16(%arg0: i32) -> (i32, i32) {
    %c0_i32 = arith.constant 0 : i32
    %c0_i32_0 = arith.constant 0 : i32
    %c0_i32_1 = arith.constant 0 : i32
    return %c0_i32, %c0_i32_0 : i32, i32
  }
  func.func @transform_17(%arg0: i32) -> (i32, i32) {
    %c0_i32 = arith.constant 0 : i32
    %c0_i32_0 = arith.constant 0 : i32
    %c0_i32_1 = arith.constant 0 : i32
    return %c0_i32, %c0_i32_0 : i32, i32
  }
  func.func @transform_18(%arg0: i32) -> (i32, i32) {
    %c0_i32 = arith.constant 0 : i32
    %c0_i32_0 = arith.constant 0 : i32
    %c0_i32_1 = arith.constant 0 : i32
    return %c0_i32, %c0_i32_0 : i32, i32
  }
  func.func @transform_19(%arg0: i32) -> (i32, i32) {
    %c0_i32 = arith.constant 0 : i32
    %c0_i32_0 = arith.constant 0 : i32
    %c0_i32_1 = arith.constant 0 : i32
    return %c0_i32, %c0_i32_0 : i32, i32
  }
  func.func @transform_20(%arg0: i32) -> (i32, i32) {
    %c0_i32 = arith.constant 0 : i32
    %c0_i32_0 = arith.constant 0 : i32
    %c0_i32_1 = arith.constant 0 : i32
    return %c0_i32, %c0_i32_0 : i32, i32
  }
  func.func @transform_21(%arg0: i32) -> (i32, i32) {
    %c0_i32 = arith.constant 0 : i32
    %c0_i32_0 = arith.constant 0 : i32
    %c0_i32_1 = arith.constant 0 : i32
    return %c0_i32, %c0_i32_0 : i32, i32
  }
  func.func @transform_22(%arg0: i32) -> (i32, i32) {
    %c0_i32 = arith.constant 0 : i32
    %c0_i32_0 = arith.constant 0 : i32
    %c0_i32_1 = arith.constant 0 : i32
    return %c0_i32, %c0_i32_0 : i32, i32
  }
  func.func @transform_23(%arg0: i32) -> (i32, i32) {
    %c0_i32 = arith.constant 0 : i32
    %c0_i32_0 = arith.constant 0 : i32
    %c0_i32_1 = arith.constant 0 : i32
    return %c0_i32, %c0_i32_0 : i32, i32
  }
  func.func @transform_24(%arg0: i32) -> (i32, i32) {
    %c0_i32 = arith.constant 0 : i32
    %c0_i32_0 = arith.constant 0 : i32
    %c0_i32_1 = arith.constant 0 : i32
    return %c0_i32, %c0_i32_0 : i32, i32
  }
  func.func @transform_25(%arg0: i32) -> (i32, i32) {
    %c0_i32 = arith.constant 0 : i32
    %c0_i32_0 = arith.constant 0 : i32
    %c0_i32_1 = arith.constant 0 : i32
    return %c0_i32, %c0_i32_0 : i32, i32
  }
  func.func @transform_26(%arg0: i32) -> (i32, i32) {
    %c0_i32 = arith.constant 0 : i32
    %c0_i32_0 = arith.constant 0 : i32
    %c0_i32_1 = arith.constant 0 : i32
    return %c0_i32, %c0_i32_0 : i32, i32
  }
  func.func @transform_27(%arg0: i32) -> (i32, i32) {
    %c0_i32 = arith.constant 0 : i32
    %c0_i32_0 = arith.constant 0 : i32
    %c0_i32_1 = arith.constant 0 : i32
    return %c0_i32, %c0_i32_0 : i32, i32
  }
  func.func @transform_28(%arg0: i32) -> (i32, i32, i32) {
    %c0_i32 = arith.constant 0 : i32
    %c0_i32_0 = arith.constant 0 : i32
    %c0_i32_1 = arith.constant 0 : i32
    return %arg0, %c0_i32, %c0_i32_0 : i32, i32, i32
  }
}

</mosaic_0001>

<llo_original>
// kernel: two_stage_forward.1
$region0: #{two_stage_forward.1}
  #allocation0 [shape = 'u32[]', space=smem, size = 0x4, offset = 0x4, fixed_abs, tag = 'smem constant byte address 0x4 - core index']
  #allocation1 [shape = 'u32[144,128]{1,0:T(1,128)}', space=vmem, size = 0x12000, scoped, tag = 'internal scratch']
  #allocation2 [shape = 'f32[1,1]{1,0:T(1,128)S(1)}', space=vmem, size = 0x200, scoped, tag = 'scoped memory for two_stage_forward.1']
  %s0 = inlined_call_operand.vmem [shape: f32[2,16,128], index: 0, kind: input, shape index: {}]
  %s1 = inlined_call_operand.hbm [shape: bf16[3,8,16], index: 1, kind: input, shape index: {}]
  %s2 = inlined_call_operand.hbm [shape: bf16[384,256], index: 2, kind: input, shape index: {}]
  %s3 = inlined_call_operand.hbm [shape: f32[1,256], index: 3, kind: input, shape index: {}]
  %s4 = inlined_call_operand.hbm [shape: f32[1,256], index: 4, kind: input, shape index: {}]
  %s5 = inlined_call_operand.hbm [shape: bf16[3,4,8], index: 5, kind: input, shape index: {}]
  %s6 = inlined_call_operand.vmem [shape: bf16[768,256], index: 6, kind: input, shape index: {}]
  %s7 = inlined_call_operand.hbm [shape: f32[1,256], index: 7, kind: input, shape index: {}]
  %s8 = inlined_call_operand.hbm [shape: f32[1,256], index: 8, kind: input, shape index: {}]
  %s9 = inlined_call_operand.hbm [shape: bf16[3,2,4], index: 9, kind: input, shape index: {}]
  %s10 = inlined_call_operand.vmem [shape: bf16[768,256], index: 10, kind: input, shape index: {}]
  %s11 = inlined_call_operand.hbm [shape: f32[1,256], index: 11, kind: input, shape index: {}]
  %s12 = inlined_call_operand.hbm [shape: f32[1,256], index: 12, kind: input, shape index: {}]
  %s13 = inlined_call_operand.vmem [shape: bf16[3,2,2], index: 13, kind: input, shape index: {}]
  %s14 = inlined_call_operand.hbm [shape: bf16[768,768], index: 14, kind: input, shape index: {}]
  %s15 = inlined_call_operand.hbm [shape: f32[1,768], index: 15, kind: input, shape index: {}]
  %s16 = inlined_call_operand.hbm [shape: f32[1,768], index: 16, kind: input, shape index: {}]
  %s17 = inlined_call_operand.hbm [shape: bf16[384,512], index: 17, kind: input, shape index: {}]
  %s18 = inlined_call_operand.hbm [shape: f32[1,512], index: 18, kind: input, shape index: {}]
  %s19 = inlined_call_operand.vmem [shape: f32[256,3], index: 19, kind: input, shape index: {}]
  %s20 = inlined_call_operand.hbm [shape: f32[1,3], index: 20, kind: input, shape index: {}]
  %s21 = inlined_call_operand.vmem [shape: f32[256,1], index: 21, kind: input, shape index: {}]
  %s22 = inlined_call_operand.<no memory space> [shape: f32[1,1], index: 22, kind: input, shape index: {}]
  %s23 = inlined_call_operand.hbm [shape: f32[128,256], index: 23, kind: input, shape index: {}]
  %s24 = inlined_call_operand.hbm [shape: f32[1,256], index: 24, kind: input, shape index: {}]
  %s25 = inlined_call_operand.hbm [shape: f32[1,256], index: 25, kind: input, shape index: {}]
  %s26 = inlined_call_operand.vmem [shape: f32[256,2], index: 26, kind: input, shape index: {}]
  %s27 = inlined_call_operand.hbm [shape: f32[1,2], index: 27, kind: input, shape index: {}]
  %s28 = inlined_call_operand.hbm [shape: f32[2,1,6], index: 28, kind: output, shape index: {}]
  %s29 = sld [smem:[#allocation0]]
  $region225: #{two_stage_forward.1} parent=0
    _
  %s31 = ssub.s32 1, %s29
  %s32 = scalar_select 0, %s31, %s29
  %v33 = vstv %s22
  %34 = vst [vmem:[#allocation2] sm:$0x1] %v33
  $region1: #{two_stage_forward.1} parent=0
    #allocation3 [shape = 'u8[6144]{0}', space=vmem, size = 0x1800, scoped, tag = 'input window, operand 1, single buffered']
    #allocation4 [shape = 's32[2]{0}', space=sflag, size = 0x8, scoped, tag = 'scoped memory for two_stage_forward.1']
    #allocation5 [shape = 's32[2]{0}', space=sflag, size = 0x8, scoped, tag = 'scoped memory for two_stage_forward.1']
    #allocation6 [shape = 'u8[196608]{0}', space=vmem, size = 0x30000, scoped, tag = 'input window, operand 2, single buffered']
    #allocation7 [shape = 's32[1]{0}', space=sflag, size = 0x4, scoped, tag = 'scoped memory for two_stage_forward.1']
    #allocation8 [shape = 'u8[1024]{0}', space=vmem, size = 0x400, scoped, tag = 'input window, operand 3, single buffered']
    #allocation9 [shape = 'u8[1024]{0}', space=vmem, size = 0x400, scoped, tag = 'input window, operand 4, single buffered']
    #allocation10 [shape = 's32[1]{0}', space=sflag, size = 0x4, scoped, tag = 'scoped memory for two_stage_forward.1']
    #allocation11 [shape = 'u8[3072]{0}', space=vmem, size = 0xc00, scoped, tag = 'input window, operand 5, single buffered']
    #allocation12 [shape = 'u8[1024]{0}', space=vmem, size = 0x400, scoped, tag = 'input window, operand 7, single buffered']
    #allocation13 [shape = 's32[1]{0}', space=sflag, size = 0x4, scoped, tag = 'scoped memory for two_stage_forward.1']
    #allocation14 [shape = 'u8[1024]{0}', space=vmem, size = 0x400, scoped, tag = 'input window, operand 8, single buffered']
    #allocation15 [shape = 'u8[1536]{0}', space=vmem, size = 0x800, scoped, tag = 'input window, operand 9, single buffered']
    #allocation16 [shape = 's32[1]{0}', space=sflag, size = 0x4, scoped, tag = 'scoped memory for two_stage_forward.1']
    #allocation17 [shape = 'u8[1024]{0}', space=vmem, size = 0x400, scoped, tag = 'input window, operand 11, single buffered']
    #allocation18 [shape = 'u8[1024]{0}', space=vmem, size = 0x400, scoped, tag = 'input window, operand 12, single buffered']
    #allocation19 [shape = 's32[1]{0}', space=sflag, size = 0x4, scoped, tag = 'scoped memory for two_stage_forward.1']
    #allocation20 [shape = 'u8[1179648]{0}', space=vmem, size = 0x120000, scoped, tag = 'input window, operand 14, single buffered']
    #allocation21 [shape = 'u8[3072]{0}', space=vmem, size = 0xc00, scoped, tag = 'input window, operand 15, single buffered']
    #allocation22 [shape = 's32[1]{0}', space=sflag, size = 0x4, scoped, tag = 'scoped memory for two_stage_forward.1']
    #allocation23 [shape = 'u8[3072]{0}', space=vmem, size = 0xc00, scoped, tag = 'input window, operand 16, single buffered']
    #allocation24 [shape = 'u8[393216]{0}', space=vmem, size = 0x60000, scoped, tag = 'input window, operand 17, single buffered']
    #allocation25 [shape = 's32[1]{0}', space=sflag, size = 0x4, scoped, tag = 'scoped memory for two_stage_forward.1']
    #allocation26 [shape = 'u8[2048]{0}', space=vmem, size = 0x800, scoped, tag = 'input window, operand 18, single buffered']
    #allocation27 [shape = 'u8[512]{0}', space=vmem, size = 0x400, scoped, tag = 'input window, operand 20, single buffered']
    #allocation28 [shape = 's32[1]{0}', space=sflag, size = 0x4, scoped, tag = 'scoped memory for two_stage_forward.1']
    #allocation29 [shape = 'u8[131072]{0}', space=vmem, size = 0x20000, scoped, tag = 'input window, operand 23, single buffered']
    #allocation30 [shape = 'u8[1024]{0}', space=vmem, size = 0x400, scoped, tag = 'input window, operand 24, single buffered']
    #allocation31 [shape = 's32[1]{0}', space=sflag, size = 0x4, scoped, tag = 'scoped memory for two_stage_forward.1']
    #allocation32 [shape = 'u8[1024]{0}', space=vmem, size = 0x400, scoped, tag = 'input window, operand 25, single buffered']
    #allocation33 [shape = 'u8[512]{0}', space=vmem, size = 0x400, scoped, tag = 'input window, operand 27, single buffered']
    #allocation34 [shape = 's32[1]{0}', space=sflag, size = 0x4, scoped, tag = 'scoped memory for two_stage_forward.1']
    #allocation35 [shape = 'u8[1024]{0}', space=vmem, size = 0x400, scoped, tag = 'output window, operand 0']
    %35 = vsyncpa [#allocation4], 0
    %36 = vsyncpa [#allocation7], 0
    %37 = vsyncpa [#allocation10], 0
    %38 = vsyncpa [#allocation13], 0
    %39 = vsyncpa [#allocation16], 0
    %40 = vsyncpa [#allocation19], 0
    %41 = vsyncpa [#allocation22], 0
    %42 = vsyncpa [#allocation25], 0
    %43 = vsyncpa [#allocation28], 0
    %44 = vsyncpa [#allocation31], 0
    %45 = vsyncpa [#allocation34], 0
    %46 = vsyncpa [#allocation5], 0
    %s47 = scalar_lea.sflag [#allocation5], 1
    %48 = vsyncpa %s47, 0
    loop: start=0, step=1, limit=4
    $region2: #{two_stage_forward.1} parent=1 // loop_pre_header
      _
    $region3: #{two_stage_forward.1} parent=1 // loop_header
      %s50 = sphi 0, %s54
      %p51 = scmp.ge.s32.totalorder %s50, 4
      %s60 = sphi 0, %s62
      %s63 = sphi 0, %s60
      %s64 = sphi 0, %s63
      %s80 = sphi 0, %s64
      %s84 = sphi 0, %s84
      %s86 = sphi 0, %s84
      %s87 = sphi 0, %s86
      %s101 = sphi 0, %s87
      %s105 = sphi 0, %s105
      %s107 = sphi 0, %s105
      %s108 = sphi 0, %s107
      %s122 = sphi 0, %s108
      %s126 = sphi 0, %s126
      %s128 = sphi 0, %s126
      %s129 = sphi 0, %s128
      %s143 = sphi 0, %s129
      %s147 = sphi 0, %s147
      %s149 = sphi 0, %s147
      %s150 = sphi 0, %s149
      %s164 = sphi 0, %s150
      %s168 = sphi 0, %s168
      %s170 = sphi 0, %s168
      %s171 = sphi 0, %s170
      %s185 = sphi 0, %s171
      %s189 = sphi 0, %s189
      %s191 = sphi 0, %s189
      %s192 = sphi 0, %s191
      %s206 = sphi 0, %s192
      %s210 = sphi 0, %s210
      %s212 = sphi 0, %s210
      %s213 = sphi 0, %s212
      %s227 = sphi 0, %s213
      %s231 = sphi 0, %s231
      %s233 = sphi 0, %s231
      %s234 = sphi 0, %s233
      %s248 = sphi 0, %s234
      %s252 = sphi 0, %s252
      %s254 = sphi 0, %s252
      %s255 = sphi 0, %s254
      %s269 = sphi 0, %s255
      %s273 = sphi 0, %s273
      %s275 = sphi 0, %s273
      %s276 = sphi 0, %s275
      %s290 = sphi 0, %s276
      %s294 = sphi 0, %s294
      %s296 = sphi 0, %s294
      %s297 = sphi 0, %s296
      %s311 = sphi 0, %s297
      %s315 = sphi 0, %s315
      %s317 = sphi 0, %s315
      %s318 = sphi 0, %s317
      %s332 = sphi 0, %s318
      %s336 = sphi 0, %s336
      %s338 = sphi 0, %s336
      %s339 = sphi 0, %s338
      %s353 = sphi 0, %s339
      %s357 = sphi 0, %s357
      %s359 = sphi 0, %s357
      %s360 = sphi 0, %s359
      %s374 = sphi 0, %s360
      %s378 = sphi 0, %s378
      %s380 = sphi 0, %s378
      %s381 = sphi 0, %s380
      %s395 = sphi 0, %s381
      %s399 = sphi 0, %s399
      %s401 = sphi 0, %s399
      %s402 = sphi 0, %s401
      %s416 = sphi 0, %s402
      %s420 = sphi 0, %s420
      %s422 = sphi 0, %s420
      %s423 = sphi 0, %s422
      %s437 = sphi 0, %s423
      %s441 = sphi 0, %s441
      %s443 = sphi 0, %s441
      %s444 = sphi 0, %s443
      %s458 = sphi 0, %s444
      %s462 = sphi 0, %s462
      %s464 = sphi 0, %s462
      %s465 = sphi 0, %s464
      %s479 = sphi 0, %s465
      %s483 = sphi 0, %s483
      %s485 = sphi 0, %s483
      %s486 = sphi 0, %s485
      %s500 = sphi 0, %s486
      %s504 = sphi 0, %s504
      %s506 = sphi 0, %s504
      %s507 = sphi 0, %s506
      %s521 = sphi 0, %s507
      %s525 = sphi 0, %s525
      %s527 = sphi 0, %s525
      %s528 = sphi 0, %s527
      %s542 = sphi 0, %s528
      %s546 = sphi 0, %s546
      %s548 = sphi 0, %s546
      %s549 = sphi 0, %s548
      %s563 = sphi 0, %s549
      %s567 = sphi 0, %s567
      %s569 = sphi 0, %s567
      %s570 = sphi 0, %s569
      %s584 = sphi 0, %s570
      %s588 = sphi 0, %s588
      %s590 = sphi 0, %s588
      %s591 = sphi 0, %s590
      %s605 = sphi 0, %s591
      %s609 = sphi 0, %s609
      %s611 = sphi 0, %s609
      %s612 = sphi 0, %s611
      %s626 = sphi 0, %s612
      %s630 = sphi 0, %s630
      %s632 = sphi 0, %s630
      %s633 = sphi 0, %s632
      %s647 = sphi 0, %s633
      %s653 = sphi 0, %s655
      %s656 = sphi 0, %s653
      %s657 = sphi 0, %s656
      %s673 = sphi 0, %s657
    $region4: #{two_stage_forward.1} parent=1 // loop_header_branch
      %53 = sbr.rel (%p51) target = $region8
    $region5: #{two_stage_forward.1} parent=1 // loop_body
      %s55 = ssub.s32 %s50, 1
      %s56 = ssub.s32 %s50, 2
      %s57 = sadd.s32 %s50, 1
      %s58 = ssub.s32 %s50, %s57
      %p59 = scmp.eq.s32.totalorder %s58, 0
      %s61 = sadd.s32 %s60, 1
      %s62 = scalar_select %p59, %s60, %s61
      %p65 = pneg %p59
      %p66 = scmp.eq.s32.totalorder %s50, 1
      %p67 = por %p65, %p66
      %p68 = scmp.ne.s32.totalorder %s60, %s63
      %p69 = scmp.eq.s32.totalorder %s50, 0
      %p70 = por %p68, %p69
      %p71 = scmp.ne.s32.totalorder %s60, %s63
      %p72 = scmp.eq.s32.totalorder %s55, 1
      %p73 = por %p71, %p72
      %p74 = scmp.ne.s32.totalorder %s63, %s64
      %p75 = scmp.eq.s32.totalorder %s55, 0
      %p76 = por %p74, %p75
      %p77 = scmp.ne.s32.totalorder %s63, %s64
      %p78 = scmp.eq.s32.totalorder %s56, 1
      %p79 = por %p77, %p78
      %p81 = scmp.ne.s32.totalorder %s64, %s80
      %p82 = scmp.eq.s32.totalorder %s56, 0
      %p83 = por %p81, %p82
      %s85 = sadd.s32 %s84, 1
      %p88 = scmp.eq.s32.totalorder %s50, 1
      %p89 = scmp.ne.s32.totalorder %s84, %s86
      %p90 = scmp.eq.s32.totalorder %s50, 0
      %p91 = por %p89, %p90
      %p92 = scmp.ne.s32.totalorder %s84, %s86
      %p93 = scmp.eq.s32.totalorder %s55, 1
      %p94 = por %p92, %p93
      %p95 = scmp.ne.s32.totalorder %s86, %s87
      %p96 = scmp.eq.s32.totalorder %s55, 0
      %p97 = por %p95, %p96
      %p98 = scmp.ne.s32.totalorder %s86, %s87
      %p99 = scmp.eq.s32.totalorder %s56, 1
      %p100 = por %p98, %p99
      %p102 = scmp.ne.s32.totalorder %s87, %s101
      %p103 = scmp.eq.s32.totalorder %s56, 0
      %p104 = por %p102, %p103
      %s106 = sadd.s32 %s105, 1
      %p109 = scmp.eq.s32.totalorder %s50, 1
      %p110 = scmp.ne.s32.totalorder %s105, %s107
      %p111 = scmp.eq.s32.totalorder %s50, 0
      %p112 = por %p110, %p111
      %p113 = scmp.ne.s32.totalorder %s105, %s107
      %p114 = scmp.eq.s32.totalorder %s55, 1
      %p115 = por %p113, %p114
      %p116 = scmp.ne.s32.totalorder %s107, %s108
      %p117 = scmp.eq.s32.totalorder %s55, 0
      %p118 = por %p116, %p117
      %p119 = scmp.ne.s32.totalorder %s107, %s108
      %p120 = scmp.eq.s32.totalorder %s56, 1
      %p121 = por %p119, %p120
      %p123 = scmp.ne.s32.totalorder %s108, %s122
      %p124 = scmp.eq.s32.totalorder %s56, 0
      %p125 = por %p123, %p124
      %s127 = sadd.s32 %s126, 1
      %p130 = scmp.eq.s32.totalorder %s50, 1
      %p131 = scmp.ne.s32.totalorder %s126, %s128
      %p132 = scmp.eq.s32.totalorder %s50, 0
      %p133 = por %p131, %p132
      %p134 = scmp.ne.s32.totalorder %s126, %s128
      %p135 = scmp.eq.s32.totalorder %s55, 1
      %p136 = por %p134, %p135
      %p137 = scmp.ne.s32.totalorder %s128, %s129
      %p138 = scmp.eq.s32.totalorder %s55, 0
      %p139 = por %p137, %p138
      %p140 = scmp.ne.s32.totalorder %s128, %s129
      %p141 = scmp.eq.s32.totalorder %s56, 1
      %p142 = por %p140, %p141
      %p144 = scmp.ne.s32.totalorder %s129, %s143
      %p145 = scmp.eq.s32.totalorder %s56, 0
      %p146 = por %p144, %p145
      %s148 = sadd.s32 %s147, 1
      %p151 = scmp.eq.s32.totalorder %s50, 1
      %p152 = scmp.ne.s32.totalorder %s147, %s149
      %p153 = scmp.eq.s32.totalorder %s50, 0
      %p154 = por %p152, %p153
      %p155 = scmp.ne.s32.totalorder %s147, %s149
      %p156 = scmp.eq.s32.totalorder %s55, 1
      %p157 = por %p155, %p156
      %p158 = scmp.ne.s32.totalorder %s149, %s150
      %p159 = scmp.eq.s32.totalorder %s55, 0
      %p160 = por %p158, %p159
      %p161 = scmp.ne.s32.totalorder %s149, %s150
      %p162 = scmp.eq.s32.totalorder %s56, 1
      %p163 = por %p161, %p162
      %p165 = scmp.ne.s32.totalorder %s150, %s164
      %p166 = scmp.eq.s32.totalorder %s56, 0
      %p167 = por %p165, %p166
      %s169 = sadd.s32 %s168, 1
      %p172 = scmp.eq.s32.totalorder %s50, 1
      %p173 = scmp.ne.s32.totalorder %s168, %s170
      %p174 = scmp.eq.s32.totalorder %s50, 0
      %p175 = por %p173, %p174
      %p176 = scmp.ne.s32.totalorder %s168, %s170
      %p177 = scmp.eq.s32.totalorder %s55, 1
      %p178 = por %p176, %p177
      %p179 = scmp.ne.s32.totalorder %s170, %s171
      %p180 = scmp.eq.s32.totalorder %s55, 0
      %p181 = por %p179, %p180
      %p182 = scmp.ne.s32.totalorder %s170, %s171
      %p183 = scmp.eq.s32.totalorder %s56, 1
      %p184 = por %p182, %p183
      %p186 = scmp.ne.s32.totalorder %s171, %s185
      %p187 = scmp.eq.s32.totalorder %s56, 0
      %p188 = por %p186, %p187
      %s190 = sadd.s32 %s189, 1
      %p193 = scmp.eq.s32.totalorder %s50, 1
      %p194 = scmp.ne.s32.totalorder %s189, %s191
      %p195 = scmp.eq.s32.totalorder %s50, 0
      %p196 = por %p194, %p195
      %p197 = scmp.ne.s32.totalorder %s189, %s191
      %p198 = scmp.eq.s32.totalorder %s55, 1
      %p199 = por %p197, %p198
      %p200 = scmp.ne.s32.totalorder %s191, %s192
      %p201 = scmp.eq.s32.totalorder %s55, 0
      %p202 = por %p200, %p201
      %p203 = scmp.ne.s32.totalorder %s191, %s192
      %p204 = scmp.eq.s32.totalorder %s56, 1
      %p205 = por %p203, %p204
      %p207 = scmp.ne.s32.totalorder %s192, %s206
      %p208 = scmp.eq.s32.totalorder %s56, 0
      %p209 = por %p207, %p208
      %s211 = sadd.s32 %s210, 1
      %p214 = scmp.eq.s32.totalorder %s50, 1
      %p215 = scmp.ne.s32.totalorder %s210, %s212
      %p216 = scmp.eq.s32.totalorder %s50, 0
      %p217 = por %p215, %p216
      %p218 = scmp.ne.s32.totalorder %s210, %s212
      %p219 = scmp.eq.s32.totalorder %s55, 1
      %p220 = por %p218, %p219
      %p221 = scmp.ne.s32.totalorder %s212, %s213
      %p222 = scmp.eq.s32.totalorder %s55, 0
      %p223 = por %p221, %p222
      %p224 = scmp.ne.s32.totalorder %s212, %s213
      %p225 = scmp.eq.s32.totalorder %s56, 1
      %p226 = por %p224, %p225
      %p228 = scmp.ne.s32.totalorder %s213, %s227
      %p229 = scmp.eq.s32.totalorder %s56, 0
      %p230 = por %p228, %p229
      %s232 = sadd.s32 %s231, 1
      %p235 = scmp.eq.s32.totalorder %s50, 1
      %p236 = scmp.ne.s32.totalorder %s231, %s233
      %p237 = scmp.eq.s32.totalorder %s50, 0
      %p238 = por %p236, %p237
      %p239 = scmp.ne.s32.totalorder %s231, %s233
      %p240 = scmp.eq.s32.totalorder %s55, 1
      %p241 = por %p239, %p240
      %p242 = scmp.ne.s32.totalorder %s233, %s234
      %p243 = scmp.eq.s32.totalorder %s55, 0
      %p244 = por %p242, %p243
      %p245 = scmp.ne.s32.totalorder %s233, %s234
      %p246 = scmp.eq.s32.totalorder %s56, 1
      %p247 = por %p245, %p246
      %p249 = scmp.ne.s32.totalorder %s234, %s248
      %p250 = scmp.eq.s32.totalorder %s56, 0
      %p251 = por %p249, %p250
      %s253 = sadd.s32 %s252, 1
      %p256 = scmp.eq.s32.totalorder %s50, 1
      %p257 = scmp.ne.s32.totalorder %s252, %s254
      %p258 = scmp.eq.s32.totalorder %s50, 0
      %p259 = por %p257, %p258
      %p260 = scmp.ne.s32.totalorder %s252, %s254
      %p261 = scmp.eq.s32.totalorder %s55, 1
      %p262 = por %p260, %p261
      %p263 = scmp.ne.s32.totalorder %s254, %s255
      %p264 = scmp.eq.s32.totalorder %s55, 0
      %p265 = por %p263, %p264
      %p266 = scmp.ne.s32.totalorder %s254, %s255
      %p267 = scmp.eq.s32.totalorder %s56, 1
      %p268 = por %p266, %p267
      %p270 = scmp.ne.s32.totalorder %s255, %s269
      %p271 = scmp.eq.s32.totalorder %s56, 0
      %p272 = por %p270, %p271
      %s274 = sadd.s32 %s273, 1
      %p277 = scmp.eq.s32.totalorder %s50, 1
      %p278 = scmp.ne.s32.totalorder %s273, %s275
      %p279 = scmp.eq.s32.totalorder %s50, 0
      %p280 = por %p278, %p279
      %p281 = scmp.ne.s32.totalorder %s273, %s275
      %p282 = scmp.eq.s32.totalorder %s55, 1
      %p283 = por %p281, %p282
      %p284 = scmp.ne.s32.totalorder %s275, %s276
      %p285 = scmp.eq.s32.totalorder %s55, 0
      %p286 = por %p284, %p285
      %p287 = scmp.ne.s32.totalorder %s275, %s276
      %p288 = scmp.eq.s32.totalorder %s56, 1
      %p289 = por %p287, %p288
      %p291 = scmp.ne.s32.totalorder %s276, %s290
      %p292 = scmp.eq.s32.totalorder %s56, 0
      %p293 = por %p291, %p292
      %s295 = sadd.s32 %s294, 1
      %p298 = scmp.eq.s32.totalorder %s50, 1
      %p299 = scmp.ne.s32.totalorder %s294, %s296
      %p300 = scmp.eq.s32.totalorder %s50, 0
      %p301 = por %p299, %p300
      %p302 = scmp.ne.s32.totalorder %s294, %s296
      %p303 = scmp.eq.s32.totalorder %s55, 1
      %p304 = por %p302, %p303
      %p305 = scmp.ne.s32.totalorder %s296, %s297
      %p306 = scmp.eq.s32.totalorder %s55, 0
      %p307 = por %p305, %p306
      %p308 = scmp.ne.s32.totalorder %s296, %s297
      %p309 = scmp.eq.s32.totalorder %s56, 1
      %p310 = por %p308, %p309
      %p312 = scmp.ne.s32.totalorder %s297, %s311
      %p313 = scmp.eq.s32.totalorder %s56, 0
      %p314 = por %p312, %p313
      %s316 = sadd.s32 %s315, 1
      %p319 = scmp.eq.s32.totalorder %s50, 1
      %p320 = scmp.ne.s32.totalorder %s315, %s317
      %p321 = scmp.eq.s32.totalorder %s50, 0
      %p322 = por %p320, %p321
      %p323 = scmp.ne.s32.totalorder %s315, %s317
      %p324 = scmp.eq.s32.totalorder %s55, 1
      %p325 = por %p323, %p324
      %p326 = scmp.ne.s32.totalorder %s317, %s318
      %p327 = scmp.eq.s32.totalorder %s55, 0
      %p328 = por %p326, %p327
      %p329 = scmp.ne.s32.totalorder %s317, %s318
      %p330 = scmp.eq.s32.totalorder %s56, 1
      %p331 = por %p329, %p330
      %p333 = scmp.ne.s32.totalorder %s318, %s332
      %p334 = scmp.eq.s32.totalorder %s56, 0
      %p335 = por %p333, %p334
      %s337 = sadd.s32 %s336, 1
      %p340 = scmp.eq.s32.totalorder %s50, 1
      %p341 = scmp.ne.s32.totalorder %s336, %s338
      %p342 = scmp.eq.s32.totalorder %s50, 0
      %p343 = por %p341, %p342
      %p344 = scmp.ne.s32.totalorder %s336, %s338
      %p345 = scmp.eq.s32.totalorder %s55, 1
      %p346 = por %p344, %p345
      %p347 = scmp.ne.s32.totalorder %s338, %s339
      %p348 = scmp.eq.s32.totalorder %s55, 0
      %p349 = por %p347, %p348
      %p350 = scmp.ne.s32.totalorder %s338, %s339
      %p351 = scmp.eq.s32.totalorder %s56, 1
      %p352 = por %p350, %p351
      %p354 = scmp.ne.s32.totalorder %s339, %s353
      %p355 = scmp.eq.s32.totalorder %s56, 0
      %p356 = por %p354, %p355
      %s358 = sadd.s32 %s357, 1
      %p361 = scmp.eq.s32.totalorder %s50, 1
      %p362 = scmp.ne.s32.totalorder %s357, %s359
      %p363 = scmp.eq.s32.totalorder %s50, 0
      %p364 = por %p362, %p363
      %p365 = scmp.ne.s32.totalorder %s357, %s359
      %p366 = scmp.eq.s32.totalorder %s55, 1
      %p367 = por %p365, %p366
      %p368 = scmp.ne.s32.totalorder %s359, %s360
      %p369 = scmp.eq.s32.totalorder %s55, 0
      %p370 = por %p368, %p369
      %p371 = scmp.ne.s32.totalorder %s359, %s360
      %p372 = scmp.eq.s32.totalorder %s56, 1
      %p373 = por %p371, %p372
      %p375 = scmp.ne.s32.totalorder %s360, %s374
      %p376 = scmp.eq.s32.totalorder %s56, 0
      %p377 = por %p375, %p376
      %s379 = sadd.s32 %s378, 1
      %p382 = scmp.eq.s32.totalorder %s50, 1
      %p383 = scmp.ne.s32.totalorder %s378, %s380
      %p384 = scmp.eq.s32.totalorder %s50, 0
      %p385 = por %p383, %p384
      %p386 = scmp.ne.s32.totalorder %s378, %s380
      %p387 = scmp.eq.s32.totalorder %s55, 1
      %p388 = por %p386, %p387
      %p389 = scmp.ne.s32.totalorder %s380, %s381
      %p390 = scmp.eq.s32.totalorder %s55, 0
      %p391 = por %p389, %p390
      %p392 = scmp.ne.s32.totalorder %s380, %s381
      %p393 = scmp.eq.s32.totalorder %s56, 1
      %p394 = por %p392, %p393
      %p396 = scmp.ne.s32.totalorder %s381, %s395
      %p397 = scmp.eq.s32.totalorder %s56, 0
      %p398 = por %p396, %p397
      %s400 = sadd.s32 %s399, 1
      %p403 = scmp.eq.s32.totalorder %s50, 1
      %p404 = scmp.ne.s32.totalorder %s399, %s401
      %p405 = scmp.eq.s32.totalorder %s50, 0
      %p406 = por %p404, %p405
      %p407 = scmp.ne.s32.totalorder %s399, %s401
      %p408 = scmp.eq.s32.totalorder %s55, 1
      %p409 = por %p407, %p408
      %p410 = scmp.ne.s32.totalorder %s401, %s402
      %p411 = scmp.eq.s32.totalorder %s55, 0
      %p412 = por %p410, %p411
      %p413 = scmp.ne.s32.totalorder %s401, %s402
      %p414 = scmp.eq.s32.totalorder %s56, 1
      %p415 = por %p413, %p414
      %p417 = scmp.ne.s32.totalorder %s402, %s416
      %p418 = scmp.eq.s32.totalorder %s56, 0
      %p419 = por %p417, %p418
      %s421 = sadd.s32 %s420, 1
      %p424 = scmp.eq.s32.totalorder %s50, 1
      %p425 = scmp.ne.s32.totalorder %s420, %s422
      %p426 = scmp.eq.s32.totalorder %s50, 0
      %p427 = por %p425, %p426
      %p428 = scmp.ne.s32.totalorder %s420, %s422
      %p429 = scmp.eq.s32.totalorder %s55, 1
      %p430 = por %p428, %p429
      %p431 = scmp.ne.s32.totalorder %s422, %s423
      %p432 = scmp.eq.s32.totalorder %s55, 0
      %p433 = por %p431, %p432
      %p434 = scmp.ne.s32.totalorder %s422, %s423
      %p435 = scmp.eq.s32.totalorder %s56, 1
      %p436 = por %p434, %p435
      %p438 = scmp.ne.s32.totalorder %s423, %s437
      %p439 = scmp.eq.s32.totalorder %s56, 0
      %p440 = por %p438, %p439
      %s442 = sadd.s32 %s441, 1
      %p445 = scmp.eq.s32.totalorder %s50, 1
      %p446 = scmp.ne.s32.totalorder %s441, %s443
      %p447 = scmp.eq.s32.totalorder %s50, 0
      %p448 = por %p446, %p447
      %p449 = scmp.ne.s32.totalorder %s441, %s443
      %p450 = scmp.eq.s32.totalorder %s55, 1
      %p451 = por %p449, %p450
      %p452 = scmp.ne.s32.totalorder %s443, %s444
      %p453 = scmp.eq.s32.totalorder %s55, 0
      %p454 = por %p452, %p453
      %p455 = scmp.ne.s32.totalorder %s443, %s444
      %p456 = scmp.eq.s32.totalorder %s56, 1
      %p457 = por %p455, %p456
      %p459 = scmp.ne.s32.totalorder %s444, %s458
      %p460 = scmp.eq.s32.totalorder %s56, 0
      %p461 = por %p459, %p460
      %s463 = sadd.s32 %s462, 1
      %p466 = scmp.eq.s32.totalorder %s50, 1
      %p467 = scmp.ne.s32.totalorder %s462, %s464
      %p468 = scmp.eq.s32.totalorder %s50, 0
      %p469 = por %p467, %p468
      %p470 = scmp.ne.s32.totalorder %s462, %s464
      %p471 = scmp.eq.s32.totalorder %s55, 1
      %p472 = por %p470, %p471
      %p473 = scmp.ne.s32.totalorder %s464, %s465
      %p474 = scmp.eq.s32.totalorder %s55, 0
      %p475 = por %p473, %p474
      %p476 = scmp.ne.s32.totalorder %s464, %s465
      %p477 = scmp.eq.s32.totalorder %s56, 1
      %p478 = por %p476, %p477
      %p480 = scmp.ne.s32.totalorder %s465, %s479
      %p481 = scmp.eq.s32.totalorder %s56, 0
      %p482 = por %p480, %p481
      %s484 = sadd.s32 %s483, 1
      %p487 = scmp.eq.s32.totalorder %s50, 1
      %p488 = scmp.ne.s32.totalorder %s483, %s485
      %p489 = scmp.eq.s32.totalorder %s50, 0
      %p490 = por %p488, %p489
      %p491 = scmp.ne.s32.totalorder %s483, %s485
      %p492 = scmp.eq.s32.totalorder %s55, 1
      %p493 = por %p491, %p492
      %p494 = scmp.ne.s32.totalorder %s485, %s486
      %p495 = scmp.eq.s32.totalorder %s55, 0
      %p496 = por %p494, %p495
      %p497 = scmp.ne.s32.totalorder %s485, %s486
      %p498 = scmp.eq.s32.totalorder %s56, 1
      %p499 = por %p497, %p498
      %p501 = scmp.ne.s32.totalorder %s486, %s500
      %p502 = scmp.eq.s32.totalorder %s56, 0
      %p503 = por %p501, %p502
      %s505 = sadd.s32 %s504, 1
      %p508 = scmp.eq.s32.totalorder %s50, 1
      %p509 = scmp.ne.s32.totalorder %s504, %s506
      %p510 = scmp.eq.s32.totalorder %s50, 0
      %p511 = por %p509, %p510
      %p512 = scmp.ne.s32.totalorder %s504, %s506
      %p513 = scmp.eq.s32.totalorder %s55, 1
      %p514 = por %p512, %p513
      %p515 = scmp.ne.s32.totalorder %s506, %s507
      %p516 = scmp.eq.s32.totalorder %s55, 0
      %p517 = por %p515, %p516
      %p518 = scmp.ne.s32.totalorder %s506, %s507
      %p519 = scmp.eq.s32.totalorder %s56, 1
      %p520 = por %p518, %p519
      %p522 = scmp.ne.s32.totalorder %s507, %s521
      %p523 = scmp.eq.s32.totalorder %s56, 0
      %p524 = por %p522, %p523
      %s526 = sadd.s32 %s525, 1
      %p529 = scmp.eq.s32.totalorder %s50, 1
      %p530 = scmp.ne.s32.totalorder %s525, %s527
      %p531 = scmp.eq.s32.totalorder %s50, 0
      %p532 = por %p530, %p531
      %p533 = scmp.ne.s32.totalorder %s525, %s527
      %p534 = scmp.eq.s32.totalorder %s55, 1
      %p535 = por %p533, %p534
      %p536 = scmp.ne.s32.totalorder %s527, %s528
      %p537 = scmp.eq.s32.totalorder %s55, 0
      %p538 = por %p536, %p537
      %p539 = scmp.ne.s32.totalorder %s527, %s528
      %p540 = scmp.eq.s32.totalorder %s56, 1
      %p541 = por %p539, %p540
      %p543 = scmp.ne.s32.totalorder %s528, %s542
      %p544 = scmp.eq.s32.totalorder %s56, 0
      %p545 = por %p543, %p544
      %s547 = sadd.s32 %s546, 1
      %p550 = scmp.eq.s32.totalorder %s50, 1
      %p551 = scmp.ne.s32.totalorder %s546, %s548
      %p552 = scmp.eq.s32.totalorder %s50, 0
      %p553 = por %p551, %p552
      %p554 = scmp.ne.s32.totalorder %s546, %s548
      %p555 = scmp.eq.s32.totalorder %s55, 1
      %p556 = por %p554, %p555
      %p557 = scmp.ne.s32.totalorder %s548, %s549
      %p558 = scmp.eq.s32.totalorder %s55, 0
      %p559 = por %p557, %p558
      %p560 = scmp.ne.s32.totalorder %s548, %s549
      %p561 = scmp.eq.s32.totalorder %s56, 1
      %p562 = por %p560, %p561
      %p564 = scmp.ne.s32.totalorder %s549, %s563
      %p565 = scmp.eq.s32.totalorder %s56, 0
      %p566 = por %p564, %p565
      %s568 = sadd.s32 %s567, 1
      %p571 = scmp.eq.s32.totalorder %s50, 1
      %p572 = scmp.ne.s32.totalorder %s567, %s569
      %p573 = scmp.eq.s32.totalorder %s50, 0
      %p574 = por %p572, %p573
      %p575 = scmp.ne.s32.totalorder %s567, %s569
      %p576 = scmp.eq.s32.totalorder %s55, 1
      %p577 = por %p575, %p576
      %p578 = scmp.ne.s32.totalorder %s569, %s570
      %p579 = scmp.eq.s32.totalorder %s55, 0
      %p580 = por %p578, %p579
      %p581 = scmp.ne.s32.totalorder %s569, %s570
      %p582 = scmp.eq.s32.totalorder %s56, 1
      %p583 = por %p581, %p582
      %p585 = scmp.ne.s32.totalorder %s570, %s584
      %p586 = scmp.eq.s32.totalorder %s56, 0
      %p587 = por %p585, %p586
      %s589 = sadd.s32 %s588, 1
      %p592 = scmp.eq.s32.totalorder %s50, 1
      %p593 = scmp.ne.s32.totalorder %s588, %s590
      %p594 = scmp.eq.s32.totalorder %s50, 0
      %p595 = por %p593, %p594
      %p596 = scmp.ne.s32.totalorder %s588, %s590
      %p597 = scmp.eq.s32.totalorder %s55, 1
      %p598 = por %p596, %p597
      %p599 = scmp.ne.s32.totalorder %s590, %s591
      %p600 = scmp.eq.s32.totalorder %s55, 0
      %p601 = por %p599, %p600
      %p602 = scmp.ne.s32.totalorder %s590, %s591
      %p603 = scmp.eq.s32.totalorder %s56, 1
      %p604 = por %p602, %p603
      %p606 = scmp.ne.s32.totalorder %s591, %s605
      %p607 = scmp.eq.s32.totalorder %s56, 0
      %p608 = por %p606, %p607
      %s610 = sadd.s32 %s609, 1
      %p613 = scmp.eq.s32.totalorder %s50, 1
      %p614 = scmp.ne.s32.totalorder %s609, %s611
      %p615 = scmp.eq.s32.totalorder %s50, 0
      %p616 = por %p614, %p615
      %p617 = scmp.ne.s32.totalorder %s609, %s611
      %p618 = scmp.eq.s32.totalorder %s55, 1
      %p619 = por %p617, %p618
      %p620 = scmp.ne.s32.totalorder %s611, %s612
      %p621 = scmp.eq.s32.totalorder %s55, 0
      %p622 = por %p620, %p621
      %p623 = scmp.ne.s32.totalorder %s611, %s612
      %p624 = scmp.eq.s32.totalorder %s56, 1
      %p625 = por %p623, %p624
      %p627 = scmp.ne.s32.totalorder %s612, %s626
      %p628 = scmp.eq.s32.totalorder %s56, 0
      %p629 = por %p627, %p628
      %s631 = sadd.s32 %s630, 1
      %p634 = scmp.eq.s32.totalorder %s50, 1
      %p635 = scmp.ne.s32.totalorder %s630, %s632
      %p636 = scmp.eq.s32.totalorder %s50, 0
      %p637 = por %p635, %p636
      %p638 = scmp.ne.s32.totalorder %s630, %s632
      %p639 = scmp.eq.s32.totalorder %s55, 1
      %p640 = por %p638, %p639
      %p641 = scmp.ne.s32.totalorder %s632, %s633
      %p642 = scmp.eq.s32.totalorder %s55, 0
      %p643 = por %p641, %p642
      %p644 = scmp.ne.s32.totalorder %s632, %s633
      %p645 = scmp.eq.s32.totalorder %s56, 1
      %p646 = por %p644, %p645
      %p648 = scmp.ne.s32.totalorder %s633, %s647
      %p649 = scmp.eq.s32.totalorder %s56, 0
      %p650 = por %p648, %p649
      %s651 = ssub.s32 %s50, %s57
      %p652 = scmp.eq.s32.totalorder %s651, 0
      %s654 = sadd.s32 %s653, 1
      %s655 = scalar_select %p652, %s653, %s654
      %p658 = pneg %p652
      %p659 = scmp.eq.s32.totalorder %s50, 1
      %p660 = por %p658, %p659
      %p661 = scmp.ne.s32.totalorder %s653, %s656
      %p662 = scmp.eq.s32.totalorder %s50, 0
      %p663 = por %p661, %p662
      %p664 = scmp.ne.s32.totalorder %s653, %s656
      %p665 = scmp.eq.s32.totalorder %s55, 1
      %p666 = por %p664, %p665
      %p667 = scmp.ne.s32.totalorder %s656, %s657
      %p668 = scmp.eq.s32.totalorder %s55, 0
      %p669 = por %p667, %p668
      %p670 = scmp.ne.s32.totalorder %s656, %s657
      %p671 = scmp.eq.s32.totalorder %s56, 1
      %p672 = por %p670, %p671
      %p674 = scmp.ne.s32.totalorder %s657, %s673
      %p675 = scmp.eq.s32.totalorder %s56, 0
      %p676 = por %p674, %p675
      %p677 = scmp.le.s32.totalorder 1, %s50
      %p678 = scmp.lt.s32.totalorder %s50, 3
      %p679 = pnand %p677, %p678
      %p680 = pneg %p679
      // Predicated region
      $region9: #{two_stage_forward.1} parent=5 // pred_check
        _
      $region10: #{two_stage_forward.1} parent=5 // pred_check_branch
        %682 = sbr.rel (%p679) target = $region12
      $region11: #{two_stage_forward.1} parent=5 // pred_region
        %s683 = ssub.s32 %s50, 1
        // Predicated region
        $region13: #{two_stage_forward.1} parent=11 // pred_check
          %p684 = pneg %p97
        $region14: #{two_stage_forward.1} parent=11 // pred_check_branch
          %686 = sbr.rel (%p684) target = $region16
        $region15: #{two_stage_forward.1} parent=11 // pred_region
          %s688 = ssub.s32 192, 192
          %689 = vsyncadd [#allocation4], %s688
          %s690 = sshll.u32 [#allocation3], 4
          %s691 = int_to_ptr.vmem [resolvable:$true] %s690
          %696 = dma.hbm_to_vmem [thread:$0]  %s1, 192, %s691, [#allocation4], 64, 64, 4
        $region16: #{two_stage_forward.1} parent=11 // pred_fallthru
          _
        // Predicated region
        $region17: #{two_stage_forward.1} parent=11 // pred_check
          %p697 = pneg %p118
        $region18: #{two_stage_forward.1} parent=11 // pred_check_branch
          %699 = sbr.rel (%p697) target = $region20
        $region19: #{two_stage_forward.1} parent=11 // pred_region
          %s701 = ssub.s32 6144, 6144
          %702 = vsyncadd [#allocation7], %s701
          %s703 = sshll.u32 [#allocation6], 4
          %s704 = int_to_ptr.vmem [resolvable:$true] %s703
          %709 = dma.hbm_to_vmem [thread:$0]  %s2, 6144, %s704, [#allocation7], 128, 128, 8
        $region20: #{two_stage_forward.1} parent=11 // pred_fallthru
          _
        // Predicated region
        $region21: #{two_stage_forward.1} parent=11 // pred_check
          %p710 = pneg %p139
        $region22: #{two_stage_forward.1} parent=11 // pred_check_branch
          %712 = sbr.rel (%p710) target = $region24
        $region23: #{two_stage_forward.1} parent=11 // pred_region
          %s714 = ssub.s32 32, 32
          %715 = vsyncadd [#allocation7], %s714
          %s717 = sshll.u32 [#allocation8], 4
          %s718 = int_to_ptr.vmem [resolvable:$true] %s717
          %720 = dma.hbm_to_vmem [thread:$0]  %s3, 32, %s718, [#allocation7]
        $region24: #{two_stage_forward.1} parent=11 // pred_fallthru
          _
        // Predicated region
        $region25: #{two_stage_forward.1} parent=11 // pred_check
          %p721 = pneg %p160
        $region26: #{two_stage_forward.1} parent=11 // pred_check_branch
          %723 = sbr.rel (%p721) target = $region28
        $region27: #{two_stage_forward.1} parent=11 // pred_region
          %s725 = ssub.s32 32, 32
          %726 = vsyncadd [#allocation10], %s725
          %s728 = sshll.u32 [#allocation9], 4
          %s729 = int_to_ptr.vmem [resolvable:$true] %s728
          %731 = dma.hbm_to_vmem [thread:$0]  %s4, 32, %s729, [#allocation10]
        $region28: #{two_stage_forward.1} parent=11 // pred_fallthru
          _
        // Predicated region
        $region29: #{two_stage_forward.1} parent=11 // pred_check
          %p732 = pneg %p181
        $region30: #{two_stage_forward.1} parent=11 // pred_check_branch
          %734 = sbr.rel (%p732) target = $region32
        $region31: #{two_stage_forward.1} parent=11 // pred_region
          %s736 = ssub.s32 96, 96
          %737 = vsyncadd [#allocation10], %s736
          %s738 = sshll.u32 [#allocation11], 4
          %s739 = int_to_ptr.vmem [resolvable:$true] %s738
          %744 = dma.hbm_to_vmem [thread:$0]  %s5, 96, %s739, [#allocation10], 32, 32, 2
        $region32: #{two_stage_forward.1} parent=11 // pred_fallthru
          _
        // Predicated region
        $region33: #{two_stage_forward.1} parent=11 // pred_check
          %p745 = pneg %p202
        $region34: #{two_stage_forward.1} parent=11 // pred_check_branch
          %747 = sbr.rel (%p745) target = $region36
        $region35: #{two_stage_forward.1} parent=11 // pred_region
          _
        $region36: #{two_stage_forward.1} parent=11 // pred_fallthru
          _
        // Predicated region
        $region37: #{two_stage_forward.1} parent=11 // pred_check
          %p748 = pneg %p223
        $region38: #{two_stage_forward.1} parent=11 // pred_check_branch
          %750 = sbr.rel (%p748) target = $region40
        $region39: #{two_stage_forward.1} parent=11 // pred_region
          %s752 = ssub.s32 32, 32
          %753 = vsyncadd [#allocation13], %s752
          %s755 = sshll.u32 [#allocation12], 4
          %s756 = int_to_ptr.vmem [resolvable:$true] %s755
          %758 = dma.hbm_to_vmem [thread:$0]  %s7, 32, %s756, [#allocation13]
        $region40: #{two_stage_forward.1} parent=11 // pred_fallthru
          _
        // Predicated region
        $region41: #{two_stage_forward.1} parent=11 // pred_check
          %p759 = pneg %p244
        $region42: #{two_stage_forward.1} parent=11 // pred_check_branch
          %761 = sbr.rel (%p759) target = $region44
        $region43: #{two_stage_forward.1} parent=11 // pred_region
          %s763 = ssub.s32 32, 32
          %764 = vsyncadd [#allocation13], %s763
          %s766 = sshll.u32 [#allocation14], 4
          %s767 = int_to_ptr.vmem [resolvable:$true] %s766
          %769 = dma.hbm_to_vmem [thread:$0]  %s8, 32, %s767, [#allocation13]
        $region44: #{two_stage_forward.1} parent=11 // pred_fallthru
          _
        // Predicated region
        $region45: #{two_stage_forward.1} parent=11 // pred_check
          %p770 = pneg %p265
        $region46: #{two_stage_forward.1} parent=11 // pred_check_branch
          %772 = sbr.rel (%p770) target = $region48
        $region47: #{two_stage_forward.1} parent=11 // pred_region
          %s774 = ssub.s32 48, 48
          %775 = vsyncadd [#allocation16], %s774
          %s776 = sshll.u32 [#allocation15], 4
          %s777 = int_to_ptr.vmem [resolvable:$true] %s776
          %782 = dma.hbm_to_vmem [thread:$0]  %s9, 48, %s777, [#allocation16], 16, 16, 1
        $region48: #{two_stage_forward.1} parent=11 // pred_fallthru
          _
        // Predicated region
        $region49: #{two_stage_forward.1} parent=11 // pred_check
          %p783 = pneg %p286
        $region50: #{two_stage_forward.1} parent=11 // pred_check_branch
          %785 = sbr.rel (%p783) target = $region52
        $region51: #{two_stage_forward.1} parent=11 // pred_region
          _
        $region52: #{two_stage_forward.1} parent=11 // pred_fallthru
          _
        // Predicated region
        $region53: #{two_stage_forward.1} parent=11 // pred_check
          %p786 = pneg %p307
        $region54: #{two_stage_forward.1} parent=11 // pred_check_branch
          %788 = sbr.rel (%p786) target = $region56
        $region55: #{two_stage_forward.1} parent=11 // pred_region
          %s790 = ssub.s32 32, 32
          %791 = vsyncadd [#allocation16], %s790
          %s793 = sshll.u32 [#allocation17], 4
          %s794 = int_to_ptr.vmem [resolvable:$true] %s793
          %796 = dma.hbm_to_vmem [thread:$0]  %s11, 32, %s794, [#allocation16]
        $region56: #{two_stage_forward.1} parent=11 // pred_fallthru
          _
        // Predicated region
        $region57: #{two_stage_forward.1} parent=11 // pred_check
          %p797 = pneg %p328
        $region58: #{two_stage_forward.1} parent=11 // pred_check_branch
          %799 = sbr.rel (%p797) target = $region60
        $region59: #{two_stage_forward.1} parent=11 // pred_region
          %s801 = ssub.s32 32, 32
          %802 = vsyncadd [#allocation19], %s801
          %s804 = sshll.u32 [#allocation18], 4
          %s805 = int_to_ptr.vmem [resolvable:$true] %s804
          %807 = dma.hbm_to_vmem [thread:$0]  %s12, 32, %s805, [#allocation19]
        $region60: #{two_stage_forward.1} parent=11 // pred_fallthru
          _
        // Predicated region
        $region61: #{two_stage_forward.1} parent=11 // pred_check
          %p808 = pneg %p349
        $region62: #{two_stage_forward.1} parent=11 // pred_check_branch
          %810 = sbr.rel (%p808) target = $region64
        $region63: #{two_stage_forward.1} parent=11 // pred_region
          _
        $region64: #{two_stage_forward.1} parent=11 // pred_fallthru
          _
        // Predicated region
        $region65: #{two_stage_forward.1} parent=11 // pred_check
          %p811 = pneg %p370
        $region66: #{two_stage_forward.1} parent=11 // pred_check_branch
          %813 = sbr.rel (%p811) target = $region68
        $region67: #{two_stage_forward.1} parent=11 // pred_region
          %s815 = ssub.s32 36864, 36864
          %816 = vsyncadd [#allocation19], %s815
          %s817 = sshll.u32 [#allocation20], 4
          %s818 = int_to_ptr.vmem [resolvable:$true] %s817
          %823 = dma.hbm_to_vmem [thread:$0]  %s14, 36864, %s818, [#allocation19], 384, 384, 24
        $region68: #{two_stage_forward.1} parent=11 // pred_fallthru
          _
        // Predicated region
        $region69: #{two_stage_forward.1} parent=11 // pred_check
          %p824 = pneg %p391
        $region70: #{two_stage_forward.1} parent=11 // pred_check_branch
          %826 = sbr.rel (%p824) target = $region72
        $region71: #{two_stage_forward.1} parent=11 // pred_region
          %s828 = ssub.s32 96, 96
          %829 = vsyncadd [#allocation22], %s828
          %s831 = sshll.u32 [#allocation21], 4
          %s832 = int_to_ptr.vmem [resolvable:$true] %s831
          %834 = dma.hbm_to_vmem [thread:$0]  %s15, 96, %s832, [#allocation22]
        $region72: #{two_stage_forward.1} parent=11 // pred_fallthru
          _
        // Predicated region
        $region73: #{two_stage_forward.1} parent=11 // pred_check
          %p835 = pneg %p412
        $region74: #{two_stage_forward.1} parent=11 // pred_check_branch
          %837 = sbr.rel (%p835) target = $region76
        $region75: #{two_stage_forward.1} parent=11 // pred_region
          %s839 = ssub.s32 96, 96
          %840 = vsyncadd [#allocation22], %s839
          %s842 = sshll.u32 [#allocation23], 4
          %s843 = int_to_ptr.vmem [resolvable:$true] %s842
          %845 = dma.hbm_to_vmem [thread:$0]  %s16, 96, %s843, [#allocation22]
        $region76: #{two_stage_forward.1} parent=11 // pred_fallthru
          _
        // Predicated region
        $region77: #{two_stage_forward.1} parent=11 // pred_check
          %p846 = pneg %p433
        $region78: #{two_stage_forward.1} parent=11 // pred_check_branch
          %848 = sbr.rel (%p846) target = $region80
        $region79: #{two_stage_forward.1} parent=11 // pred_region
          %s850 = ssub.s32 12288, 12288
          %851 = vsyncadd [#allocation25], %s850
          %s852 = sshll.u32 [#allocation24], 4
          %s853 = int_to_ptr.vmem [resolvable:$true] %s852
          %858 = dma.hbm_to_vmem [thread:$0]  %s17, 12288, %s853, [#allocation25], 256, 256, 16
        $region80: #{two_stage_forward.1} parent=11 // pred_fallthru
          _
        // Predicated region
        $region81: #{two_stage_forward.1} parent=11 // pred_check
          %p859 = pneg %p454
        $region82: #{two_stage_forward.1} parent=11 // pred_check_branch
          %861 = sbr.rel (%p859) target = $region84
        $region83: #{two_stage_forward.1} parent=11 // pred_region
          %s863 = ssub.s32 64, 64
          %864 = vsyncadd [#allocation25], %s863
          %s866 = sshll.u32 [#allocation26], 4
          %s867 = int_to_ptr.vmem [resolvable:$true] %s866
          %869 = dma.hbm_to_vmem [thread:$0]  %s18, 64, %s867, [#allocation25]
        $region84: #{two_stage_forward.1} parent=11 // pred_fallthru
          _
        // Predicated region
        $region85: #{two_stage_forward.1} parent=11 // pred_check
          %p870 = pneg %p475
        $region86: #{two_stage_forward.1} parent=11 // pred_check_branch
          %872 = sbr.rel (%p870) target = $region88
        $region87: #{two_stage_forward.1} parent=11 // pred_region
          _
        $region88: #{two_stage_forward.1} parent=11 // pred_fallthru
          _
        // Predicated region
        $region89: #{two_stage_forward.1} parent=11 // pred_check
          %p873 = pneg %p496
        $region90: #{two_stage_forward.1} parent=11 // pred_check_branch
          %875 = sbr.rel (%p873) target = $region92
        $region91: #{two_stage_forward.1} parent=11 // pred_region
          %s877 = ssub.s32 16, 16
          %878 = vsyncadd [#allocation28], %s877
          %s880 = sshll.u32 [#allocation27], 4
          %s881 = int_to_ptr.vmem [resolvable:$true] %s880
          %883 = dma.hbm_to_vmem [thread:$0]  %s20, 16, %s881, [#allocation28]
        $region92: #{two_stage_forward.1} parent=11 // pred_fallthru
          _
        // Predicated region
        $region93: #{two_stage_forward.1} parent=11 // pred_check
          %p884 = pneg %p517
        $region94: #{two_stage_forward.1} parent=11 // pred_check_branch
          %886 = sbr.rel (%p884) target = $region96
        $region95: #{two_stage_forward.1} parent=11 // pred_region
          _
        $region96: #{two_stage_forward.1} parent=11 // pred_fallthru
          _
        // Predicated region
        $region97: #{two_stage_forward.1} parent=11 // pred_check
          %p887 = pneg %p538
        $region98: #{two_stage_forward.1} parent=11 // pred_check_branch
          %889 = sbr.rel (%p887) target = $region100
        $region99: #{two_stage_forward.1} parent=11 // pred_region
          _
        $region100: #{two_stage_forward.1} parent=11 // pred_fallthru
          _
        // Predicated region
        $region101: #{two_stage_forward.1} parent=11 // pred_check
          %p890 = pneg %p559
        $region102: #{two_stage_forward.1} parent=11 // pred_check_branch
          %892 = sbr.rel (%p890) target = $region104
        $region103: #{two_stage_forward.1} parent=11 // pred_region
          %s894 = ssub.s32 4096, 4096
          %895 = vsyncadd [#allocation28], %s894
          %s896 = sshll.u32 [#allocation29], 4
          %s897 = int_to_ptr.vmem [resolvable:$true] %s896
          %902 = dma.hbm_to_vmem [thread:$0]  %s23, 4096, %s897, [#allocation28], 256, 256, 16
        $region104: #{two_stage_forward.1} parent=11 // pred_fallthru
          _
        // Predicated region
        $region105: #{two_stage_forward.1} parent=11 // pred_check
          %p903 = pneg %p580
        $region106: #{two_stage_forward.1} parent=11 // pred_check_branch
          %905 = sbr.rel (%p903) target = $region108
        $region107: #{two_stage_forward.1} parent=11 // pred_region
          %s907 = ssub.s32 32, 32
          %908 = vsyncadd [#allocation31], %s907
          %s910 = sshll.u32 [#allocation30], 4
          %s911 = int_to_ptr.vmem [resolvable:$true] %s910
          %913 = dma.hbm_to_vmem [thread:$0]  %s24, 32, %s911, [#allocation31]
        $region108: #{two_stage_forward.1} parent=11 // pred_fallthru
          _
        // Predicated region
        $region109: #{two_stage_forward.1} parent=11 // pred_check
          %p914 = pneg %p601
        $region110: #{two_stage_forward.1} parent=11 // pred_check_branch
          %916 = sbr.rel (%p914) target = $region112
        $region111: #{two_stage_forward.1} parent=11 // pred_region
          %s918 = ssub.s32 32, 32
          %919 = vsyncadd [#allocation31], %s918
          %s921 = sshll.u32 [#allocation32], 4
          %s922 = int_to_ptr.vmem [resolvable:$true] %s921
          %924 = dma.hbm_to_vmem [thread:$0]  %s25, 32, %s922, [#allocation31]
        $region112: #{two_stage_forward.1} parent=11 // pred_fallthru
          _
        // Predicated region
        $region113: #{two_stage_forward.1} parent=11 // pred_check
          %p925 = pneg %p622
        $region114: #{two_stage_forward.1} parent=11 // pred_check_branch
          %927 = sbr.rel (%p925) target = $region116
        $region115: #{two_stage_forward.1} parent=11 // pred_region
          _
        $region116: #{two_stage_forward.1} parent=11 // pred_fallthru
          _
        // Predicated region
        $region117: #{two_stage_forward.1} parent=11 // pred_check
          %p928 = pneg %p643
        $region118: #{two_stage_forward.1} parent=11 // pred_check_branch
          %930 = sbr.rel (%p928) target = $region120
        $region119: #{two_stage_forward.1} parent=11 // pred_region
          %s932 = ssub.s32 16, 16
          %933 = vsyncadd [#allocation34], %s932
          %s935 = sshll.u32 [#allocation33], 4
          %s936 = int_to_ptr.vmem [resolvable:$true] %s935
          %938 = dma.hbm_to_vmem [thread:$0]  %s27, 16, %s936, [#allocation34]
        $region120: #{two_stage_forward.1} parent=11 // pred_fallthru
          _
      $region12: #{two_stage_forward.1} parent=5 // pred_fallthru
        _
      %p939 = scmp.lt.s32.totalorder %s50, 2
      // Predicated region
      $region121: #{two_stage_forward.1} parent=5 // pred_check
        %p940 = pneg %p939
      $region122: #{two_stage_forward.1} parent=5 // pred_check_branch
        %942 = sbr.rel (%p940) target = $region124
      $region123: #{two_stage_forward.1} parent=5 // pred_region
        // Predicated region
        $region125: #{two_stage_forward.1} parent=123 // pred_check
          %p943 = pneg %p70
        $region126: #{two_stage_forward.1} parent=123 // pred_check_branch
          %945 = sbr.rel (%p943) target = $region128
        $region127: #{two_stage_forward.1} parent=123 // pred_region
          %p946 = scmp.lt.s32.totalorder %s50, 1
          %s947 = scalar_select %p946, %s50, 1
          %s948 = smul.addr %s947, 2
          %s949 = smul.addr %s948, 8
          %s950 = scalar_lea.vmem %s0, %s949
        $region128: #{two_stage_forward.1} parent=123 // pred_fallthru
          _
      $region124: #{two_stage_forward.1} parent=5 // pred_fallthru
        _
      %p951 = scmp.le.s32.totalorder 1, %s50
      %p952 = scmp.lt.s32.totalorder %s50, 3
      %p953 = pnand %p951, %p952
      %p954 = pneg %p953
      // Predicated region
      $region129: #{two_stage_forward.1} parent=5 // pred_check
        _
      $region130: #{two_stage_forward.1} parent=5 // pred_check_branch
        %956 = sbr.rel (%p953) target = $region132
      $region131: #{two_stage_forward.1} parent=5 // pred_region
        %s957 = ssub.s32 %s50, 1
        // Predicated region
        $region133: #{two_stage_forward.1} parent=131 // pred_check
          %p958 = pneg %p97
        $region134: #{two_stage_forward.1} parent=131 // pred_check_branch
          %960 = sbr.rel (%p958) target = $region136
        $region135: #{two_stage_forward.1} parent=131 // pred_region
          %961 = dma.done [#allocation4], 192
        $region136: #{two_stage_forward.1} parent=131 // pred_fallthru
          _
        // Predicated region
        $region137: #{two_stage_forward.1} parent=131 // pred_check
          %p962 = pneg %p118
        $region138: #{two_stage_forward.1} parent=131 // pred_check_branch
          %964 = sbr.rel (%p962) target = $region140
        $region139: #{two_stage_forward.1} parent=131 // pred_region
          %965 = dma.done [#allocation7], 6144
        $region140: #{two_stage_forward.1} parent=131 // pred_fallthru
          _
        // Predicated region
        $region141: #{two_stage_forward.1} parent=131 // pred_check
          %p966 = pneg %p139
        $region142: #{two_stage_forward.1} parent=131 // pred_check_branch
          %968 = sbr.rel (%p966) target = $region144
        $region143: #{two_stage_forward.1} parent=131 // pred_region
          %969 = dma.done [#allocation7], 32
        $region144: #{two_stage_forward.1} parent=131 // pred_fallthru
          _
        // Predicated region
        $region145: #{two_stage_forward.1} parent=131 // pred_check
          %p970 = pneg %p160
        $region146: #{two_stage_forward.1} parent=131 // pred_check_branch
          %972 = sbr.rel (%p970) target = $region148
        $region147: #{two_stage_forward.1} parent=131 // pred_region
          %973 = dma.done [#allocation10], 32
        $region148: #{two_stage_forward.1} parent=131 // pred_fallthru
          _
        // Predicated region
        $region149: #{two_stage_forward.1} parent=131 // pred_check
          %p974 = pneg %p181
        $region150: #{two_stage_forward.1} parent=131 // pred_check_branch
          %976 = sbr.rel (%p974) target = $region152
        $region151: #{two_stage_forward.1} parent=131 // pred_region
          %977 = dma.done [#allocation10], 96
        $region152: #{two_stage_forward.1} parent=131 // pred_fallthru
          _
        // Predicated region
        $region153: #{two_stage_forward.1} parent=131 // pred_check
          %p978 = pneg %p223
        $region154: #{two_stage_forward.1} parent=131 // pred_check_branch
          %980 = sbr.rel (%p978) target = $region156
        $region155: #{two_stage_forward.1} parent=131 // pred_region
          %981 = dma.done [#allocation13], 32
        $region156: #{two_stage_forward.1} parent=131 // pred_fallthru
          _
        // Predicated region
        $region157: #{two_stage_forward.1} parent=131 // pred_check
          %p982 = pneg %p244
        $region158: #{two_stage_forward.1} parent=131 // pred_check_branch
          %984 = sbr.rel (%p982) target = $region160
        $region159: #{two_stage_forward.1} parent=131 // pred_region
          %985 = dma.done [#allocation13], 32
        $region160: #{two_stage_forward.1} parent=131 // pred_fallthru
          _
        // Predicated region
        $region161: #{two_stage_forward.1} parent=131 // pred_check
          %p986 = pneg %p265
        $region162: #{two_stage_forward.1} parent=131 // pred_check_branch
          %988 = sbr.rel (%p986) target = $region164
        $region163: #{two_stage_forward.1} parent=131 // pred_region
          %989 = dma.done [#allocation16], 48
        $region164: #{two_stage_forward.1} parent=131 // pred_fallthru
          _
        // Predicated region
        $region165: #{two_stage_forward.1} parent=131 // pred_check
          %p990 = pneg %p307
        $region166: #{two_stage_forward.1} parent=131 // pred_check_branch
          %992 = sbr.rel (%p990) target = $region168
        $region167: #{two_stage_forward.1} parent=131 // pred_region
          %993 = dma.done [#allocation16], 32
        $region168: #{two_stage_forward.1} parent=131 // pred_fallthru
          _
        // Predicated region
        $region169: #{two_stage_forward.1} parent=131 // pred_check
          %p994 = pneg %p328
        $region170: #{two_stage_forward.1} parent=131 // pred_check_branch
          %996 = sbr.rel (%p994) target = $region172
        $region171: #{two_stage_forward.1} parent=131 // pred_region
          %997 = dma.done [#allocation19], 32
        $region172: #{two_stage_forward.1} parent=131 // pred_fallthru
          _
        // Predicated region
        $region173: #{two_stage_forward.1} parent=131 // pred_check
          %p998 = pneg %p370
        $region174: #{two_stage_forward.1} parent=131 // pred_check_branch
          %1000 = sbr.rel (%p998) target = $region176
        $region175: #{two_stage_forward.1} parent=131 // pred_region
          %1001 = dma.done [#allocation19], 36864
        $region176: #{two_stage_forward.1} parent=131 // pred_fallthru
          _
        // Predicated region
        $region177: #{two_stage_forward.1} parent=131 // pred_check
          %p1002 = pneg %p391
        $region178: #{two_stage_forward.1} parent=131 // pred_check_branch
          %1004 = sbr.rel (%p1002) target = $region180
        $region179: #{two_stage_forward.1} parent=131 // pred_region
          %1005 = dma.done [#allocation22], 96
        $region180: #{two_stage_forward.1} parent=131 // pred_fallthru
          _
        // Predicated region
        $region181: #{two_stage_forward.1} parent=131 // pred_check
          %p1006 = pneg %p412
        $region182: #{two_stage_forward.1} parent=131 // pred_check_branch
          %1008 = sbr.rel (%p1006) target = $region184
        $region183: #{two_stage_forward.1} parent=131 // pred_region
          %1009 = dma.done [#allocation22], 96
        $region184: #{two_stage_forward.1} parent=131 // pred_fallthru
          _
        // Predicated region
        $region185: #{two_stage_forward.1} parent=131 // pred_check
          %p1010 = pneg %p433
        $region186: #{two_stage_forward.1} parent=131 // pred_check_branch
          %1012 = sbr.rel (%p1010) target = $region188
        $region187: #{two_stage_forward.1} parent=131 // pred_region
          %1013 = dma.done [#allocation25], 12288
        $region188: #{two_stage_forward.1} parent=131 // pred_fallthru
          _
        // Predicated region
        $region189: #{two_stage_forward.1} parent=131 // pred_check
          %p1014 = pneg %p454
        $region190: #{two_stage_forward.1} parent=131 // pred_check_branch
          %1016 = sbr.rel (%p1014) target = $region192
        $region191: #{two_stage_forward.1} parent=131 // pred_region
          %1017 = dma.done [#allocation25], 64
        $region192: #{two_stage_forward.1} parent=131 // pred_fallthru
          _
        // Predicated region
        $region193: #{two_stage_forward.1} parent=131 // pred_check
          %p1018 = pneg %p496
        $region194: #{two_stage_forward.1} parent=131 // pred_check_branch
          %1020 = sbr.rel (%p1018) target = $region196
        $region195: #{two_stage_forward.1} parent=131 // pred_region
          %1021 = dma.done [#allocation28], 16
        $region196: #{two_stage_forward.1} parent=131 // pred_fallthru
          _
        // Predicated region
        $region197: #{two_stage_forward.1} parent=131 // pred_check
          %p1022 = pneg %p559
        $region198: #{two_stage_forward.1} parent=131 // pred_check_branch
          %1024 = sbr.rel (%p1022) target = $region200
        $region199: #{two_stage_forward.1} parent=131 // pred_region
          %1025 = dma.done [#allocation28], 4096
        $region200: #{two_stage_forward.1} parent=131 // pred_fallthru
          _
        // Predicated region
        $region201: #{two_stage_forward.1} parent=131 // pred_check
          %p1026 = pneg %p580
        $region202: #{two_stage_forward.1} parent=131 // pred_check_branch
          %1028 = sbr.rel (%p1026) target = $region204
        $region203: #{two_stage_forward.1} parent=131 // pred_region
          %1029 = dma.done [#allocation31], 32
        $region204: #{two_stage_forward.1} parent=131 // pred_fallthru
          _
        // Predicated region
        $region205: #{two_stage_forward.1} parent=131 // pred_check
          %p1030 = pneg %p601
        $region206: #{two_stage_forward.1} parent=131 // pred_check_branch
          %1032 = sbr.rel (%p1030) target = $region208
        $region207: #{two_stage_forward.1} parent=131 // pred_region
          %1033 = dma.done [#allocation31], 32
        $region208: #{two_stage_forward.1} parent=131 // pred_fallthru
          _
        // Predicated region
        $region209: #{two_stage_forward.1} parent=131 // pred_check
          %p1034 = pneg %p643
        $region210: #{two_stage_forward.1} parent=131 // pred_check_branch
          %1036 = sbr.rel (%p1034) target = $region212
        $region211: #{two_stage_forward.1} parent=131 // pred_region
          %1037 = dma.done [#allocation34], 16
        $region212: #{two_stage_forward.1} parent=131 // pred_fallthru
          _
        %p1038 = scmp.lt.s32.totalorder %s55, 1
        %s1039 = scalar_select %p1038, %s55, 1
        %s1040 = smul.addr %s1039, 2
        %s1041 = smul.addr %s1040, 8
        %s1042 = scalar_lea.vmem %s0, %s1041
        %p1043 = pneg %p76
        %p1044 = pneg %p73
        %p1045 = pneg %p97
        %p1046 = pneg %p94
        %p1047 = pneg %p118
        %p1048 = pneg %p115
        %p1049 = pneg %p139
        %p1050 = pneg %p136
        %p1051 = pneg %p160
        %p1052 = pneg %p157
        %p1053 = pneg %p181
        %p1054 = pneg %p178
        %p1055 = pneg %p202
        %p1056 = pneg %p199
        %p1057 = pneg %p223
        %p1058 = pneg %p220
        %p1059 = pneg %p244
        %p1060 = pneg %p241
        %p1061 = pneg %p265
        %p1062 = pneg %p262
        %p1063 = pneg %p286
        %p1064 = pneg %p283
        %p1065 = pneg %p307
        %p1066 = pneg %p304
        %p1067 = pneg %p328
        %p1068 = pneg %p325
        %p1069 = pneg %p349
        %p1070 = pneg %p346
        %p1071 = pneg %p370
        %p1072 = pneg %p367
        %p1073 = pneg %p391
        %p1074 = pneg %p388
        %p1075 = pneg %p412
        %p1076 = pneg %p409
        %p1077 = pneg %p433
        %p1078 = pneg %p430
        %p1079 = pneg %p454
        %p1080 = pneg %p451
        %p1081 = pneg %p475
        %p1082 = pneg %p472
        %p1083 = pneg %p496
        %p1084 = pneg %p493
        %p1085 = pneg %p517
        %p1086 = pneg %p514
        %p1087 = pneg %p538
        %p1088 = pneg %p535
        %p1089 = pneg %p559
        %p1090 = pneg %p556
        %p1091 = pneg %p580
        %p1092 = pneg %p577
        %p1093 = pneg %p601
        %p1094 = pneg %p598
        %p1095 = pneg %p622
        %p1096 = pneg %p619
        %p1097 = pneg %p643
        %p1098 = pneg %p640
        %p1099 = pneg %p669
        %p1100 = pneg %p666
        %s1101 = sand.u32 %s656, 1
        %s1102 = scalar_lea.sflag [#allocation5], %s1101
        %s1103 = sand.u32 %s656, 1
        %s1104 = scalar_lea.vmem [#allocation35], %s1103
        %p1105 = scmp.lt.s32.totalorder %s55, 1
        %s1106 = scalar_select %p1105, %s55, 1
        %s1107 = smul.addr %s1106, 2
        %s1108 = smul.addr %s1107, 8
        %s1109 = scalar_lea.vmem %s0, %s1108
        %v1111 = vld [vmem:[%s1109] sm:$0xff]
        %v1112 = vld [vmem:[%s1109 + $0x8] sm:$0xff]
        %v1113 = vpack.c.bf16 %v1112, %v1111
        %v1114 = vld [vmem:[#allocation3] sm:$0xf]
        %vm1115 = vcmask 130048
        %v1117 = vsel %vm1115, %v1114, 0
        %1119 = vmatprep.subr.bf16.mxu0 0
        %1120 = vmatpush1.bf16.msra.mxu0 %v1113
        %1121 = vmatprep.subr.bf16.mxu0 0
        %1122 = vmatpush1.bf16.msra.mxu0 0
        %1123 = vmatprep.subr.bf16.mxu0 0
        %1124 = vmatpush1.bf16.msra.mxu0 0
        %1125 = vmatprep.subr.bf16.mxu0 0
        %1126 = vmatpush1.bf16.msra.mxu0 0
        %1127 = vmatprep.subr.bf16.mxu0 0
        %1128 = vmatpush1.bf16.msra.mxu0 0
        %1129 = vmatprep.subr.bf16.mxu0 0
        %1130 = vmatpush1.bf16.msra.mxu0 0
        %1131 = vmatprep.subr.bf16.mxu0 0
        %1132 = vmatpush1.bf16.msra.mxu0 0
        %1133 = vmatprep.subr.bf16.mxu0 0
        %1134 = vmatpush1.bf16.msra.mxu0 0
        %1135 = vmatprep.subr.bf16.mxu0 0
        %1136 = vmatpush1.bf16.msra.mxu0 0
        %1137 = vmatprep.subr.bf16.mxu0 0
        %1138 = vmatpush1.bf16.msra.mxu0 0
        %1139 = vmatprep.subr.bf16.mxu0 0
        %1140 = vmatpush1.bf16.msra.mxu0 0
        %1141 = vmatprep.subr.bf16.mxu0 0
        %1142 = vmatpush1.bf16.msra.mxu0 0
        %1143 = vmatprep.subr.bf16.mxu0 0
        %1144 = vmatpush1.bf16.msra.mxu0 0
        %1145 = vmatprep.subr.bf16.mxu0 0
        %1146 = vmatpush1.bf16.msra.mxu0 0
        %1147 = vmatprep.subr.bf16.mxu0 0
        %1148 = vmatpush1.bf16.msra.mxu0 0
        %1149 = vmatprep.subr.bf16.mxu0 0
        %1150 = vmatpush1.bf16.msra.mxu0 0
        %1151 = vmatprep.mubr.bf16.mxu0 0
        %1152 = vmatmul.mubr.bf16.gmra.mrb[0].mxu0 %v1117
        %v1153 = vpop.f32.mrb[0].mxu0
        %v1154 = vadd.f32 0.0, %v1153
        %v1155 = vpop.f32.mrb[0].mxu0
        %v1156 = vpop.f32.mrb[0].mxu0
        %v1157 = vpop.f32.mrb[0].mxu0
        %1158 = vdwg.mxu0
        %v1159 = vpack.c.bf16 %v1154, %v1154
        %s1160 = scalar_lea.vmem [#allocation3], 4
        %v1161 = vld [vmem:[%s1160] sm:$0xf]
        %v1163 = vsel %vm1115, %v1161, 0
        %1165 = vmatprep.subr.bf16.mxu0 0
        %1166 = vmatpush1.bf16.msra.mxu0 %v1113
        %1167 = vmatprep.subr.bf16.mxu0 0
        %1168 = vmatpush1.bf16.msra.mxu0 0
        %1169 = vmatprep.subr.bf16.mxu0 0
        %1170 = vmatpush1.bf16.msra.mxu0 0
        %1171 = vmatprep.subr.bf16.mxu0 0
        %1172 = vmatpush1.bf16.msra.mxu0 0
        %1173 = vmatprep.subr.bf16.mxu0 0
        %1174 = vmatpush1.bf16.msra.mxu0 0
        %1175 = vmatprep.subr.bf16.mxu0 0
        %1176 = vmatpush1.bf16.msra.mxu0 0
        %1177 = vmatprep.subr.bf16.mxu0 0
        %1178 = vmatpush1.bf16.msra.mxu0 0
        %1179 = vmatprep.subr.bf16.mxu0 0
        %1180 = vmatpush1.bf16.msra.mxu0 0
        %1181 = vmatprep.subr.bf16.mxu0 0
        %1182 = vmatpush1.bf16.msra.mxu0 0
        %1183 = vmatprep.subr.bf16.mxu0 0
        %1184 = vmatpush1.bf16.msra.mxu0 0
        %1185 = vmatprep.subr.bf16.mxu0 0
        %1186 = vmatpush1.bf16.msra.mxu0 0
        %1187 = vmatprep.subr.bf16.mxu0 0
        %1188 = vmatpush1.bf16.msra.mxu0 0
        %1189 = vmatprep.subr.bf16.mxu0 0
        %1190 = vmatpush1.bf16.msra.mxu0 0
        %1191 = vmatprep.subr.bf16.mxu0 0
        %1192 = vmatpush1.bf16.msra.mxu0 0
        %1193 = vmatprep.subr.bf16.mxu0 0
        %1194 = vmatpush1.bf16.msra.mxu0 0
        %1195 = vmatprep.subr.bf16.mxu0 0
        %1196 = vmatpush1.bf16.msra.mxu0 0
        %1197 = vmatprep.mubr.bf16.mxu0 0
        %1198 = vmatmul.mubr.bf16.gmra.mrb[0].mxu0 %v1163
        %v1199 = vpop.f32.mrb[0].mxu0
        %v1200 = vadd.f32 0.0, %v1199
        %v1201 = vpop.f32.mrb[0].mxu0
        %v1202 = vpop.f32.mrb[0].mxu0
        %v1203 = vpop.f32.mrb[0].mxu0
        %1204 = vdwg.mxu0
        %v1205 = vpack.c.bf16 %v1200, %v1200
        %s1206 = scalar_lea.vmem [#allocation3], 8
        %v1207 = vld [vmem:[%s1206] sm:$0xf]
        %v1209 = vsel %vm1115, %v1207, 0
        %1211 = vmatprep.subr.bf16.mxu0 0
        %1212 = vmatpush1.bf16.msra.mxu0 %v1113
        %1213 = vmatprep.subr.bf16.mxu0 0
        %1214 = vmatpush1.bf16.msra.mxu0 0
        %1215 = vmatprep.subr.bf16.mxu0 0
        %1216 = vmatpush1.bf16.msra.mxu0 0
        %1217 = vmatprep.subr.bf16.mxu0 0
        %1218 = vmatpush1.bf16.msra.mxu0 0
        %1219 = vmatprep.subr.bf16.mxu0 0
        %1220 = vmatpush1.bf16.msra.mxu0 0
        %1221 = vmatprep.subr.bf16.mxu0 0
        %1222 = vmatpush1.bf16.msra.mxu0 0
        %1223 = vmatprep.subr.bf16.mxu0 0
        %1224 = vmatpush1.bf16.msra.mxu0 0
        %1225 = vmatprep.subr.bf16.mxu0 0
        %1226 = vmatpush1.bf16.msra.mxu0 0
        %1227 = vmatprep.subr.bf16.mxu0 0
        %1228 = vmatpush1.bf16.msra.mxu0 0
        %1229 = vmatprep.subr.bf16.mxu0 0
        %1230 = vmatpush1.bf16.msra.mxu0 0
        %1231 = vmatprep.subr.bf16.mxu0 0
        %1232 = vmatpush1.bf16.msra.mxu0 0
        %1233 = vmatprep.subr.bf16.mxu0 0
        %1234 = vmatpush1.bf16.msra.mxu0 0
        %1235 = vmatprep.subr.bf16.mxu0 0
        %1236 = vmatpush1.bf16.msra.mxu0 0
        %1237 = vmatprep.subr.bf16.mxu0 0
        %1238 = vmatpush1.bf16.msra.mxu0 0
        %1239 = vmatprep.subr.bf16.mxu0 0
        %1240 = vmatpush1.bf16.msra.mxu0 0
        %1241 = vmatprep.subr.bf16.mxu0 0
        %1242 = vmatpush1.bf16.msra.mxu0 0
        %1243 = vmatprep.mubr.bf16.mxu0 0
        %1244 = vmatmul.mubr.bf16.gmra.mrb[0].mxu0 %v1209
        %v1245 = vpop.f32.mrb[0].mxu0
        %v1246 = vadd.f32 0.0, %v1245
        %v1247 = vpop.f32.mrb[0].mxu0
        %v1248 = vpop.f32.mrb[0].mxu0
        %v1249 = vpop.f32.mrb[0].mxu0
        %1250 = vdwg.mxu0
        %v1251 = vpack.c.bf16 %v1246, %v1246
        %v1252 = vld [vmem:[#allocation6] sm:$0xff]
        %v1253 = vld [vmem:[#allocation6 + $0x8] sm:$0xff]
        %v1254 = vld [vmem:[#allocation6 + $0x10] sm:$0xff]
        %v1255 = vld [vmem:[#allocation6 + $0x18] sm:$0xff]
        %v1256 = vld [vmem:[#allocation6 + $0x20] sm:$0xff]
        %v1257 = vld [vmem:[#allocation6 + $0x28] sm:$0xff]
        %v1258 = vld [vmem:[#allocation6 + $0x30] sm:$0xff]
        %v1259 = vld [vmem:[#allocation6 + $0x38] sm:$0xff]
        %v1260 = vld [vmem:[#allocation6 + $0x40] sm:$0xff]
        %v1261 = vld [vmem:[#allocation6 + $0x48] sm:$0xff]
        %v1262 = vld [vmem:[#allocation6 + $0x50] sm:$0xff]
        %v1263 = vld [vmem:[#allocation6 + $0x58] sm:$0xff]
        %v1264 = vld [vmem:[#allocation6 + $0x60] sm:$0xff]
        %v1265 = vld [vmem:[#allocation6 + $0x68] sm:$0xff]
        %v1266 = vld [vmem:[#allocation6 + $0x70] sm:$0xff]
        %v1267 = vld [vmem:[#allocation6 + $0x78] sm:$0xff]
        %v1268 = vld [vmem:[#allocation6 + $0x80] sm:$0xff]
        %v1269 = vld [vmem:[#allocation6 + $0x88] sm:$0xff]
        %v1270 = vld [vmem:[#allocation6 + $0x90] sm:$0xff]
        %v1271 = vld [vmem:[#allocation6 + $0x98] sm:$0xff]
        %v1272 = vld [vmem:[#allocation6 + $0xa0] sm:$0xff]
        %v1273 = vld [vmem:[#allocation6 + $0xa8] sm:$0xff]
        %v1274 = vld [vmem:[#allocation6 + $0xb0] sm:$0xff]
        %v1275 = vld [vmem:[#allocation6 + $0xb8] sm:$0xff]
        %v1276 = vld [vmem:[#allocation6 + $0xc0] sm:$0xff]
        %v1277 = vld [vmem:[#allocation6 + $0xc8] sm:$0xff]
        %v1278 = vld [vmem:[#allocation6 + $0xd0] sm:$0xff]
        %v1279 = vld [vmem:[#allocation6 + $0xd8] sm:$0xff]
        %v1280 = vld [vmem:[#allocation6 + $0xe0] sm:$0xff]
        %v1281 = vld [vmem:[#allocation6 + $0xe8] sm:$0xff]
        %v1282 = vld [vmem:[#allocation6 + $0xf0] sm:$0xff]
        %v1283 = vld [vmem:[#allocation6 + $0xf8] sm:$0xff]
        %v1284 = vld [vmem:[#allocation6 + $0x100] sm:$0xff]
        %v1285 = vld [vmem:[#allocation6 + $0x108] sm:$0xff]
        %v1286 = vld [vmem:[#allocation6 + $0x110] sm:$0xff]
        %v1287 = vld [vmem:[#allocation6 + $0x118] sm:$0xff]
        %v1288 = vld [vmem:[#allocation6 + $0x120] sm:$0xff]
        %v1289 = vld [vmem:[#allocation6 + $0x128] sm:$0xff]
        %v1290 = vld [vmem:[#allocation6 + $0x130] sm:$0xff]
        %v1291 = vld [vmem:[#allocation6 + $0x138] sm:$0xff]
        %v1292 = vld [vmem:[#allocation6 + $0x140] sm:$0xff]
        %v1293 = vld [vmem:[#allocation6 + $0x148] sm:$0xff]
        %v1294 = vld [vmem:[#allocation6 + $0x150] sm:$0xff]
        %v1295 = vld [vmem:[#allocation6 + $0x158] sm:$0xff]
        %v1296 = vld [vmem:[#allocation6 + $0x160] sm:$0xff]
        %v1297 = vld [vmem:[#allocation6 + $0x168] sm:$0xff]
        %v1298 = vld [vmem:[#allocation6 + $0x170] sm:$0xff]
        %v1299 = vld [vmem:[#allocation6 + $0x178] sm:$0xff]
        %v1348 = vunpack.c.l.b16 %v1252
        %v1349 = vunpack.c.h.b16 %v1252
        %v1350 = vunpack.c.l.b16 %v1253
        %v1351 = vunpack.c.h.b16 %v1253
        %v1352 = vunpack.c.l.b16 %v1254
        %v1353 = vunpack.c.h.b16 %v1254
        %v1354 = vunpack.c.l.b16 %v1255
        %v1355 = vunpack.c.h.b16 %v1255
        %v1356 = vunpack.c.l.b16 %v1256
        %v1357 = vunpack.c.h.b16 %v1256
        %v1358 = vunpack.c.l.b16 %v1257
        %v1359 = vunpack.c.h.b16 %v1257
        %v1360 = vunpack.c.l.b16 %v1258
        %v1361 = vunpack.c.h.b16 %v1258
        %v1362 = vunpack.c.l.b16 %v1259
        %v1363 = vunpack.c.h.b16 %v1259
        %v1364 = vunpack.c.l.b16 %v1260
        %v1365 = vunpack.c.h.b16 %v1260
        %v1366 = vunpack.c.l.b16 %v1261
        %v1367 = vunpack.c.h.b16 %v1261
        %v1368 = vunpack.c.l.b16 %v1262
        %v1369 = vunpack.c.h.b16 %v1262
        %v1370 = vunpack.c.l.b16 %v1263
        %v1371 = vunpack.c.h.b16 %v1263
        %v1372 = vunpack.c.l.b16 %v1264
        %v1373 = vunpack.c.h.b16 %v1264
        %v1374 = vunpack.c.l.b16 %v1265
        %v1375 = vunpack.c.h.b16 %v1265
        %v1376 = vunpack.c.l.b16 %v1266
        %v1377 = vunpack.c.h.b16 %v1266
        %v1378 = vunpack.c.l.b16 %v1267
        %v1379 = vunpack.c.h.b16 %v1267
        %v1380 = vunpack.c.l.b16 %v1268
        %v1381 = vunpack.c.h.b16 %v1268
        %v1382 = vunpack.c.l.b16 %v1269
        %v1383 = vunpack.c.h.b16 %v1269
        %v1384 = vunpack.c.l.b16 %v1270
        %v1385 = vunpack.c.h.b16 %v1270
        %v1386 = vunpack.c.l.b16 %v1271
        %v1387 = vunpack.c.h.b16 %v1271
        %v1388 = vunpack.c.l.b16 %v1272
        %v1389 = vunpack.c.h.b16 %v1272
        %v1390 = vunpack.c.l.b16 %v1273
        %v1391 = vunpack.c.h.b16 %v1273
        %v1392 = vunpack.c.l.b16 %v1274
        %v1393 = vunpack.c.h.b16 %v1274
        %v1394 = vunpack.c.l.b16 %v1275
        %v1395 = vunpack.c.h.b16 %v1275
        %v1396 = vunpack.c.l.b16 %v1276
        %v1397 = vunpack.c.h.b16 %v1276
        %v1398 = vunpack.c.l.b16 %v1277
        %v1399 = vunpack.c.h.b16 %v1277
        %v1400 = vunpack.c.l.b16 %v1278
        %v1401 = vunpack.c.h.b16 %v1278
        %v1402 = vunpack.c.l.b16 %v1279
        %v1403 = vunpack.c.h.b16 %v1279
        %v1404 = vunpack.c.l.b16 %v1280
        %v1405 = vunpack.c.h.b16 %v1280
        %v1406 = vunpack.c.l.b16 %v1281
        %v1407 = vunpack.c.h.b16 %v1281
        %v1408 = vunpack.c.l.b16 %v1282
        %v1409 = vunpack.c.h.b16 %v1282
        %v1410 = vunpack.c.l.b16 %v1283
        %v1411 = vunpack.c.h.b16 %v1283
        %v1412 = vunpack.c.l.b16 %v1284
        %v1413 = vunpack.c.h.b16 %v1284
        %v1414 = vunpack.c.l.b16 %v1285
        %v1415 = vunpack.c.h.b16 %v1285
        %v1416 = vunpack.c.l.b16 %v1286
        %v1417 = vunpack.c.h.b16 %v1286
        %v1418 = vunpack.c.l.b16 %v1287
        %v1419 = vunpack.c.h.b16 %v1287
        %v1420 = vunpack.c.l.b16 %v1288
        %v1421 = vunpack.c.h.b16 %v1288
        %v1422 = vunpack.c.l.b16 %v1289
        %v1423 = vunpack.c.h.b16 %v1289
        %v1424 = vunpack.c.l.b16 %v1290
        %v1425 = vunpack.c.h.b16 %v1290
        %v1426 = vunpack.c.l.b16 %v1291
        %v1427 = vunpack.c.h.b16 %v1291
        %v1428 = vunpack.c.l.b16 %v1292
        %v1429 = vunpack.c.h.b16 %v1292
        %v1430 = vunpack.c.l.b16 %v1293
        %v1431 = vunpack.c.h.b16 %v1293
        %v1432 = vunpack.c.l.b16 %v1294
        %v1433 = vunpack.c.h.b16 %v1294
        %v1434 = vunpack.c.l.b16 %v1295
        %v1435 = vunpack.c.h.b16 %v1295
        %v1436 = vunpack.c.l.b16 %v1296
        %v1437 = vunpack.c.h.b16 %v1296
        %v1438 = vunpack.c.l.b16 %v1297
        %v1439 = vunpack.c.h.b16 %v1297
        %v1440 = vunpack.c.l.b16 %v1298
        %v1441 = vunpack.c.h.b16 %v1298
        %v1442 = vunpack.c.l.b16 %v1299
        %v1443 = vunpack.c.h.b16 %v1299
        %v1444 = vpack.c.b16 %v1350, %v1348
        %v1445 = vpack.c.b16 %v1351, %v1349
        %v1446 = vpack.c.b16 %v1354, %v1352
        %v1447 = vpack.c.b16 %v1355, %v1353
        %v1448 = vpack.c.b16 %v1358, %v1356
        %v1449 = vpack.c.b16 %v1359, %v1357
        %v1450 = vpack.c.b16 %v1362, %v1360
        %v1451 = vpack.c.b16 %v1363, %v1361
        %v1452 = vpack.c.b16 %v1366, %v1364
        %v1453 = vpack.c.b16 %v1367, %v1365
        %v1454 = vpack.c.b16 %v1370, %v1368
        %v1455 = vpack.c.b16 %v1371, %v1369
        %v1456 = vpack.c.b16 %v1374, %v1372
        %v1457 = vpack.c.b16 %v1375, %v1373
        %v1458 = vpack.c.b16 %v1378, %v1376
        %v1459 = vpack.c.b16 %v1379, %v1377
        %v1460 = vpack.c.b16 %v1382, %v1380
        %v1461 = vpack.c.b16 %v1383, %v1381
        %v1462 = vpack.c.b16 %v1386, %v1384
        %v1463 = vpack.c.b16 %v1387, %v1385
        %v1464 = vpack.c.b16 %v1390, %v1388
        %v1465 = vpack.c.b16 %v1391, %v1389
        %v1466 = vpack.c.b16 %v1394, %v1392
        %v1467 = vpack.c.b16 %v1395, %v1393
        %v1468 = vpack.c.b16 %v1398, %v1396
        %v1469 = vpack.c.b16 %v1399, %v1397
        %v1470 = vpack.c.b16 %v1402, %v1400
        %v1471 = vpack.c.b16 %v1403, %v1401
        %v1472 = vpack.c.b16 %v1406, %v1404
        %v1473 = vpack.c.b16 %v1407, %v1405
        %v1474 = vpack.c.b16 %v1410, %v1408
        %v1475 = vpack.c.b16 %v1411, %v1409
        %v1476 = vpack.c.b16 %v1414, %v1412
        %v1477 = vpack.c.b16 %v1415, %v1413
        %v1478 = vpack.c.b16 %v1418, %v1416
        %v1479 = vpack.c.b16 %v1419, %v1417
        %v1480 = vpack.c.b16 %v1422, %v1420
        %v1481 = vpack.c.b16 %v1423, %v1421
        %v1482 = vpack.c.b16 %v1426, %v1424
        %v1483 = vpack.c.b16 %v1427, %v1425
        %v1484 = vpack.c.b16 %v1430, %v1428
        %v1485 = vpack.c.b16 %v1431, %v1429
        %v1486 = vpack.c.b16 %v1434, %v1432
        %v1487 = vpack.c.b16 %v1435, %v1433
        %v1488 = vpack.c.b16 %v1438, %v1436
        %v1489 = vpack.c.b16 %v1439, %v1437
        %v1490 = vpack.c.b16 %v1442, %v1440
        %v1491 = vpack.c.b16 %v1443, %v1441
        %1540 = vmatprep.subr.bf16.mxu0 %v1445
        %1541 = vmatpush1.bf16.msra.mxu0 %v1444
        %1542 = vmatprep.subr.bf16.mxu0 %v1447
        %1543 = vmatpush1.bf16.msra.mxu0 %v1446
        %1544 = vmatprep.subr.bf16.mxu0 %v1449
        %1545 = vmatpush1.bf16.msra.mxu0 %v1448
        %1546 = vmatprep.subr.bf16.mxu0 %v1451
        %1547 = vmatpush1.bf16.msra.mxu0 %v1450
        %1548 = vmatprep.subr.bf16.mxu0 %v1453
        %1549 = vmatpush1.bf16.msra.mxu0 %v1452
        %1550 = vmatprep.subr.bf16.mxu0 %v1455
        %1551 = vmatpush1.bf16.msra.mxu0 %v1454
        %1552 = vmatprep.subr.bf16.mxu0 %v1457
        %1553 = vmatpush1.bf16.msra.mxu0 %v1456
        %1554 = vmatprep.subr.bf16.mxu0 %v1459
        %1555 = vmatpush1.bf16.msra.mxu0 %v1458
        %1556 = vmatprep.subr.bf16.mxu0 %v1461
        %1557 = vmatpush1.bf16.msra.mxu0 %v1460
        %1558 = vmatprep.subr.bf16.mxu0 %v1463
        %1559 = vmatpush1.bf16.msra.mxu0 %v1462
        %1560 = vmatprep.subr.bf16.mxu0 %v1465
        %1561 = vmatpush1.bf16.msra.mxu0 %v1464
        %1562 = vmatprep.subr.bf16.mxu0 %v1467
        %1563 = vmatpush1.bf16.msra.mxu0 %v1466
        %1564 = vmatprep.subr.bf16.mxu0 %v1469
        %1565 = vmatpush1.bf16.msra.mxu0 %v1468
        %1566 = vmatprep.subr.bf16.mxu0 %v1471
        %1567 = vmatpush1.bf16.msra.mxu0 %v1470
        %1568 = vmatprep.subr.bf16.mxu0 %v1473
        %1569 = vmatpush1.bf16.msra.mxu0 %v1472
        %1570 = vmatprep.subr.bf16.mxu0 %v1475
        %1571 = vmatpush1.bf16.msra.mxu0 %v1474
        %1572 = vmatprep.mubr.bf16.mxu0 %v1205
        %1573 = vmatmul.mubr.bf16.gmra.mrb[0].mxu0 %v1159
        %v1574 = vpop.f32.mrb[0].mxu0
        %v1575 = vadd.f32 0.0, %v1574
        %v1576 = vpop.f32.mrb[0].mxu0
        %v1577 = vadd.f32 0.0, %v1576
        %v1578 = vpop.f32.mrb[0].mxu0
        %v1579 = vpop.f32.mrb[0].mxu0
        %1580 = vdwg.mxu0
        %1581 = vmatprep.subr.bf16.mxu0 %v1477
        %1582 = vmatpush1.bf16.msra.mxu0 %v1476
        %1583 = vmatprep.subr.bf16.mxu0 %v1479
        %1584 = vmatpush1.bf16.msra.mxu0 %v1478
        %1585 = vmatprep.subr.bf16.mxu0 %v1481
        %1586 = vmatpush1.bf16.msra.mxu0 %v1480
        %1587 = vmatprep.subr.bf16.mxu0 %v1483
        %1588 = vmatpush1.bf16.msra.mxu0 %v1482
        %1589 = vmatprep.subr.bf16.mxu0 %v1485
        %1590 = vmatpush1.bf16.msra.mxu0 %v1484
        %1591 = vmatprep.subr.bf16.mxu0 %v1487
        %1592 = vmatpush1.bf16.msra.mxu0 %v1486
        %1593 = vmatprep.subr.bf16.mxu0 %v1489
        %1594 = vmatpush1.bf16.msra.mxu0 %v1488
        %1595 = vmatprep.subr.bf16.mxu0 %v1491
        %1596 = vmatpush1.bf16.msra.mxu0 %v1490
        %1597 = vmatprep.subr.bf16.mxu0 0
        %1598 = vmatpush1.bf16.msra.mxu0 0
        %1599 = vmatprep.subr.bf16.mxu0 0
        %1600 = vmatpush1.bf16.msra.mxu0 0
        %1601 = vmatprep.subr.bf16.mxu0 0
        %1602 = vmatpush1.bf16.msra.mxu0 0
        %1603 = vmatprep.subr.bf16.mxu0 0
        %1604 = vmatpush1.bf16.msra.mxu0 0
        %1605 = vmatprep.subr.bf16.mxu0 0
        %1606 = vmatpush1.bf16.msra.mxu0 0
        %1607 = vmatprep.subr.bf16.mxu0 0
        %1608 = vmatpush1.bf16.msra.mxu0 0
        %1609 = vmatprep.subr.bf16.mxu0 0
        %1610 = vmatpush1.bf16.msra.mxu0 0
        %1611 = vmatprep.subr.bf16.mxu0 0
        %1612 = vmatpush1.bf16.msra.mxu0 0
        %1613 = vmatprep.mubr.bf16.mxu0 0
        %1614 = vmatmul.mubr.bf16.gmra.mrb[0].mxu0 %v1251
        %v1615 = vpop.f32.mrb[0].mxu0
        %v1616 = vadd.f32 %v1575, %v1615
        %v1617 = vpop.f32.mrb[0].mxu0
        %v1618 = vadd.f32 %v1577, %v1617
        %v1619 = vpop.f32.mrb[0].mxu0
        %v1620 = vpop.f32.mrb[0].mxu0
        %1621 = vdwg.mxu0
        %v1622 = vld [vmem:[#allocation8] sm:$0x3]
        %v1624 = vlaneseq
        %v1625 = vshrl.u32 %v1624, 7
        %v1626 = vsub.s32 0, %v1625
        %v1627 = vrot.slane %v1622, %v1626
        %v1628 = vlaneseq
        %v1629 = vshrl.u32 %v1628, 7
        %v1630 = vsub.s32 1, %v1629
        %v1631 = vrot.slane %v1622, %v1630
        %v1634 = vmul.f32 %v1616, %v1627
        %v1635 = vmul.f32 %v1618, %v1631
        %v1636 = vld [vmem:[#allocation9] sm:$0x3]
        %v1638 = vlaneseq
        %v1639 = vshrl.u32 %v1638, 7
        %v1640 = vsub.s32 0, %v1639
        %v1641 = vrot.slane %v1636, %v1640
        %v1642 = vlaneseq
        %v1643 = vshrl.u32 %v1642, 7
        %v1644 = vsub.s32 1, %v1643
        %v1645 = vrot.slane %v1636, %v1644
        %v1648 = vadd.f32 %v1634, %v1641
        %v1649 = vadd.f32 %v1635, %v1645
        %v1650 = vmax.f32 %v1648, 0.0
        %v1651 = vmax.f32 %v1649, 0.0
        %v1652 = vpack.c.bf16 %v1650, %v1650
        %v1653 = vpack.c.bf16 %v1651, %v1651
        %v1654 = vld [vmem:[#allocation11] sm:$0x3]
        %vm1655 = vcmask 64512
        %v1657 = vsel %vm1655, %v1654, 0
        %vm1659 = vcmask 1043456
        %v1661 = vsel %vm1659, %v1652, 0
        %v1664 = vsel %vm1659, %v1653, 0
        %1666 = vmatprep.subr.bf16.mxu0 %v1664
        %1667 = vmatpush1.bf16.msra.mxu0 %v1661
        %1668 = vmatprep.subr.bf16.mxu0 0
        %1669 = vmatpush1.bf16.msra.mxu0 0
        %1670 = vmatprep.subr.bf16.mxu0 0
        %1671 = vmatpush1.bf16.msra.mxu0 0
        %1672 = vmatprep.subr.bf16.mxu0 0
        %1673 = vmatpush1.bf16.msra.mxu0 0
        %1674 = vmatprep.subr.bf16.mxu0 0
        %1675 = vmatpush1.bf16.msra.mxu0 0
        %1676 = vmatprep.subr.bf16.mxu0 0
        %1677 = vmatpush1.bf16.msra.mxu0 0
        %1678 = vmatprep.subr.bf16.mxu0 0
        %1679 = vmatpush1.bf16.msra.mxu0 0
        %1680 = vmatprep.subr.bf16.mxu0 0
        %1681 = vmatpush1.bf16.msra.mxu0 0
        %1682 = vmatprep.subr.bf16.mxu0 0
        %1683 = vmatpush1.bf16.msra.mxu0 0
        %1684 = vmatprep.subr.bf16.mxu0 0
        %1685 = vmatpush1.bf16.msra.mxu0 0
        %1686 = vmatprep.subr.bf16.mxu0 0
        %1687 = vmatpush1.bf16.msra.mxu0 0
        %1688 = vmatprep.subr.bf16.mxu0 0
        %1689 = vmatpush1.bf16.msra.mxu0 0
        %1690 = vmatprep.subr.bf16.mxu0 0
        %1691 = vmatpush1.bf16.msra.mxu0 0
        %1692 = vmatprep.subr.bf16.mxu0 0
        %1693 = vmatpush1.bf16.msra.mxu0 0
        %1694 = vmatprep.subr.bf16.mxu0 0
        %1695 = vmatpush1.bf16.msra.mxu0 0
        %1696 = vmatprep.subr.bf16.mxu0 0
        %1697 = vmatpush1.bf16.msra.mxu0 0
        %1698 = vmatprep.mubr.bf16.mxu0 0
        %1699 = vmatmul.mubr.bf16.gmra.mrb[0].mxu0 %v1657
        %v1700 = vpop.f32.mrb[0].mxu0
        %v1701 = vadd.f32 0.0, %v1700
        %v1702 = vpop.f32.mrb[0].mxu0
        %v1703 = vadd.f32 0.0, %v1702
        %v1704 = vpop.f32.mrb[0].mxu0
        %v1705 = vpop.f32.mrb[0].mxu0
        %1706 = vdwg.mxu0
        %v1707 = vpack.c.bf16 %v1701, %v1701
        %v1708 = vpack.c.bf16 %v1703, %v1703
        %s1709 = scalar_lea.vmem [#allocation11], 2
        %v1710 = vld [vmem:[%s1709] sm:$0x3]
        %v1712 = vsel %vm1655, %v1710, 0
        %1714 = vmatprep.subr.bf16.mxu0 %v1664
        %1715 = vmatpush1.bf16.msra.mxu0 %v1661
        %1716 = vmatprep.subr.bf16.mxu0 0
        %1717 = vmatpush1.bf16.msra.mxu0 0
        %1718 = vmatprep.subr.bf16.mxu0 0
        %1719 = vmatpush1.bf16.msra.mxu0 0
        %1720 = vmatprep.subr.bf16.mxu0 0
        %1721 = vmatpush1.bf16.msra.mxu0 0
        %1722 = vmatprep.subr.bf16.mxu0 0
        %1723 = vmatpush1.bf16.msra.mxu0 0
        %1724 = vmatprep.subr.bf16.mxu0 0
        %1725 = vmatpush1.bf16.msra.mxu0 0
        %1726 = vmatprep.subr.bf16.mxu0 0
        %1727 = vmatpush1.bf16.msra.mxu0 0
        %1728 = vmatprep.subr.bf16.mxu0 0
        %1729 = vmatpush1.bf16.msra.mxu0 0
        %1730 = vmatprep.subr.bf16.mxu0 0
        %1731 = vmatpush1.bf16.msra.mxu0 0
        %1732 = vmatprep.subr.bf16.mxu0 0
        %1733 = vmatpush1.bf16.msra.mxu0 0
        %1734 = vmatprep.subr.bf16.mxu0 0
        %1735 = vmatpush1.bf16.msra.mxu0 0
        %1736 = vmatprep.subr.bf16.mxu0 0
        %1737 = vmatpush1.bf16.msra.mxu0 0
        %1738 = vmatprep.subr.bf16.mxu0 0
        %1739 = vmatpush1.bf16.msra.mxu0 0
        %1740 = vmatprep.subr.bf16.mxu0 0
        %1741 = vmatpush1.bf16.msra.mxu0 0
        %1742 = vmatprep.subr.bf16.mxu0 0
        %1743 = vmatpush1.bf16.msra.mxu0 0
        %1744 = vmatprep.subr.bf16.mxu0 0
        %1745 = vmatpush1.bf16.msra.mxu0 0
        %1746 = vmatprep.mubr.bf16.mxu0 0
        %1747 = vmatmul.mubr.bf16.gmra.mrb[0].mxu0 %v1712
        %v1748 = vpop.f32.mrb[0].mxu0
        %v1749 = vadd.f32 0.0, %v1748
        %v1750 = vpop.f32.mrb[0].mxu0
        %v1751 = vadd.f32 0.0, %v1750
        %v1752 = vpop.f32.mrb[0].mxu0
        %v1753 = vpop.f32.mrb[0].mxu0
        %1754 = vdwg.mxu0
        %v1755 = vpack.c.bf16 %v1749, %v1749
        %v1756 = vpack.c.bf16 %v1751, %v1751
        %s1757 = scalar_lea.vmem [#allocation11], 4
        %v1758 = vld [vmem:[%s1757] sm:$0x3]
        %v1760 = vsel %vm1655, %v1758, 0
        %1762 = vmatprep.subr.bf16.mxu0 %v1664
        %1763 = vmatpush1.bf16.msra.mxu0 %v1661
        %1764 = vmatprep.subr.bf16.mxu0 0
        %1765 = vmatpush1.bf16.msra.mxu0 0
        %1766 = vmatprep.subr.bf16.mxu0 0
        %1767 = vmatpush1.bf16.msra.mxu0 0
        %1768 = vmatprep.subr.bf16.mxu0 0
        %1769 = vmatpush1.bf16.msra.mxu0 0
        %1770 = vmatprep.subr.bf16.mxu0 0
        %1771 = vmatpush1.bf16.msra.mxu0 0
        %1772 = vmatprep.subr.bf16.mxu0 0
        %1773 = vmatpush1.bf16.msra.mxu0 0
        %1774 = vmatprep.subr.bf16.mxu0 0
        %1775 = vmatpush1.bf16.msra.mxu0 0
        %1776 = vmatprep.subr.bf16.mxu0 0
        %1777 = vmatpush1.bf16.msra.mxu0 0
        %1778 = vmatprep.subr.bf16.mxu0 0
        %1779 = vmatpush1.bf16.msra.mxu0 0
        %1780 = vmatprep.subr.bf16.mxu0 0
        %1781 = vmatpush1.bf16.msra.mxu0 0
        %1782 = vmatprep.subr.bf16.mxu0 0
        %1783 = vmatpush1.bf16.msra.mxu0 0
        %1784 = vmatprep.subr.bf16.mxu0 0
        %1785 = vmatpush1.bf16.msra.mxu0 0
        %1786 = vmatprep.subr.bf16.mxu0 0
        %1787 = vmatpush1.bf16.msra.mxu0 0
        %1788 = vmatprep.subr.bf16.mxu0 0
        %1789 = vmatpush1.bf16.msra.mxu0 0
        %1790 = vmatprep.subr.bf16.mxu0 0
        %1791 = vmatpush1.bf16.msra.mxu0 0
        %1792 = vmatprep.subr.bf16.mxu0 0
        %1793 = vmatpush1.bf16.msra.mxu0 0
        %1794 = vmatprep.mubr.bf16.mxu0 0
        %1795 = vmatmul.mubr.bf16.gmra.mrb[0].mxu0 %v1760
        %v1796 = vpop.f32.mrb[0].mxu0
        %v1797 = vadd.f32 0.0, %v1796
        %v1798 = vpop.f32.mrb[0].mxu0
        %v1799 = vadd.f32 0.0, %v1798
        %v1800 = vpop.f32.mrb[0].mxu0
        %v1801 = vpop.f32.mrb[0].mxu0
        %1802 = vdwg.mxu0
        %v1803 = vpack.c.bf16 %v1797, %v1797
        %v1804 = vpack.c.bf16 %v1799, %v1799
        %v1805 = vld [vmem:[%s6] sm:$0xff]
        %v1806 = vld [vmem:[%s6 + $0x8] sm:$0xff]
        %v1807 = vld [vmem:[%s6 + $0x10] sm:$0xff]
        %v1808 = vld [vmem:[%s6 + $0x18] sm:$0xff]
        %v1809 = vld [vmem:[%s6 + $0x20] sm:$0xff]
        %v1810 = vld [vmem:[%s6 + $0x28] sm:$0xff]
        %v1811 = vld [vmem:[%s6 + $0x30] sm:$0xff]
        %v1812 = vld [vmem:[%s6 + $0x38] sm:$0xff]
        %v1813 = vld [vmem:[%s6 + $0x40] sm:$0xff]
        %v1814 = vld [vmem:[%s6 + $0x48] sm:$0xff]
        %v1815 = vld [vmem:[%s6 + $0x50] sm:$0xff]
        %v1816 = vld [vmem:[%s6 + $0x58] sm:$0xff]
        %v1817 = vld [vmem:[%s6 + $0x60] sm:$0xff]
        %v1818 = vld [vmem:[%s6 + $0x68] sm:$0xff]
        %v1819 = vld [vmem:[%s6 + $0x70] sm:$0xff]
        %v1820 = vld [vmem:[%s6 + $0x78] sm:$0xff]
        %v1821 = vld [vmem:[%s6 + $0x80] sm:$0xff]
        %v1822 = vld [vmem:[%s6 + $0x88] sm:$0xff]
        %v1823 = vld [vmem:[%s6 + $0x90] sm:$0xff]
        %v1824 = vld [vmem:[%s6 + $0x98] sm:$0xff]
        %v1825 = vld [vmem:[%s6 + $0xa0] sm:$0xff]
        %v1826 = vld [vmem:[%s6 + $0xa8] sm:$0xff]
        %v1827 = vld [vmem:[%s6 + $0xb0] sm:$0xff]
        %v1828 = vld [vmem:[%s6 + $0xb8] sm:$0xff]
        %v1829 = vld [vmem:[%s6 + $0xc0] sm:$0xff]
        %v1830 = vld [vmem:[%s6 + $0xc8] sm:$0xff]
        %v1831 = vld [vmem:[%s6 + $0xd0] sm:$0xff]
        %v1832 = vld [vmem:[%s6 + $0xd8] sm:$0xff]
        %v1833 = vld [vmem:[%s6 + $0xe0] sm:$0xff]
        %v1834 = vld [vmem:[%s6 + $0xe8] sm:$0xff]
        %v1835 = vld [vmem:[%s6 + $0xf0] sm:$0xff]
        %v1836 = vld [vmem:[%s6 + $0xf8] sm:$0xff]
        %v1837 = vld [vmem:[%s6 + $0x100] sm:$0xff]
        %v1838 = vld [vmem:[%s6 + $0x108] sm:$0xff]
        %v1839 = vld [vmem:[%s6 + $0x110] sm:$0xff]
        %v1840 = vld [vmem:[%s6 + $0x118] sm:$0xff]
        %v1841 = vld [vmem:[%s6 + $0x120] sm:$0xff]
        %v1842 = vld [vmem:[%s6 + $0x128] sm:$0xff]
        %v1843 = vld [vmem:[%s6 + $0x130] sm:$0xff]
        %v1844 = vld [vmem:[%s6 + $0x138] sm:$0xff]
        %v1845 = vld [vmem:[%s6 + $0x140] sm:$0xff]
        %v1846 = vld [vmem:[%s6 + $0x148] sm:$0xff]
        %v1847 = vld [vmem:[%s6 + $0x150] sm:$0xff]
        %v1848 = vld [vmem:[%s6 + $0x158] sm:$0xff]
        %v1849 = vld [vmem:[%s6 + $0x160] sm:$0xff]
        %v1850 = vld [vmem:[%s6 + $0x168] sm:$0xff]
        %v1851 = vld [vmem:[%s6 + $0x170] sm:$0xff]
        %v1852 = vld [vmem:[%s6 + $0x178] sm:$0xff]
        %v1853 = vld [vmem:[%s6 + $0x180] sm:$0xff]
        %v1854 = vld [vmem:[%s6 + $0x188] sm:$0xff]
        %v1855 = vld [vmem:[%s6 + $0x190] sm:$0xff]
        %v1856 = vld [vmem:[%s6 + $0x198] sm:$0xff]
        %v1857 = vld [vmem:[%s6 + $0x1a0] sm:$0xff]
        %v1858 = vld [vmem:[%s6 + $0x1a8] sm:$0xff]
        %v1859 = vld [vmem:[%s6 + $0x1b0] sm:$0xff]
        %v1860 = vld [vmem:[%s6 + $0x1b8] sm:$0xff]
        %v1861 = vld [vmem:[%s6 + $0x1c0] sm:$0xff]
        %v1862 = vld [vmem:[%s6 + $0x1c8] sm:$0xff]
        %v1863 = vld [vmem:[%s6 + $0x1d0] sm:$0xff]
        %v1864 = vld [vmem:[%s6 + $0x1d8] sm:$0xff]
        %v1865 = vld [vmem:[%s6 + $0x1e0] sm:$0xff]
        %v1866 = vld [vmem:[%s6 + $0x1e8] sm:$0xff]
        %v1867 = vld [vmem:[%s6 + $0x1f0] sm:$0xff]
        %v1868 = vld [vmem:[%s6 + $0x1f8] sm:$0xff]
        %v1869 = vld [vmem:[%s6 + $0x200] sm:$0xff]
        %v1870 = vld [vmem:[%s6 + $0x208] sm:$0xff]
        %v1871 = vld [vmem:[%s6 + $0x210] sm:$0xff]
        %v1872 = vld [vmem:[%s6 + $0x218] sm:$0xff]
        %v1873 = vld [vmem:[%s6 + $0x220] sm:$0xff]
        %v1874 = vld [vmem:[%s6 + $0x228] sm:$0xff]
        %v1875 = vld [vmem:[%s6 + $0x230] sm:$0xff]
        %v1876 = vld [vmem:[%s6 + $0x238] sm:$0xff]
        %v1877 = vld [vmem:[%s6 + $0x240] sm:$0xff]
        %v1878 = vld [vmem:[%s6 + $0x248] sm:$0xff]
        %v1879 = vld [vmem:[%s6 + $0x250] sm:$0xff]
        %v1880 = vld [vmem:[%s6 + $0x258] sm:$0xff]
        %v1881 = vld [vmem:[%s6 + $0x260] sm:$0xff]
        %v1882 = vld [vmem:[%s6 + $0x268] sm:$0xff]
        %v1883 = vld [vmem:[%s6 + $0x270] sm:$0xff]
        %v1884 = vld [vmem:[%s6 + $0x278] sm:$0xff]
        %v1885 = vld [vmem:[%s6 + $0x280] sm:$0xff]
        %v1886 = vld [vmem:[%s6 + $0x288] sm:$0xff]
        %v1887 = vld [vmem:[%s6 + $0x290] sm:$0xff]
        %v1888 = vld [vmem:[%s6 + $0x298] sm:$0xff]
        %v1889 = vld [vmem:[%s6 + $0x2a0] sm:$0xff]
        %v1890 = vld [vmem:[%s6 + $0x2a8] sm:$0xff]
        %v1891 = vld [vmem:[%s6 + $0x2b0] sm:$0xff]
        %v1892 = vld [vmem:[%s6 + $0x2b8] sm:$0xff]
        %v1893 = vld [vmem:[%s6 + $0x2c0] sm:$0xff]
        %v1894 = vld [vmem:[%s6 + $0x2c8] sm:$0xff]
        %v1895 = vld [vmem:[%s6 + $0x2d0] sm:$0xff]
        %v1896 = vld [vmem:[%s6 + $0x2d8] sm:$0xff]
        %v1897 = vld [vmem:[%s6 + $0x2e0] sm:$0xff]
        %v1898 = vld [vmem:[%s6 + $0x2e8] sm:$0xff]
        %v1899 = vld [vmem:[%s6 + $0x2f0] sm:$0xff]
        %v1900 = vld [vmem:[%s6 + $0x2f8] sm:$0xff]
        %v1997 = vunpack.c.l.b16 %v1805
        %v1998 = vunpack.c.h.b16 %v1805
        %v1999 = vunpack.c.l.b16 %v1806
        %v2000 = vunpack.c.h.b16 %v1806
        %v2001 = vunpack.c.l.b16 %v1807
        %v2002 = vunpack.c.h.b16 %v1807
        %v2003 = vunpack.c.l.b16 %v1808
        %v2004 = vunpack.c.h.b16 %v1808
        %v2005 = vunpack.c.l.b16 %v1809
        %v2006 = vunpack.c.h.b16 %v1809
        %v2007 = vunpack.c.l.b16 %v1810
        %v2008 = vunpack.c.h.b16 %v1810
        %v2009 = vunpack.c.l.b16 %v1811
        %v2010 = vunpack.c.h.b16 %v1811
        %v2011 = vunpack.c.l.b16 %v1812
        %v2012 = vunpack.c.h.b16 %v1812
        %v2013 = vunpack.c.l.b16 %v1813
        %v2014 = vunpack.c.h.b16 %v1813
        %v2015 = vunpack.c.l.b16 %v1814
        %v2016 = vunpack.c.h.b16 %v1814
        %v2017 = vunpack.c.l.b16 %v1815
        %v2018 = vunpack.c.h.b16 %v1815
        %v2019 = vunpack.c.l.b16 %v1816
        %v2020 = vunpack.c.h.b16 %v1816
        %v2021 = vunpack.c.l.b16 %v1817
        %v2022 = vunpack.c.h.b16 %v1817
        %v2023 = vunpack.c.l.b16 %v1818
        %v2024 = vunpack.c.h.b16 %v1818
        %v2025 = vunpack.c.l.b16 %v1819
        %v2026 = vunpack.c.h.b16 %v1819
        %v2027 = vunpack.c.l.b16 %v1820
        %v2028 = vunpack.c.h.b16 %v1820
        %v2029 = vunpack.c.l.b16 %v1821
        %v2030 = vunpack.c.h.b16 %v1821
        %v2031 = vunpack.c.l.b16 %v1822
        %v2032 = vunpack.c.h.b16 %v1822
        %v2033 = vunpack.c.l.b16 %v1823
        %v2034 = vunpack.c.h.b16 %v1823
        %v2035 = vunpack.c.l.b16 %v1824
        %v2036 = vunpack.c.h.b16 %v1824
        %v2037 = vunpack.c.l.b16 %v1825
        %v2038 = vunpack.c.h.b16 %v1825
        %v2039 = vunpack.c.l.b16 %v1826
        %v2040 = vunpack.c.h.b16 %v1826
        %v2041 = vunpack.c.l.b16 %v1827
        %v2042 = vunpack.c.h.b16 %v1827
        %v2043 = vunpack.c.l.b16 %v1828
        %v2044 = vunpack.c.h.b16 %v1828
        %v2045 = vunpack.c.l.b16 %v1829
        %v2046 = vunpack.c.h.b16 %v1829
        %v2047 = vunpack.c.l.b16 %v1830
        %v2048 = vunpack.c.h.b16 %v1830
        %v2049 = vunpack.c.l.b16 %v1831
        %v2050 = vunpack.c.h.b16 %v1831
        %v2051 = vunpack.c.l.b16 %v1832
        %v2052 = vunpack.c.h.b16 %v1832
        %v2053 = vunpack.c.l.b16 %v1833
        %v2054 = vunpack.c.h.b16 %v1833
        %v2055 = vunpack.c.l.b16 %v1834
        %v2056 = vunpack.c.h.b16 %v1834
        %v2057 = vunpack.c.l.b16 %v1835
        %v2058 = vunpack.c.h.b16 %v1835
        %v2059 = vunpack.c.l.b16 %v1836
        %v2060 = vunpack.c.h.b16 %v1836
        %v2061 = vunpack.c.l.b16 %v1837
        %v2062 = vunpack.c.h.b16 %v1837
        %v2063 = vunpack.c.l.b16 %v1838
        %v2064 = vunpack.c.h.b16 %v1838
        %v2065 = vunpack.c.l.b16 %v1839
        %v2066 = vunpack.c.h.b16 %v1839
        %v2067 = vunpack.c.l.b16 %v1840
        %v2068 = vunpack.c.h.b16 %v1840
        %v2069 = vunpack.c.l.b16 %v1841
        %v2070 = vunpack.c.h.b16 %v1841
        %v2071 = vunpack.c.l.b16 %v1842
        %v2072 = vunpack.c.h.b16 %v1842
        %v2073 = vunpack.c.l.b16 %v1843
        %v2074 = vunpack.c.h.b16 %v1843
        %v2075 = vunpack.c.l.b16 %v1844
        %v2076 = vunpack.c.h.b16 %v1844
        %v2077 = vunpack.c.l.b16 %v1845
        %v2078 = vunpack.c.h.b16 %v1845
        %v2079 = vunpack.c.l.b16 %v1846
        %v2080 = vunpack.c.h.b16 %v1846
        %v2081 = vunpack.c.l.b16 %v1847
        %v2082 = vunpack.c.h.b16 %v1847
        %v2083 = vunpack.c.l.b16 %v1848
        %v2084 = vunpack.c.h.b16 %v1848
        %v2085 = vunpack.c.l.b16 %v1849
        %v2086 = vunpack.c.h.b16 %v1849
        %v2087 = vunpack.c.l.b16 %v1850
        %v2088 = vunpack.c.h.b16 %v1850
        %v2089 = vunpack.c.l.b16 %v1851
        %v2090 = vunpack.c.h.b16 %v1851
        %v2091 = vunpack.c.l.b16 %v1852
        %v2092 = vunpack.c.h.b16 %v1852
        %v2093 = vunpack.c.l.b16 %v1853
        %v2094 = vunpack.c.h.b16 %v1853
        %v2095 = vunpack.c.l.b16 %v1854
        %v2096 = vunpack.c.h.b16 %v1854
        %v2097 = vunpack.c.l.b16 %v1855
        %v2098 = vunpack.c.h.b16 %v1855
        %v2099 = vunpack.c.l.b16 %v1856
        %v2100 = vunpack.c.h.b16 %v1856
        %v2101 = vunpack.c.l.b16 %v1857
        %v2102 = vunpack.c.h.b16 %v1857
        %v2103 = vunpack.c.l.b16 %v1858
        %v2104 = vunpack.c.h.b16 %v1858
        %v2105 = vunpack.c.l.b16 %v1859
        %v2106 = vunpack.c.h.b16 %v1859
        %v2107 = vunpack.c.l.b16 %v1860
        %v2108 = vunpack.c.h.b16 %v1860
        %v2109 = vunpack.c.l.b16 %v1861
        %v2110 = vunpack.c.h.b16 %v1861
        %v2111 = vunpack.c.l.b16 %v1862
        %v2112 = vunpack.c.h.b16 %v1862
        %v2113 = vunpack.c.l.b16 %v1863
        %v2114 = vunpack.c.h.b16 %v1863
        %v2115 = vunpack.c.l.b16 %v1864
        %v2116 = vunpack.c.h.b16 %v1864
        %v2117 = vunpack.c.l.b16 %v1865
        %v2118 = vunpack.c.h.b16 %v1865
        %v2119 = vunpack.c.l.b16 %v1866
        %v2120 = vunpack.c.h.b16 %v1866
        %v2121 = vunpack.c.l.b16 %v1867
        %v2122 = vunpack.c.h.b16 %v1867
        %v2123 = vunpack.c.l.b16 %v1868
        %v2124 = vunpack.c.h.b16 %v1868
        %v2125 = vunpack.c.l.b16 %v1869
        %v2126 = vunpack.c.h.b16 %v1869
        %v2127 = vunpack.c.l.b16 %v1870
        %v2128 = vunpack.c.h.b16 %v1870
        %v2129 = vunpack.c.l.b16 %v1871
        %v2130 = vunpack.c.h.b16 %v1871
        %v2131 = vunpack.c.l.b16 %v1872
        %v2132 = vunpack.c.h.b16 %v1872
        %v2133 = vunpack.c.l.b16 %v1873
        %v2134 = vunpack.c.h.b16 %v1873
        %v2135 = vunpack.c.l.b16 %v1874
        %v2136 = vunpack.c.h.b16 %v1874
        %v2137 = vunpack.c.l.b16 %v1875
        %v2138 = vunpack.c.h.b16 %v1875
        %v2139 = vunpack.c.l.b16 %v1876
        %v2140 = vunpack.c.h.b16 %v1876
        %v2141 = vunpack.c.l.b16 %v1877
        %v2142 = vunpack.c.h.b16 %v1877
        %v2143 = vunpack.c.l.b16 %v1878
        %v2144 = vunpack.c.h.b16 %v1878
        %v2145 = vunpack.c.l.b16 %v1879
        %v2146 = vunpack.c.h.b16 %v1879
        %v2147 = vunpack.c.l.b16 %v1880
        %v2148 = vunpack.c.h.b16 %v1880
        %v2149 = vunpack.c.l.b16 %v1881
        %v2150 = vunpack.c.h.b16 %v1881
        %v2151 = vunpack.c.l.b16 %v1882
        %v2152 = vunpack.c.h.b16 %v1882
        %v2153 = vunpack.c.l.b16 %v1883
        %v2154 = vunpack.c.h.b16 %v1883
        %v2155 = vunpack.c.l.b16 %v1884
        %v2156 = vunpack.c.h.b16 %v1884
        %v2157 = vunpack.c.l.b16 %v1885
        %v2158 = vunpack.c.h.b16 %v1885
        %v2159 = vunpack.c.l.b16 %v1886
        %v2160 = vunpack.c.h.b16 %v1886
        %v2161 = vunpack.c.l.b16 %v1887
        %v2162 = vunpack.c.h.b16 %v1887
        %v2163 = vunpack.c.l.b16 %v1888
        %v2164 = vunpack.c.h.b16 %v1888
        %v2165 = vunpack.c.l.b16 %v1889
        %v2166 = vunpack.c.h.b16 %v1889
        %v2167 = vunpack.c.l.b16 %v1890
        %v2168 = vunpack.c.h.b16 %v1890
        %v2169 = vunpack.c.l.b16 %v1891
        %v2170 = vunpack.c.h.b16 %v1891
        %v2171 = vunpack.c.l.b16 %v1892
        %v2172 = vunpack.c.h.b16 %v1892
        %v2173 = vunpack.c.l.b16 %v1893
        %v2174 = vunpack.c.h.b16 %v1893
        %v2175 = vunpack.c.l.b16 %v1894
        %v2176 = vunpack.c.h.b16 %v1894
        %v2177 = vunpack.c.l.b16 %v1895
        %v2178 = vunpack.c.h.b16 %v1895
        %v2179 = vunpack.c.l.b16 %v1896
        %v2180 = vunpack.c.h.b16 %v1896
        %v2181 = vunpack.c.l.b16 %v1897
        %v2182 = vunpack.c.h.b16 %v1897
        %v2183 = vunpack.c.l.b16 %v1898
        %v2184 = vunpack.c.h.b16 %v1898
        %v2185 = vunpack.c.l.b16 %v1899
        %v2186 = vunpack.c.h.b16 %v1899
        %v2187 = vunpack.c.l.b16 %v1900
        %v2188 = vunpack.c.h.b16 %v1900
        %v2189 = vpack.c.b16 %v1999, %v1997
        %v2190 = vpack.c.b16 %v2000, %v1998
        %v2191 = vpack.c.b16 %v2003, %v2001
        %v2192 = vpack.c.b16 %v2004, %v2002
        %v2193 = vpack.c.b16 %v2007, %v2005
        %v2194 = vpack.c.b16 %v2008, %v2006
        %v2195 = vpack.c.b16 %v2011, %v2009
        %v2196 = vpack.c.b16 %v2012, %v2010
        %v2197 = vpack.c.b16 %v2015, %v2013
        %v2198 = vpack.c.b16 %v2016, %v2014
        %v2199 = vpack.c.b16 %v2019, %v2017
        %v2200 = vpack.c.b16 %v2020, %v2018
        %v2201 = vpack.c.b16 %v2023, %v2021
        %v2202 = vpack.c.b16 %v2024, %v2022
        %v2203 = vpack.c.b16 %v2027, %v2025
        %v2204 = vpack.c.b16 %v2028, %v2026
        %v2205 = vpack.c.b16 %v2031, %v2029
        %v2206 = vpack.c.b16 %v2032, %v2030
        %v2207 = vpack.c.b16 %v2035, %v2033
        %v2208 = vpack.c.b16 %v2036, %v2034
        %v2209 = vpack.c.b16 %v2039, %v2037
        %v2210 = vpack.c.b16 %v2040, %v2038
        %v2211 = vpack.c.b16 %v2043, %v2041
        %v2212 = vpack.c.b16 %v2044, %v2042
        %v2213 = vpack.c.b16 %v2047, %v2045
        %v2214 = vpack.c.b16 %v2048, %v2046
        %v2215 = vpack.c.b16 %v2051, %v2049
        %v2216 = vpack.c.b16 %v2052, %v2050
        %v2217 = vpack.c.b16 %v2055, %v2053
        %v2218 = vpack.c.b16 %v2056, %v2054
        %v2219 = vpack.c.b16 %v2059, %v2057
        %v2220 = vpack.c.b16 %v2060, %v2058
        %v2221 = vpack.c.b16 %v2063, %v2061
        %v2222 = vpack.c.b16 %v2064, %v2062
        %v2223 = vpack.c.b16 %v2067, %v2065
        %v2224 = vpack.c.b16 %v2068, %v2066
        %v2225 = vpack.c.b16 %v2071, %v2069
        %v2226 = vpack.c.b16 %v2072, %v2070
        %v2227 = vpack.c.b16 %v2075, %v2073
        %v2228 = vpack.c.b16 %v2076, %v2074
        %v2229 = vpack.c.b16 %v2079, %v2077
        %v2230 = vpack.c.b16 %v2080, %v2078
        %v2231 = vpack.c.b16 %v2083, %v2081
        %v2232 = vpack.c.b16 %v2084, %v2082
        %v2233 = vpack.c.b16 %v2087, %v2085
        %v2234 = vpack.c.b16 %v2088, %v2086
        %v2235 = vpack.c.b16 %v2091, %v2089
        %v2236 = vpack.c.b16 %v2092, %v2090
        %v2237 = vpack.c.b16 %v2095, %v2093
        %v2238 = vpack.c.b16 %v2096, %v2094
        %v2239 = vpack.c.b16 %v2099, %v2097
        %v2240 = vpack.c.b16 %v2100, %v2098
        %v2241 = vpack.c.b16 %v2103, %v2101
        %v2242 = vpack.c.b16 %v2104, %v2102
        %v2243 = vpack.c.b16 %v2107, %v2105
        %v2244 = vpack.c.b16 %v2108, %v2106
        %v2245 = vpack.c.b16 %v2111, %v2109
        %v2246 = vpack.c.b16 %v2112, %v2110
        %v2247 = vpack.c.b16 %v2115, %v2113
        %v2248 = vpack.c.b16 %v2116, %v2114
        %v2249 = vpack.c.b16 %v2119, %v2117
        %v2250 = vpack.c.b16 %v2120, %v2118
        %v2251 = vpack.c.b16 %v2123, %v2121
        %v2252 = vpack.c.b16 %v2124, %v2122
        %v2253 = vpack.c.b16 %v2127, %v2125
        %v2254 = vpack.c.b16 %v2128, %v2126
        %v2255 = vpack.c.b16 %v2131, %v2129
        %v2256 = vpack.c.b16 %v2132, %v2130
        %v2257 = vpack.c.b16 %v2135, %v2133
        %v2258 = vpack.c.b16 %v2136, %v2134
        %v2259 = vpack.c.b16 %v2139, %v2137
        %v2260 = vpack.c.b16 %v2140, %v2138
        %v2261 = vpack.c.b16 %v2143, %v2141
        %v2262 = vpack.c.b16 %v2144, %v2142
        %v2263 = vpack.c.b16 %v2147, %v2145
        %v2264 = vpack.c.b16 %v2148, %v2146
        %v2265 = vpack.c.b16 %v2151, %v2149
        %v2266 = vpack.c.b16 %v2152, %v2150
        %v2267 = vpack.c.b16 %v2155, %v2153
        %v2268 = vpack.c.b16 %v2156, %v2154
        %v2269 = vpack.c.b16 %v2159, %v2157
        %v2270 = vpack.c.b16 %v2160, %v2158
        %v2271 = vpack.c.b16 %v2163, %v2161
        %v2272 = vpack.c.b16 %v2164, %v2162
        %v2273 = vpack.c.b16 %v2167, %v2165
        %v2274 = vpack.c.b16 %v2168, %v2166
        %v2275 = vpack.c.b16 %v2171, %v2169
        %v2276 = vpack.c.b16 %v2172, %v2170
        %v2277 = vpack.c.b16 %v2175, %v2173
        %v2278 = vpack.c.b16 %v2176, %v2174
        %v2279 = vpack.c.b16 %v2179, %v2177
        %v2280 = vpack.c.b16 %v2180, %v2178
        %v2281 = vpack.c.b16 %v2183, %v2181
        %v2282 = vpack.c.b16 %v2184, %v2182
        %v2283 = vpack.c.b16 %v2187, %v2185
        %v2284 = vpack.c.b16 %v2188, %v2186
        %2381 = vmatprep.subr.bf16.mxu0 %v2190
        %2382 = vmatpush1.bf16.msra.mxu0 %v2189
        %2383 = vmatprep.subr.bf16.mxu0 %v2192
        %2384 = vmatpush1.bf16.msra.mxu0 %v2191
        %2385 = vmatprep.subr.bf16.mxu0 %v2194
        %2386 = vmatpush1.bf16.msra.mxu0 %v2193
        %2387 = vmatprep.subr.bf16.mxu0 %v2196
        %2388 = vmatpush1.bf16.msra.mxu0 %v2195
        %2389 = vmatprep.subr.bf16.mxu0 %v2198
        %2390 = vmatpush1.bf16.msra.mxu0 %v2197
        %2391 = vmatprep.subr.bf16.mxu0 %v2200
        %2392 = vmatpush1.bf16.msra.mxu0 %v2199
        %2393 = vmatprep.subr.bf16.mxu0 %v2202
        %2394 = vmatpush1.bf16.msra.mxu0 %v2201
        %2395 = vmatprep.subr.bf16.mxu0 %v2204
        %2396 = vmatpush1.bf16.msra.mxu0 %v2203
        %2397 = vmatprep.subr.bf16.mxu0 %v2206
        %2398 = vmatpush1.bf16.msra.mxu0 %v2205
        %2399 = vmatprep.subr.bf16.mxu0 %v2208
        %2400 = vmatpush1.bf16.msra.mxu0 %v2207
        %2401 = vmatprep.subr.bf16.mxu0 %v2210
        %2402 = vmatpush1.bf16.msra.mxu0 %v2209
        %2403 = vmatprep.subr.bf16.mxu0 %v2212
        %2404 = vmatpush1.bf16.msra.mxu0 %v2211
        %2405 = vmatprep.subr.bf16.mxu0 %v2214
        %2406 = vmatpush1.bf16.msra.mxu0 %v2213
        %2407 = vmatprep.subr.bf16.mxu0 %v2216
        %2408 = vmatpush1.bf16.msra.mxu0 %v2215
        %2409 = vmatprep.subr.bf16.mxu0 %v2218
        %2410 = vmatpush1.bf16.msra.mxu0 %v2217
        %2411 = vmatprep.subr.bf16.mxu0 %v2220
        %2412 = vmatpush1.bf16.msra.mxu0 %v2219
        %2413 = vmatprep.mubr.bf16.mxu0 %v1708
        %2414 = vmatmul.mubr.bf16.gmra.mrb[0].mxu0 %v1707
        %v2415 = vpop.f32.mrb[0].mxu0
        %v2416 = vadd.f32 0.0, %v2415
        %v2417 = vpop.f32.mrb[0].mxu0
        %v2418 = vadd.f32 0.0, %v2417
        %v2419 = vpop.f32.mrb[0].mxu0
        %v2420 = vpop.f32.mrb[0].mxu0
        %2421 = vdwg.mxu0
        %2422 = vmatprep.subr.bf16.mxu0 %v2222
        %2423 = vmatpush1.bf16.msra.mxu0 %v2221
        %2424 = vmatprep.subr.bf16.mxu0 %v2224
        %2425 = vmatpush1.bf16.msra.mxu0 %v2223
        %2426 = vmatprep.subr.bf16.mxu0 %v2226
        %2427 = vmatpush1.bf16.msra.mxu0 %v2225
        %2428 = vmatprep.subr.bf16.mxu0 %v2228
        %2429 = vmatpush1.bf16.msra.mxu0 %v2227
        %2430 = vmatprep.subr.bf16.mxu0 %v2230
        %2431 = vmatpush1.bf16.msra.mxu0 %v2229
        %2432 = vmatprep.subr.bf16.mxu0 %v2232
        %2433 = vmatpush1.bf16.msra.mxu0 %v2231
        %2434 = vmatprep.subr.bf16.mxu0 %v2234
        %2435 = vmatpush1.bf16.msra.mxu0 %v2233
        %2436 = vmatprep.subr.bf16.mxu0 %v2236
        %2437 = vmatpush1.bf16.msra.mxu0 %v2235
        %2438 = vmatprep.subr.bf16.mxu0 %v2238
        %2439 = vmatpush1.bf16.msra.mxu0 %v2237
        %2440 = vmatprep.subr.bf16.mxu0 %v2240
        %2441 = vmatpush1.bf16.msra.mxu0 %v2239
        %2442 = vmatprep.subr.bf16.mxu0 %v2242
        %2443 = vmatpush1.bf16.msra.mxu0 %v2241
        %2444 = vmatprep.subr.bf16.mxu0 %v2244
        %2445 = vmatpush1.bf16.msra.mxu0 %v2243
        %2446 = vmatprep.subr.bf16.mxu0 %v2246
        %2447 = vmatpush1.bf16.msra.mxu0 %v2245
        %2448 = vmatprep.subr.bf16.mxu0 %v2248
        %2449 = vmatpush1.bf16.msra.mxu0 %v2247
        %2450 = vmatprep.subr.bf16.mxu0 %v2250
        %2451 = vmatpush1.bf16.msra.mxu0 %v2249
        %2452 = vmatprep.subr.bf16.mxu0 %v2252
        %2453 = vmatpush1.bf16.msra.mxu0 %v2251
        %2454 = vmatprep.mubr.bf16.mxu0 %v1756
        %2455 = vmatmul.mubr.bf16.gmra.mrb[0].mxu0 %v1755
        %v2456 = vpop.f32.mrb[0].mxu0
        %v2457 = vadd.f32 %v2416, %v2456
        %v2458 = vpop.f32.mrb[0].mxu0
        %v2459 = vadd.f32 %v2418, %v2458
        %v2460 = vpop.f32.mrb[0].mxu0
        %v2461 = vpop.f32.mrb[0].mxu0
        %2462 = vdwg.mxu0
        %2463 = vmatprep.subr.bf16.mxu0 %v2254
        %2464 = vmatpush1.bf16.msra.mxu0 %v2253
        %2465 = vmatprep.subr.bf16.mxu0 %v2256
        %2466 = vmatpush1.bf16.msra.mxu0 %v2255
        %2467 = vmatprep.subr.bf16.mxu0 %v2258
        %2468 = vmatpush1.bf16.msra.mxu0 %v2257
        %2469 = vmatprep.subr.bf16.mxu0 %v2260
        %2470 = vmatpush1.bf16.msra.mxu0 %v2259
        %2471 = vmatprep.subr.bf16.mxu0 %v2262
        %2472 = vmatpush1.bf16.msra.mxu0 %v2261
        %2473 = vmatprep.subr.bf16.mxu0 %v2264
        %2474 = vmatpush1.bf16.msra.mxu0 %v2263
        %2475 = vmatprep.subr.bf16.mxu0 %v2266
        %2476 = vmatpush1.bf16.msra.mxu0 %v2265
        %2477 = vmatprep.subr.bf16.mxu0 %v2268
        %2478 = vmatpush1.bf16.msra.mxu0 %v2267
        %2479 = vmatprep.subr.bf16.mxu0 %v2270
        %2480 = vmatpush1.bf16.msra.mxu0 %v2269
        %2481 = vmatprep.subr.bf16.mxu0 %v2272
        %2482 = vmatpush1.bf16.msra.mxu0 %v2271
        %2483 = vmatprep.subr.bf16.mxu0 %v2274
        %2484 = vmatpush1.bf16.msra.mxu0 %v2273
        %2485 = vmatprep.subr.bf16.mxu0 %v2276
        %2486 = vmatpush1.bf16.msra.mxu0 %v2275
        %2487 = vmatprep.subr.bf16.mxu0 %v2278
        %2488 = vmatpush1.bf16.msra.mxu0 %v2277
        %2489 = vmatprep.subr.bf16.mxu0 %v2280
        %2490 = vmatpush1.bf16.msra.mxu0 %v2279
        %2491 = vmatprep.subr.bf16.mxu0 %v2282
        %2492 = vmatpush1.bf16.msra.mxu0 %v2281
        %2493 = vmatprep.subr.bf16.mxu0 %v2284
        %2494 = vmatpush1.bf16.msra.mxu0 %v2283
        %2495 = vmatprep.mubr.bf16.mxu0 %v1804
        %2496 = vmatmul.mubr.bf16.gmra.mrb[0].mxu0 %v1803
        %v2497 = vpop.f32.mrb[0].mxu0
        %v2498 = vadd.f32 %v2457, %v2497
        %v2499 = vpop.f32.mrb[0].mxu0
        %v2500 = vadd.f32 %v2459, %v2499
        %v2501 = vpop.f32.mrb[0].mxu0
        %v2502 = vpop.f32.mrb[0].mxu0
        %2503 = vdwg.mxu0
        %v2504 = vld [vmem:[#allocation12] sm:$0x3]
        %v2506 = vlaneseq
        %v2507 = vshrl.u32 %v2506, 7
        %v2508 = vsub.s32 0, %v2507
        %v2509 = vrot.slane %v2504, %v2508
        %v2510 = vlaneseq
        %v2511 = vshrl.u32 %v2510, 7
        %v2512 = vsub.s32 1, %v2511
        %v2513 = vrot.slane %v2504, %v2512
        %v2516 = vmul.f32 %v2498, %v2509
        %v2517 = vmul.f32 %v2500, %v2513
        %v2518 = vld [vmem:[#allocation14] sm:$0x3]
        %v2520 = vlaneseq
        %v2521 = vshrl.u32 %v2520, 7
        %v2522 = vsub.s32 0, %v2521
        %v2523 = vrot.slane %v2518, %v2522
        %v2524 = vlaneseq
        %v2525 = vshrl.u32 %v2524, 7
        %v2526 = vsub.s32 1, %v2525
        %v2527 = vrot.slane %v2518, %v2526
        %v2530 = vadd.f32 %v2516, %v2523
        %v2531 = vadd.f32 %v2517, %v2527
        %v2532 = vmax.f32 %v2530, 0.0
        %v2533 = vmax.f32 %v2531, 0.0
        %v2534 = vpack.c.bf16 %v2532, %v2532
        %v2535 = vpack.c.bf16 %v2533, %v2533
        %v2536 = vld [vmem:[#allocation15] sm:$0x1]
        %vm2537 = vcmask 31744
        %v2539 = vsel %vm2537, %v2536, 0
        %vm2541 = vcmask 1041408
        %v2543 = vsel %vm2541, %v2534, 0
        %v2546 = vsel %vm2541, %v2535, 0
        %2548 = vmatprep.subr.bf16.mxu0 %v2546
        %2549 = vmatpush1.bf16.msra.mxu0 %v2543
        %2550 = vmatprep.subr.bf16.mxu0 0
        %2551 = vmatpush1.bf16.msra.mxu0 0
        %2552 = vmatprep.subr.bf16.mxu0 0
        %2553 = vmatpush1.bf16.msra.mxu0 0
        %2554 = vmatprep.subr.bf16.mxu0 0
        %2555 = vmatpush1.bf16.msra.mxu0 0
        %2556 = vmatprep.subr.bf16.mxu0 0
        %2557 = vmatpush1.bf16.msra.mxu0 0
        %2558 = vmatprep.subr.bf16.mxu0 0
        %2559 = vmatpush1.bf16.msra.mxu0 0
        %2560 = vmatprep.subr.bf16.mxu0 0
        %2561 = vmatpush1.bf16.msra.mxu0 0
        %2562 = vmatprep.subr.bf16.mxu0 0
        %2563 = vmatpush1.bf16.msra.mxu0 0
        %2564 = vmatprep.subr.bf16.mxu0 0
        %2565 = vmatpush1.bf16.msra.mxu0 0
        %2566 = vmatprep.subr.bf16.mxu0 0
        %2567 = vmatpush1.bf16.msra.mxu0 0
        %2568 = vmatprep.subr.bf16.mxu0 0
        %2569 = vmatpush1.bf16.msra.mxu0 0
        %2570 = vmatprep.subr.bf16.mxu0 0
        %2571 = vmatpush1.bf16.msra.mxu0 0
        %2572 = vmatprep.subr.bf16.mxu0 0
        %2573 = vmatpush1.bf16.msra.mxu0 0
        %2574 = vmatprep.subr.bf16.mxu0 0
        %2575 = vmatpush1.bf16.msra.mxu0 0
        %2576 = vmatprep.subr.bf16.mxu0 0
        %2577 = vmatpush1.bf16.msra.mxu0 0
        %2578 = vmatprep.subr.bf16.mxu0 0
        %2579 = vmatpush1.bf16.msra.mxu0 0
        %2580 = vmatprep.mubr.bf16.mxu0 0
        %2581 = vmatmul.mubr.bf16.gmra.mrb[0].mxu0 %v2539
        %v2582 = vpop.f32.mrb[0].mxu0
        %v2583 = vadd.f32 0.0, %v2582
        %v2584 = vpop.f32.mrb[0].mxu0
        %v2585 = vadd.f32 0.0, %v2584
        %v2586 = vpop.f32.mrb[0].mxu0
        %v2587 = vpop.f32.mrb[0].mxu0
        %2588 = vdwg.mxu0
        %v2589 = vpack.c.bf16 %v2583, %v2583
        %v2590 = vpack.c.bf16 %v2585, %v2585
        %s2591 = scalar_lea.vmem [#allocation15], 1
        %v2592 = vld [vmem:[%s2591] sm:$0x1]
        %v2594 = vsel %vm2537, %v2592, 0
        %2596 = vmatprep.subr.bf16.mxu0 %v2546
        %2597 = vmatpush1.bf16.msra.mxu0 %v2543
        %2598 = vmatprep.subr.bf16.mxu0 0
        %2599 = vmatpush1.bf16.msra.mxu0 0
        %2600 = vmatprep.subr.bf16.mxu0 0
        %2601 = vmatpush1.bf16.msra.mxu0 0
        %2602 = vmatprep.subr.bf16.mxu0 0
        %2603 = vmatpush1.bf16.msra.mxu0 0
        %2604 = vmatprep.subr.bf16.mxu0 0
        %2605 = vmatpush1.bf16.msra.mxu0 0
        %2606 = vmatprep.subr.bf16.mxu0 0
        %2607 = vmatpush1.bf16.msra.mxu0 0
        %2608 = vmatprep.subr.bf16.mxu0 0
        %2609 = vmatpush1.bf16.msra.mxu0 0
        %2610 = vmatprep.subr.bf16.mxu0 0
        %2611 = vmatpush1.bf16.msra.mxu0 0
        %2612 = vmatprep.subr.bf16.mxu0 0
        %2613 = vmatpush1.bf16.msra.mxu0 0
        %2614 = vmatprep.subr.bf16.mxu0 0
        %2615 = vmatpush1.bf16.msra.mxu0 0
        %2616 = vmatprep.subr.bf16.mxu0 0
        %2617 = vmatpush1.bf16.msra.mxu0 0
        %2618 = vmatprep.subr.bf16.mxu0 0
        %2619 = vmatpush1.bf16.msra.mxu0 0
        %2620 = vmatprep.subr.bf16.mxu0 0
        %2621 = vmatpush1.bf16.msra.mxu0 0
        %2622 = vmatprep.subr.bf16.mxu0 0
        %2623 = vmatpush1.bf16.msra.mxu0 0
        %2624 = vmatprep.subr.bf16.mxu0 0
        %2625 = vmatpush1.bf16.msra.mxu0 0
        %2626 = vmatprep.subr.bf16.mxu0 0
        %2627 = vmatpush1.bf16.msra.mxu0 0
        %2628 = vmatprep.mubr.bf16.mxu0 0
        %2629 = vmatmul.mubr.bf16.gmra.mrb[0].mxu0 %v2594
        %v2630 = vpop.f32.mrb[0].mxu0
        %v2631 = vadd.f32 0.0, %v2630
        %v2632 = vpop.f32.mrb[0].mxu0
        %v2633 = vadd.f32 0.0, %v2632
        %v2634 = vpop.f32.mrb[0].mxu0
        %v2635 = vpop.f32.mrb[0].mxu0
        %2636 = vdwg.mxu0
        %v2637 = vpack.c.bf16 %v2631, %v2631
        %v2638 = vpack.c.bf16 %v2633, %v2633
        %s2639 = scalar_lea.vmem [#allocation15], 2
        %v2640 = vld [vmem:[%s2639] sm:$0x1]
        %v2642 = vsel %vm2537, %v2640, 0
        %2644 = vmatprep.subr.bf16.mxu0 %v2546
        %2645 = vmatpush1.bf16.msra.mxu0 %v2543
        %2646 = vmatprep.subr.bf16.mxu0 0
        %2647 = vmatpush1.bf16.msra.mxu0 0
        %2648 = vmatprep.subr.bf16.mxu0 0
        %2649 = vmatpush1.bf16.msra.mxu0 0
        %2650 = vmatprep.subr.bf16.mxu0 0
        %2651 = vmatpush1.bf16.msra.mxu0 0
        %2652 = vmatprep.subr.bf16.mxu0 0
        %2653 = vmatpush1.bf16.msra.mxu0 0
        %2654 = vmatprep.subr.bf16.mxu0 0
        %2655 = vmatpush1.bf16.msra.mxu0 0
        %2656 = vmatprep.subr.bf16.mxu0 0
        %2657 = vmatpush1.bf16.msra.mxu0 0
        %2658 = vmatprep.subr.bf16.mxu0 0
        %2659 = vmatpush1.bf16.msra.mxu0 0
        %2660 = vmatprep.subr.bf16.mxu0 0
        %2661 = vmatpush1.bf16.msra.mxu0 0
        %2662 = vmatprep.subr.bf16.mxu0 0
        %2663 = vmatpush1.bf16.msra.mxu0 0
        %2664 = vmatprep.subr.bf16.mxu0 0
        %2665 = vmatpush1.bf16.msra.mxu0 0
        %2666 = vmatprep.subr.bf16.mxu0 0
        %2667 = vmatpush1.bf16.msra.mxu0 0
        %2668 = vmatprep.subr.bf16.mxu0 0
        %2669 = vmatpush1.bf16.msra.mxu0 0
        %2670 = vmatprep.subr.bf16.mxu0 0
        %2671 = vmatpush1.bf16.msra.mxu0 0
        %2672 = vmatprep.subr.bf16.mxu0 0
        %2673 = vmatpush1.bf16.msra.mxu0 0
        %2674 = vmatprep.subr.bf16.mxu0 0
        %2675 = vmatpush1.bf16.msra.mxu0 0
        %2676 = vmatprep.mubr.bf16.mxu0 0
        %2677 = vmatmul.mubr.bf16.gmra.mrb[0].mxu0 %v2642
        %v2678 = vpop.f32.mrb[0].mxu0
        %v2679 = vadd.f32 0.0, %v2678
        %v2680 = vpop.f32.mrb[0].mxu0
        %v2681 = vadd.f32 0.0, %v2680
        %v2682 = vpop.f32.mrb[0].mxu0
        %v2683 = vpop.f32.mrb[0].mxu0
        %2684 = vdwg.mxu0
        %v2685 = vpack.c.bf16 %v2679, %v2679
        %v2686 = vpack.c.bf16 %v2681, %v2681
        %v2687 = vld [vmem:[%s10] sm:$0xff]
        %v2688 = vld [vmem:[%s10 + $0x8] sm:$0xff]
        %v2689 = vld [vmem:[%s10 + $0x10] sm:$0xff]
        %v2690 = vld [vmem:[%s10 + $0x18] sm:$0xff]
        %v2691 = vld [vmem:[%s10 + $0x20] sm:$0xff]
        %v2692 = vld [vmem:[%s10 + $0x28] sm:$0xff]
        %v2693 = vld [vmem:[%s10 + $0x30] sm:$0xff]
        %v2694 = vld [vmem:[%s10 + $0x38] sm:$0xff]
        %v2695 = vld [vmem:[%s10 + $0x40] sm:$0xff]
        %v2696 = vld [vmem:[%s10 + $0x48] sm:$0xff]
        %v2697 = vld [vmem:[%s10 + $0x50] sm:$0xff]
        %v2698 = vld [vmem:[%s10 + $0x58] sm:$0xff]
        %v2699 = vld [vmem:[%s10 + $0x60] sm:$0xff]
        %v2700 = vld [vmem:[%s10 + $0x68] sm:$0xff]
        %v2701 = vld [vmem:[%s10 + $0x70] sm:$0xff]
        %v2702 = vld [vmem:[%s10 + $0x78] sm:$0xff]
        %v2703 = vld [vmem:[%s10 + $0x80] sm:$0xff]
        %v2704 = vld [vmem:[%s10 + $0x88] sm:$0xff]
        %v2705 = vld [vmem:[%s10 + $0x90] sm:$0xff]
        %v2706 = vld [vmem:[%s10 + $0x98] sm:$0xff]
        %v2707 = vld [vmem:[%s10 + $0xa0] sm:$0xff]
        %v2708 = vld [vmem:[%s10 + $0xa8] sm:$0xff]
        %v2709 = vld [vmem:[%s10 + $0xb0] sm:$0xff]
        %v2710 = vld [vmem:[%s10 + $0xb8] sm:$0xff]
        %v2711 = vld [vmem:[%s10 + $0xc0] sm:$0xff]
        %v2712 = vld [vmem:[%s10 + $0xc8] sm:$0xff]
        %v2713 = vld [vmem:[%s10 + $0xd0] sm:$0xff]
        %v2714 = vld [vmem:[%s10 + $0xd8] sm:$0xff]
        %v2715 = vld [vmem:[%s10 + $0xe0] sm:$0xff]
        %v2716 = vld [vmem:[%s10 + $0xe8] sm:$0xff]
        %v2717 = vld [vmem:[%s10 + $0xf0] sm:$0xff]
        %v2718 = vld [vmem:[%s10 + $0xf8] sm:$0xff]
        %v2719 = vld [vmem:[%s10 + $0x100] sm:$0xff]
        %v2720 = vld [vmem:[%s10 + $0x108] sm:$0xff]
        %v2721 = vld [vmem:[%s10 + $0x110] sm:$0xff]
        %v2722 = vld [vmem:[%s10 + $0x118] sm:$0xff]
        %v2723 = vld [vmem:[%s10 + $0x120] sm:$0xff]
        %v2724 = vld [vmem:[%s10 + $0x128] sm:$0xff]
        %v2725 = vld [vmem:[%s10 + $0x130] sm:$0xff]
        %v2726 = vld [vmem:[%s10 + $0x138] sm:$0xff]
        %v2727 = vld [vmem:[%s10 + $0x140] sm:$0xff]
        %v2728 = vld [vmem:[%s10 + $0x148] sm:$0xff]
        %v2729 = vld [vmem:[%s10 + $0x150] sm:$0xff]
        %v2730 = vld [vmem:[%s10 + $0x158] sm:$0xff]
        %v2731 = vld [vmem:[%s10 + $0x160] sm:$0xff]
        %v2732 = vld [vmem:[%s10 + $0x168] sm:$0xff]
        %v2733 = vld [vmem:[%s10 + $0x170] sm:$0xff]
        %v2734 = vld [vmem:[%s10 + $0x178] sm:$0xff]
        %v2735 = vld [vmem:[%s10 + $0x180] sm:$0xff]
        %v2736 = vld [vmem:[%s10 + $0x188] sm:$0xff]
        %v2737 = vld [vmem:[%s10 + $0x190] sm:$0xff]
        %v2738 = vld [vmem:[%s10 + $0x198] sm:$0xff]
        %v2739 = vld [vmem:[%s10 + $0x1a0] sm:$0xff]
        %v2740 = vld [vmem:[%s10 + $0x1a8] sm:$0xff]
        %v2741 = vld [vmem:[%s10 + $0x1b0] sm:$0xff]
        %v2742 = vld [vmem:[%s10 + $0x1b8] sm:$0xff]
        %v2743 = vld [vmem:[%s10 + $0x1c0] sm:$0xff]
        %v2744 = vld [vmem:[%s10 + $0x1c8] sm:$0xff]
        %v2745 = vld [vmem:[%s10 + $0x1d0] sm:$0xff]
        %v2746 = vld [vmem:[%s10 + $0x1d8] sm:$0xff]
        %v2747 = vld [vmem:[%s10 + $0x1e0] sm:$0xff]
        %v2748 = vld [vmem:[%s10 + $0x1e8] sm:$0xff]
        %v2749 = vld [vmem:[%s10 + $0x1f0] sm:$0xff]
        %v2750 = vld [vmem:[%s10 + $0x1f8] sm:$0xff]
        %v2751 = vld [vmem:[%s10 + $0x200] sm:$0xff]
        %v2752 = vld [vmem:[%s10 + $0x208] sm:$0xff]
        %v2753 = vld [vmem:[%s10 + $0x210] sm:$0xff]
        %v2754 = vld [vmem:[%s10 + $0x218] sm:$0xff]
        %v2755 = vld [vmem:[%s10 + $0x220] sm:$0xff]
        %v2756 = vld [vmem:[%s10 + $0x228] sm:$0xff]
        %v2757 = vld [vmem:[%s10 + $0x230] sm:$0xff]
        %v2758 = vld [vmem:[%s10 + $0x238] sm:$0xff]
        %v2759 = vld [vmem:[%s10 + $0x240] sm:$0xff]
        %v2760 = vld [vmem:[%s10 + $0x248] sm:$0xff]
        %v2761 = vld [vmem:[%s10 + $0x250] sm:$0xff]
        %v2762 = vld [vmem:[%s10 + $0x258] sm:$0xff]
        %v2763 = vld [vmem:[%s10 + $0x260] sm:$0xff]
        %v2764 = vld [vmem:[%s10 + $0x268] sm:$0xff]
        %v2765 = vld [vmem:[%s10 + $0x270] sm:$0xff]
        %v2766 = vld [vmem:[%s10 + $0x278] sm:$0xff]
        %v2767 = vld [vmem:[%s10 + $0x280] sm:$0xff]
        %v2768 = vld [vmem:[%s10 + $0x288] sm:$0xff]
        %v2769 = vld [vmem:[%s10 + $0x290] sm:$0xff]
        %v2770 = vld [vmem:[%s10 + $0x298] sm:$0xff]
        %v2771 = vld [vmem:[%s10 + $0x2a0] sm:$0xff]
        %v2772 = vld [vmem:[%s10 + $0x2a8] sm:$0xff]
        %v2773 = vld [vmem:[%s10 + $0x2b0] sm:$0xff]
        %v2774 = vld [vmem:[%s10 + $0x2b8] sm:$0xff]
        %v2775 = vld [vmem:[%s10 + $0x2c0] sm:$0xff]
        %v2776 = vld [vmem:[%s10 + $0x2c8] sm:$0xff]
        %v2777 = vld [vmem:[%s10 + $0x2d0] sm:$0xff]
        %v2778 = vld [vmem:[%s10 + $0x2d8] sm:$0xff]
        %v2779 = vld [vmem:[%s10 + $0x2e0] sm:$0xff]
        %v2780 = vld [vmem:[%s10 + $0x2e8] sm:$0xff]
        %v2781 = vld [vmem:[%s10 + $0x2f0] sm:$0xff]
        %v2782 = vld [vmem:[%s10 + $0x2f8] sm:$0xff]
        %v2879 = vunpack.c.l.b16 %v2687
        %v2880 = vunpack.c.h.b16 %v2687
        %v2881 = vunpack.c.l.b16 %v2688
        %v2882 = vunpack.c.h.b16 %v2688
        %v2883 = vunpack.c.l.b16 %v2689
        %v2884 = vunpack.c.h.b16 %v2689
        %v2885 = vunpack.c.l.b16 %v2690
        %v2886 = vunpack.c.h.b16 %v2690
        %v2887 = vunpack.c.l.b16 %v2691
        %v2888 = vunpack.c.h.b16 %v2691
        %v2889 = vunpack.c.l.b16 %v2692
        %v2890 = vunpack.c.h.b16 %v2692
        %v2891 = vunpack.c.l.b16 %v2693
        %v2892 = vunpack.c.h.b16 %v2693
        %v2893 = vunpack.c.l.b16 %v2694
        %v2894 = vunpack.c.h.b16 %v2694
        %v2895 = vunpack.c.l.b16 %v2695
        %v2896 = vunpack.c.h.b16 %v2695
        %v2897 = vunpack.c.l.b16 %v2696
        %v2898 = vunpack.c.h.b16 %v2696
        %v2899 = vunpack.c.l.b16 %v2697
        %v2900 = vunpack.c.h.b16 %v2697
        %v2901 = vunpack.c.l.b16 %v2698
        %v2902 = vunpack.c.h.b16 %v2698
        %v2903 = vunpack.c.l.b16 %v2699
        %v2904 = vunpack.c.h.b16 %v2699
        %v2905 = vunpack.c.l.b16 %v2700
        %v2906 = vunpack.c.h.b16 %v2700
        %v2907 = vunpack.c.l.b16 %v2701
        %v2908 = vunpack.c.h.b16 %v2701
        %v2909 = vunpack.c.l.b16 %v2702
        %v2910 = vunpack.c.h.b16 %v2702
        %v2911 = vunpack.c.l.b16 %v2703
        %v2912 = vunpack.c.h.b16 %v2703
        %v2913 = vunpack.c.l.b16 %v2704
        %v2914 = vunpack.c.h.b16 %v2704
        %v2915 = vunpack.c.l.b16 %v2705
        %v2916 = vunpack.c.h.b16 %v2705
        %v2917 = vunpack.c.l.b16 %v2706
        %v2918 = vunpack.c.h.b16 %v2706
        %v2919 = vunpack.c.l.b16 %v2707
        %v2920 = vunpack.c.h.b16 %v2707
        %v2921 = vunpack.c.l.b16 %v2708
        %v2922 = vunpack.c.h.b16 %v2708
        %v2923 = vunpack.c.l.b16 %v2709
        %v2924 = vunpack.c.h.b16 %v2709
        %v2925 = vunpack.c.l.b16 %v2710
        %v2926 = vunpack.c.h.b16 %v2710
        %v2927 = vunpack.c.l.b16 %v2711
        %v2928 = vunpack.c.h.b16 %v2711
        %v2929 = vunpack.c.l.b16 %v2712
        %v2930 = vunpack.c.h.b16 %v2712
        %v2931 = vunpack.c.l.b16 %v2713
        %v2932 = vunpack.c.h.b16 %v2713
        %v2933 = vunpack.c.l.b16 %v2714
        %v2934 = vunpack.c.h.b16 %v2714
        %v2935 = vunpack.c.l.b16 %v2715
        %v2936 = vunpack.c.h.b16 %v2715
        %v2937 = vunpack.c.l.b16 %v2716
        %v2938 = vunpack.c.h.b16 %v2716
        %v2939 = vunpack.c.l.b16 %v2717
        %v2940 = vunpack.c.h.b16 %v2717
        %v2941 = vunpack.c.l.b16 %v2718
        %v2942 = vunpack.c.h.b16 %v2718
        %v2943 = vunpack.c.l.b16 %v2719
        %v2944 = vunpack.c.h.b16 %v2719
        %v2945 = vunpack.c.l.b16 %v2720
        %v2946 = vunpack.c.h.b16 %v2720
        %v2947 = vunpack.c.l.b16 %v2721
        %v2948 = vunpack.c.h.b16 %v2721
        %v2949 = vunpack.c.l.b16 %v2722
        %v2950 = vunpack.c.h.b16 %v2722
        %v2951 = vunpack.c.l.b16 %v2723
        %v2952 = vunpack.c.h.b16 %v2723
        %v2953 = vunpack.c.l.b16 %v2724
        %v2954 = vunpack.c.h.b16 %v2724
        %v2955 = vunpack.c.l.b16 %v2725
        %v2956 = vunpack.c.h.b16 %v2725
        %v2957 = vunpack.c.l.b16 %v2726
        %v2958 = vunpack.c.h.b16 %v2726
        %v2959 = vunpack.c.l.b16 %v2727
        %v2960 = vunpack.c.h.b16 %v2727
        %v2961 = vunpack.c.l.b16 %v2728
        %v2962 = vunpack.c.h.b16 %v2728
        %v2963 = vunpack.c.l.b16 %v2729
        %v2964 = vunpack.c.h.b16 %v2729
        %v2965 = vunpack.c.l.b16 %v2730
        %v2966 = vunpack.c.h.b16 %v2730
        %v2967 = vunpack.c.l.b16 %v2731
        %v2968 = vunpack.c.h.b16 %v2731
        %v2969 = vunpack.c.l.b16 %v2732
        %v2970 = vunpack.c.h.b16 %v2732
        %v2971 = vunpack.c.l.b16 %v2733
        %v2972 = vunpack.c.h.b16 %v2733
        %v2973 = vunpack.c.l.b16 %v2734
        %v2974 = vunpack.c.h.b16 %v2734
        %v2975 = vunpack.c.l.b16 %v2735
        %v2976 = vunpack.c.h.b16 %v2735
        %v2977 = vunpack.c.l.b16 %v2736
        %v2978 = vunpack.c.h.b16 %v2736
        %v2979 = vunpack.c.l.b16 %v2737
        %v2980 = vunpack.c.h.b16 %v2737
        %v2981 = vunpack.c.l.b16 %v2738
        %v2982 = vunpack.c.h.b16 %v2738
        %v2983 = vunpack.c.l.b16 %v2739
        %v2984 = vunpack.c.h.b16 %v2739
        %v2985 = vunpack.c.l.b16 %v2740
        %v2986 = vunpack.c.h.b16 %v2740
        %v2987 = vunpack.c.l.b16 %v2741
        %v2988 = vunpack.c.h.b16 %v2741
        %v2989 = vunpack.c.l.b16 %v2742
        %v2990 = vunpack.c.h.b16 %v2742
        %v2991 = vunpack.c.l.b16 %v2743
        %v2992 = vunpack.c.h.b16 %v2743
        %v2993 = vunpack.c.l.b16 %v2744
        %v2994 = vunpack.c.h.b16 %v2744
        %v2995 = vunpack.c.l.b16 %v2745
        %v2996 = vunpack.c.h.b16 %v2745
        %v2997 = vunpack.c.l.b16 %v2746
        %v2998 = vunpack.c.h.b16 %v2746
        %v2999 = vunpack.c.l.b16 %v2747
        %v3000 = vunpack.c.h.b16 %v2747
        %v3001 = vunpack.c.l.b16 %v2748
        %v3002 = vunpack.c.h.b16 %v2748
        %v3003 = vunpack.c.l.b16 %v2749
        %v3004 = vunpack.c.h.b16 %v2749
        %v3005 = vunpack.c.l.b16 %v2750
        %v3006 = vunpack.c.h.b16 %v2750
        %v3007 = vunpack.c.l.b16 %v2751
        %v3008 = vunpack.c.h.b16 %v2751
        %v3009 = vunpack.c.l.b16 %v2752
        %v3010 = vunpack.c.h.b16 %v2752
        %v3011 = vunpack.c.l.b16 %v2753
        %v3012 = vunpack.c.h.b16 %v2753
        %v3013 = vunpack.c.l.b16 %v2754
        %v3014 = vunpack.c.h.b16 %v2754
        %v3015 = vunpack.c.l.b16 %v2755
        %v3016 = vunpack.c.h.b16 %v2755
        %v3017 = vunpack.c.l.b16 %v2756
        %v3018 = vunpack.c.h.b16 %v2756
        %v3019 = vunpack.c.l.b16 %v2757
        %v3020 = vunpack.c.h.b16 %v2757
        %v3021 = vunpack.c.l.b16 %v2758
        %v3022 = vunpack.c.h.b16 %v2758
        %v3023 = vunpack.c.l.b16 %v2759
        %v3024 = vunpack.c.h.b16 %v2759
        %v3025 = vunpack.c.l.b16 %v2760
        %v3026 = vunpack.c.h.b16 %v2760
        %v3027 = vunpack.c.l.b16 %v2761
        %v3028 = vunpack.c.h.b16 %v2761
        %v3029 = vunpack.c.l.b16 %v2762
        %v3030 = vunpack.c.h.b16 %v2762
        %v3031 = vunpack.c.l.b16 %v2763
        %v3032 = vunpack.c.h.b16 %v2763
        %v3033 = vunpack.c.l.b16 %v2764
        %v3034 = vunpack.c.h.b16 %v2764
        %v3035 = vunpack.c.l.b16 %v2765
        %v3036 = vunpack.c.h.b16 %v2765
        %v3037 = vunpack.c.l.b16 %v2766
        %v3038 = vunpack.c.h.b16 %v2766
        %v3039 = vunpack.c.l.b16 %v2767
        %v3040 = vunpack.c.h.b16 %v2767
        %v3041 = vunpack.c.l.b16 %v2768
        %v3042 = vunpack.c.h.b16 %v2768
        %v3043 = vunpack.c.l.b16 %v2769
        %v3044 = vunpack.c.h.b16 %v2769
        %v3045 = vunpack.c.l.b16 %v2770
        %v3046 = vunpack.c.h.b16 %v2770
        %v3047 = vunpack.c.l.b16 %v2771
        %v3048 = vunpack.c.h.b16 %v2771
        %v3049 = vunpack.c.l.b16 %v2772
        %v3050 = vunpack.c.h.b16 %v2772
        %v3051 = vunpack.c.l.b16 %v2773
        %v3052 = vunpack.c.h.b16 %v2773
        %v3053 = vunpack.c.l.b16 %v2774
        %v3054 = vunpack.c.h.b16 %v2774
        %v3055 = vunpack.c.l.b16 %v2775
        %v3056 = vunpack.c.h.b16 %v2775
        %v3057 = vunpack.c.l.b16 %v2776
        %v3058 = vunpack.c.h.b16 %v2776
        %v3059 = vunpack.c.l.b16 %v2777
        %v3060 = vunpack.c.h.b16 %v2777
        %v3061 = vunpack.c.l.b16 %v2778
        %v3062 = vunpack.c.h.b16 %v2778
        %v3063 = vunpack.c.l.b16 %v2779
        %v3064 = vunpack.c.h.b16 %v2779
        %v3065 = vunpack.c.l.b16 %v2780
        %v3066 = vunpack.c.h.b16 %v2780
        %v3067 = vunpack.c.l.b16 %v2781
        %v3068 = vunpack.c.h.b16 %v2781
        %v3069 = vunpack.c.l.b16 %v2782
        %v3070 = vunpack.c.h.b16 %v2782
        %v3071 = vpack.c.b16 %v2881, %v2879
        %v3072 = vpack.c.b16 %v2882, %v2880
        %v3073 = vpack.c.b16 %v2885, %v2883
        %v3074 = vpack.c.b16 %v2886, %v2884
        %v3075 = vpack.c.b16 %v2889, %v2887
        %v3076 = vpack.c.b16 %v2890, %v2888
        %v3077 = vpack.c.b16 %v2893, %v2891
        %v3078 = vpack.c.b16 %v2894, %v2892
        %v3079 = vpack.c.b16 %v2897, %v2895
        %v3080 = vpack.c.b16 %v2898, %v2896
        %v3081 = vpack.c.b16 %v2901, %v2899
        %v3082 = vpack.c.b16 %v2902, %v2900
        %v3083 = vpack.c.b16 %v2905, %v2903
        %v3084 = vpack.c.b16 %v2906, %v2904
        %v3085 = vpack.c.b16 %v2909, %v2907
        %v3086 = vpack.c.b16 %v2910, %v2908
        %v3087 = vpack.c.b16 %v2913, %v2911
        %v3088 = vpack.c.b16 %v2914, %v2912
        %v3089 = vpack.c.b16 %v2917, %v2915
        %v3090 = vpack.c.b16 %v2918, %v2916
        %v3091 = vpack.c.b16 %v2921, %v2919
        %v3092 = vpack.c.b16 %v2922, %v2920
        %v3093 = vpack.c.b16 %v2925, %v2923
        %v3094 = vpack.c.b16 %v2926, %v2924
        %v3095 = vpack.c.b16 %v2929, %v2927
        %v3096 = vpack.c.b16 %v2930, %v2928
        %v3097 = vpack.c.b16 %v2933, %v2931
        %v3098 = vpack.c.b16 %v2934, %v2932
        %v3099 = vpack.c.b16 %v2937, %v2935
        %v3100 = vpack.c.b16 %v2938, %v2936
        %v3101 = vpack.c.b16 %v2941, %v2939
        %v3102 = vpack.c.b16 %v2942, %v2940
        %v3103 = vpack.c.b16 %v2945, %v2943
        %v3104 = vpack.c.b16 %v2946, %v2944
        %v3105 = vpack.c.b16 %v2949, %v2947
        %v3106 = vpack.c.b16 %v2950, %v2948
        %v3107 = vpack.c.b16 %v2953, %v2951
        %v3108 = vpack.c.b16 %v2954, %v2952
        %v3109 = vpack.c.b16 %v2957, %v2955
        %v3110 = vpack.c.b16 %v2958, %v2956
        %v3111 = vpack.c.b16 %v2961, %v2959
        %v3112 = vpack.c.b16 %v2962, %v2960
        %v3113 = vpack.c.b16 %v2965, %v2963
        %v3114 = vpack.c.b16 %v2966, %v2964
        %v3115 = vpack.c.b16 %v2969, %v2967
        %v3116 = vpack.c.b16 %v2970, %v2968
        %v3117 = vpack.c.b16 %v2973, %v2971
        %v3118 = vpack.c.b16 %v2974, %v2972
        %v3119 = vpack.c.b16 %v2977, %v2975
        %v3120 = vpack.c.b16 %v2978, %v2976
        %v3121 = vpack.c.b16 %v2981, %v2979
        %v3122 = vpack.c.b16 %v2982, %v2980
        %v3123 = vpack.c.b16 %v2985, %v2983
        %v3124 = vpack.c.b16 %v2986, %v2984
        %v3125 = vpack.c.b16 %v2989, %v2987
        %v3126 = vpack.c.b16 %v2990, %v2988
        %v3127 = vpack.c.b16 %v2993, %v2991
        %v3128 = vpack.c.b16 %v2994, %v2992
        %v3129 = vpack.c.b16 %v2997, %v2995
        %v3130 = vpack.c.b16 %v2998, %v2996
        %v3131 = vpack.c.b16 %v3001, %v2999
        %v3132 = vpack.c.b16 %v3002, %v3000
        %v3133 = vpack.c.b16 %v3005, %v3003
        %v3134 = vpack.c.b16 %v3006, %v3004
        %v3135 = vpack.c.b16 %v3009, %v3007
        %v3136 = vpack.c.b16 %v3010, %v3008
        %v3137 = vpack.c.b16 %v3013, %v3011
        %v3138 = vpack.c.b16 %v3014, %v3012
        %v3139 = vpack.c.b16 %v3017, %v3015
        %v3140 = vpack.c.b16 %v3018, %v3016
        %v3141 = vpack.c.b16 %v3021, %v3019
        %v3142 = vpack.c.b16 %v3022, %v3020
        %v3143 = vpack.c.b16 %v3025, %v3023
        %v3144 = vpack.c.b16 %v3026, %v3024
        %v3145 = vpack.c.b16 %v3029, %v3027
        %v3146 = vpack.c.b16 %v3030, %v3028
        %v3147 = vpack.c.b16 %v3033, %v3031
        %v3148 = vpack.c.b16 %v3034, %v3032
        %v3149 = vpack.c.b16 %v3037, %v3035
        %v3150 = vpack.c.b16 %v3038, %v3036
        %v3151 = vpack.c.b16 %v3041, %v3039
        %v3152 = vpack.c.b16 %v3042, %v3040
        %v3153 = vpack.c.b16 %v3045, %v3043
        %v3154 = vpack.c.b16 %v3046, %v3044
        %v3155 = vpack.c.b16 %v3049, %v3047
        %v3156 = vpack.c.b16 %v3050, %v3048
        %v3157 = vpack.c.b16 %v3053, %v3051
        %v3158 = vpack.c.b16 %v3054, %v3052
        %v3159 = vpack.c.b16 %v3057, %v3055
        %v3160 = vpack.c.b16 %v3058, %v3056
        %v3161 = vpack.c.b16 %v3061, %v3059
        %v3162 = vpack.c.b16 %v3062, %v3060
        %v3163 = vpack.c.b16 %v3065, %v3063
        %v3164 = vpack.c.b16 %v3066, %v3064
        %v3165 = vpack.c.b16 %v3069, %v3067
        %v3166 = vpack.c.b16 %v3070, %v3068
        %3263 = vmatprep.subr.bf16.mxu0 %v3072
        %3264 = vmatpush1.bf16.msra.mxu0 %v3071
        %3265 = vmatprep.subr.bf16.mxu0 %v3074
        %3266 = vmatpush1.bf16.msra.mxu0 %v3073
        %3267 = vmatprep.subr.bf16.mxu0 %v3076
        %3268 = vmatpush1.bf16.msra.mxu0 %v3075
        %3269 = vmatprep.subr.bf16.mxu0 %v3078
        %3270 = vmatpush1.bf16.msra.mxu0 %v3077
        %3271 = vmatprep.subr.bf16.mxu0 %v3080
        %3272 = vmatpush1.bf16.msra.mxu0 %v3079
        %3273 = vmatprep.subr.bf16.mxu0 %v3082
        %3274 = vmatpush1.bf16.msra.mxu0 %v3081
        %3275 = vmatprep.subr.bf16.mxu0 %v3084
        %3276 = vmatpush1.bf16.msra.mxu0 %v3083
        %3277 = vmatprep.subr.bf16.mxu0 %v3086
        %3278 = vmatpush1.bf16.msra.mxu0 %v3085
        %3279 = vmatprep.subr.bf16.mxu0 %v3088
        %3280 = vmatpush1.bf16.msra.mxu0 %v3087
        %3281 = vmatprep.subr.bf16.mxu0 %v3090
        %3282 = vmatpush1.bf16.msra.mxu0 %v3089
        %3283 = vmatprep.subr.bf16.mxu0 %v3092
        %3284 = vmatpush1.bf16.msra.mxu0 %v3091
        %3285 = vmatprep.subr.bf16.mxu0 %v3094
        %3286 = vmatpush1.bf16.msra.mxu0 %v3093
        %3287 = vmatprep.subr.bf16.mxu0 %v3096
        %3288 = vmatpush1.bf16.msra.mxu0 %v3095
        %3289 = vmatprep.subr.bf16.mxu0 %v3098
        %3290 = vmatpush1.bf16.msra.mxu0 %v3097
        %3291 = vmatprep.subr.bf16.mxu0 %v3100
        %3292 = vmatpush1.bf16.msra.mxu0 %v3099
        %3293 = vmatprep.subr.bf16.mxu0 %v3102
        %3294 = vmatpush1.bf16.msra.mxu0 %v3101
        %3295 = vmatprep.mubr.bf16.mxu0 %v2590
        %3296 = vmatmul.mubr.bf16.gmra.mrb[0].mxu0 %v2589
        %v3297 = vpop.f32.mrb[0].mxu0
        %v3298 = vadd.f32 0.0, %v3297
        %v3299 = vpop.f32.mrb[0].mxu0
        %v3300 = vadd.f32 0.0, %v3299
        %v3301 = vpop.f32.mrb[0].mxu0
        %v3302 = vpop.f32.mrb[0].mxu0
        %3303 = vdwg.mxu0
        %3304 = vmatprep.subr.bf16.mxu0 %v3104
        %3305 = vmatpush1.bf16.msra.mxu0 %v3103
        %3306 = vmatprep.subr.bf16.mxu0 %v3106
        %3307 = vmatpush1.bf16.msra.mxu0 %v3105
        %3308 = vmatprep.subr.bf16.mxu0 %v3108
        %3309 = vmatpush1.bf16.msra.mxu0 %v3107
        %3310 = vmatprep.subr.bf16.mxu0 %v3110
        %3311 = vmatpush1.bf16.msra.mxu0 %v3109
        %3312 = vmatprep.subr.bf16.mxu0 %v3112
        %3313 = vmatpush1.bf16.msra.mxu0 %v3111
        %3314 = vmatprep.subr.bf16.mxu0 %v3114
        %3315 = vmatpush1.bf16.msra.mxu0 %v3113
        %3316 = vmatprep.subr.bf16.mxu0 %v3116
        %3317 = vmatpush1.bf16.msra.mxu0 %v3115
        %3318 = vmatprep.subr.bf16.mxu0 %v3118
        %3319 = vmatpush1.bf16.msra.mxu0 %v3117
        %3320 = vmatprep.subr.bf16.mxu0 %v3120
        %3321 = vmatpush1.bf16.msra.mxu0 %v3119
        %3322 = vmatprep.subr.bf16.mxu0 %v3122
        %3323 = vmatpush1.bf16.msra.mxu0 %v3121
        %3324 = vmatprep.subr.bf16.mxu0 %v3124
        %3325 = vmatpush1.bf16.msra.mxu0 %v3123
        %3326 = vmatprep.subr.bf16.mxu0 %v3126
        %3327 = vmatpush1.bf16.msra.mxu0 %v3125
        %3328 = vmatprep.subr.bf16.mxu0 %v3128
        %3329 = vmatpush1.bf16.msra.mxu0 %v3127
        %3330 = vmatprep.subr.bf16.mxu0 %v3130
        %3331 = vmatpush1.bf16.msra.mxu0 %v3129
        %3332 = vmatprep.subr.bf16.mxu0 %v3132
        %3333 = vmatpush1.bf16.msra.mxu0 %v3131
        %3334 = vmatprep.subr.bf16.mxu0 %v3134
        %3335 = vmatpush1.bf16.msra.mxu0 %v3133
        %3336 = vmatprep.mubr.bf16.mxu0 %v2638
        %3337 = vmatmul.mubr.bf16.gmra.mrb[0].mxu0 %v2637
        %v3338 = vpop.f32.mrb[0].mxu0
        %v3339 = vadd.f32 %v3298, %v3338
        %v3340 = vpop.f32.mrb[0].mxu0
        %v3341 = vadd.f32 %v3300, %v3340
        %v3342 = vpop.f32.mrb[0].mxu0
        %v3343 = vpop.f32.mrb[0].mxu0
        %3344 = vdwg.mxu0
        %3345 = vmatprep.subr.bf16.mxu0 %v3136
        %3346 = vmatpush1.bf16.msra.mxu0 %v3135
        %3347 = vmatprep.subr.bf16.mxu0 %v3138
        %3348 = vmatpush1.bf16.msra.mxu0 %v3137
        %3349 = vmatprep.subr.bf16.mxu0 %v3140
        %3350 = vmatpush1.bf16.msra.mxu0 %v3139
        %3351 = vmatprep.subr.bf16.mxu0 %v3142
        %3352 = vmatpush1.bf16.msra.mxu0 %v3141
        %3353 = vmatprep.subr.bf16.mxu0 %v3144
        %3354 = vmatpush1.bf16.msra.mxu0 %v3143
        %3355 = vmatprep.subr.bf16.mxu0 %v3146
        %3356 = vmatpush1.bf16.msra.mxu0 %v3145
        %3357 = vmatprep.subr.bf16.mxu0 %v3148
        %3358 = vmatpush1.bf16.msra.mxu0 %v3147
        %3359 = vmatprep.subr.bf16.mxu0 %v3150
        %3360 = vmatpush1.bf16.msra.mxu0 %v3149
        %3361 = vmatprep.subr.bf16.mxu0 %v3152
        %3362 = vmatpush1.bf16.msra.mxu0 %v3151
        %3363 = vmatprep.subr.bf16.mxu0 %v3154
        %3364 = vmatpush1.bf16.msra.mxu0 %v3153
        %3365 = vmatprep.subr.bf16.mxu0 %v3156
        %3366 = vmatpush1.bf16.msra.mxu0 %v3155
        %3367 = vmatprep.subr.bf16.mxu0 %v3158
        %3368 = vmatpush1.bf16.msra.mxu0 %v3157
        %3369 = vmatprep.subr.bf16.mxu0 %v3160
        %3370 = vmatpush1.bf16.msra.mxu0 %v3159
        %3371 = vmatprep.subr.bf16.mxu0 %v3162
        %3372 = vmatpush1.bf16.msra.mxu0 %v3161
        %3373 = vmatprep.subr.bf16.mxu0 %v3164
        %3374 = vmatpush1.bf16.msra.mxu0 %v3163
        %3375 = vmatprep.subr.bf16.mxu0 %v3166
        %3376 = vmatpush1.bf16.msra.mxu0 %v3165
        %3377 = vmatprep.mubr.bf16.mxu0 %v2686
        %3378 = vmatmul.mubr.bf16.gmra.mrb[0].mxu0 %v2685
        %v3379 = vpop.f32.mrb[0].mxu0
        %v3380 = vadd.f32 %v3339, %v3379
        %v3381 = vpop.f32.mrb[0].mxu0
        %v3382 = vadd.f32 %v3341, %v3381
        %v3383 = vpop.f32.mrb[0].mxu0
        %v3384 = vpop.f32.mrb[0].mxu0
        %3385 = vdwg.mxu0
        %v3386 = vld [vmem:[#allocation17] sm:$0x3]
        %v3388 = vlaneseq
        %v3389 = vshrl.u32 %v3388, 7
        %v3390 = vsub.s32 0, %v3389
        %v3391 = vrot.slane %v3386, %v3390
        %v3392 = vlaneseq
        %v3393 = vshrl.u32 %v3392, 7
        %v3394 = vsub.s32 1, %v3393
        %v3395 = vrot.slane %v3386, %v3394
        %v3398 = vmul.f32 %v3380, %v3391
        %v3399 = vmul.f32 %v3382, %v3395
        %v3400 = vld [vmem:[#allocation18] sm:$0x3]
        %v3402 = vlaneseq
        %v3403 = vshrl.u32 %v3402, 7
        %v3404 = vsub.s32 0, %v3403
        %v3405 = vrot.slane %v3400, %v3404
        %v3406 = vlaneseq
        %v3407 = vshrl.u32 %v3406, 7
        %v3408 = vsub.s32 1, %v3407
        %v3409 = vrot.slane %v3400, %v3408
        %v3412 = vadd.f32 %v3398, %v3405
        %v3413 = vadd.f32 %v3399, %v3409
        %v3414 = vmax.f32 %v3412, 0.0
        %v3415 = vmax.f32 %v3413, 0.0
        %v3416 = vpack.c.bf16 %v3414, %v3414
        %v3417 = vpack.c.bf16 %v3415, %v3415
        %v3418 = vld [vmem:[%s13] sm:$0x1]
        %vm3419 = vcmask 15360
        %v3421 = vsel %vm3419, %v3418, 0
        %vm3423 = vcmask 1040384
        %v3425 = vsel %vm3423, %v3416, 0
        %v3428 = vsel %vm3423, %v3417, 0
        %3430 = vmatprep.subr.bf16.mxu0 %v3428
        %3431 = vmatpush1.bf16.msra.mxu0 %v3425
        %3432 = vmatprep.subr.bf16.mxu0 0
        %3433 = vmatpush1.bf16.msra.mxu0 0
        %3434 = vmatprep.subr.bf16.mxu0 0
        %3435 = vmatpush1.bf16.msra.mxu0 0
        %3436 = vmatprep.subr.bf16.mxu0 0
        %3437 = vmatpush1.bf16.msra.mxu0 0
        %3438 = vmatprep.subr.bf16.mxu0 0
        %3439 = vmatpush1.bf16.msra.mxu0 0
        %3440 = vmatprep.subr.bf16.mxu0 0
        %3441 = vmatpush1.bf16.msra.mxu0 0
        %3442 = vmatprep.subr.bf16.mxu0 0
        %3443 = vmatpush1.bf16.msra.mxu0 0
        %3444 = vmatprep.subr.bf16.mxu0 0
        %3445 = vmatpush1.bf16.msra.mxu0 0
        %3446 = vmatprep.subr.bf16.mxu0 0
        %3447 = vmatpush1.bf16.msra.mxu0 0
        %3448 = vmatprep.subr.bf16.mxu0 0
        %3449 = vmatpush1.bf16.msra.mxu0 0
        %3450 = vmatprep.subr.bf16.mxu0 0
        %3451 = vmatpush1.bf16.msra.mxu0 0
        %3452 = vmatprep.subr.bf16.mxu0 0
        %3453 = vmatpush1.bf16.msra.mxu0 0
        %3454 = vmatprep.subr.bf16.mxu0 0
        %3455 = vmatpush1.bf16.msra.mxu0 0
        %3456 = vmatprep.subr.bf16.mxu0 0
        %3457 = vmatpush1.bf16.msra.mxu0 0
        %3458 = vmatprep.subr.bf16.mxu0 0
        %3459 = vmatpush1.bf16.msra.mxu0 0
        %3460 = vmatprep.subr.bf16.mxu0 0
        %3461 = vmatpush1.bf16.msra.mxu0 0
        %3462 = vmatprep.mubr.bf16.mxu0 0
        %3463 = vmatmul.mubr.bf16.gmra.mrb[0].mxu0 %v3421
        %v3464 = vpop.f32.mrb[0].mxu0
        %v3465 = vadd.f32 0.0, %v3464
        %v3466 = vpop.f32.mrb[0].mxu0
        %v3467 = vadd.f32 0.0, %v3466
        %v3468 = vpop.f32.mrb[0].mxu0
        %v3469 = vpop.f32.mrb[0].mxu0
        %3470 = vdwg.mxu0
        %v3471 = vpack.c.bf16 %v3465, %v3465
        %v3472 = vpack.c.bf16 %v3467, %v3467
        %s3473 = scalar_lea.vmem %s13, 1
        %v3474 = vld [vmem:[%s3473] sm:$0x1]
        %v3476 = vsel %vm3419, %v3474, 0
        %3478 = vmatprep.subr.bf16.mxu0 %v3428
        %3479 = vmatpush1.bf16.msra.mxu0 %v3425
        %3480 = vmatprep.subr.bf16.mxu0 0
        %3481 = vmatpush1.bf16.msra.mxu0 0
        %3482 = vmatprep.subr.bf16.mxu0 0
        %3483 = vmatpush1.bf16.msra.mxu0 0
        %3484 = vmatprep.subr.bf16.mxu0 0
        %3485 = vmatpush1.bf16.msra.mxu0 0
        %3486 = vmatprep.subr.bf16.mxu0 0
        %3487 = vmatpush1.bf16.msra.mxu0 0
        %3488 = vmatprep.subr.bf16.mxu0 0
        %3489 = vmatpush1.bf16.msra.mxu0 0
        %3490 = vmatprep.subr.bf16.mxu0 0
        %3491 = vmatpush1.bf16.msra.mxu0 0
        %3492 = vmatprep.subr.bf16.mxu0 0
        %3493 = vmatpush1.bf16.msra.mxu0 0
        %3494 = vmatprep.subr.bf16.mxu0 0
        %3495 = vmatpush1.bf16.msra.mxu0 0
        %3496 = vmatprep.subr.bf16.mxu0 0
        %3497 = vmatpush1.bf16.msra.mxu0 0
        %3498 = vmatprep.subr.bf16.mxu0 0
        %3499 = vmatpush1.bf16.msra.mxu0 0
        %3500 = vmatprep.subr.bf16.mxu0 0
        %3501 = vmatpush1.bf16.msra.mxu0 0
        %3502 = vmatprep.subr.bf16.mxu0 0
        %3503 = vmatpush1.bf16.msra.mxu0 0
        %3504 = vmatprep.subr.bf16.mxu0 0
        %3505 = vmatpush1.bf16.msra.mxu0 0
        %3506 = vmatprep.subr.bf16.mxu0 0
        %3507 = vmatpush1.bf16.msra.mxu0 0
        %3508 = vmatprep.subr.bf16.mxu0 0
        %3509 = vmatpush1.bf16.msra.mxu0 0
        %3510 = vmatprep.mubr.bf16.mxu0 0
        %3511 = vmatmul.mubr.bf16.gmra.mrb[0].mxu0 %v3476
        %v3512 = vpop.f32.mrb[0].mxu0
        %v3513 = vadd.f32 0.0, %v3512
        %v3514 = vpop.f32.mrb[0].mxu0
        %v3515 = vadd.f32 0.0, %v3514
        %v3516 = vpop.f32.mrb[0].mxu0
        %v3517 = vpop.f32.mrb[0].mxu0
        %3518 = vdwg.mxu0
        %v3519 = vpack.c.bf16 %v3513, %v3513
        %v3520 = vpack.c.bf16 %v3515, %v3515
        %s3521 = scalar_lea.vmem %s13, 2
        %v3522 = vld [vmem:[%s3521] sm:$0x1]
        %v3524 = vsel %vm3419, %v3522, 0
        %3526 = vmatprep.subr.bf16.mxu0 %v3428
        %3527 = vmatpush1.bf16.msra.mxu0 %v3425
        %3528 = vmatprep.subr.bf16.mxu0 0
        %3529 = vmatpush1.bf16.msra.mxu0 0
        %3530 = vmatprep.subr.bf16.mxu0 0
        %3531 = vmatpush1.bf16.msra.mxu0 0
        %3532 = vmatprep.subr.bf16.mxu0 0
        %3533 = vmatpush1.bf16.msra.mxu0 0
        %3534 = vmatprep.subr.bf16.mxu0 0
        %3535 = vmatpush1.bf16.msra.mxu0 0
        %3536 = vmatprep.subr.bf16.mxu0 0
        %3537 = vmatpush1.bf16.msra.mxu0 0
        %3538 = vmatprep.subr.bf16.mxu0 0
        %3539 = vmatpush1.bf16.msra.mxu0 0
        %3540 = vmatprep.subr.bf16.mxu0 0
        %3541 = vmatpush1.bf16.msra.mxu0 0
        %3542 = vmatprep.subr.bf16.mxu0 0
        %3543 = vmatpush1.bf16.msra.mxu0 0
        %3544 = vmatprep.subr.bf16.mxu0 0
        %3545 = vmatpush1.bf16.msra.mxu0 0
        %3546 = vmatprep.subr.bf16.mxu0 0
        %3547 = vmatpush1.bf16.msra.mxu0 0
        %3548 = vmatprep.subr.bf16.mxu0 0
        %3549 = vmatpush1.bf16.msra.mxu0 0
        %3550 = vmatprep.subr.bf16.mxu0 0
        %3551 = vmatpush1.bf16.msra.mxu0 0
        %3552 = vmatprep.subr.bf16.mxu0 0
        %3553 = vmatpush1.bf16.msra.mxu0 0
        %3554 = vmatprep.subr.bf16.mxu0 0
        %3555 = vmatpush1.bf16.msra.mxu0 0
        %3556 = vmatprep.subr.bf16.mxu0 0
        %3557 = vmatpush1.bf16.msra.mxu0 0
        %3558 = vmatprep.mubr.bf16.mxu0 0
        %3559 = vmatmul.mubr.bf16.gmra.mrb[0].mxu0 %v3524
        %v3560 = vpop.f32.mrb[0].mxu0
        %v3561 = vadd.f32 0.0, %v3560
        %v3562 = vpop.f32.mrb[0].mxu0
        %v3563 = vadd.f32 0.0, %v3562
        %v3564 = vpop.f32.mrb[0].mxu0
        %v3565 = vpop.f32.mrb[0].mxu0
        %3566 = vdwg.mxu0
        %v3567 = vpack.c.bf16 %v3561, %v3561
        %v3568 = vpack.c.bf16 %v3563, %v3563
        %v3569 = vld [vmem:[#allocation20] sm:$0xff]
        %v3570 = vld [vmem:[#allocation20 + $0x8] sm:$0xff]
        %v3571 = vld [vmem:[#allocation20 + $0x10] sm:$0xff]
        %v3572 = vld [vmem:[#allocation20 + $0x18] sm:$0xff]
        %v3573 = vld [vmem:[#allocation20 + $0x20] sm:$0xff]
        %v3574 = vld [vmem:[#allocation20 + $0x28] sm:$0xff]
        %v3575 = vld [vmem:[#allocation20 + $0x30] sm:$0xff]
        %v3576 = vld [vmem:[#allocation20 + $0x38] sm:$0xff]
        %v3577 = vld [vmem:[#allocation20 + $0x40] sm:$0xff]
        %v3578 = vld [vmem:[#allocation20 + $0x48] sm:$0xff]
        %v3579 = vld [vmem:[#allocation20 + $0x50] sm:$0xff]
        %v3580 = vld [vmem:[#allocation20 + $0x58] sm:$0xff]
        %v3581 = vld [vmem:[#allocation20 + $0x60] sm:$0xff]
        %v3582 = vld [vmem:[#allocation20 + $0x68] sm:$0xff]
        %v3583 = vld [vmem:[#allocation20 + $0x70] sm:$0xff]
        %v3584 = vld [vmem:[#allocation20 + $0x78] sm:$0xff]
        %v3585 = vld [vmem:[#allocation20 + $0x80] sm:$0xff]
        %v3586 = vld [vmem:[#allocation20 + $0x88] sm:$0xff]
        %v3587 = vld [vmem:[#allocation20 + $0x90] sm:$0xff]
        %v3588 = vld [vmem:[#allocation20 + $0x98] sm:$0xff]
        %v3589 = vld [vmem:[#allocation20 + $0xa0] sm:$0xff]
        %v3590 = vld [vmem:[#allocation20 + $0xa8] sm:$0xff]
        %v3591 = vld [vmem:[#allocation20 + $0xb0] sm:$0xff]
        %v3592 = vld [vmem:[#allocation20 + $0xb8] sm:$0xff]
        %v3593 = vld [vmem:[#allocation20 + $0xc0] sm:$0xff]
        %v3594 = vld [vmem:[#allocation20 + $0xc8] sm:$0xff]
        %v3595 = vld [vmem:[#allocation20 + $0xd0] sm:$0xff]
        %v3596 = vld [vmem:[#allocation20 + $0xd8] sm:$0xff]
        %v3597 = vld [vmem:[#allocation20 + $0xe0] sm:$0xff]
        %v3598 = vld [vmem:[#allocation20 + $0xe8] sm:$0xff]
        %v3599 = vld [vmem:[#allocation20 + $0xf0] sm:$0xff]
        %v3600 = vld [vmem:[#allocation20 + $0xf8] sm:$0xff]
        %v3601 = vld [vmem:[#allocation20 + $0x100] sm:$0xff]
        %v3602 = vld [vmem:[#allocation20 + $0x108] sm:$0xff]
        %v3603 = vld [vmem:[#allocation20 + $0x110] sm:$0xff]
        %v3604 = vld [vmem:[#allocation20 + $0x118] sm:$0xff]
        %v3605 = vld [vmem:[#allocation20 + $0x120] sm:$0xff]
        %v3606 = vld [vmem:[#allocation20 + $0x128] sm:$0xff]
        %v3607 = vld [vmem:[#allocation20 + $0x130] sm:$0xff]
        %v3608 = vld [vmem:[#allocation20 + $0x138] sm:$0xff]
        %v3609 = vld [vmem:[#allocation20 + $0x140] sm:$0xff]
        %v3610 = vld [vmem:[#allocation20 + $0x148] sm:$0xff]
        %v3611 = vld [vmem:[#allocation20 + $0x150] sm:$0xff]
        %v3612 = vld [vmem:[#allocation20 + $0x158] sm:$0xff]
        %v3613 = vld [vmem:[#allocation20 + $0x160] sm:$0xff]
        %v3614 = vld [vmem:[#allocation20 + $0x168] sm:$0xff]
        %v3615 = vld [vmem:[#allocation20 + $0x170] sm:$0xff]
        %v3616 = vld [vmem:[#allocation20 + $0x178] sm:$0xff]
        %v3617 = vld [vmem:[#allocation20 + $0x180] sm:$0xff]
        %v3618 = vld [vmem:[#allocation20 + $0x188] sm:$0xff]
        %v3619 = vld [vmem:[#allocation20 + $0x190] sm:$0xff]
        %v3620 = vld [vmem:[#allocation20 + $0x198] sm:$0xff]
        %v3621 = vld [vmem:[#allocation20 + $0x1a0] sm:$0xff]
        %v3622 = vld [vmem:[#allocation20 + $0x1a8] sm:$0xff]
        %v3623 = vld [vmem:[#allocation20 + $0x1b0] sm:$0xff]
        %v3624 = vld [vmem:[#allocation20 + $0x1b8] sm:$0xff]
        %v3625 = vld [vmem:[#allocation20 + $0x1c0] sm:$0xff]
        %v3626 = vld [vmem:[#allocation20 + $0x1c8] sm:$0xff]
        %v3627 = vld [vmem:[#allocation20 + $0x1d0] sm:$0xff]
        %v3628 = vld [vmem:[#allocation20 + $0x1d8] sm:$0xff]
        %v3629 = vld [vmem:[#allocation20 + $0x1e0] sm:$0xff]
        %v3630 = vld [vmem:[#allocation20 + $0x1e8] sm:$0xff]
        %v3631 = vld [vmem:[#allocation20 + $0x1f0] sm:$0xff]
        %v3632 = vld [vmem:[#allocation20 + $0x1f8] sm:$0xff]
        %v3633 = vld [vmem:[#allocation20 + $0x200] sm:$0xff]
        %v3634 = vld [vmem:[#allocation20 + $0x208] sm:$0xff]
        %v3635 = vld [vmem:[#allocation20 + $0x210] sm:$0xff]
        %v3636 = vld [vmem:[#allocation20 + $0x218] sm:$0xff]
        %v3637 = vld [vmem:[#allocation20 + $0x220] sm:$0xff]
        %v3638 = vld [vmem:[#allocation20 + $0x228] sm:$0xff]
        %v3639 = vld [vmem:[#allocation20 + $0x230] sm:$0xff]
        %v3640 = vld [vmem:[#allocation20 + $0x238] sm:$0xff]
        %v3641 = vld [vmem:[#allocation20 + $0x240] sm:$0xff]
        %v3642 = vld [vmem:[#allocation20 + $0x248] sm:$0xff]
        %v3643 = vld [vmem:[#allocation20 + $0x250] sm:$0xff]
        %v3644 = vld [vmem:[#allocation20 + $0x258] sm:$0xff]
        %v3645 = vld [vmem:[#allocation20 + $0x260] sm:$0xff]
        %v3646 = vld [vmem:[#allocation20 + $0x268] sm:$0xff]
        %v3647 = vld [vmem:[#allocation20 + $0x270] sm:$0xff]
        %v3648 = vld [vmem:[#allocation20 + $0x278] sm:$0xff]
        %v3649 = vld [vmem:[#allocation20 + $0x280] sm:$0xff]
        %v3650 = vld [vmem:[#allocation20 + $0x288] sm:$0xff]
        %v3651 = vld [vmem:[#allocation20 + $0x290] sm:$0xff]
        %v3652 = vld [vmem:[#allocation20 + $0x298] sm:$0xff]
        %v3653 = vld [vmem:[#allocation20 + $0x2a0] sm:$0xff]
        %v3654 = vld [vmem:[#allocation20 + $0x2a8] sm:$0xff]
        %v3655 = vld [vmem:[#allocation20 + $0x2b0] sm:$0xff]
        %v3656 = vld [vmem:[#allocation20 + $0x2b8] sm:$0xff]
        %v3657 = vld [vmem:[#allocation20 + $0x2c0] sm:$0xff]
        %v3658 = vld [vmem:[#allocation20 + $0x2c8] sm:$0xff]
        %v3659 = vld [vmem:[#allocation20 + $0x2d0] sm:$0xff]
        %v3660 = vld [vmem:[#allocation20 + $0x2d8] sm:$0xff]
        %v3661 = vld [vmem:[#allocation20 + $0x2e0] sm:$0xff]
        %v3662 = vld [vmem:[#allocation20 + $0x2e8] sm:$0xff]
        %v3663 = vld [vmem:[#allocation20 + $0x2f0] sm:$0xff]
        %v3664 = vld [vmem:[#allocation20 + $0x2f8] sm:$0xff]
        %v3665 = vld [vmem:[#allocation20 + $0x300] sm:$0xff]
        %v3666 = vld [vmem:[#allocation20 + $0x308] sm:$0xff]
        %v3667 = vld [vmem:[#allocation20 + $0x310] sm:$0xff]
        %v3668 = vld [vmem:[#allocation20 + $0x318] sm:$0xff]
        %v3669 = vld [vmem:[#allocation20 + $0x320] sm:$0xff]
        %v3670 = vld [vmem:[#allocation20 + $0x328] sm:$0xff]
        %v3671 = vld [vmem:[#allocation20 + $0x330] sm:$0xff]
        %v3672 = vld [vmem:[#allocation20 + $0x338] sm:$0xff]
        %v3673 = vld [vmem:[#allocation20 + $0x340] sm:$0xff]
        %v3674 = vld [vmem:[#allocation20 + $0x348] sm:$0xff]
        %v3675 = vld [vmem:[#allocation20 + $0x350] sm:$0xff]
        %v3676 = vld [vmem:[#allocation20 + $0x358] sm:$0xff]
        %v3677 = vld [vmem:[#allocation20 + $0x360] sm:$0xff]
        %v3678 = vld [vmem:[#allocation20 + $0x368] sm:$0xff]
        %v3679 = vld [vmem:[#allocation20 + $0x370] sm:$0xff]
        %v3680 = vld [vmem:[#allocation20 + $0x378] sm:$0xff]
        %v3681 = vld [vmem:[#allocation20 + $0x380] sm:$0xff]
        %v3682 = vld [vmem:[#allocation20 + $0x388] sm:$0xff]
        %v3683 = vld [vmem:[#allocation20 + $0x390] sm:$0xff]
        %v3684 = vld [vmem:[#allocation20 + $0x398] sm:$0xff]
        %v3685 = vld [vmem:[#allocation20 + $0x3a0] sm:$0xff]
        %v3686 = vld [vmem:[#allocation20 + $0x3a8] sm:$0xff]
        %v3687 = vld [vmem:[#allocation20 + $0x3b0] sm:$0xff]
        %v3688 = vld [vmem:[#allocation20 + $0x3b8] sm:$0xff]
        %v3689 = vld [vmem:[#allocation20 + $0x3c0] sm:$0xff]
        %v3690 = vld [vmem:[#allocation20 + $0x3c8] sm:$0xff]
        %v3691 = vld [vmem:[#allocation20 + $0x3d0] sm:$0xff]
        %v3692 = vld [vmem:[#allocation20 + $0x3d8] sm:$0xff]
        %v3693 = vld [vmem:[#allocation20 + $0x3e0] sm:$0xff]
        %v3694 = vld [vmem:[#allocation20 + $0x3e8] sm:$0xff]
        %v3695 = vld [vmem:[#allocation20 + $0x3f0] sm:$0xff]
        %v3696 = vld [vmem:[#allocation20 + $0x3f8] sm:$0xff]
        %v3697 = vld [vmem:[#allocation20 + $0x400] sm:$0xff]
        %v3698 = vld [vmem:[#allocation20 + $0x408] sm:$0xff]
        %v3699 = vld [vmem:[#allocation20 + $0x410] sm:$0xff]
        %v3700 = vld [vmem:[#allocation20 + $0x418] sm:$0xff]
        %v3701 = vld [vmem:[#allocation20 + $0x420] sm:$0xff]
        %v3702 = vld [vmem:[#allocation20 + $0x428] sm:$0xff]
        %v3703 = vld [vmem:[#allocation20 + $0x430] sm:$0xff]
        %v3704 = vld [vmem:[#allocation20 + $0x438] sm:$0xff]
        %v3705 = vld [vmem:[#allocation20 + $0x440] sm:$0xff]
        %v3706 = vld [vmem:[#allocation20 + $0x448] sm:$0xff]
        %v3707 = vld [vmem:[#allocation20 + $0x450] sm:$0xff]
        %v3708 = vld [vmem:[#allocation20 + $0x458] sm:$0xff]
        %v3709 = vld [vmem:[#allocation20 + $0x460] sm:$0xff]
        %v3710 = vld [vmem:[#allocation20 + $0x468] sm:$0xff]
        %v3711 = vld [vmem:[#allocation20 + $0x470] sm:$0xff]
        %v3712 = vld [vmem:[#allocation20 + $0x478] sm:$0xff]
        %v3713 = vld [vmem:[#allocation20 + $0x480] sm:$0xff]
        %v3714 = vld [vmem:[#allocation20 + $0x488] sm:$0xff]
        %v3715 = vld [vmem:[#allocation20 + $0x490] sm:$0xff]
        %v3716 = vld [vmem:[#allocation20 + $0x498] sm:$0xff]
        %v3717 = vld [vmem:[#allocation20 + $0x4a0] sm:$0xff]
        %v3718 = vld [vmem:[#allocation20 + $0x4a8] sm:$0xff]
        %v3719 = vld [vmem:[#allocation20 + $0x4b0] sm:$0xff]
        %v3720 = vld [vmem:[#allocation20 + $0x4b8] sm:$0xff]
        %v3721 = vld [vmem:[#allocation20 + $0x4c0] sm:$0xff]
        %v3722 = vld [vmem:[#allocation20 + $0x4c8] sm:$0xff]
        %v3723 = vld [vmem:[#allocation20 + $0x4d0] sm:$0xff]
        %v3724 = vld [vmem:[#allocation20 + $0x4d8] sm:$0xff]
        %v3725 = vld [vmem:[#allocation20 + $0x4e0] sm:$0xff]
        %v3726 = vld [vmem:[#allocation20 + $0x4e8] sm:$0xff]
        %v3727 = vld [vmem:[#allocation20 + $0x4f0] sm:$0xff]
        %v3728 = vld [vmem:[#allocation20 + $0x4f8] sm:$0xff]
        %v3729 = vld [vmem:[#allocation20 + $0x500] sm:$0xff]
        %v3730 = vld [vmem:[#allocation20 + $0x508] sm:$0xff]
        %v3731 = vld [vmem:[#allocation20 + $0x510] sm:$0xff]
        %v3732 = vld [vmem:[#allocation20 + $0x518] sm:$0xff]
        %v3733 = vld [vmem:[#allocation20 + $0x520] sm:$0xff]
        %v3734 = vld [vmem:[#allocation20 + $0x528] sm:$0xff]
        %v3735 = vld [vmem:[#allocation20 + $0x530] sm:$0xff]
        %v3736 = vld [vmem:[#allocation20 + $0x538] sm:$0xff]
        %v3737 = vld [vmem:[#allocation20 + $0x540] sm:$0xff]
        %v3738 = vld [vmem:[#allocation20 + $0x548] sm:$0xff]
        %v3739 = vld [vmem:[#allocation20 + $0x550] sm:$0xff]
        %v3740 = vld [vmem:[#allocation20 + $0x558] sm:$0xff]
        %v3741 = vld [vmem:[#allocation20 + $0x560] sm:$0xff]
        %v3742 = vld [vmem:[#allocation20 + $0x568] sm:$0xff]
        %v3743 = vld [vmem:[#allocation20 + $0x570] sm:$0xff]
        %v3744 = vld [vmem:[#allocation20 + $0x578] sm:$0xff]
        %v3745 = vld [vmem:[#allocation20 + $0x580] sm:$0xff]
        %v3746 = vld [vmem:[#allocation20 + $0x588] sm:$0xff]
        %v3747 = vld [vmem:[#allocation20 + $0x590] sm:$0xff]
        %v3748 = vld [vmem:[#allocation20 + $0x598] sm:$0xff]
        %v3749 = vld [vmem:[#allocation20 + $0x5a0] sm:$0xff]
        %v3750 = vld [vmem:[#allocation20 + $0x5a8] sm:$0xff]
        %v3751 = vld [vmem:[#allocation20 + $0x5b0] sm:$0xff]
        %v3752 = vld [vmem:[#allocation20 + $0x5b8] sm:$0xff]
        %v3753 = vld [vmem:[#allocation20 + $0x5c0] sm:$0xff]
        %v3754 = vld [vmem:[#allocation20 + $0x5c8] sm:$0xff]
        %v3755 = vld [vmem:[#allocation20 + $0x5d0] sm:$0xff]
        %v3756 = vld [vmem:[#allocation20 + $0x5d8] sm:$0xff]
        %v3757 = vld [vmem:[#allocation20 + $0x5e0] sm:$0xff]
        %v3758 = vld [vmem:[#allocation20 + $0x5e8] sm:$0xff]
        %v3759 = vld [vmem:[#allocation20 + $0x5f0] sm:$0xff]
        %v3760 = vld [vmem:[#allocation20 + $0x5f8] sm:$0xff]
        %v3761 = vld [vmem:[#allocation20 + $0x600] sm:$0xff]
        %v3762 = vld [vmem:[#allocation20 + $0x608] sm:$0xff]
        %v3763 = vld [vmem:[#allocation20 + $0x610] sm:$0xff]
        %v3764 = vld [vmem:[#allocation20 + $0x618] sm:$0xff]
        %v3765 = vld [vmem:[#allocation20 + $0x620] sm:$0xff]
        %v3766 = vld [vmem:[#allocation20 + $0x628] sm:$0xff]
        %v3767 = vld [vmem:[#allocation20 + $0x630] sm:$0xff]
        %v3768 = vld [vmem:[#allocation20 + $0x638] sm:$0xff]
        %v3769 = vld [vmem:[#allocation20 + $0x640] sm:$0xff]
        %v3770 = vld [vmem:[#allocation20 + $0x648] sm:$0xff]
        %v3771 = vld [vmem:[#allocation20 + $0x650] sm:$0xff]
        %v3772 = vld [vmem:[#allocation20 + $0x658] sm:$0xff]
        %v3773 = vld [vmem:[#allocation20 + $0x660] sm:$0xff]
        %v3774 = vld [vmem:[#allocation20 + $0x668] sm:$0xff]
        %v3775 = vld [vmem:[#allocation20 + $0x670] sm:$0xff]
        %v3776 = vld [vmem:[#allocation20 + $0x678] sm:$0xff]
        %v3777 = vld [vmem:[#allocation20 + $0x680] sm:$0xff]
        %v3778 = vld [vmem:[#allocation20 + $0x688] sm:$0xff]
        %v3779 = vld [vmem:[#allocation20 + $0x690] sm:$0xff]
        %v3780 = vld [vmem:[#allocation20 + $0x698] sm:$0xff]
        %v3781 = vld [vmem:[#allocation20 + $0x6a0] sm:$0xff]
        %v3782 = vld [vmem:[#allocation20 + $0x6a8] sm:$0xff]
        %v3783 = vld [vmem:[#allocation20 + $0x6b0] sm:$0xff]
        %v3784 = vld [vmem:[#allocation20 + $0x6b8] sm:$0xff]
        %v3785 = vld [vmem:[#allocation20 + $0x6c0] sm:$0xff]
        %v3786 = vld [vmem:[#allocation20 + $0x6c8] sm:$0xff]
        %v3787 = vld [vmem:[#allocation20 + $0x6d0] sm:$0xff]
        %v3788 = vld [vmem:[#allocation20 + $0x6d8] sm:$0xff]
        %v3789 = vld [vmem:[#allocation20 + $0x6e0] sm:$0xff]
        %v3790 = vld [vmem:[#allocation20 + $0x6e8] sm:$0xff]
        %v3791 = vld [vmem:[#allocation20 + $0x6f0] sm:$0xff]
        %v3792 = vld [vmem:[#allocation20 + $0x6f8] sm:$0xff]
        %v3793 = vld [vmem:[#allocation20 + $0x700] sm:$0xff]
        %v3794 = vld [vmem:[#allocation20 + $0x708] sm:$0xff]
        %v3795 = vld [vmem:[#allocation20 + $0x710] sm:$0xff]
        %v3796 = vld [vmem:[#allocation20 + $0x718] sm:$0xff]
        %v3797 = vld [vmem:[#allocation20 + $0x720] sm:$0xff]
        %v3798 = vld [vmem:[#allocation20 + $0x728] sm:$0xff]
        %v3799 = vld [vmem:[#allocation20 + $0x730] sm:$0xff]
        %v3800 = vld [vmem:[#allocation20 + $0x738] sm:$0xff]
        %v3801 = vld [vmem:[#allocation20 + $0x740] sm:$0xff]
        %v3802 = vld [vmem:[#allocation20 + $0x748] sm:$0xff]
        %v3803 = vld [vmem:[#allocation20 + $0x750] sm:$0xff]
        %v3804 = vld [vmem:[#allocation20 + $0x758] sm:$0xff]
        %v3805 = vld [vmem:[#allocation20 + $0x760] sm:$0xff]
        %v3806 = vld [vmem:[#allocation20 + $0x768] sm:$0xff]
        %v3807 = vld [vmem:[#allocation20 + $0x770] sm:$0xff]
        %v3808 = vld [vmem:[#allocation20 + $0x778] sm:$0xff]
        %v3809 = vld [vmem:[#allocation20 + $0x780] sm:$0xff]
        %v3810 = vld [vmem:[#allocation20 + $0x788] sm:$0xff]
        %v3811 = vld [vmem:[#allocation20 + $0x790] sm:$0xff]
        %v3812 = vld [vmem:[#allocation20 + $0x798] sm:$0xff]
        %v3813 = vld [vmem:[#allocation20 + $0x7a0] sm:$0xff]
        %v3814 = vld [vmem:[#allocation20 + $0x7a8] sm:$0xff]
        %v3815 = vld [vmem:[#allocation20 + $0x7b0] sm:$0xff]
        %v3816 = vld [vmem:[#allocation20 + $0x7b8] sm:$0xff]
        %v3817 = vld [vmem:[#allocation20 + $0x7c0] sm:$0xff]
        %v3818 = vld [vmem:[#allocation20 + $0x7c8] sm:$0xff]
        %v3819 = vld [vmem:[#allocation20 + $0x7d0] sm:$0xff]
        %v3820 = vld [vmem:[#allocation20 + $0x7d8] sm:$0xff]
        %v3821 = vld [vmem:[#allocation20 + $0x7e0] sm:$0xff]
        %v3822 = vld [vmem:[#allocation20 + $0x7e8] sm:$0xff]
        %v3823 = vld [vmem:[#allocation20 + $0x7f0] sm:$0xff]
        %v3824 = vld [vmem:[#allocation20 + $0x7f8] sm:$0xff]
        %v3825 = vld [vmem:[#allocation20 + $0x800] sm:$0xff]
        %v3826 = vld [vmem:[#allocation20 + $0x808] sm:$0xff]
        %v3827 = vld [vmem:[#allocation20 + $0x810] sm:$0xff]
        %v3828 = vld [vmem:[#allocation20 + $0x818] sm:$0xff]
        %v3829 = vld [vmem:[#allocation20 + $0x820] sm:$0xff]
        %v3830 = vld [vmem:[#allocation20 + $0x828] sm:$0xff]
        %v3831 = vld [vmem:[#allocation20 + $0x830] sm:$0xff]
        %v3832 = vld [vmem:[#allocation20 + $0x838] sm:$0xff]
        %v3833 = vld [vmem:[#allocation20 + $0x840] sm:$0xff]
        %v3834 = vld [vmem:[#allocation20 + $0x848] sm:$0xff]
        %v3835 = vld [vmem:[#allocation20 + $0x850] sm:$0xff]
        %v3836 = vld [vmem:[#allocation20 + $0x858] sm:$0xff]
        %v3837 = vld [vmem:[#allocation20 + $0x860] sm:$0xff]
        %v3838 = vld [vmem:[#allocation20 + $0x868] sm:$0xff]
        %v3839 = vld [vmem:[#allocation20 + $0x870] sm:$0xff]
        %v3840 = vld [vmem:[#allocation20 + $0x878] sm:$0xff]
        %v3841 = vld [vmem:[#allocation20 + $0x880] sm:$0xff]
        %v3842 = vld [vmem:[#allocation20 + $0x888] sm:$0xff]
        %v3843 = vld [vmem:[#allocation20 + $0x890] sm:$0xff]
        %v3844 = vld [vmem:[#allocation20 + $0x898] sm:$0xff]
        %v3845 = vld [vmem:[#allocation20 + $0x8a0] sm:$0xff]
        %v3846 = vld [vmem:[#allocation20 + $0x8a8] sm:$0xff]
        %v3847 = vld [vmem:[#allocation20 + $0x8b0] sm:$0xff]
        %v3848 = vld [vmem:[#allocation20 + $0x8b8] sm:$0xff]
        %v3849 = vld [vmem:[#allocation20 + $0x8c0] sm:$0xff]
        %v3850 = vld [vmem:[#allocation20 + $0x8c8] sm:$0xff]
        %v3851 = vld [vmem:[#allocation20 + $0x8d0] sm:$0xff]
        %v3852 = vld [vmem:[#allocation20 + $0x8d8] sm:$0xff]
        %v3853 = vld [vmem:[#allocation20 + $0x8e0] sm:$0xff]
        %v3854 = vld [vmem:[#allocation20 + $0x8e8] sm:$0xff]
        %v3855 = vld [vmem:[#allocation20 + $0x8f0] sm:$0xff]
        %v3856 = vld [vmem:[#allocation20 + $0x8f8] sm:$0xff]
        %v4145 = vunpack.c.l.b16 %v3569
        %v4146 = vunpack.c.h.b16 %v3569
        %v4147 = vunpack.c.l.b16 %v3570
        %v4148 = vunpack.c.h.b16 %v3570
        %v4149 = vunpack.c.l.b16 %v3571
        %v4150 = vunpack.c.h.b16 %v3571
        %v4151 = vunpack.c.l.b16 %v3572
        %v4152 = vunpack.c.h.b16 %v3572
        %v4153 = vunpack.c.l.b16 %v3573
        %v4154 = vunpack.c.h.b16 %v3573
        %v4155 = vunpack.c.l.b16 %v3574
        %v4156 = vunpack.c.h.b16 %v3574
        %v4157 = vunpack.c.l.b16 %v3575
        %v4158 = vunpack.c.h.b16 %v3575
        %v4159 = vunpack.c.l.b16 %v3576
        %v4160 = vunpack.c.h.b16 %v3576
        %v4161 = vunpack.c.l.b16 %v3577
        %v4162 = vunpack.c.h.b16 %v3577
        %v4163 = vunpack.c.l.b16 %v3578
        %v4164 = vunpack.c.h.b16 %v3578
        %v4165 = vunpack.c.l.b16 %v3579
        %v4166 = vunpack.c.h.b16 %v3579
        %v4167 = vunpack.c.l.b16 %v3580
        %v4168 = vunpack.c.h.b16 %v3580
        %v4169 = vunpack.c.l.b16 %v3581
        %v4170 = vunpack.c.h.b16 %v3581
        %v4171 = vunpack.c.l.b16 %v3582
        %v4172 = vunpack.c.h.b16 %v3582
        %v4173 = vunpack.c.l.b16 %v3583
        %v4174 = vunpack.c.h.b16 %v3583
        %v4175 = vunpack.c.l.b16 %v3584
        %v4176 = vunpack.c.h.b16 %v3584
        %v4177 = vunpack.c.l.b16 %v3585
        %v4178 = vunpack.c.h.b16 %v3585
        %v4179 = vunpack.c.l.b16 %v3586
        %v4180 = vunpack.c.h.b16 %v3586
        %v4181 = vunpack.c.l.b16 %v3587
        %v4182 = vunpack.c.h.b16 %v3587
        %v4183 = vunpack.c.l.b16 %v3588
        %v4184 = vunpack.c.h.b16 %v3588
        %v4185 = vunpack.c.l.b16 %v3589
        %v4186 = vunpack.c.h.b16 %v3589
        %v4187 = vunpack.c.l.b16 %v3590
        %v4188 = vunpack.c.h.b16 %v3590
        %v4189 = vunpack.c.l.b16 %v3591
        %v4190 = vunpack.c.h.b16 %v3591
        %v4191 = vunpack.c.l.b16 %v3592
        %v4192 = vunpack.c.h.b16 %v3592
        %v4193 = vunpack.c.l.b16 %v3593
        %v4194 = vunpack.c.h.b16 %v3593
        %v4195 = vunpack.c.l.b16 %v3594
        %v4196 = vunpack.c.h.b16 %v3594
        %v4197 = vunpack.c.l.b16 %v3595
        %v4198 = vunpack.c.h.b16 %v3595
        %v4199 = vunpack.c.l.b16 %v3596
        %v4200 = vunpack.c.h.b16 %v3596
        %v4201 = vunpack.c.l.b16 %v3597
        %v4202 = vunpack.c.h.b16 %v3597
        %v4203 = vunpack.c.l.b16 %v3598
        %v4204 = vunpack.c.h.b16 %v3598
        %v4205 = vunpack.c.l.b16 %v3599
        %v4206 = vunpack.c.h.b16 %v3599
        %v4207 = vunpack.c.l.b16 %v3600
        %v4208 = vunpack.c.h.b16 %v3600
        %v4209 = vunpack.c.l.b16 %v3601
        %v4210 = vunpack.c.h.b16 %v3601
        %v4211 = vunpack.c.l.b16 %v3602
        %v4212 = vunpack.c.h.b16 %v3602
        %v4213 = vunpack.c.l.b16 %v3603
        %v4214 = vunpack.c.h.b16 %v3603
        %v4215 = vunpack.c.l.b16 %v3604
        %v4216 = vunpack.c.h.b16 %v3604
        %v4217 = vunpack.c.l.b16 %v3605
        %v4218 = vunpack.c.h.b16 %v3605
        %v4219 = vunpack.c.l.b16 %v3606
        %v4220 = vunpack.c.h.b16 %v3606
        %v4221 = vunpack.c.l.b16 %v3607
        %v4222 = vunpack.c.h.b16 %v3607
        %v4223 = vunpack.c.l.b16 %v3608
        %v4224 = vunpack.c.h.b16 %v3608
        %v4225 = vunpack.c.l.b16 %v3609
        %v4226 = vunpack.c.h.b16 %v3609
        %v4227 = vunpack.c.l.b16 %v3610
        %v4228 = vunpack.c.h.b16 %v3610
        %v4229 = vunpack.c.l.b16 %v3611
        %v4230 = vunpack.c.h.b16 %v3611
        %v4231 = vunpack.c.l.b16 %v3612
        %v4232 = vunpack.c.h.b16 %v3612
        %v4233 = vunpack.c.l.b16 %v3613
        %v4234 = vunpack.c.h.b16 %v3613
        %v4235 = vunpack.c.l.b16 %v3614
        %v4236 = vunpack.c.h.b16 %v3614
        %v4237 = vunpack.c.l.b16 %v3615
        %v4238 = vunpack.c.h.b16 %v3615
        %v4239 = vunpack.c.l.b16 %v3616
        %v4240 = vunpack.c.h.b16 %v3616
        %v4241 = vunpack.c.l.b16 %v3617
        %v4242 = vunpack.c.h.b16 %v3617
        %v4243 = vunpack.c.l.b16 %v3618
        %v4244 = vunpack.c.h.b16 %v3618
        %v4245 = vunpack.c.l.b16 %v3619
        %v4246 = vunpack.c.h.b16 %v3619
        %v4247 = vunpack.c.l.b16 %v3620
        %v4248 = vunpack.c.h.b16 %v3620
        %v4249 = vunpack.c.l.b16 %v3621
        %v4250 = vunpack.c.h.b16 %v3621
        %v4251 = vunpack.c.l.b16 %v3622
        %v4252 = vunpack.c.h.b16 %v3622
        %v4253 = vunpack.c.l.b16 %v3623
        %v4254 = vunpack.c.h.b16 %v3623
        %v4255 = vunpack.c.l.b16 %v3624
        %v4256 = vunpack.c.h.b16 %v3624
        %v4257 = vunpack.c.l.b16 %v3625
        %v4258 = vunpack.c.h.b16 %v3625
        %v4259 = vunpack.c.l.b16 %v3626
        %v4260 = vunpack.c.h.b16 %v3626
        %v4261 = vunpack.c.l.b16 %v3627
        %v4262 = vunpack.c.h.b16 %v3627
        %v4263 = vunpack.c.l.b16 %v3628
        %v4264 = vunpack.c.h.b16 %v3628
        %v4265 = vunpack.c.l.b16 %v3629
        %v4266 = vunpack.c.h.b16 %v3629
        %v4267 = vunpack.c.l.b16 %v3630
        %v4268 = vunpack.c.h.b16 %v3630
        %v4269 = vunpack.c.l.b16 %v3631
        %v4270 = vunpack.c.h.b16 %v3631
        %v4271 = vunpack.c.l.b16 %v3632
        %v4272 = vunpack.c.h.b16 %v3632
        %v4273 = vunpack.c.l.b16 %v3633
        %v4274 = vunpack.c.h.b16 %v3633
        %v4275 = vunpack.c.l.b16 %v3634
        %v4276 = vunpack.c.h.b16 %v3634
        %v4277 = vunpack.c.l.b16 %v3635
        %v4278 = vunpack.c.h.b16 %v3635
        %v4279 = vunpack.c.l.b16 %v3636
        %v4280 = vunpack.c.h.b16 %v3636
        %v4281 = vunpack.c.l.b16 %v3637
        %v4282 = vunpack.c.h.b16 %v3637
        %v4283 = vunpack.c.l.b16 %v3638
        %v4284 = vunpack.c.h.b16 %v3638
        %v4285 = vunpack.c.l.b16 %v3639
        %v4286 = vunpack.c.h.b16 %v3639
        %v4287 = vunpack.c.l.b16 %v3640
        %v4288 = vunpack.c.h.b16 %v3640
        %v4289 = vunpack.c.l.b16 %v3641
        %v4290 = vunpack.c.h.b16 %v3641
        %v4291 = vunpack.c.l.b16 %v3642
        %v4292 = vunpack.c.h.b16 %v3642
        %v4293 = vunpack.c.l.b16 %v3643
        %v4294 = vunpack.c.h.b16 %v3643
        %v4295 = vunpack.c.l.b16 %v3644
        %v4296 = vunpack.c.h.b16 %v3644
        %v4297 = vunpack.c.l.b16 %v3645
        %v4298 = vunpack.c.h.b16 %v3645
        %v4299 = vunpack.c.l.b16 %v3646
        %v4300 = vunpack.c.h.b16 %v3646
        %v4301 = vunpack.c.l.b16 %v3647
        %v4302 = vunpack.c.h.b16 %v3647
        %v4303 = vunpack.c.l.b16 %v3648
        %v4304 = vunpack.c.h.b16 %v3648
        %v4305 = vunpack.c.l.b16 %v3649
        %v4306 = vunpack.c.h.b16 %v3649
        %v4307 = vunpack.c.l.b16 %v3650
        %v4308 = vunpack.c.h.b16 %v3650
        %v4309 = vunpack.c.l.b16 %v3651
        %v4310 = vunpack.c.h.b16 %v3651
        %v4311 = vunpack.c.l.b16 %v3652
        %v4312 = vunpack.c.h.b16 %v3652
        %v4313 = vunpack.c.l.b16 %v3653
        %v4314 = vunpack.c.h.b16 %v3653
        %v4315 = vunpack.c.l.b16 %v3654
        %v4316 = vunpack.c.h.b16 %v3654
        %v4317 = vunpack.c.l.b16 %v3655
        %v4318 = vunpack.c.h.b16 %v3655
        %v4319 = vunpack.c.l.b16 %v3656
        %v4320 = vunpack.c.h.b16 %v3656
        %v4321 = vunpack.c.l.b16 %v3657
        %v4322 = vunpack.c.h.b16 %v3657
        %v4323 = vunpack.c.l.b16 %v3658
        %v4324 = vunpack.c.h.b16 %v3658
        %v4325 = vunpack.c.l.b16 %v3659
        %v4326 = vunpack.c.h.b16 %v3659
        %v4327 = vunpack.c.l.b16 %v3660
        %v4328 = vunpack.c.h.b16 %v3660
        %v4329 = vunpack.c.l.b16 %v3661
        %v4330 = vunpack.c.h.b16 %v3661
        %v4331 = vunpack.c.l.b16 %v3662
        %v4332 = vunpack.c.h.b16 %v3662
        %v4333 = vunpack.c.l.b16 %v3663
        %v4334 = vunpack.c.h.b16 %v3663
        %v4335 = vunpack.c.l.b16 %v3664
        %v4336 = vunpack.c.h.b16 %v3664
        %v4337 = vunpack.c.l.b16 %v3665
        %v4338 = vunpack.c.h.b16 %v3665
        %v4339 = vunpack.c.l.b16 %v3666
        %v4340 = vunpack.c.h.b16 %v3666
        %v4341 = vunpack.c.l.b16 %v3667
        %v4342 = vunpack.c.h.b16 %v3667
        %v4343 = vunpack.c.l.b16 %v3668
        %v4344 = vunpack.c.h.b16 %v3668
        %v4345 = vunpack.c.l.b16 %v3669
        %v4346 = vunpack.c.h.b16 %v3669
        %v4347 = vunpack.c.l.b16 %v3670
        %v4348 = vunpack.c.h.b16 %v3670
        %v4349 = vunpack.c.l.b16 %v3671
        %v4350 = vunpack.c.h.b16 %v3671
        %v4351 = vunpack.c.l.b16 %v3672
        %v4352 = vunpack.c.h.b16 %v3672
        %v4353 = vunpack.c.l.b16 %v3673
        %v4354 = vunpack.c.h.b16 %v3673
        %v4355 = vunpack.c.l.b16 %v3674
        %v4356 = vunpack.c.h.b16 %v3674
        %v4357 = vunpack.c.l.b16 %v3675
        %v4358 = vunpack.c.h.b16 %v3675
        %v4359 = vunpack.c.l.b16 %v3676
        %v4360 = vunpack.c.h.b16 %v3676
        %v4361 = vunpack.c.l.b16 %v3677
        %v4362 = vunpack.c.h.b16 %v3677
        %v4363 = vunpack.c.l.b16 %v3678
        %v4364 = vunpack.c.h.b16 %v3678
        %v4365 = vunpack.c.l.b16 %v3679
        %v4366 = vunpack.c.h.b16 %v3679
        %v4367 = vunpack.c.l.b16 %v3680
        %v4368 = vunpack.c.h.b16 %v3680
        %v4369 = vunpack.c.l.b16 %v3681
        %v4370 = vunpack.c.h.b16 %v3681
        %v4371 = vunpack.c.l.b16 %v3682
        %v4372 = vunpack.c.h.b16 %v3682
        %v4373 = vunpack.c.l.b16 %v3683
        %v4374 = vunpack.c.h.b16 %v3683
        %v4375 = vunpack.c.l.b16 %v3684
        %v4376 = vunpack.c.h.b16 %v3684
        %v4377 = vunpack.c.l.b16 %v3685
        %v4378 = vunpack.c.h.b16 %v3685
        %v4379 = vunpack.c.l.b16 %v3686
        %v4380 = vunpack.c.h.b16 %v3686
        %v4381 = vunpack.c.l.b16 %v3687
        %v4382 = vunpack.c.h.b16 %v3687
        %v4383 = vunpack.c.l.b16 %v3688
        %v4384 = vunpack.c.h.b16 %v3688
        %v4385 = vunpack.c.l.b16 %v3689
        %v4386 = vunpack.c.h.b16 %v3689
        %v4387 = vunpack.c.l.b16 %v3690
        %v4388 = vunpack.c.h.b16 %v3690
        %v4389 = vunpack.c.l.b16 %v3691
        %v4390 = vunpack.c.h.b16 %v3691
        %v4391 = vunpack.c.l.b16 %v3692
        %v4392 = vunpack.c.h.b16 %v3692
        %v4393 = vunpack.c.l.b16 %v3693
        %v4394 = vunpack.c.h.b16 %v3693
        %v4395 = vunpack.c.l.b16 %v3694
        %v4396 = vunpack.c.h.b16 %v3694
        %v4397 = vunpack.c.l.b16 %v3695
        %v4398 = vunpack.c.h.b16 %v3695
        %v4399 = vunpack.c.l.b16 %v3696
        %v4400 = vunpack.c.h.b16 %v3696
        %v4401 = vunpack.c.l.b16 %v3697
        %v4402 = vunpack.c.h.b16 %v3697
        %v4403 = vunpack.c.l.b16 %v3698
        %v4404 = vunpack.c.h.b16 %v3698
        %v4405 = vunpack.c.l.b16 %v3699
        %v4406 = vunpack.c.h.b16 %v3699
        %v4407 = vunpack.c.l.b16 %v3700
        %v4408 = vunpack.c.h.b16 %v3700
        %v4409 = vunpack.c.l.b16 %v3701
        %v4410 = vunpack.c.h.b16 %v3701
        %v4411 = vunpack.c.l.b16 %v3702
        %v4412 = vunpack.c.h.b16 %v3702
        %v4413 = vunpack.c.l.b16 %v3703
        %v4414 = vunpack.c.h.b16 %v3703
        %v4415 = vunpack.c.l.b16 %v3704
        %v4416 = vunpack.c.h.b16 %v3704
        %v4417 = vunpack.c.l.b16 %v3705
        %v4418 = vunpack.c.h.b16 %v3705
        %v4419 = vunpack.c.l.b16 %v3706
        %v4420 = vunpack.c.h.b16 %v3706
        %v4421 = vunpack.c.l.b16 %v3707
        %v4422 = vunpack.c.h.b16 %v3707
        %v4423 = vunpack.c.l.b16 %v3708
        %v4424 = vunpack.c.h.b16 %v3708
        %v4425 = vunpack.c.l.b16 %v3709
        %v4426 = vunpack.c.h.b16 %v3709
        %v4427 = vunpack.c.l.b16 %v3710
        %v4428 = vunpack.c.h.b16 %v3710
        %v4429 = vunpack.c.l.b16 %v3711
        %v4430 = vunpack.c.h.b16 %v3711
        %v4431 = vunpack.c.l.b16 %v3712
        %v4432 = vunpack.c.h.b16 %v3712
        %v4433 = vunpack.c.l.b16 %v3713
        %v4434 = vunpack.c.h.b16 %v3713
        %v4435 = vunpack.c.l.b16 %v3714
        %v4436 = vunpack.c.h.b16 %v3714
        %v4437 = vunpack.c.l.b16 %v3715
        %v4438 = vunpack.c.h.b16 %v3715
        %v4439 = vunpack.c.l.b16 %v3716
        %v4440 = vunpack.c.h.b16 %v3716
        %v4441 = vunpack.c.l.b16 %v3717
        %v4442 = vunpack.c.h.b16 %v3717
        %v4443 = vunpack.c.l.b16 %v3718
        %v4444 = vunpack.c.h.b16 %v3718
        %v4445 = vunpack.c.l.b16 %v3719
        %v4446 = vunpack.c.h.b16 %v3719
        %v4447 = vunpack.c.l.b16 %v3720
        %v4448 = vunpack.c.h.b16 %v3720
        %v4449 = vunpack.c.l.b16 %v3721
        %v4450 = vunpack.c.h.b16 %v3721
        %v4451 = vunpack.c.l.b16 %v3722
        %v4452 = vunpack.c.h.b16 %v3722
        %v4453 = vunpack.c.l.b16 %v3723
        %v4454 = vunpack.c.h.b16 %v3723
        %v4455 = vunpack.c.l.b16 %v3724
        %v4456 = vunpack.c.h.b16 %v3724
        %v4457 = vunpack.c.l.b16 %v3725
        %v4458 = vunpack.c.h.b16 %v3725
        %v4459 = vunpack.c.l.b16 %v3726
        %v4460 = vunpack.c.h.b16 %v3726
        %v4461 = vunpack.c.l.b16 %v3727
        %v4462 = vunpack.c.h.b16 %v3727
        %v4463 = vunpack.c.l.b16 %v3728
        %v4464 = vunpack.c.h.b16 %v3728
        %v4465 = vunpack.c.l.b16 %v3729
        %v4466 = vunpack.c.h.b16 %v3729
        %v4467 = vunpack.c.l.b16 %v3730
        %v4468 = vunpack.c.h.b16 %v3730
        %v4469 = vunpack.c.l.b16 %v3731
        %v4470 = vunpack.c.h.b16 %v3731
        %v4471 = vunpack.c.l.b16 %v3732
        %v4472 = vunpack.c.h.b16 %v3732
        %v4473 = vunpack.c.l.b16 %v3733
        %v4474 = vunpack.c.h.b16 %v3733
        %v4475 = vunpack.c.l.b16 %v3734
        %v4476 = vunpack.c.h.b16 %v3734
        %v4477 = vunpack.c.l.b16 %v3735
        %v4478 = vunpack.c.h.b16 %v3735
        %v4479 = vunpack.c.l.b16 %v3736
        %v4480 = vunpack.c.h.b16 %v3736
        %v4481 = vunpack.c.l.b16 %v3737
        %v4482 = vunpack.c.h.b16 %v3737
        %v4483 = vunpack.c.l.b16 %v3738
        %v4484 = vunpack.c.h.b16 %v3738
        %v4485 = vunpack.c.l.b16 %v3739
        %v4486 = vunpack.c.h.b16 %v3739
        %v4487 = vunpack.c.l.b16 %v3740
        %v4488 = vunpack.c.h.b16 %v3740
        %v4489 = vunpack.c.l.b16 %v3741
        %v4490 = vunpack.c.h.b16 %v3741
        %v4491 = vunpack.c.l.b16 %v3742
        %v4492 = vunpack.c.h.b16 %v3742
        %v4493 = vunpack.c.l.b16 %v3743
        %v4494 = vunpack.c.h.b16 %v3743
        %v4495 = vunpack.c.l.b16 %v3744
        %v4496 = vunpack.c.h.b16 %v3744
        %v4497 = vunpack.c.l.b16 %v3745
        %v4498 = vunpack.c.h.b16 %v3745
        %v4499 = vunpack.c.l.b16 %v3746
        %v4500 = vunpack.c.h.b16 %v3746
        %v4501 = vunpack.c.l.b16 %v3747
        %v4502 = vunpack.c.h.b16 %v3747
        %v4503 = vunpack.c.l.b16 %v3748
        %v4504 = vunpack.c.h.b16 %v3748
        %v4505 = vunpack.c.l.b16 %v3749
        %v4506 = vunpack.c.h.b16 %v3749
        %v4507 = vunpack.c.l.b16 %v3750
        %v4508 = vunpack.c.h.b16 %v3750
        %v4509 = vunpack.c.l.b16 %v3751
        %v4510 = vunpack.c.h.b16 %v3751
        %v4511 = vunpack.c.l.b16 %v3752
        %v4512 = vunpack.c.h.b16 %v3752
        %v4513 = vunpack.c.l.b16 %v3753
        %v4514 = vunpack.c.h.b16 %v3753
        %v4515 = vunpack.c.l.b16 %v3754
        %v4516 = vunpack.c.h.b16 %v3754
        %v4517 = vunpack.c.l.b16 %v3755
        %v4518 = vunpack.c.h.b16 %v3755
        %v4519 = vunpack.c.l.b16 %v3756
        %v4520 = vunpack.c.h.b16 %v3756
        %v4521 = vunpack.c.l.b16 %v3757
        %v4522 = vunpack.c.h.b16 %v3757
        %v4523 = vunpack.c.l.b16 %v3758
        %v4524 = vunpack.c.h.b16 %v3758
        %v4525 = vunpack.c.l.b16 %v3759
        %v4526 = vunpack.c.h.b16 %v3759
        %v4527 = vunpack.c.l.b16 %v3760
        %v4528 = vunpack.c.h.b16 %v3760
        %v4529 = vunpack.c.l.b16 %v3761
        %v4530 = vunpack.c.h.b16 %v3761
        %v4531 = vunpack.c.l.b16 %v3762
        %v4532 = vunpack.c.h.b16 %v3762
        %v4533 = vunpack.c.l.b16 %v3763
        %v4534 = vunpack.c.h.b16 %v3763
        %v4535 = vunpack.c.l.b16 %v3764
        %v4536 = vunpack.c.h.b16 %v3764
        %v4537 = vunpack.c.l.b16 %v3765
        %v4538 = vunpack.c.h.b16 %v3765
        %v4539 = vunpack.c.l.b16 %v3766
        %v4540 = vunpack.c.h.b16 %v3766
        %v4541 = vunpack.c.l.b16 %v3767
        %v4542 = vunpack.c.h.b16 %v3767
        %v4543 = vunpack.c.l.b16 %v3768
        %v4544 = vunpack.c.h.b16 %v3768
        %v4545 = vunpack.c.l.b16 %v3769
        %v4546 = vunpack.c.h.b16 %v3769
        %v4547 = vunpack.c.l.b16 %v3770
        %v4548 = vunpack.c.h.b16 %v3770
        %v4549 = vunpack.c.l.b16 %v3771
        %v4550 = vunpack.c.h.b16 %v3771
        %v4551 = vunpack.c.l.b16 %v3772
        %v4552 = vunpack.c.h.b16 %v3772
        %v4553 = vunpack.c.l.b16 %v3773
        %v4554 = vunpack.c.h.b16 %v3773
        %v4555 = vunpack.c.l.b16 %v3774
        %v4556 = vunpack.c.h.b16 %v3774
        %v4557 = vunpack.c.l.b16 %v3775
        %v4558 = vunpack.c.h.b16 %v3775
        %v4559 = vunpack.c.l.b16 %v3776
        %v4560 = vunpack.c.h.b16 %v3776
        %v4561 = vunpack.c.l.b16 %v3777
        %v4562 = vunpack.c.h.b16 %v3777
        %v4563 = vunpack.c.l.b16 %v3778
        %v4564 = vunpack.c.h.b16 %v3778
        %v4565 = vunpack.c.l.b16 %v3779
        %v4566 = vunpack.c.h.b16 %v3779
        %v4567 = vunpack.c.l.b16 %v3780
        %v4568 = vunpack.c.h.b16 %v3780
        %v4569 = vunpack.c.l.b16 %v3781
        %v4570 = vunpack.c.h.b16 %v3781
        %v4571 = vunpack.c.l.b16 %v3782
        %v4572 = vunpack.c.h.b16 %v3782
        %v4573 = vunpack.c.l.b16 %v3783
        %v4574 = vunpack.c.h.b16 %v3783
        %v4575 = vunpack.c.l.b16 %v3784
        %v4576 = vunpack.c.h.b16 %v3784
        %v4577 = vunpack.c.l.b16 %v3785
        %v4578 = vunpack.c.h.b16 %v3785
        %v4579 = vunpack.c.l.b16 %v3786
        %v4580 = vunpack.c.h.b16 %v3786
        %v4581 = vunpack.c.l.b16 %v3787
        %v4582 = vunpack.c.h.b16 %v3787
        %v4583 = vunpack.c.l.b16 %v3788
        %v4584 = vunpack.c.h.b16 %v3788
        %v4585 = vunpack.c.l.b16 %v3789
        %v4586 = vunpack.c.h.b16 %v3789
        %v4587 = vunpack.c.l.b16 %v3790
        %v4588 = vunpack.c.h.b16 %v3790
        %v4589 = vunpack.c.l.b16 %v3791
        %v4590 = vunpack.c.h.b16 %v3791
        %v4591 = vunpack.c.l.b16 %v3792
        %v4592 = vunpack.c.h.b16 %v3792
        %v4593 = vunpack.c.l.b16 %v3793
        %v4594 = vunpack.c.h.b16 %v3793
        %v4595 = vunpack.c.l.b16 %v3794
        %v4596 = vunpack.c.h.b16 %v3794
        %v4597 = vunpack.c.l.b16 %v3795
        %v4598 = vunpack.c.h.b16 %v3795
        %v4599 = vunpack.c.l.b16 %v3796
        %v4600 = vunpack.c.h.b16 %v3796
        %v4601 = vunpack.c.l.b16 %v3797
        %v4602 = vunpack.c.h.b16 %v3797
        %v4603 = vunpack.c.l.b16 %v3798
        %v4604 = vunpack.c.h.b16 %v3798
        %v4605 = vunpack.c.l.b16 %v3799
        %v4606 = vunpack.c.h.b16 %v3799
        %v4607 = vunpack.c.l.b16 %v3800
        %v4608 = vunpack.c.h.b16 %v3800
        %v4609 = vunpack.c.l.b16 %v3801
        %v4610 = vunpack.c.h.b16 %v3801
        %v4611 = vunpack.c.l.b16 %v3802
        %v4612 = vunpack.c.h.b16 %v3802
        %v4613 = vunpack.c.l.b16 %v3803
        %v4614 = vunpack.c.h.b16 %v3803
        %v4615 = vunpack.c.l.b16 %v3804
        %v4616 = vunpack.c.h.b16 %v3804
        %v4617 = vunpack.c.l.b16 %v3805
        %v4618 = vunpack.c.h.b16 %v3805
        %v4619 = vunpack.c.l.b16 %v3806
        %v4620 = vunpack.c.h.b16 %v3806
        %v4621 = vunpack.c.l.b16 %v3807
        %v4622 = vunpack.c.h.b16 %v3807
        %v4623 = vunpack.c.l.b16 %v3808
        %v4624 = vunpack.c.h.b16 %v3808
        %v4625 = vunpack.c.l.b16 %v3809
        %v4626 = vunpack.c.h.b16 %v3809
        %v4627 = vunpack.c.l.b16 %v3810
        %v4628 = vunpack.c.h.b16 %v3810
        %v4629 = vunpack.c.l.b16 %v3811
        %v4630 = vunpack.c.h.b16 %v3811
        %v4631 = vunpack.c.l.b16 %v3812
        %v4632 = vunpack.c.h.b16 %v3812
        %v4633 = vunpack.c.l.b16 %v3813
        %v4634 = vunpack.c.h.b16 %v3813
        %v4635 = vunpack.c.l.b16 %v3814
        %v4636 = vunpack.c.h.b16 %v3814
        %v4637 = vunpack.c.l.b16 %v3815
        %v4638 = vunpack.c.h.b16 %v3815
        %v4639 = vunpack.c.l.b16 %v3816
        %v4640 = vunpack.c.h.b16 %v3816
        %v4641 = vunpack.c.l.b16 %v3817
        %v4642 = vunpack.c.h.b16 %v3817
        %v4643 = vunpack.c.l.b16 %v3818
        %v4644 = vunpack.c.h.b16 %v3818
        %v4645 = vunpack.c.l.b16 %v3819
        %v4646 = vunpack.c.h.b16 %v3819
        %v4647 = vunpack.c.l.b16 %v3820
        %v4648 = vunpack.c.h.b16 %v3820
        %v4649 = vunpack.c.l.b16 %v3821
        %v4650 = vunpack.c.h.b16 %v3821
        %v4651 = vunpack.c.l.b16 %v3822
        %v4652 = vunpack.c.h.b16 %v3822
        %v4653 = vunpack.c.l.b16 %v3823
        %v4654 = vunpack.c.h.b16 %v3823
        %v4655 = vunpack.c.l.b16 %v3824
        %v4656 = vunpack.c.h.b16 %v3824
        %v4657 = vunpack.c.l.b16 %v3825
        %v4658 = vunpack.c.h.b16 %v3825
        %v4659 = vunpack.c.l.b16 %v3826
        %v4660 = vunpack.c.h.b16 %v3826
        %v4661 = vunpack.c.l.b16 %v3827
        %v4662 = vunpack.c.h.b16 %v3827
        %v4663 = vunpack.c.l.b16 %v3828
        %v4664 = vunpack.c.h.b16 %v3828
        %v4665 = vunpack.c.l.b16 %v3829
        %v4666 = vunpack.c.h.b16 %v3829
        %v4667 = vunpack.c.l.b16 %v3830
        %v4668 = vunpack.c.h.b16 %v3830
        %v4669 = vunpack.c.l.b16 %v3831
        %v4670 = vunpack.c.h.b16 %v3831
        %v4671 = vunpack.c.l.b16 %v3832
        %v4672 = vunpack.c.h.b16 %v3832
        %v4673 = vunpack.c.l.b16 %v3833
        %v4674 = vunpack.c.h.b16 %v3833
        %v4675 = vunpack.c.l.b16 %v3834
        %v4676 = vunpack.c.h.b16 %v3834
        %v4677 = vunpack.c.l.b16 %v3835
        %v4678 = vunpack.c.h.b16 %v3835
        %v4679 = vunpack.c.l.b16 %v3836
        %v4680 = vunpack.c.h.b16 %v3836
        %v4681 = vunpack.c.l.b16 %v3837
        %v4682 = vunpack.c.h.b16 %v3837
        %v4683 = vunpack.c.l.b16 %v3838
        %v4684 = vunpack.c.h.b16 %v3838
        %v4685 = vunpack.c.l.b16 %v3839
        %v4686 = vunpack.c.h.b16 %v3839
        %v4687 = vunpack.c.l.b16 %v3840
        %v4688 = vunpack.c.h.b16 %v3840
        %v4689 = vunpack.c.l.b16 %v3841
        %v4690 = vunpack.c.h.b16 %v3841
        %v4691 = vunpack.c.l.b16 %v3842
        %v4692 = vunpack.c.h.b16 %v3842
        %v4693 = vunpack.c.l.b16 %v3843
        %v4694 = vunpack.c.h.b16 %v3843
        %v4695 = vunpack.c.l.b16 %v3844
        %v4696 = vunpack.c.h.b16 %v3844
        %v4697 = vunpack.c.l.b16 %v3845
        %v4698 = vunpack.c.h.b16 %v3845
        %v4699 = vunpack.c.l.b16 %v3846
        %v4700 = vunpack.c.h.b16 %v3846
        %v4701 = vunpack.c.l.b16 %v3847
        %v4702 = vunpack.c.h.b16 %v3847
        %v4703 = vunpack.c.l.b16 %v3848
        %v4704 = vunpack.c.h.b16 %v3848
        %v4705 = vunpack.c.l.b16 %v3849
        %v4706 = vunpack.c.h.b16 %v3849
        %v4707 = vunpack.c.l.b16 %v3850
        %v4708 = vunpack.c.h.b16 %v3850
        %v4709 = vunpack.c.l.b16 %v3851
        %v4710 = vunpack.c.h.b16 %v3851
        %v4711 = vunpack.c.l.b16 %v3852
        %v4712 = vunpack.c.h.b16 %v3852
        %v4713 = vunpack.c.l.b16 %v3853
        %v4714 = vunpack.c.h.b16 %v3853
        %v4715 = vunpack.c.l.b16 %v3854
        %v4716 = vunpack.c.h.b16 %v3854
        %v4717 = vunpack.c.l.b16 %v3855
        %v4718 = vunpack.c.h.b16 %v3855
        %v4719 = vunpack.c.l.b16 %v3856
        %v4720 = vunpack.c.h.b16 %v3856
        %v4721 = vpack.c.b16 %v4151, %v4145
        %v4722 = vpack.c.b16 %v4152, %v4146
        %v4723 = vpack.c.b16 %v4153, %v4147
        %v4724 = vpack.c.b16 %v4154, %v4148
        %v4725 = vpack.c.b16 %v4155, %v4149
        %v4726 = vpack.c.b16 %v4156, %v4150
        %v4727 = vpack.c.b16 %v4163, %v4157
        %v4728 = vpack.c.b16 %v4164, %v4158
        %v4729 = vpack.c.b16 %v4165, %v4159
        %v4730 = vpack.c.b16 %v4166, %v4160
        %v4731 = vpack.c.b16 %v4167, %v4161
        %v4732 = vpack.c.b16 %v4168, %v4162
        %v4733 = vpack.c.b16 %v4175, %v4169
        %v4734 = vpack.c.b16 %v4176, %v4170
        %v4735 = vpack.c.b16 %v4177, %v4171
        %v4736 = vpack.c.b16 %v4178, %v4172
        %v4737 = vpack.c.b16 %v4179, %v4173
        %v4738 = vpack.c.b16 %v4180, %v4174
        %v4739 = vpack.c.b16 %v4187, %v4181
        %v4740 = vpack.c.b16 %v4188, %v4182
        %v4741 = vpack.c.b16 %v4189, %v4183
        %v4742 = vpack.c.b16 %v4190, %v4184
        %v4743 = vpack.c.b16 %v4191, %v4185
        %v4744 = vpack.c.b16 %v4192, %v4186
        %v4745 = vpack.c.b16 %v4199, %v4193
        %v4746 = vpack.c.b16 %v4200, %v4194
        %v4747 = vpack.c.b16 %v4201, %v4195
        %v4748 = vpack.c.b16 %v4202, %v4196
        %v4749 = vpack.c.b16 %v4203, %v4197
        %v4750 = vpack.c.b16 %v4204, %v4198
        %v4751 = vpack.c.b16 %v4211, %v4205
        %v4752 = vpack.c.b16 %v4212, %v4206
        %v4753 = vpack.c.b16 %v4213, %v4207
        %v4754 = vpack.c.b16 %v4214, %v4208
        %v4755 = vpack.c.b16 %v4215, %v4209
        %v4756 = vpack.c.b16 %v4216, %v4210
        %v4757 = vpack.c.b16 %v4223, %v4217
        %v4758 = vpack.c.b16 %v4224, %v4218
        %v4759 = vpack.c.b16 %v4225, %v4219
        %v4760 = vpack.c.b16 %v4226, %v4220
        %v4761 = vpack.c.b16 %v4227, %v4221
        %v4762 = vpack.c.b16 %v4228, %v4222
        %v4763 = vpack.c.b16 %v4235, %v4229
        %v4764 = vpack.c.b16 %v4236, %v4230
        %v4765 = vpack.c.b16 %v4237, %v4231
        %v4766 = vpack.c.b16 %v4238, %v4232
        %v4767 = vpack.c.b16 %v4239, %v4233
        %v4768 = vpack.c.b16 %v4240, %v4234
        %v4769 = vpack.c.b16 %v4247, %v4241
        %v4770 = vpack.c.b16 %v4248, %v4242
        %v4771 = vpack.c.b16 %v4249, %v4243
        %v4772 = vpack.c.b16 %v4250, %v4244
        %v4773 = vpack.c.b16 %v4251, %v4245
        %v4774 = vpack.c.b16 %v4252, %v4246
        %v4775 = vpack.c.b16 %v4259, %v4253
        %v4776 = vpack.c.b16 %v4260, %v4254
        %v4777 = vpack.c.b16 %v4261, %v4255
        %v4778 = vpack.c.b16 %v4262, %v4256
        %v4779 = vpack.c.b16 %v4263, %v4257
        %v4780 = vpack.c.b16 %v4264, %v4258
        %v4781 = vpack.c.b16 %v4271, %v4265
        %v4782 = vpack.c.b16 %v4272, %v4266
        %v4783 = vpack.c.b16 %v4273, %v4267
        %v4784 = vpack.c.b16 %v4274, %v4268
        %v4785 = vpack.c.b16 %v4275, %v4269
        %v4786 = vpack.c.b16 %v4276, %v4270
        %v4787 = vpack.c.b16 %v4283, %v4277
        %v4788 = vpack.c.b16 %v4284, %v4278
        %v4789 = vpack.c.b16 %v4285, %v4279
        %v4790 = vpack.c.b16 %v4286, %v4280
        %v4791 = vpack.c.b16 %v4287, %v4281
        %v4792 = vpack.c.b16 %v4288, %v4282
        %v4793 = vpack.c.b16 %v4295, %v4289
        %v4794 = vpack.c.b16 %v4296, %v4290
        %v4795 = vpack.c.b16 %v4297, %v4291
        %v4796 = vpack.c.b16 %v4298, %v4292
        %v4797 = vpack.c.b16 %v4299, %v4293
        %v4798 = vpack.c.b16 %v4300, %v4294
        %v4799 = vpack.c.b16 %v4307, %v4301
        %v4800 = vpack.c.b16 %v4308, %v4302
        %v4801 = vpack.c.b16 %v4309, %v4303
        %v4802 = vpack.c.b16 %v4310, %v4304
        %v4803 = vpack.c.b16 %v4311, %v4305
        %v4804 = vpack.c.b16 %v4312, %v4306
        %v4805 = vpack.c.b16 %v4319, %v4313
        %v4806 = vpack.c.b16 %v4320, %v4314
        %v4807 = vpack.c.b16 %v4321, %v4315
        %v4808 = vpack.c.b16 %v4322, %v4316
        %v4809 = vpack.c.b16 %v4323, %v4317
        %v4810 = vpack.c.b16 %v4324, %v4318
        %v4811 = vpack.c.b16 %v4331, %v4325
        %v4812 = vpack.c.b16 %v4332, %v4326
        %v4813 = vpack.c.b16 %v4333, %v4327
        %v4814 = vpack.c.b16 %v4334, %v4328
        %v4815 = vpack.c.b16 %v4335, %v4329
        %v4816 = vpack.c.b16 %v4336, %v4330
        %v4817 = vpack.c.b16 %v4343, %v4337
        %v4818 = vpack.c.b16 %v4344, %v4338
        %v4819 = vpack.c.b16 %v4345, %v4339
        %v4820 = vpack.c.b16 %v4346, %v4340
        %v4821 = vpack.c.b16 %v4347, %v4341
        %v4822 = vpack.c.b16 %v4348, %v4342
        %v4823 = vpack.c.b16 %v4355, %v4349
        %v4824 = vpack.c.b16 %v4356, %v4350
        %v4825 = vpack.c.b16 %v4357, %v4351
        %v4826 = vpack.c.b16 %v4358, %v4352
        %v4827 = vpack.c.b16 %v4359, %v4353
        %v4828 = vpack.c.b16 %v4360, %v4354
        %v4829 = vpack.c.b16 %v4367, %v4361
        %v4830 = vpack.c.b16 %v4368, %v4362
        %v4831 = vpack.c.b16 %v4369, %v4363
        %v4832 = vpack.c.b16 %v4370, %v4364
        %v4833 = vpack.c.b16 %v4371, %v4365
        %v4834 = vpack.c.b16 %v4372, %v4366
        %v4835 = vpack.c.b16 %v4379, %v4373
        %v4836 = vpack.c.b16 %v4380, %v4374
        %v4837 = vpack.c.b16 %v4381, %v4375
        %v4838 = vpack.c.b16 %v4382, %v4376
        %v4839 = vpack.c.b16 %v4383, %v4377
        %v4840 = vpack.c.b16 %v4384, %v4378
        %v4841 = vpack.c.b16 %v4391, %v4385
        %v4842 = vpack.c.b16 %v4392, %v4386
        %v4843 = vpack.c.b16 %v4393, %v4387
        %v4844 = vpack.c.b16 %v4394, %v4388
        %v4845 = vpack.c.b16 %v4395, %v4389
        %v4846 = vpack.c.b16 %v4396, %v4390
        %v4847 = vpack.c.b16 %v4403, %v4397
        %v4848 = vpack.c.b16 %v4404, %v4398
        %v4849 = vpack.c.b16 %v4405, %v4399
        %v4850 = vpack.c.b16 %v4406, %v4400
        %v4851 = vpack.c.b16 %v4407, %v4401
        %v4852 = vpack.c.b16 %v4408, %v4402
        %v4853 = vpack.c.b16 %v4415, %v4409
        %v4854 = vpack.c.b16 %v4416, %v4410
        %v4855 = vpack.c.b16 %v4417, %v4411
        %v4856 = vpack.c.b16 %v4418, %v4412
        %v4857 = vpack.c.b16 %v4419, %v4413
        %v4858 = vpack.c.b16 %v4420, %v4414
        %v4859 = vpack.c.b16 %v4427, %v4421
        %v4860 = vpack.c.b16 %v4428, %v4422
        %v4861 = vpack.c.b16 %v4429, %v4423
        %v4862 = vpack.c.b16 %v4430, %v4424
        %v4863 = vpack.c.b16 %v4431, %v4425
        %v4864 = vpack.c.b16 %v4432, %v4426
        %v4865 = vpack.c.b16 %v4439, %v4433
        %v4866 = vpack.c.b16 %v4440, %v4434
        %v4867 = vpack.c.b16 %v4441, %v4435
        %v4868 = vpack.c.b16 %v4442, %v4436
        %v4869 = vpack.c.b16 %v4443, %v4437
        %v4870 = vpack.c.b16 %v4444, %v4438
        %v4871 = vpack.c.b16 %v4451, %v4445
        %v4872 = vpack.c.b16 %v4452, %v4446
        %v4873 = vpack.c.b16 %v4453, %v4447
        %v4874 = vpack.c.b16 %v4454, %v4448
        %v4875 = vpack.c.b16 %v4455, %v4449
        %v4876 = vpack.c.b16 %v4456, %v4450
        %v4877 = vpack.c.b16 %v4463, %v4457
        %v4878 = vpack.c.b16 %v4464, %v4458
        %v4879 = vpack.c.b16 %v4465, %v4459
        %v4880 = vpack.c.b16 %v4466, %v4460
        %v4881 = vpack.c.b16 %v4467, %v4461
        %v4882 = vpack.c.b16 %v4468, %v4462
        %v4883 = vpack.c.b16 %v4475, %v4469
        %v4884 = vpack.c.b16 %v4476, %v4470
        %v4885 = vpack.c.b16 %v4477, %v4471
        %v4886 = vpack.c.b16 %v4478, %v4472
        %v4887 = vpack.c.b16 %v4479, %v4473
        %v4888 = vpack.c.b16 %v4480, %v4474
        %v4889 = vpack.c.b16 %v4487, %v4481
        %v4890 = vpack.c.b16 %v4488, %v4482
        %v4891 = vpack.c.b16 %v4489, %v4483
        %v4892 = vpack.c.b16 %v4490, %v4484
        %v4893 = vpack.c.b16 %v4491, %v4485
        %v4894 = vpack.c.b16 %v4492, %v4486
        %v4895 = vpack.c.b16 %v4499, %v4493
        %v4896 = vpack.c.b16 %v4500, %v4494
        %v4897 = vpack.c.b16 %v4501, %v4495
        %v4898 = vpack.c.b16 %v4502, %v4496
        %v4899 = vpack.c.b16 %v4503, %v4497
        %v4900 = vpack.c.b16 %v4504, %v4498
        %v4901 = vpack.c.b16 %v4511, %v4505
        %v4902 = vpack.c.b16 %v4512, %v4506
        %v4903 = vpack.c.b16 %v4513, %v4507
        %v4904 = vpack.c.b16 %v4514, %v4508
        %v4905 = vpack.c.b16 %v4515, %v4509
        %v4906 = vpack.c.b16 %v4516, %v4510
        %v4907 = vpack.c.b16 %v4523, %v4517
        %v4908 = vpack.c.b16 %v4524, %v4518
        %v4909 = vpack.c.b16 %v4525, %v4519
        %v4910 = vpack.c.b16 %v4526, %v4520
        %v4911 = vpack.c.b16 %v4527, %v4521
        %v4912 = vpack.c.b16 %v4528, %v4522
        %v4913 = vpack.c.b16 %v4535, %v4529
        %v4914 = vpack.c.b16 %v4536, %v4530
        %v4915 = vpack.c.b16 %v4537, %v4531
        %v4916 = vpack.c.b16 %v4538, %v4532
        %v4917 = vpack.c.b16 %v4539, %v4533
        %v4918 = vpack.c.b16 %v4540, %v4534
        %v4919 = vpack.c.b16 %v4547, %v4541
        %v4920 = vpack.c.b16 %v4548, %v4542
        %v4921 = vpack.c.b16 %v4549, %v4543
        %v4922 = vpack.c.b16 %v4550, %v4544
        %v4923 = vpack.c.b16 %v4551, %v4545
        %v4924 = vpack.c.b16 %v4552, %v4546
        %v4925 = vpack.c.b16 %v4559, %v4553
        %v4926 = vpack.c.b16 %v4560, %v4554
        %v4927 = vpack.c.b16 %v4561, %v4555
        %v4928 = vpack.c.b16 %v4562, %v4556
        %v4929 = vpack.c.b16 %v4563, %v4557
        %v4930 = vpack.c.b16 %v4564, %v4558
        %v4931 = vpack.c.b16 %v4571, %v4565
        %v4932 = vpack.c.b16 %v4572, %v4566
        %v4933 = vpack.c.b16 %v4573, %v4567
        %v4934 = vpack.c.b16 %v4574, %v4568
        %v4935 = vpack.c.b16 %v4575, %v4569
        %v4936 = vpack.c.b16 %v4576, %v4570
        %v4937 = vpack.c.b16 %v4583, %v4577
        %v4938 = vpack.c.b16 %v4584, %v4578
        %v4939 = vpack.c.b16 %v4585, %v4579
        %v4940 = vpack.c.b16 %v4586, %v4580
        %v4941 = vpack.c.b16 %v4587, %v4581
        %v4942 = vpack.c.b16 %v4588, %v4582
        %v4943 = vpack.c.b16 %v4595, %v4589
        %v4944 = vpack.c.b16 %v4596, %v4590
        %v4945 = vpack.c.b16 %v4597, %v4591
        %v4946 = vpack.c.b16 %v4598, %v4592
        %v4947 = vpack.c.b16 %v4599, %v4593
        %v4948 = vpack.c.b16 %v4600, %v4594
        %v4949 = vpack.c.b16 %v4607, %v4601
        %v4950 = vpack.c.b16 %v4608, %v4602
        %v4951 = vpack.c.b16 %v4609, %v4603
        %v4952 = vpack.c.b16 %v4610, %v4604
        %v4953 = vpack.c.b16 %v4611, %v4605
        %v4954 = vpack.c.b16 %v4612, %v4606
        %v4955 = vpack.c.b16 %v4619, %v4613
        %v4956 = vpack.c.b16 %v4620, %v4614
        %v4957 = vpack.c.b16 %v4621, %v4615
        %v4958 = vpack.c.b16 %v4622, %v4616
        %v4959 = vpack.c.b16 %v4623, %v4617
        %v4960 = vpack.c.b16 %v4624, %v4618
        %v4961 = vpack.c.b16 %v4631, %v4625
        %v4962 = vpack.c.b16 %v4632, %v4626
        %v4963 = vpack.c.b16 %v4633, %v4627
        %v4964 = vpack.c.b16 %v4634, %v4628
        %v4965 = vpack.c.b16 %v4635, %v4629
        %v4966 = vpack.c.b16 %v4636, %v4630
        %v4967 = vpack.c.b16 %v4643, %v4637
        %v4968 = vpack.c.b16 %v4644, %v4638
        %v4969 = vpack.c.b16 %v4645, %v4639
        %v4970 = vpack.c.b16 %v4646, %v4640
        %v4971 = vpack.c.b16 %v4647, %v4641
        %v4972 = vpack.c.b16 %v4648, %v4642
        %v4973 = vpack.c.b16 %v4655, %v4649
        %v4974 = vpack.c.b16 %v4656, %v4650
        %v4975 = vpack.c.b16 %v4657, %v4651
        %v4976 = vpack.c.b16 %v4658, %v4652
        %v4977 = vpack.c.b16 %v4659, %v4653
        %v4978 = vpack.c.b16 %v4660, %v4654
        %v4979 = vpack.c.b16 %v4667, %v4661
        %v4980 = vpack.c.b16 %v4668, %v4662
        %v4981 = vpack.c.b16 %v4669, %v4663
        %v4982 = vpack.c.b16 %v4670, %v4664
        %v4983 = vpack.c.b16 %v4671, %v4665
        %v4984 = vpack.c.b16 %v4672, %v4666
        %v4985 = vpack.c.b16 %v4679, %v4673
        %v4986 = vpack.c.b16 %v4680, %v4674
        %v4987 = vpack.c.b16 %v4681, %v4675
        %v4988 = vpack.c.b16 %v4682, %v4676
        %v4989 = vpack.c.b16 %v4683, %v4677
        %v4990 = vpack.c.b16 %v4684, %v4678
        %v4991 = vpack.c.b16 %v4691, %v4685
        %v4992 = vpack.c.b16 %v4692, %v4686
        %v4993 = vpack.c.b16 %v4693, %v4687
        %v4994 = vpack.c.b16 %v4694, %v4688
        %v4995 = vpack.c.b16 %v4695, %v4689
        %v4996 = vpack.c.b16 %v4696, %v4690
        %v4997 = vpack.c.b16 %v4703, %v4697
        %v4998 = vpack.c.b16 %v4704, %v4698
        %v4999 = vpack.c.b16 %v4705, %v4699
        %v5000 = vpack.c.b16 %v4706, %v4700
        %v5001 = vpack.c.b16 %v4707, %v4701
        %v5002 = vpack.c.b16 %v4708, %v4702
        %v5003 = vpack.c.b16 %v4715, %v4709
        %v5004 = vpack.c.b16 %v4716, %v4710
        %v5005 = vpack.c.b16 %v4717, %v4711
        %v5006 = vpack.c.b16 %v4718, %v4712
        %v5007 = vpack.c.b16 %v4719, %v4713
        %v5008 = vpack.c.b16 %v4720, %v4714
        %5297 = vmatprep.subr.bf16.mxu0 %v4722
        %5298 = vmatpush1.bf16.msra.mxu0 %v4721
        %5299 = vmatprep.subr.bf16.mxu0 %v4728
        %5300 = vmatpush1.bf16.msra.mxu0 %v4727
        %5301 = vmatprep.subr.bf16.mxu0 %v4734
        %5302 = vmatpush1.bf16.msra.mxu0 %v4733
        %5303 = vmatprep.subr.bf16.mxu0 %v4740
        %5304 = vmatpush1.bf16.msra.mxu0 %v4739
        %5305 = vmatprep.subr.bf16.mxu0 %v4746
        %5306 = vmatpush1.bf16.msra.mxu0 %v4745
        %5307 = vmatprep.subr.bf16.mxu0 %v4752
        %5308 = vmatpush1.bf16.msra.mxu0 %v4751
        %5309 = vmatprep.subr.bf16.mxu0 %v4758
        %5310 = vmatpush1.bf16.msra.mxu0 %v4757
        %5311 = vmatprep.subr.bf16.mxu0 %v4764
        %5312 = vmatpush1.bf16.msra.mxu0 %v4763
        %5313 = vmatprep.subr.bf16.mxu0 %v4770
        %5314 = vmatpush1.bf16.msra.mxu0 %v4769
        %5315 = vmatprep.subr.bf16.mxu0 %v4776
        %5316 = vmatpush1.bf16.msra.mxu0 %v4775
        %5317 = vmatprep.subr.bf16.mxu0 %v4782
        %5318 = vmatpush1.bf16.msra.mxu0 %v4781
        %5319 = vmatprep.subr.bf16.mxu0 %v4788
        %5320 = vmatpush1.bf16.msra.mxu0 %v4787
        %5321 = vmatprep.subr.bf16.mxu0 %v4794
        %5322 = vmatpush1.bf16.msra.mxu0 %v4793
        %5323 = vmatprep.subr.bf16.mxu0 %v4800
        %5324 = vmatpush1.bf16.msra.mxu0 %v4799
        %5325 = vmatprep.subr.bf16.mxu0 %v4806
        %5326 = vmatpush1.bf16.msra.mxu0 %v4805
        %5327 = vmatprep.subr.bf16.mxu0 %v4812
        %5328 = vmatpush1.bf16.msra.mxu0 %v4811
        %5329 = vmatprep.mubr.bf16.mxu0 %v3472
        %5330 = vmatmul.mubr.bf16.gmra.mrb[0].mxu0 %v3471
        %v5331 = vpop.f32.mrb[0].mxu0
        %v5332 = vadd.f32 0.0, %v5331
        %v5333 = vpop.f32.mrb[0].mxu0
        %v5334 = vadd.f32 0.0, %v5333
        %v5335 = vpop.f32.mrb[0].mxu0
        %v5336 = vpop.f32.mrb[0].mxu0
        %5337 = vdwg.mxu0
        %5338 = vmatprep.subr.bf16.mxu0 %v4818
        %5339 = vmatpush1.bf16.msra.mxu0 %v4817
        %5340 = vmatprep.subr.bf16.mxu0 %v4824
        %5341 = vmatpush1.bf16.msra.mxu0 %v4823
        %5342 = vmatprep.subr.bf16.mxu0 %v4830
        %5343 = vmatpush1.bf16.msra.mxu0 %v4829
        %5344 = vmatprep.subr.bf16.mxu0 %v4836
        %5345 = vmatpush1.bf16.msra.mxu0 %v4835
        %5346 = vmatprep.subr.bf16.mxu0 %v4842
        %5347 = vmatpush1.bf16.msra.mxu0 %v4841
        %5348 = vmatprep.subr.bf16.mxu0 %v4848
        %5349 = vmatpush1.bf16.msra.mxu0 %v4847
        %5350 = vmatprep.subr.bf16.mxu0 %v4854
        %5351 = vmatpush1.bf16.msra.mxu0 %v4853
        %5352 = vmatprep.subr.bf16.mxu0 %v4860
        %5353 = vmatpush1.bf16.msra.mxu0 %v4859
        %5354 = vmatprep.subr.bf16.mxu0 %v4866
        %5355 = vmatpush1.bf16.msra.mxu0 %v4865
        %5356 = vmatprep.subr.bf16.mxu0 %v4872
        %5357 = vmatpush1.bf16.msra.mxu0 %v4871
        %5358 = vmatprep.subr.bf16.mxu0 %v4878
        %5359 = vmatpush1.bf16.msra.mxu0 %v4877
        %5360 = vmatprep.subr.bf16.mxu0 %v4884
        %5361 = vmatpush1.bf16.msra.mxu0 %v4883
        %5362 = vmatprep.subr.bf16.mxu0 %v4890
        %5363 = vmatpush1.bf16.msra.mxu0 %v4889
        %5364 = vmatprep.subr.bf16.mxu0 %v4896
        %5365 = vmatpush1.bf16.msra.mxu0 %v4895
        %5366 = vmatprep.subr.bf16.mxu0 %v4902
        %5367 = vmatpush1.bf16.msra.mxu0 %v4901
        %5368 = vmatprep.subr.bf16.mxu0 %v4908
        %5369 = vmatpush1.bf16.msra.mxu0 %v4907
        %5370 = vmatprep.mubr.bf16.mxu0 %v3520
        %5371 = vmatmul.mubr.bf16.gmra.mrb[0].mxu0 %v3519
        %v5372 = vpop.f32.mrb[0].mxu0
        %v5373 = vadd.f32 %v5332, %v5372
        %v5374 = vpop.f32.mrb[0].mxu0
        %v5375 = vadd.f32 %v5334, %v5374
        %v5376 = vpop.f32.mrb[0].mxu0
        %v5377 = vpop.f32.mrb[0].mxu0
        %5378 = vdwg.mxu0
        %5379 = vmatprep.subr.bf16.mxu0 %v4914
        %5380 = vmatpush1.bf16.msra.mxu0 %v4913
        %5381 = vmatprep.subr.bf16.mxu0 %v4920
        %5382 = vmatpush1.bf16.msra.mxu0 %v4919
        %5383 = vmatprep.subr.bf16.mxu0 %v4926
        %5384 = vmatpush1.bf16.msra.mxu0 %v4925
        %5385 = vmatprep.subr.bf16.mxu0 %v4932
        %5386 = vmatpush1.bf16.msra.mxu0 %v4931
        %5387 = vmatprep.subr.bf16.mxu0 %v4938
        %5388 = vmatpush1.bf16.msra.mxu0 %v4937
        %5389 = vmatprep.subr.bf16.mxu0 %v4944
        %5390 = vmatpush1.bf16.msra.mxu0 %v4943
        %5391 = vmatprep.subr.bf16.mxu0 %v4950
        %5392 = vmatpush1.bf16.msra.mxu0 %v4949
        %5393 = vmatprep.subr.bf16.mxu0 %v4956
        %5394 = vmatpush1.bf16.msra.mxu0 %v4955
        %5395 = vmatprep.subr.bf16.mxu0 %v4962
        %5396 = vmatpush1.bf16.msra.mxu0 %v4961
        %5397 = vmatprep.subr.bf16.mxu0 %v4968
        %5398 = vmatpush1.bf16.msra.mxu0 %v4967
        %5399 = vmatprep.subr.bf16.mxu0 %v4974
        %5400 = vmatpush1.bf16.msra.mxu0 %v4973
        %5401 = vmatprep.subr.bf16.mxu0 %v4980
        %5402 = vmatpush1.bf16.msra.mxu0 %v4979
        %5403 = vmatprep.subr.bf16.mxu0 %v4986
        %5404 = vmatpush1.bf16.msra.mxu0 %v4985
        %5405 = vmatprep.subr.bf16.mxu0 %v4992
        %5406 = vmatpush1.bf16.msra.mxu0 %v4991
        %5407 = vmatprep.subr.bf16.mxu0 %v4998
        %5408 = vmatpush1.bf16.msra.mxu0 %v4997
        %5409 = vmatprep.subr.bf16.mxu0 %v5004
        %5410 = vmatpush1.bf16.msra.mxu0 %v5003
        %5411 = vmatprep.mubr.bf16.mxu0 %v3568
        %5412 = vmatmul.mubr.bf16.gmra.mrb[0].mxu0 %v3567
        %v5413 = vpop.f32.mrb[0].mxu0
        %v5414 = vadd.f32 %v5373, %v5413
        %v5415 = vpop.f32.mrb[0].mxu0
        %v5416 = vadd.f32 %v5375, %v5415
        %v5417 = vpop.f32.mrb[0].mxu0
        %v5418 = vpop.f32.mrb[0].mxu0
        %5419 = vdwg.mxu0
        %5420 = vmatprep.subr.bf16.mxu0 %v4724
        %5421 = vmatpush1.bf16.msra.mxu0 %v4723
        %5422 = vmatprep.subr.bf16.mxu0 %v4730
        %5423 = vmatpush1.bf16.msra.mxu0 %v4729
        %5424 = vmatprep.subr.bf16.mxu0 %v4736
        %5425 = vmatpush1.bf16.msra.mxu0 %v4735
        %5426 = vmatprep.subr.bf16.mxu0 %v4742
        %5427 = vmatpush1.bf16.msra.mxu0 %v4741
        %5428 = vmatprep.subr.bf16.mxu0 %v4748
        %5429 = vmatpush1.bf16.msra.mxu0 %v4747
        %5430 = vmatprep.subr.bf16.mxu0 %v4754
        %5431 = vmatpush1.bf16.msra.mxu0 %v4753
        %5432 = vmatprep.subr.bf16.mxu0 %v4760
        %5433 = vmatpush1.bf16.msra.mxu0 %v4759
        %5434 = vmatprep.subr.bf16.mxu0 %v4766
        %5435 = vmatpush1.bf16.msra.mxu0 %v4765
        %5436 = vmatprep.subr.bf16.mxu0 %v4772
        %5437 = vmatpush1.bf16.msra.mxu0 %v4771
        %5438 = vmatprep.subr.bf16.mxu0 %v4778
        %5439 = vmatpush1.bf16.msra.mxu0 %v4777
        %5440 = vmatprep.subr.bf16.mxu0 %v4784
        %5441 = vmatpush1.bf16.msra.mxu0 %v4783
        %5442 = vmatprep.subr.bf16.mxu0 %v4790
        %5443 = vmatpush1.bf16.msra.mxu0 %v4789
        %5444 = vmatprep.subr.bf16.mxu0 %v4796
        %5445 = vmatpush1.bf16.msra.mxu0 %v4795
        %5446 = vmatprep.subr.bf16.mxu0 %v4802
        %5447 = vmatpush1.bf16.msra.mxu0 %v4801
        %5448 = vmatprep.subr.bf16.mxu0 %v4808
        %5449 = vmatpush1.bf16.msra.mxu0 %v4807
        %5450 = vmatprep.subr.bf16.mxu0 %v4814
        %5451 = vmatpush1.bf16.msra.mxu0 %v4813
        %5452 = vmatprep.mubr.bf16.mxu0 %v3472
        %5453 = vmatmul.mubr.bf16.gmra.mrb[0].mxu0 %v3471
        %v5454 = vpop.f32.mrb[0].mxu0
        %v5455 = vadd.f32 0.0, %v5454
        %v5456 = vpop.f32.mrb[0].mxu0
        %v5457 = vadd.f32 0.0, %v5456
        %v5458 = vpop.f32.mrb[0].mxu0
        %v5459 = vpop.f32.mrb[0].mxu0
        %5460 = vdwg.mxu0
        %5461 = vmatprep.subr.bf16.mxu0 %v4820
        %5462 = vmatpush1.bf16.msra.mxu0 %v4819
        %5463 = vmatprep.subr.bf16.mxu0 %v4826
        %5464 = vmatpush1.bf16.msra.mxu0 %v4825
        %5465 = vmatprep.subr.bf16.mxu0 %v4832
        %5466 = vmatpush1.bf16.msra.mxu0 %v4831
        %5467 = vmatprep.subr.bf16.mxu0 %v4838
        %5468 = vmatpush1.bf16.msra.mxu0 %v4837
        %5469 = vmatprep.subr.bf16.mxu0 %v4844
        %5470 = vmatpush1.bf16.msra.mxu0 %v4843
        %5471 = vmatprep.subr.bf16.mxu0 %v4850
        %5472 = vmatpush1.bf16.msra.mxu0 %v4849
        %5473 = vmatprep.subr.bf16.mxu0 %v4856
        %5474 = vmatpush1.bf16.msra.mxu0 %v4855
        %5475 = vmatprep.subr.bf16.mxu0 %v4862
        %5476 = vmatpush1.bf16.msra.mxu0 %v4861
        %5477 = vmatprep.subr.bf16.mxu0 %v4868
        %5478 = vmatpush1.bf16.msra.mxu0 %v4867
        %5479 = vmatprep.subr.bf16.mxu0 %v4874
        %5480 = vmatpush1.bf16.msra.mxu0 %v4873
        %5481 = vmatprep.subr.bf16.mxu0 %v4880
        %5482 = vmatpush1.bf16.msra.mxu0 %v4879
        %5483 = vmatprep.subr.bf16.mxu0 %v4886
        %5484 = vmatpush1.bf16.msra.mxu0 %v4885
        %5485 = vmatprep.subr.bf16.mxu0 %v4892
        %5486 = vmatpush1.bf16.msra.mxu0 %v4891
        %5487 = vmatprep.subr.bf16.mxu0 %v4898
        %5488 = vmatpush1.bf16.msra.mxu0 %v4897
        %5489 = vmatprep.subr.bf16.mxu0 %v4904
        %5490 = vmatpush1.bf16.msra.mxu0 %v4903
        %5491 = vmatprep.subr.bf16.mxu0 %v4910
        %5492 = vmatpush1.bf16.msra.mxu0 %v4909
        %5493 = vmatprep.mubr.bf16.mxu0 %v3520
        %5494 = vmatmul.mubr.bf16.gmra.mrb[0].mxu0 %v3519
        %v5495 = vpop.f32.mrb[0].mxu0
        %v5496 = vadd.f32 %v5455, %v5495
        %v5497 = vpop.f32.mrb[0].mxu0
        %v5498 = vadd.f32 %v5457, %v5497
        %v5499 = vpop.f32.mrb[0].mxu0
        %v5500 = vpop.f32.mrb[0].mxu0
        %5501 = vdwg.mxu0
        %5502 = vmatprep.subr.bf16.mxu0 %v4916
        %5503 = vmatpush1.bf16.msra.mxu0 %v4915
        %5504 = vmatprep.subr.bf16.mxu0 %v4922
        %5505 = vmatpush1.bf16.msra.mxu0 %v4921
        %5506 = vmatprep.subr.bf16.mxu0 %v4928
        %5507 = vmatpush1.bf16.msra.mxu0 %v4927
        %5508 = vmatprep.subr.bf16.mxu0 %v4934
        %5509 = vmatpush1.bf16.msra.mxu0 %v4933
        %5510 = vmatprep.subr.bf16.mxu0 %v4940
        %5511 = vmatpush1.bf16.msra.mxu0 %v4939
        %5512 = vmatprep.subr.bf16.mxu0 %v4946
        %5513 = vmatpush1.bf16.msra.mxu0 %v4945
        %5514 = vmatprep.subr.bf16.mxu0 %v4952
        %5515 = vmatpush1.bf16.msra.mxu0 %v4951
        %5516 = vmatprep.subr.bf16.mxu0 %v4958
        %5517 = vmatpush1.bf16.msra.mxu0 %v4957
        %5518 = vmatprep.subr.bf16.mxu0 %v4964
        %5519 = vmatpush1.bf16.msra.mxu0 %v4963
        %5520 = vmatprep.subr.bf16.mxu0 %v4970
        %5521 = vmatpush1.bf16.msra.mxu0 %v4969
        %5522 = vmatprep.subr.bf16.mxu0 %v4976
        %5523 = vmatpush1.bf16.msra.mxu0 %v4975
        %5524 = vmatprep.subr.bf16.mxu0 %v4982
        %5525 = vmatpush1.bf16.msra.mxu0 %v4981
        %5526 = vmatprep.subr.bf16.mxu0 %v4988
        %5527 = vmatpush1.bf16.msra.mxu0 %v4987
        %5528 = vmatprep.subr.bf16.mxu0 %v4994
        %5529 = vmatpush1.bf16.msra.mxu0 %v4993
        %5530 = vmatprep.subr.bf16.mxu0 %v5000
        %5531 = vmatpush1.bf16.msra.mxu0 %v4999
        %5532 = vmatprep.subr.bf16.mxu0 %v5006
        %5533 = vmatpush1.bf16.msra.mxu0 %v5005
        %5534 = vmatprep.mubr.bf16.mxu0 %v3568
        %5535 = vmatmul.mubr.bf16.gmra.mrb[0].mxu0 %v3567
        %v5536 = vpop.f32.mrb[0].mxu0
        %v5537 = vadd.f32 %v5496, %v5536
        %v5538 = vpop.f32.mrb[0].mxu0
        %v5539 = vadd.f32 %v5498, %v5538
        %v5540 = vpop.f32.mrb[0].mxu0
        %v5541 = vpop.f32.mrb[0].mxu0
        %5542 = vdwg.mxu0
        %5543 = vmatprep.subr.bf16.mxu0 %v4726
        %5544 = vmatpush1.bf16.msra.mxu0 %v4725
        %5545 = vmatprep.subr.bf16.mxu0 %v4732
        %5546 = vmatpush1.bf16.msra.mxu0 %v4731
        %5547 = vmatprep.subr.bf16.mxu0 %v4738
        %5548 = vmatpush1.bf16.msra.mxu0 %v4737
        %5549 = vmatprep.subr.bf16.mxu0 %v4744
        %5550 = vmatpush1.bf16.msra.mxu0 %v4743
        %5551 = vmatprep.subr.bf16.mxu0 %v4750
        %5552 = vmatpush1.bf16.msra.mxu0 %v4749
        %5553 = vmatprep.subr.bf16.mxu0 %v4756
        %5554 = vmatpush1.bf16.msra.mxu0 %v4755
        %5555 = vmatprep.subr.bf16.mxu0 %v4762
        %5556 = vmatpush1.bf16.msra.mxu0 %v4761
        %5557 = vmatprep.subr.bf16.mxu0 %v4768
        %5558 = vmatpush1.bf16.msra.mxu0 %v4767
        %5559 = vmatprep.subr.bf16.mxu0 %v4774
        %5560 = vmatpush1.bf16.msra.mxu0 %v4773
        %5561 = vmatprep.subr.bf16.mxu0 %v4780
        %5562 = vmatpush1.bf16.msra.mxu0 %v4779
        %5563 = vmatprep.subr.bf16.mxu0 %v4786
        %5564 = vmatpush1.bf16.msra.mxu0 %v4785
        %5565 = vmatprep.subr.bf16.mxu0 %v4792
        %5566 = vmatpush1.bf16.msra.mxu0 %v4791
        %5567 = vmatprep.subr.bf16.mxu0 %v4798
        %5568 = vmatpush1.bf16.msra.mxu0 %v4797
        %5569 = vmatprep.subr.bf16.mxu0 %v4804
        %5570 = vmatpush1.bf16.msra.mxu0 %v4803
        %5571 = vmatprep.subr.bf16.mxu0 %v4810
        %5572 = vmatpush1.bf16.msra.mxu0 %v4809
        %5573 = vmatprep.subr.bf16.mxu0 %v4816
        %5574 = vmatpush1.bf16.msra.mxu0 %v4815
        %5575 = vmatprep.mubr.bf16.mxu0 %v3472
        %5576 = vmatmul.mubr.bf16.gmra.mrb[0].mxu0 %v3471
        %v5577 = vpop.f32.mrb[0].mxu0
        %v5578 = vadd.f32 0.0, %v5577
        %v5579 = vpop.f32.mrb[0].mxu0
        %v5580 = vadd.f32 0.0, %v5579
        %v5581 = vpop.f32.mrb[0].mxu0
        %v5582 = vpop.f32.mrb[0].mxu0
        %5583 = vdwg.mxu0
        %5584 = vmatprep.subr.bf16.mxu0 %v4822
        %5585 = vmatpush1.bf16.msra.mxu0 %v4821
        %5586 = vmatprep.subr.bf16.mxu0 %v4828
        %5587 = vmatpush1.bf16.msra.mxu0 %v4827
        %5588 = vmatprep.subr.bf16.mxu0 %v4834
        %5589 = vmatpush1.bf16.msra.mxu0 %v4833
        %5590 = vmatprep.subr.bf16.mxu0 %v4840
        %5591 = vmatpush1.bf16.msra.mxu0 %v4839
        %5592 = vmatprep.subr.bf16.mxu0 %v4846
        %5593 = vmatpush1.bf16.msra.mxu0 %v4845
        %5594 = vmatprep.subr.bf16.mxu0 %v4852
        %5595 = vmatpush1.bf16.msra.mxu0 %v4851
        %5596 = vmatprep.subr.bf16.mxu0 %v4858
        %5597 = vmatpush1.bf16.msra.mxu0 %v4857
        %5598 = vmatprep.subr.bf16.mxu0 %v4864
        %5599 = vmatpush1.bf16.msra.mxu0 %v4863
        %5600 = vmatprep.subr.bf16.mxu0 %v4870
        %5601 = vmatpush1.bf16.msra.mxu0 %v4869
        %5602 = vmatprep.subr.bf16.mxu0 %v4876
        %5603 = vmatpush1.bf16.msra.mxu0 %v4875
        %5604 = vmatprep.subr.bf16.mxu0 %v4882
        %5605 = vmatpush1.bf16.msra.mxu0 %v4881
        %5606 = vmatprep.subr.bf16.mxu0 %v4888
        %5607 = vmatpush1.bf16.msra.mxu0 %v4887
        %5608 = vmatprep.subr.bf16.mxu0 %v4894
        %5609 = vmatpush1.bf16.msra.mxu0 %v4893
        %5610 = vmatprep.subr.bf16.mxu0 %v4900
        %5611 = vmatpush1.bf16.msra.mxu0 %v4899
        %5612 = vmatprep.subr.bf16.mxu0 %v4906
        %5613 = vmatpush1.bf16.msra.mxu0 %v4905
        %5614 = vmatprep.subr.bf16.mxu0 %v4912
        %5615 = vmatpush1.bf16.msra.mxu0 %v4911
        %5616 = vmatprep.mubr.bf16.mxu0 %v3520
        %5617 = vmatmul.mubr.bf16.gmra.mrb[0].mxu0 %v3519
        %v5618 = vpop.f32.mrb[0].mxu0
        %v5619 = vadd.f32 %v5578, %v5618
        %v5620 = vpop.f32.mrb[0].mxu0
        %v5621 = vadd.f32 %v5580, %v5620
        %v5622 = vpop.f32.mrb[0].mxu0
        %v5623 = vpop.f32.mrb[0].mxu0
        %5624 = vdwg.mxu0
        %5625 = vmatprep.subr.bf16.mxu0 %v4918
        %5626 = vmatpush1.bf16.msra.mxu0 %v4917
        %5627 = vmatprep.subr.bf16.mxu0 %v4924
        %5628 = vmatpush1.bf16.msra.mxu0 %v4923
        %5629 = vmatprep.subr.bf16.mxu0 %v4930
        %5630 = vmatpush1.bf16.msra.mxu0 %v4929
        %5631 = vmatprep.subr.bf16.mxu0 %v4936
        %5632 = vmatpush1.bf16.msra.mxu0 %v4935
        %5633 = vmatprep.subr.bf16.mxu0 %v4942
        %5634 = vmatpush1.bf16.msra.mxu0 %v4941
        %5635 = vmatprep.subr.bf16.mxu0 %v4948
        %5636 = vmatpush1.bf16.msra.mxu0 %v4947
        %5637 = vmatprep.subr.bf16.mxu0 %v4954
        %5638 = vmatpush1.bf16.msra.mxu0 %v4953
        %5639 = vmatprep.subr.bf16.mxu0 %v4960
        %5640 = vmatpush1.bf16.msra.mxu0 %v4959
        %5641 = vmatprep.subr.bf16.mxu0 %v4966
        %5642 = vmatpush1.bf16.msra.mxu0 %v4965
        %5643 = vmatprep.subr.bf16.mxu0 %v4972
        %5644 = vmatpush1.bf16.msra.mxu0 %v4971
        %5645 = vmatprep.subr.bf16.mxu0 %v4978
        %5646 = vmatpush1.bf16.msra.mxu0 %v4977
        %5647 = vmatprep.subr.bf16.mxu0 %v4984
        %5648 = vmatpush1.bf16.msra.mxu0 %v4983
        %5649 = vmatprep.subr.bf16.mxu0 %v4990
        %5650 = vmatpush1.bf16.msra.mxu0 %v4989
        %5651 = vmatprep.subr.bf16.mxu0 %v4996
        %5652 = vmatpush1.bf16.msra.mxu0 %v4995
        %5653 = vmatprep.subr.bf16.mxu0 %v5002
        %5654 = vmatpush1.bf16.msra.mxu0 %v5001
        %5655 = vmatprep.subr.bf16.mxu0 %v5008
        %5656 = vmatpush1.bf16.msra.mxu0 %v5007
        %5657 = vmatprep.mubr.bf16.mxu0 %v3568
        %5658 = vmatmul.mubr.bf16.gmra.mrb[0].mxu0 %v3567
        %v5659 = vpop.f32.mrb[0].mxu0
        %v5660 = vadd.f32 %v5619, %v5659
        %v5661 = vpop.f32.mrb[0].mxu0
        %v5662 = vadd.f32 %v5621, %v5661
        %v5663 = vpop.f32.mrb[0].mxu0
        %v5664 = vpop.f32.mrb[0].mxu0
        %5665 = vdwg.mxu0
        %v5666 = vld [vmem:[#allocation21] sm:$0x3f]
        %v5668 = vlaneseq
        %v5669 = vshrl.u32 %v5668, 7
        %v5670 = vsub.s32 0, %v5669
        %v5671 = vrot.slane %v5666, %v5670
        %v5672 = vlaneseq
        %v5673 = vshrl.u32 %v5672, 7
        %v5674 = vsub.s32 1, %v5673
        %v5675 = vrot.slane %v5666, %v5674
        %v5676 = vlaneseq
        %v5677 = vshrl.u32 %v5676, 7
        %v5678 = vsub.s32 2, %v5677
        %v5679 = vrot.slane %v5666, %v5678
        %v5680 = vlaneseq
        %v5681 = vshrl.u32 %v5680, 7
        %v5682 = vsub.s32 3, %v5681
        %v5683 = vrot.slane %v5666, %v5682
        %v5684 = vlaneseq
        %v5685 = vshrl.u32 %v5684, 7
        %v5686 = vsub.s32 4, %v5685
        %v5687 = vrot.slane %v5666, %v5686
        %v5688 = vlaneseq
        %v5689 = vshrl.u32 %v5688, 7
        %v5690 = vsub.s32 5, %v5689
        %v5691 = vrot.slane %v5666, %v5690
        %v5698 = vmul.f32 %v5414, %v5671
        %v5699 = vmul.f32 %v5416, %v5675
        %v5700 = vmul.f32 %v5537, %v5679
        %v5701 = vmul.f32 %v5539, %v5683
        %v5702 = vmul.f32 %v5660, %v5687
        %v5703 = vmul.f32 %v5662, %v5691
        %v5704 = vld [vmem:[#allocation23] sm:$0x3f]
        %v5706 = vlaneseq
        %v5707 = vshrl.u32 %v5706, 7
        %v5708 = vsub.s32 0, %v5707
        %v5709 = vrot.slane %v5704, %v5708
        %v5710 = vlaneseq
        %v5711 = vshrl.u32 %v5710, 7
        %v5712 = vsub.s32 1, %v5711
        %v5713 = vrot.slane %v5704, %v5712
        %v5714 = vlaneseq
        %v5715 = vshrl.u32 %v5714, 7
        %v5716 = vsub.s32 2, %v5715
        %v5717 = vrot.slane %v5704, %v5716
        %v5718 = vlaneseq
        %v5719 = vshrl.u32 %v5718, 7
        %v5720 = vsub.s32 3, %v5719
        %v5721 = vrot.slane %v5704, %v5720
        %v5722 = vlaneseq
        %v5723 = vshrl.u32 %v5722, 7
        %v5724 = vsub.s32 4, %v5723
        %v5725 = vrot.slane %v5704, %v5724
        %v5726 = vlaneseq
        %v5727 = vshrl.u32 %v5726, 7
        %v5728 = vsub.s32 5, %v5727
        %v5729 = vrot.slane %v5704, %v5728
        %v5736 = vadd.f32 %v5698, %v5709
        %v5737 = vadd.f32 %v5699, %v5713
        %v5738 = vadd.f32 %v5700, %v5717
        %v5739 = vadd.f32 %v5701, %v5721
        %v5740 = vadd.f32 %v5702, %v5725
        %v5741 = vadd.f32 %v5703, %v5729
        %v5742 = vmax.f32 %v5736, 0.0
        %v5743 = vmax.f32 %v5737, 0.0
        %v5744 = vmax.f32 %v5738, 0.0
        %v5745 = vmax.f32 %v5739, 0.0
        %v5746 = vmax.f32 %v5740, 0.0
        %v5747 = vmax.f32 %v5741, 0.0
        %v5748 = vadd.f32 %v5742, 0.0
        %v5749 = vadd.f32 %v5743, 0.0
        %v5750 = vadd.f32 %v5744, 0.0
        %v5751 = vadd.f32 %v5748, %v5745
        %v5752 = vadd.f32 %v5749, %v5746
        %v5753 = vadd.f32 %v5750, %v5747
        %v5757 = vrot.slane %v5742, 1
        %v5758 = vrot.slane %v5743, 1
        %v5759 = vrot.slane %v5744, 1
        %v5763 = vadd.f32 %v5751, %v5757
        %v5764 = vadd.f32 %v5752, %v5758
        %v5765 = vadd.f32 %v5753, %v5759
        %v5769 = vrot.slane %v5745, 1
        %v5770 = vrot.slane %v5746, 1
        %v5771 = vrot.slane %v5747, 1
        %v5775 = vadd.f32 %v5763, %v5769
        %v5776 = vadd.f32 %v5764, %v5770
        %v5777 = vadd.f32 %v5765, %v5771
        %v5778 = vmul.f32 %v5775, 0.25
        %v5779 = vmul.f32 %v5776, 0.25
        %v5780 = vmul.f32 %v5777, 0.25
        %v5781 = vpack.c.bf16 %v5778, %v5778
        %v5782 = vpack.c.bf16 %v5779, %v5779
        %v5783 = vpack.c.bf16 %v5780, %v5780
        %v5784 = vld [vmem:[#allocation24] sm:$0xff]
        %v5785 = vld [vmem:[#allocation24 + $0x8] sm:$0xff]
        %v5786 = vld [vmem:[#allocation24 + $0x10] sm:$0xff]
        %v5787 = vld [vmem:[#allocation24 + $0x18] sm:$0xff]
        %v5788 = vld [vmem:[#allocation24 + $0x20] sm:$0xff]
        %v5789 = vld [vmem:[#allocation24 + $0x28] sm:$0xff]
        %v5790 = vld [vmem:[#allocation24 + $0x30] sm:$0xff]
        %v5791 = vld [vmem:[#allocation24 + $0x38] sm:$0xff]
        %v5792 = vld [vmem:[#allocation24 + $0x40] sm:$0xff]
        %v5793 = vld [vmem:[#allocation24 + $0x48] sm:$0xff]
        %v5794 = vld [vmem:[#allocation24 + $0x50] sm:$0xff]
        %v5795 = vld [vmem:[#allocation24 + $0x58] sm:$0xff]
        %v5796 = vld [vmem:[#allocation24 + $0x60] sm:$0xff]
        %v5797 = vld [vmem:[#allocation24 + $0x68] sm:$0xff]
        %v5798 = vld [vmem:[#allocation24 + $0x70] sm:$0xff]
        %v5799 = vld [vmem:[#allocation24 + $0x78] sm:$0xff]
        %v5800 = vld [vmem:[#allocation24 + $0x80] sm:$0xff]
        %v5801 = vld [vmem:[#allocation24 + $0x88] sm:$0xff]
        %v5802 = vld [vmem:[#allocation24 + $0x90] sm:$0xff]
        %v5803 = vld [vmem:[#allocation24 + $0x98] sm:$0xff]
        %v5804 = vld [vmem:[#allocation24 + $0xa0] sm:$0xff]
        %v5805 = vld [vmem:[#allocation24 + $0xa8] sm:$0xff]
        %v5806 = vld [vmem:[#allocation24 + $0xb0] sm:$0xff]
        %v5807 = vld [vmem:[#allocation24 + $0xb8] sm:$0xff]
        %v5808 = vld [vmem:[#allocation24 + $0xc0] sm:$0xff]
        %v5809 = vld [vmem:[#allocation24 + $0xc8] sm:$0xff]
        %v5810 = vld [vmem:[#allocation24 + $0xd0] sm:$0xff]
        %v5811 = vld [vmem:[#allocation24 + $0xd8] sm:$0xff]
        %v5812 = vld [vmem:[#allocation24 + $0xe0] sm:$0xff]
        %v5813 = vld [vmem:[#allocation24 + $0xe8] sm:$0xff]
        %v5814 = vld [vmem:[#allocation24 + $0xf0] sm:$0xff]
        %v5815 = vld [vmem:[#allocation24 + $0xf8] sm:$0xff]
        %v5816 = vld [vmem:[#allocation24 + $0x100] sm:$0xff]
        %v5817 = vld [vmem:[#allocation24 + $0x108] sm:$0xff]
        %v5818 = vld [vmem:[#allocation24 + $0x110] sm:$0xff]
        %v5819 = vld [vmem:[#allocation24 + $0x118] sm:$0xff]
        %v5820 = vld [vmem:[#allocation24 + $0x120] sm:$0xff]
        %v5821 = vld [vmem:[#allocation24 + $0x128] sm:$0xff]
        %v5822 = vld [vmem:[#allocation24 + $0x130] sm:$0xff]
        %v5823 = vld [vmem:[#allocation24 + $0x138] sm:$0xff]
        %v5824 = vld [vmem:[#allocation24 + $0x140] sm:$0xff]
        %v5825 = vld [vmem:[#allocation24 + $0x148] sm:$0xff]
        %v5826 = vld [vmem:[#allocation24 + $0x150] sm:$0xff]
        %v5827 = vld [vmem:[#allocation24 + $0x158] sm:$0xff]
        %v5828 = vld [vmem:[#allocation24 + $0x160] sm:$0xff]
        %v5829 = vld [vmem:[#allocation24 + $0x168] sm:$0xff]
        %v5830 = vld [vmem:[#allocation24 + $0x170] sm:$0xff]
        %v5831 = vld [vmem:[#allocation24 + $0x178] sm:$0xff]
        %v5832 = vld [vmem:[#allocation24 + $0x180] sm:$0xff]
        %v5833 = vld [vmem:[#allocation24 + $0x188] sm:$0xff]
        %v5834 = vld [vmem:[#allocation24 + $0x190] sm:$0xff]
        %v5835 = vld [vmem:[#allocation24 + $0x198] sm:$0xff]
        %v5836 = vld [vmem:[#allocation24 + $0x1a0] sm:$0xff]
        %v5837 = vld [vmem:[#allocation24 + $0x1a8] sm:$0xff]
        %v5838 = vld [vmem:[#allocation24 + $0x1b0] sm:$0xff]
        %v5839 = vld [vmem:[#allocation24 + $0x1b8] sm:$0xff]
        %v5840 = vld [vmem:[#allocation24 + $0x1c0] sm:$0xff]
        %v5841 = vld [vmem:[#allocation24 + $0x1c8] sm:$0xff]
        %v5842 = vld [vmem:[#allocation24 + $0x1d0] sm:$0xff]
        %v5843 = vld [vmem:[#allocation24 + $0x1d8] sm:$0xff]
        %v5844 = vld [vmem:[#allocation24 + $0x1e0] sm:$0xff]
        %v5845 = vld [vmem:[#allocation24 + $0x1e8] sm:$0xff]
        %v5846 = vld [vmem:[#allocation24 + $0x1f0] sm:$0xff]
        %v5847 = vld [vmem:[#allocation24 + $0x1f8] sm:$0xff]
        %v5848 = vld [vmem:[#allocation24 + $0x200] sm:$0xff]
        %v5849 = vld [vmem:[#allocation24 + $0x208] sm:$0xff]
        %v5850 = vld [vmem:[#allocation24 + $0x210] sm:$0xff]
        %v5851 = vld [vmem:[#allocation24 + $0x218] sm:$0xff]
        %v5852 = vld [vmem:[#allocation24 + $0x220] sm:$0xff]
        %v5853 = vld [vmem:[#allocation24 + $0x228] sm:$0xff]
        %v5854 = vld [vmem:[#allocation24 + $0x230] sm:$0xff]
        %v5855 = vld [vmem:[#allocation24 + $0x238] sm:$0xff]
        %v5856 = vld [vmem:[#allocation24 + $0x240] sm:$0xff]
        %v5857 = vld [vmem:[#allocation24 + $0x248] sm:$0xff]
        %v5858 = vld [vmem:[#allocation24 + $0x250] sm:$0xff]
        %v5859 = vld [vmem:[#allocation24 + $0x258] sm:$0xff]
        %v5860 = vld [vmem:[#allocation24 + $0x260] sm:$0xff]
        %v5861 = vld [vmem:[#allocation24 + $0x268] sm:$0xff]
        %v5862 = vld [vmem:[#allocation24 + $0x270] sm:$0xff]
        %v5863 = vld [vmem:[#allocation24 + $0x278] sm:$0xff]
        %v5864 = vld [vmem:[#allocation24 + $0x280] sm:$0xff]
        %v5865 = vld [vmem:[#allocation24 + $0x288] sm:$0xff]
        %v5866 = vld [vmem:[#allocation24 + $0x290] sm:$0xff]
        %v5867 = vld [vmem:[#allocation24 + $0x298] sm:$0xff]
        %v5868 = vld [vmem:[#allocation24 + $0x2a0] sm:$0xff]
        %v5869 = vld [vmem:[#allocation24 + $0x2a8] sm:$0xff]
        %v5870 = vld [vmem:[#allocation24 + $0x2b0] sm:$0xff]
        %v5871 = vld [vmem:[#allocation24 + $0x2b8] sm:$0xff]
        %v5872 = vld [vmem:[#allocation24 + $0x2c0] sm:$0xff]
        %v5873 = vld [vmem:[#allocation24 + $0x2c8] sm:$0xff]
        %v5874 = vld [vmem:[#allocation24 + $0x2d0] sm:$0xff]
        %v5875 = vld [vmem:[#allocation24 + $0x2d8] sm:$0xff]
        %v5876 = vld [vmem:[#allocation24 + $0x2e0] sm:$0xff]
        %v5877 = vld [vmem:[#allocation24 + $0x2e8] sm:$0xff]
        %v5878 = vld [vmem:[#allocation24 + $0x2f0] sm:$0xff]
        %v5879 = vld [vmem:[#allocation24 + $0x2f8] sm:$0xff]
        %v5880 = vld [vmem:[#allocation26] sm:$0xf]
        %v5977 = vunpack.c.l.b16 %v5784
        %v5978 = vunpack.c.h.b16 %v5784
        %v5979 = vunpack.c.l.b16 %v5785
        %v5980 = vunpack.c.h.b16 %v5785
        %v5981 = vunpack.c.l.b16 %v5786
        %v5982 = vunpack.c.h.b16 %v5786
        %v5983 = vunpack.c.l.b16 %v5787
        %v5984 = vunpack.c.h.b16 %v5787
        %v5985 = vunpack.c.l.b16 %v5788
        %v5986 = vunpack.c.h.b16 %v5788
        %v5987 = vunpack.c.l.b16 %v5789
        %v5988 = vunpack.c.h.b16 %v5789
        %v5989 = vunpack.c.l.b16 %v5790
        %v5990 = vunpack.c.h.b16 %v5790
        %v5991 = vunpack.c.l.b16 %v5791
        %v5992 = vunpack.c.h.b16 %v5791
        %v5993 = vunpack.c.l.b16 %v5792
        %v5994 = vunpack.c.h.b16 %v5792
        %v5995 = vunpack.c.l.b16 %v5793
        %v5996 = vunpack.c.h.b16 %v5793
        %v5997 = vunpack.c.l.b16 %v5794
        %v5998 = vunpack.c.h.b16 %v5794
        %v5999 = vunpack.c.l.b16 %v5795
        %v6000 = vunpack.c.h.b16 %v5795
        %v6001 = vunpack.c.l.b16 %v5796
        %v6002 = vunpack.c.h.b16 %v5796
        %v6003 = vunpack.c.l.b16 %v5797
        %v6004 = vunpack.c.h.b16 %v5797
        %v6005 = vunpack.c.l.b16 %v5798
        %v6006 = vunpack.c.h.b16 %v5798
        %v6007 = vunpack.c.l.b16 %v5799
        %v6008 = vunpack.c.h.b16 %v5799
        %v6009 = vunpack.c.l.b16 %v5800
        %v6010 = vunpack.c.h.b16 %v5800
        %v6011 = vunpack.c.l.b16 %v5801
        %v6012 = vunpack.c.h.b16 %v5801
        %v6013 = vunpack.c.l.b16 %v5802
        %v6014 = vunpack.c.h.b16 %v5802
        %v6015 = vunpack.c.l.b16 %v5803
        %v6016 = vunpack.c.h.b16 %v5803
        %v6017 = vunpack.c.l.b16 %v5804
        %v6018 = vunpack.c.h.b16 %v5804
        %v6019 = vunpack.c.l.b16 %v5805
        %v6020 = vunpack.c.h.b16 %v5805
        %v6021 = vunpack.c.l.b16 %v5806
        %v6022 = vunpack.c.h.b16 %v5806
        %v6023 = vunpack.c.l.b16 %v5807
        %v6024 = vunpack.c.h.b16 %v5807
        %v6025 = vunpack.c.l.b16 %v5808
        %v6026 = vunpack.c.h.b16 %v5808
        %v6027 = vunpack.c.l.b16 %v5809
        %v6028 = vunpack.c.h.b16 %v5809
        %v6029 = vunpack.c.l.b16 %v5810
        %v6030 = vunpack.c.h.b16 %v5810
        %v6031 = vunpack.c.l.b16 %v5811
        %v6032 = vunpack.c.h.b16 %v5811
        %v6033 = vunpack.c.l.b16 %v5812
        %v6034 = vunpack.c.h.b16 %v5812
        %v6035 = vunpack.c.l.b16 %v5813
        %v6036 = vunpack.c.h.b16 %v5813
        %v6037 = vunpack.c.l.b16 %v5814
        %v6038 = vunpack.c.h.b16 %v5814
        %v6039 = vunpack.c.l.b16 %v5815
        %v6040 = vunpack.c.h.b16 %v5815
        %v6041 = vunpack.c.l.b16 %v5816
        %v6042 = vunpack.c.h.b16 %v5816
        %v6043 = vunpack.c.l.b16 %v5817
        %v6044 = vunpack.c.h.b16 %v5817
        %v6045 = vunpack.c.l.b16 %v5818
        %v6046 = vunpack.c.h.b16 %v5818
        %v6047 = vunpack.c.l.b16 %v5819
        %v6048 = vunpack.c.h.b16 %v5819
        %v6049 = vunpack.c.l.b16 %v5820
        %v6050 = vunpack.c.h.b16 %v5820
        %v6051 = vunpack.c.l.b16 %v5821
        %v6052 = vunpack.c.h.b16 %v5821
        %v6053 = vunpack.c.l.b16 %v5822
        %v6054 = vunpack.c.h.b16 %v5822
        %v6055 = vunpack.c.l.b16 %v5823
        %v6056 = vunpack.c.h.b16 %v5823
        %v6057 = vunpack.c.l.b16 %v5824
        %v6058 = vunpack.c.h.b16 %v5824
        %v6059 = vunpack.c.l.b16 %v5825
        %v6060 = vunpack.c.h.b16 %v5825
        %v6061 = vunpack.c.l.b16 %v5826
        %v6062 = vunpack.c.h.b16 %v5826
        %v6063 = vunpack.c.l.b16 %v5827
        %v6064 = vunpack.c.h.b16 %v5827
        %v6065 = vunpack.c.l.b16 %v5828
        %v6066 = vunpack.c.h.b16 %v5828
        %v6067 = vunpack.c.l.b16 %v5829
        %v6068 = vunpack.c.h.b16 %v5829
        %v6069 = vunpack.c.l.b16 %v5830
        %v6070 = vunpack.c.h.b16 %v5830
        %v6071 = vunpack.c.l.b16 %v5831
        %v6072 = vunpack.c.h.b16 %v5831
        %v6073 = vunpack.c.l.b16 %v5832
        %v6074 = vunpack.c.h.b16 %v5832
        %v6075 = vunpack.c.l.b16 %v5833
        %v6076 = vunpack.c.h.b16 %v5833
        %v6077 = vunpack.c.l.b16 %v5834
        %v6078 = vunpack.c.h.b16 %v5834
        %v6079 = vunpack.c.l.b16 %v5835
        %v6080 = vunpack.c.h.b16 %v5835
        %v6081 = vunpack.c.l.b16 %v5836
        %v6082 = vunpack.c.h.b16 %v5836
        %v6083 = vunpack.c.l.b16 %v5837
        %v6084 = vunpack.c.h.b16 %v5837
        %v6085 = vunpack.c.l.b16 %v5838
        %v6086 = vunpack.c.h.b16 %v5838
        %v6087 = vunpack.c.l.b16 %v5839
        %v6088 = vunpack.c.h.b16 %v5839
        %v6089 = vunpack.c.l.b16 %v5840
        %v6090 = vunpack.c.h.b16 %v5840
        %v6091 = vunpack.c.l.b16 %v5841
        %v6092 = vunpack.c.h.b16 %v5841
        %v6093 = vunpack.c.l.b16 %v5842
        %v6094 = vunpack.c.h.b16 %v5842
        %v6095 = vunpack.c.l.b16 %v5843
        %v6096 = vunpack.c.h.b16 %v5843
        %v6097 = vunpack.c.l.b16 %v5844
        %v6098 = vunpack.c.h.b16 %v5844
        %v6099 = vunpack.c.l.b16 %v5845
        %v6100 = vunpack.c.h.b16 %v5845
        %v6101 = vunpack.c.l.b16 %v5846
        %v6102 = vunpack.c.h.b16 %v5846
        %v6103 = vunpack.c.l.b16 %v5847
        %v6104 = vunpack.c.h.b16 %v5847
        %v6105 = vunpack.c.l.b16 %v5848
        %v6106 = vunpack.c.h.b16 %v5848
        %v6107 = vunpack.c.l.b16 %v5849
        %v6108 = vunpack.c.h.b16 %v5849
        %v6109 = vunpack.c.l.b16 %v5850
        %v6110 = vunpack.c.h.b16 %v5850
        %v6111 = vunpack.c.l.b16 %v5851
        %v6112 = vunpack.c.h.b16 %v5851
        %v6113 = vunpack.c.l.b16 %v5852
        %v6114 = vunpack.c.h.b16 %v5852
        %v6115 = vunpack.c.l.b16 %v5853
        %v6116 = vunpack.c.h.b16 %v5853
        %v6117 = vunpack.c.l.b16 %v5854
        %v6118 = vunpack.c.h.b16 %v5854
        %v6119 = vunpack.c.l.b16 %v5855
        %v6120 = vunpack.c.h.b16 %v5855
        %v6121 = vunpack.c.l.b16 %v5856
        %v6122 = vunpack.c.h.b16 %v5856
        %v6123 = vunpack.c.l.b16 %v5857
        %v6124 = vunpack.c.h.b16 %v5857
        %v6125 = vunpack.c.l.b16 %v5858
        %v6126 = vunpack.c.h.b16 %v5858
        %v6127 = vunpack.c.l.b16 %v5859
        %v6128 = vunpack.c.h.b16 %v5859
        %v6129 = vunpack.c.l.b16 %v5860
        %v6130 = vunpack.c.h.b16 %v5860
        %v6131 = vunpack.c.l.b16 %v5861
        %v6132 = vunpack.c.h.b16 %v5861
        %v6133 = vunpack.c.l.b16 %v5862
        %v6134 = vunpack.c.h.b16 %v5862
        %v6135 = vunpack.c.l.b16 %v5863
        %v6136 = vunpack.c.h.b16 %v5863
        %v6137 = vunpack.c.l.b16 %v5864
        %v6138 = vunpack.c.h.b16 %v5864
        %v6139 = vunpack.c.l.b16 %v5865
        %v6140 = vunpack.c.h.b16 %v5865
        %v6141 = vunpack.c.l.b16 %v5866
        %v6142 = vunpack.c.h.b16 %v5866
        %v6143 = vunpack.c.l.b16 %v5867
        %v6144 = vunpack.c.h.b16 %v5867
        %v6145 = vunpack.c.l.b16 %v5868
        %v6146 = vunpack.c.h.b16 %v5868
        %v6147 = vunpack.c.l.b16 %v5869
        %v6148 = vunpack.c.h.b16 %v5869
        %v6149 = vunpack.c.l.b16 %v5870
        %v6150 = vunpack.c.h.b16 %v5870
        %v6151 = vunpack.c.l.b16 %v5871
        %v6152 = vunpack.c.h.b16 %v5871
        %v6153 = vunpack.c.l.b16 %v5872
        %v6154 = vunpack.c.h.b16 %v5872
        %v6155 = vunpack.c.l.b16 %v5873
        %v6156 = vunpack.c.h.b16 %v5873
        %v6157 = vunpack.c.l.b16 %v5874
        %v6158 = vunpack.c.h.b16 %v5874
        %v6159 = vunpack.c.l.b16 %v5875
        %v6160 = vunpack.c.h.b16 %v5875
        %v6161 = vunpack.c.l.b16 %v5876
        %v6162 = vunpack.c.h.b16 %v5876
        %v6163 = vunpack.c.l.b16 %v5877
        %v6164 = vunpack.c.h.b16 %v5877
        %v6165 = vunpack.c.l.b16 %v5878
        %v6166 = vunpack.c.h.b16 %v5878
        %v6167 = vunpack.c.l.b16 %v5879
        %v6168 = vunpack.c.h.b16 %v5879
        %v6169 = vpack.c.b16 %v5981, %v5977
        %v6170 = vpack.c.b16 %v5982, %v5978
        %v6171 = vpack.c.b16 %v5983, %v5979
        %v6172 = vpack.c.b16 %v5984, %v5980
        %v6173 = vpack.c.b16 %v5989, %v5985
        %v6174 = vpack.c.b16 %v5990, %v5986
        %v6175 = vpack.c.b16 %v5991, %v5987
        %v6176 = vpack.c.b16 %v5992, %v5988
        %v6177 = vpack.c.b16 %v5997, %v5993
        %v6178 = vpack.c.b16 %v5998, %v5994
        %v6179 = vpack.c.b16 %v5999, %v5995
        %v6180 = vpack.c.b16 %v6000, %v5996
        %v6181 = vpack.c.b16 %v6005, %v6001
        %v6182 = vpack.c.b16 %v6006, %v6002
        %v6183 = vpack.c.b16 %v6007, %v6003
        %v6184 = vpack.c.b16 %v6008, %v6004
        %v6185 = vpack.c.b16 %v6013, %v6009
        %v6186 = vpack.c.b16 %v6014, %v6010
        %v6187 = vpack.c.b16 %v6015, %v6011
        %v6188 = vpack.c.b16 %v6016, %v6012
        %v6189 = vpack.c.b16 %v6021, %v6017
        %v6190 = vpack.c.b16 %v6022, %v6018
        %v6191 = vpack.c.b16 %v6023, %v6019
        %v6192 = vpack.c.b16 %v6024, %v6020
        %v6193 = vpack.c.b16 %v6029, %v6025
        %v6194 = vpack.c.b16 %v6030, %v6026
        %v6195 = vpack.c.b16 %v6031, %v6027
        %v6196 = vpack.c.b16 %v6032, %v6028
        %v6197 = vpack.c.b16 %v6037, %v6033
        %v6198 = vpack.c.b16 %v6038, %v6034
        %v6199 = vpack.c.b16 %v6039, %v6035
        %v6200 = vpack.c.b16 %v6040, %v6036
        %v6201 = vpack.c.b16 %v6045, %v6041
        %v6202 = vpack.c.b16 %v6046, %v6042
        %v6203 = vpack.c.b16 %v6047, %v6043
        %v6204 = vpack.c.b16 %v6048, %v6044
        %v6205 = vpack.c.b16 %v6053, %v6049
        %v6206 = vpack.c.b16 %v6054, %v6050
        %v6207 = vpack.c.b16 %v6055, %v6051
        %v6208 = vpack.c.b16 %v6056, %v6052
        %v6209 = vpack.c.b16 %v6061, %v6057
        %v6210 = vpack.c.b16 %v6062, %v6058
        %v6211 = vpack.c.b16 %v6063, %v6059
        %v6212 = vpack.c.b16 %v6064, %v6060
        %v6213 = vpack.c.b16 %v6069, %v6065
        %v6214 = vpack.c.b16 %v6070, %v6066
        %v6215 = vpack.c.b16 %v6071, %v6067
        %v6216 = vpack.c.b16 %v6072, %v6068
        %v6217 = vpack.c.b16 %v6077, %v6073
        %v6218 = vpack.c.b16 %v6078, %v6074
        %v6219 = vpack.c.b16 %v6079, %v6075
        %v6220 = vpack.c.b16 %v6080, %v6076
        %v6221 = vpack.c.b16 %v6085, %v6081
        %v6222 = vpack.c.b16 %v6086, %v6082
        %v6223 = vpack.c.b16 %v6087, %v6083
        %v6224 = vpack.c.b16 %v6088, %v6084
        %v6225 = vpack.c.b16 %v6093, %v6089
        %v6226 = vpack.c.b16 %v6094, %v6090
        %v6227 = vpack.c.b16 %v6095, %v6091
        %v6228 = vpack.c.b16 %v6096, %v6092
        %v6229 = vpack.c.b16 %v6101, %v6097
        %v6230 = vpack.c.b16 %v6102, %v6098
        %v6231 = vpack.c.b16 %v6103, %v6099
        %v6232 = vpack.c.b16 %v6104, %v6100
        %v6233 = vpack.c.b16 %v6109, %v6105
        %v6234 = vpack.c.b16 %v6110, %v6106
        %v6235 = vpack.c.b16 %v6111, %v6107
        %v6236 = vpack.c.b16 %v6112, %v6108
        %v6237 = vpack.c.b16 %v6117, %v6113
        %v6238 = vpack.c.b16 %v6118, %v6114
        %v6239 = vpack.c.b16 %v6119, %v6115
        %v6240 = vpack.c.b16 %v6120, %v6116
        %v6241 = vpack.c.b16 %v6125, %v6121
        %v6242 = vpack.c.b16 %v6126, %v6122
        %v6243 = vpack.c.b16 %v6127, %v6123
        %v6244 = vpack.c.b16 %v6128, %v6124
        %v6245 = vpack.c.b16 %v6133, %v6129
        %v6246 = vpack.c.b16 %v6134, %v6130
        %v6247 = vpack.c.b16 %v6135, %v6131
        %v6248 = vpack.c.b16 %v6136, %v6132
        %v6249 = vpack.c.b16 %v6141, %v6137
        %v6250 = vpack.c.b16 %v6142, %v6138
        %v6251 = vpack.c.b16 %v6143, %v6139
        %v6252 = vpack.c.b16 %v6144, %v6140
        %v6253 = vpack.c.b16 %v6149, %v6145
        %v6254 = vpack.c.b16 %v6150, %v6146
        %v6255 = vpack.c.b16 %v6151, %v6147
        %v6256 = vpack.c.b16 %v6152, %v6148
        %v6257 = vpack.c.b16 %v6157, %v6153
        %v6258 = vpack.c.b16 %v6158, %v6154
        %v6259 = vpack.c.b16 %v6159, %v6155
        %v6260 = vpack.c.b16 %v6160, %v6156
        %v6261 = vpack.c.b16 %v6165, %v6161
        %v6262 = vpack.c.b16 %v6166, %v6162
        %v6263 = vpack.c.b16 %v6167, %v6163
        %v6264 = vpack.c.b16 %v6168, %v6164
        %v6362 = vlaneseq
        %v6363 = vshrl.u32 %v6362, 7
        %v6364 = vsub.s32 0, %v6363
        %v6365 = vrot.slane %v5880, %v6364
        %v6366 = vlaneseq
        %v6367 = vshrl.u32 %v6366, 7
        %v6368 = vsub.s32 1, %v6367
        %v6369 = vrot.slane %v5880, %v6368
        %v6370 = vlaneseq
        %v6371 = vshrl.u32 %v6370, 7
        %v6372 = vsub.s32 2, %v6371
        %v6373 = vrot.slane %v5880, %v6372
        %v6374 = vlaneseq
        %v6375 = vshrl.u32 %v6374, 7
        %v6376 = vsub.s32 3, %v6375
        %v6377 = vrot.slane %v5880, %v6376
        %6382 = vmatprep.subr.bf16.mxu0 %v6170
        %6383 = vmatpush1.bf16.msra.mxu0 %v6169
        %6384 = vmatprep.subr.bf16.mxu0 %v6174
        %6385 = vmatpush1.bf16.msra.mxu0 %v6173
        %6386 = vmatprep.subr.bf16.mxu0 %v6178
        %6387 = vmatpush1.bf16.msra.mxu0 %v6177
        %6388 = vmatprep.subr.bf16.mxu0 %v6182
        %6389 = vmatpush1.bf16.msra.mxu0 %v6181
        %6390 = vmatprep.subr.bf16.mxu0 %v6186
        %6391 = vmatpush1.bf16.msra.mxu0 %v6185
        %6392 = vmatprep.subr.bf16.mxu0 %v6190
        %6393 = vmatpush1.bf16.msra.mxu0 %v6189
        %6394 = vmatprep.subr.bf16.mxu0 %v6194
        %6395 = vmatpush1.bf16.msra.mxu0 %v6193
        %6396 = vmatprep.subr.bf16.mxu0 %v6198
        %6397 = vmatpush1.bf16.msra.mxu0 %v6197
        %6398 = vmatprep.subr.bf16.mxu0 %v6202
        %6399 = vmatpush1.bf16.msra.mxu0 %v6201
        %6400 = vmatprep.subr.bf16.mxu0 %v6206
        %6401 = vmatpush1.bf16.msra.mxu0 %v6205
        %6402 = vmatprep.subr.bf16.mxu0 %v6210
        %6403 = vmatpush1.bf16.msra.mxu0 %v6209
        %6404 = vmatprep.subr.bf16.mxu0 %v6214
        %6405 = vmatpush1.bf16.msra.mxu0 %v6213
        %6406 = vmatprep.subr.bf16.mxu0 %v6218
        %6407 = vmatpush1.bf16.msra.mxu0 %v6217
        %6408 = vmatprep.subr.bf16.mxu0 %v6222
        %6409 = vmatpush1.bf16.msra.mxu0 %v6221
        %6410 = vmatprep.subr.bf16.mxu0 %v6226
        %6411 = vmatpush1.bf16.msra.mxu0 %v6225
        %6412 = vmatprep.subr.bf16.mxu0 %v6230
        %6413 = vmatpush1.bf16.msra.mxu0 %v6229
        %6414 = vmatprep.mubr.bf16.mxu0 %v5782
        %6415 = vmatmul.mubr.bf16.gmra.mrb[0].mxu0 %v5781
        %v6416 = vpop.f32.mrb[0].mxu0
        %v6417 = vadd.f32 %v6365, %v6416
        %v6418 = vpop.f32.mrb[0].mxu0
        %v6419 = vadd.f32 %v6369, %v6418
        %v6420 = vpop.f32.mrb[0].mxu0
        %v6421 = vpop.f32.mrb[0].mxu0
        %6422 = vdwg.mxu0
        %6423 = vmatprep.subr.bf16.mxu0 %v6234
        %6424 = vmatpush1.bf16.msra.mxu0 %v6233
        %6425 = vmatprep.subr.bf16.mxu0 %v6238
        %6426 = vmatpush1.bf16.msra.mxu0 %v6237
        %6427 = vmatprep.subr.bf16.mxu0 %v6242
        %6428 = vmatpush1.bf16.msra.mxu0 %v6241
        %6429 = vmatprep.subr.bf16.mxu0 %v6246
        %6430 = vmatpush1.bf16.msra.mxu0 %v6245
        %6431 = vmatprep.subr.bf16.mxu0 %v6250
        %6432 = vmatpush1.bf16.msra.mxu0 %v6249
        %6433 = vmatprep.subr.bf16.mxu0 %v6254
        %6434 = vmatpush1.bf16.msra.mxu0 %v6253
        %6435 = vmatprep.subr.bf16.mxu0 %v6258
        %6436 = vmatpush1.bf16.msra.mxu0 %v6257
        %6437 = vmatprep.subr.bf16.mxu0 %v6262
        %6438 = vmatpush1.bf16.msra.mxu0 %v6261
        %6439 = vmatprep.subr.bf16.mxu0 0
        %6440 = vmatpush1.bf16.msra.mxu0 0
        %6441 = vmatprep.subr.bf16.mxu0 0
        %6442 = vmatpush1.bf16.msra.mxu0 0
        %6443 = vmatprep.subr.bf16.mxu0 0
        %6444 = vmatpush1.bf16.msra.mxu0 0
        %6445 = vmatprep.subr.bf16.mxu0 0
        %6446 = vmatpush1.bf16.msra.mxu0 0
        %6447 = vmatprep.subr.bf16.mxu0 0
        %6448 = vmatpush1.bf16.msra.mxu0 0
        %6449 = vmatprep.subr.bf16.mxu0 0
        %6450 = vmatpush1.bf16.msra.mxu0 0
        %6451 = vmatprep.subr.bf16.mxu0 0
        %6452 = vmatpush1.bf16.msra.mxu0 0
        %6453 = vmatprep.subr.bf16.mxu0 0
        %6454 = vmatpush1.bf16.msra.mxu0 0
        %6455 = vmatprep.mubr.bf16.mxu0 0
        %6456 = vmatmul.mubr.bf16.gmra.mrb[0].mxu0 %v5783
        %v6457 = vpop.f32.mrb[0].mxu0
        %v6458 = vadd.f32 %v6417, %v6457
        %v6459 = vpop.f32.mrb[0].mxu0
        %v6460 = vadd.f32 %v6419, %v6459
        %v6461 = vpop.f32.mrb[0].mxu0
        %v6462 = vpop.f32.mrb[0].mxu0
        %6463 = vdwg.mxu0
        %6464 = vmatprep.subr.bf16.mxu0 %v6172
        %6465 = vmatpush1.bf16.msra.mxu0 %v6171
        %6466 = vmatprep.subr.bf16.mxu0 %v6176
        %6467 = vmatpush1.bf16.msra.mxu0 %v6175
        %6468 = vmatprep.subr.bf16.mxu0 %v6180
        %6469 = vmatpush1.bf16.msra.mxu0 %v6179
        %6470 = vmatprep.subr.bf16.mxu0 %v6184
        %6471 = vmatpush1.bf16.msra.mxu0 %v6183
        %6472 = vmatprep.subr.bf16.mxu0 %v6188
        %6473 = vmatpush1.bf16.msra.mxu0 %v6187
        %6474 = vmatprep.subr.bf16.mxu0 %v6192
        %6475 = vmatpush1.bf16.msra.mxu0 %v6191
        %6476 = vmatprep.subr.bf16.mxu0 %v6196
        %6477 = vmatpush1.bf16.msra.mxu0 %v6195
        %6478 = vmatprep.subr.bf16.mxu0 %v6200
        %6479 = vmatpush1.bf16.msra.mxu0 %v6199
        %6480 = vmatprep.subr.bf16.mxu0 %v6204
        %6481 = vmatpush1.bf16.msra.mxu0 %v6203
        %6482 = vmatprep.subr.bf16.mxu0 %v6208
        %6483 = vmatpush1.bf16.msra.mxu0 %v6207
        %6484 = vmatprep.subr.bf16.mxu0 %v6212
        %6485 = vmatpush1.bf16.msra.mxu0 %v6211
        %6486 = vmatprep.subr.bf16.mxu0 %v6216
        %6487 = vmatpush1.bf16.msra.mxu0 %v6215
        %6488 = vmatprep.subr.bf16.mxu0 %v6220
        %6489 = vmatpush1.bf16.msra.mxu0 %v6219
        %6490 = vmatprep.subr.bf16.mxu0 %v6224
        %6491 = vmatpush1.bf16.msra.mxu0 %v6223
        %6492 = vmatprep.subr.bf16.mxu0 %v6228
        %6493 = vmatpush1.bf16.msra.mxu0 %v6227
        %6494 = vmatprep.subr.bf16.mxu0 %v6232
        %6495 = vmatpush1.bf16.msra.mxu0 %v6231
        %6496 = vmatprep.mubr.bf16.mxu0 %v5782
        %6497 = vmatmul.mubr.bf16.gmra.mrb[0].mxu0 %v5781
        %v6498 = vpop.f32.mrb[0].mxu0
        %v6499 = vadd.f32 %v6373, %v6498
        %v6500 = vpop.f32.mrb[0].mxu0
        %v6501 = vadd.f32 %v6377, %v6500
        %v6502 = vpop.f32.mrb[0].mxu0
        %v6503 = vpop.f32.mrb[0].mxu0
        %6504 = vdwg.mxu0
        %6505 = vmatprep.subr.bf16.mxu0 %v6236
        %6506 = vmatpush1.bf16.msra.mxu0 %v6235
        %6507 = vmatprep.subr.bf16.mxu0 %v6240
        %6508 = vmatpush1.bf16.msra.mxu0 %v6239
        %6509 = vmatprep.subr.bf16.mxu0 %v6244
        %6510 = vmatpush1.bf16.msra.mxu0 %v6243
        %6511 = vmatprep.subr.bf16.mxu0 %v6248
        %6512 = vmatpush1.bf16.msra.mxu0 %v6247
        %6513 = vmatprep.subr.bf16.mxu0 %v6252
        %6514 = vmatpush1.bf16.msra.mxu0 %v6251
        %6515 = vmatprep.subr.bf16.mxu0 %v6256
        %6516 = vmatpush1.bf16.msra.mxu0 %v6255
        %6517 = vmatprep.subr.bf16.mxu0 %v6260
        %6518 = vmatpush1.bf16.msra.mxu0 %v6259
        %6519 = vmatprep.subr.bf16.mxu0 %v6264
        %6520 = vmatpush1.bf16.msra.mxu0 %v6263
        %6521 = vmatprep.subr.bf16.mxu0 0
        %6522 = vmatpush1.bf16.msra.mxu0 0
        %6523 = vmatprep.subr.bf16.mxu0 0
        %6524 = vmatpush1.bf16.msra.mxu0 0
        %6525 = vmatprep.subr.bf16.mxu0 0
        %6526 = vmatpush1.bf16.msra.mxu0 0
        %6527 = vmatprep.subr.bf16.mxu0 0
        %6528 = vmatpush1.bf16.msra.mxu0 0
        %6529 = vmatprep.subr.bf16.mxu0 0
        %6530 = vmatpush1.bf16.msra.mxu0 0
        %6531 = vmatprep.subr.bf16.mxu0 0
        %6532 = vmatpush1.bf16.msra.mxu0 0
        %6533 = vmatprep.subr.bf16.mxu0 0
        %6534 = vmatpush1.bf16.msra.mxu0 0
        %6535 = vmatprep.subr.bf16.mxu0 0
        %6536 = vmatpush1.bf16.msra.mxu0 0
        %6537 = vmatprep.mubr.bf16.mxu0 0
        %6538 = vmatmul.mubr.bf16.gmra.mrb[0].mxu0 %v5783
        %v6539 = vpop.f32.mrb[0].mxu0
        %v6540 = vadd.f32 %v6499, %v6539
        %v6541 = vpop.f32.mrb[0].mxu0
        %v6542 = vadd.f32 %v6501, %v6541
        %v6543 = vpop.f32.mrb[0].mxu0
        %v6544 = vpop.f32.mrb[0].mxu0
        %6545 = vdwg.mxu0
        %v6546 = vmax.f32 %v6458, 0.0
        %v6547 = vmax.f32 %v6460, 0.0
        %v6548 = vmax.f32 %v6540, 0.0
        %v6549 = vmax.f32 %v6542, 0.0
        %v6550 = vld [vmem:[%s19] sm:$0xff]
        %v6551 = vld [vmem:[%s19 + $0x8] sm:$0xff]
        %v6552 = vld [vmem:[%s19 + $0x10] sm:$0xff]
        %v6553 = vld [vmem:[%s19 + $0x18] sm:$0xff]
        %v6554 = vld [vmem:[%s19 + $0x20] sm:$0xff]
        %v6555 = vld [vmem:[%s19 + $0x28] sm:$0xff]
        %v6556 = vld [vmem:[%s19 + $0x30] sm:$0xff]
        %v6557 = vld [vmem:[%s19 + $0x38] sm:$0xff]
        %v6558 = vld [vmem:[%s19 + $0x40] sm:$0xff]
        %v6559 = vld [vmem:[%s19 + $0x48] sm:$0xff]
        %v6560 = vld [vmem:[%s19 + $0x50] sm:$0xff]
        %v6561 = vld [vmem:[%s19 + $0x58] sm:$0xff]
        %v6562 = vld [vmem:[%s19 + $0x60] sm:$0xff]
        %v6563 = vld [vmem:[%s19 + $0x68] sm:$0xff]
        %v6564 = vld [vmem:[%s19 + $0x70] sm:$0xff]
        %v6565 = vld [vmem:[%s19 + $0x78] sm:$0xff]
        %v6566 = vld [vmem:[%s19 + $0x80] sm:$0xff]
        %v6567 = vld [vmem:[%s19 + $0x88] sm:$0xff]
        %v6568 = vld [vmem:[%s19 + $0x90] sm:$0xff]
        %v6569 = vld [vmem:[%s19 + $0x98] sm:$0xff]
        %v6570 = vld [vmem:[%s19 + $0xa0] sm:$0xff]
        %v6571 = vld [vmem:[%s19 + $0xa8] sm:$0xff]
        %v6572 = vld [vmem:[%s19 + $0xb0] sm:$0xff]
        %v6573 = vld [vmem:[%s19 + $0xb8] sm:$0xff]
        %v6574 = vld [vmem:[%s19 + $0xc0] sm:$0xff]
        %v6575 = vld [vmem:[%s19 + $0xc8] sm:$0xff]
        %v6576 = vld [vmem:[%s19 + $0xd0] sm:$0xff]
        %v6577 = vld [vmem:[%s19 + $0xd8] sm:$0xff]
        %v6578 = vld [vmem:[%s19 + $0xe0] sm:$0xff]
        %v6579 = vld [vmem:[%s19 + $0xe8] sm:$0xff]
        %v6580 = vld [vmem:[%s19 + $0xf0] sm:$0xff]
        %v6581 = vld [vmem:[%s19 + $0xf8] sm:$0xff]
        %v6582 = vld [vmem:[#allocation27] sm:$0x1]
        %6583 = vmatprep.subr.mxu0 0.0
        %6584 = vmatpush1.msra.mxu0 %v6550
        %6585 = vmatprep.subr.mxu0 0.0
        %6586 = vmatpush1.msra.mxu0 %v6551
        %6587 = vmatprep.subr.mxu0 0.0
        %6588 = vmatpush1.msra.mxu0 %v6552
        %6589 = vmatprep.subr.mxu0 0.0
        %6590 = vmatpush1.msra.mxu0 %v6553
        %6591 = vmatprep.subr.mxu0 0.0
        %6592 = vmatpush1.msra.mxu0 %v6554
        %6593 = vmatprep.subr.mxu0 0.0
        %6594 = vmatpush1.msra.mxu0 %v6555
        %6595 = vmatprep.subr.mxu0 0.0
        %6596 = vmatpush1.msra.mxu0 %v6556
        %6597 = vmatprep.subr.mxu0 0.0
        %6598 = vmatpush1.msra.mxu0 %v6557
        %6599 = vmatprep.subr.mxu0 0.0
        %6600 = vmatpush1.msra.mxu0 %v6558
        %6601 = vmatprep.subr.mxu0 0.0
        %6602 = vmatpush1.msra.mxu0 %v6559
        %6603 = vmatprep.subr.mxu0 0.0
        %6604 = vmatpush1.msra.mxu0 %v6560
        %6605 = vmatprep.subr.mxu0 0.0
        %6606 = vmatpush1.msra.mxu0 %v6561
        %6607 = vmatprep.subr.mxu0 0.0
        %6608 = vmatpush1.msra.mxu0 %v6562
        %6609 = vmatprep.subr.mxu0 0.0
        %6610 = vmatpush1.msra.mxu0 %v6563
        %6611 = vmatprep.subr.mxu0 0.0
        %6612 = vmatpush1.msra.mxu0 %v6564
        %6613 = vmatprep.subr.mxu0 0.0
        %6614 = vmatpush1.msra.mxu0 %v6565
        %6615 = vmatprep.subr.mxu0 0.0
        %6616 = vmatpush1.msra.mxu0 %v6566
        %6617 = vmatprep.subr.mxu0 0.0
        %6618 = vmatpush1.msra.mxu0 %v6567
        %6619 = vmatprep.subr.mxu0 0.0
        %6620 = vmatpush1.msra.mxu0 %v6568
        %6621 = vmatprep.subr.mxu0 0.0
        %6622 = vmatpush1.msra.mxu0 %v6569
        %6623 = vmatprep.subr.mxu0 0.0
        %6624 = vmatpush1.msra.mxu0 %v6570
        %6625 = vmatprep.subr.mxu0 0.0
        %6626 = vmatpush1.msra.mxu0 %v6571
        %6627 = vmatprep.subr.mxu0 0.0
        %6628 = vmatpush1.msra.mxu0 %v6572
        %6629 = vmatprep.subr.mxu0 0.0
        %6630 = vmatpush1.msra.mxu0 %v6573
        %6631 = vmatprep.subr.mxu0 0.0
        %6632 = vmatpush1.msra.mxu0 %v6574
        %6633 = vmatprep.subr.mxu0 0.0
        %6634 = vmatpush1.msra.mxu0 %v6575
        %6635 = vmatprep.subr.mxu0 0.0
        %6636 = vmatpush1.msra.mxu0 %v6576
        %6637 = vmatprep.subr.mxu0 0.0
        %6638 = vmatpush1.msra.mxu0 %v6577
        %6639 = vmatprep.subr.mxu0 0.0
        %6640 = vmatpush1.msra.mxu0 %v6578
        %6641 = vmatprep.subr.mxu0 0.0
        %6642 = vmatpush1.msra.mxu0 %v6579
        %6643 = vmatprep.subr.mxu0 0.0
        %6644 = vmatpush1.msra.mxu0 %v6580
        %6645 = vmatprep.subr.mxu0 0.0
        %6646 = vmatpush1.msra.mxu0 %v6581
        %6647 = vmatprep.mubr.f32.mxu0 %v6547
        %6648 = vmatmul.mubr.f32.gmra.mrb[0].mxu0 %v6546
        %v6649 = vpop.f32.mrb[0].mxu0
        %v6650 = vadd.f32 %v6582, %v6649
        %v6651 = vpop.f32.mrb[0].mxu0
        %6652 = vdwg.mxu0
        %v6653 = vxor.u32 %v6650, 2147483648
        %v6654 = vmul.f32 %v6653, 1.442695
        %v6655 = vpow.pop %v6654
        %v6656 = vadd.f32 %v6655, 1.0
        %v6657 = vrcp.pop %v6656
        %v6658 = vmul.f32 1.0, %v6657
        %v6659 = vld [vmem:[%s21] sm:$0xff]
        %v6660 = vld [vmem:[%s21 + $0x8] sm:$0xff]
        %v6661 = vld [vmem:[%s21 + $0x10] sm:$0xff]
        %v6662 = vld [vmem:[%s21 + $0x18] sm:$0xff]
        %v6663 = vld [vmem:[%s21 + $0x20] sm:$0xff]
        %v6664 = vld [vmem:[%s21 + $0x28] sm:$0xff]
        %v6665 = vld [vmem:[%s21 + $0x30] sm:$0xff]
        %v6666 = vld [vmem:[%s21 + $0x38] sm:$0xff]
        %v6667 = vld [vmem:[%s21 + $0x40] sm:$0xff]
        %v6668 = vld [vmem:[%s21 + $0x48] sm:$0xff]
        %v6669 = vld [vmem:[%s21 + $0x50] sm:$0xff]
        %v6670 = vld [vmem:[%s21 + $0x58] sm:$0xff]
        %v6671 = vld [vmem:[%s21 + $0x60] sm:$0xff]
        %v6672 = vld [vmem:[%s21 + $0x68] sm:$0xff]
        %v6673 = vld [vmem:[%s21 + $0x70] sm:$0xff]
        %v6674 = vld [vmem:[%s21 + $0x78] sm:$0xff]
        %v6675 = vld [vmem:[%s21 + $0x80] sm:$0xff]
        %v6676 = vld [vmem:[%s21 + $0x88] sm:$0xff]
        %v6677 = vld [vmem:[%s21 + $0x90] sm:$0xff]
        %v6678 = vld [vmem:[%s21 + $0x98] sm:$0xff]
        %v6679 = vld [vmem:[%s21 + $0xa0] sm:$0xff]
        %v6680 = vld [vmem:[%s21 + $0xa8] sm:$0xff]
        %v6681 = vld [vmem:[%s21 + $0xb0] sm:$0xff]
        %v6682 = vld [vmem:[%s21 + $0xb8] sm:$0xff]
        %v6683 = vld [vmem:[%s21 + $0xc0] sm:$0xff]
        %v6684 = vld [vmem:[%s21 + $0xc8] sm:$0xff]
        %v6685 = vld [vmem:[%s21 + $0xd0] sm:$0xff]
        %v6686 = vld [vmem:[%s21 + $0xd8] sm:$0xff]
        %v6687 = vld [vmem:[%s21 + $0xe0] sm:$0xff]
        %v6688 = vld [vmem:[%s21 + $0xe8] sm:$0xff]
        %v6689 = vld [vmem:[%s21 + $0xf0] sm:$0xff]
        %v6690 = vld [vmem:[%s21 + $0xf8] sm:$0xff]
        %v6691 = vld [vmem:[#allocation2] sm:$0x1]
        %6692 = vmatprep.subr.mxu0 0.0
        %6693 = vmatpush1.msra.mxu0 %v6659
        %6694 = vmatprep.subr.mxu0 0.0
        %6695 = vmatpush1.msra.mxu0 %v6660
        %6696 = vmatprep.subr.mxu0 0.0
        %6697 = vmatpush1.msra.mxu0 %v6661
        %6698 = vmatprep.subr.mxu0 0.0
        %6699 = vmatpush1.msra.mxu0 %v6662
        %6700 = vmatprep.subr.mxu0 0.0
        %6701 = vmatpush1.msra.mxu0 %v6663
        %6702 = vmatprep.subr.mxu0 0.0
        %6703 = vmatpush1.msra.mxu0 %v6664
        %6704 = vmatprep.subr.mxu0 0.0
        %6705 = vmatpush1.msra.mxu0 %v6665
        %6706 = vmatprep.subr.mxu0 0.0
        %6707 = vmatpush1.msra.mxu0 %v6666
        %6708 = vmatprep.subr.mxu0 0.0
        %6709 = vmatpush1.msra.mxu0 %v6667
        %6710 = vmatprep.subr.mxu0 0.0
        %6711 = vmatpush1.msra.mxu0 %v6668
        %6712 = vmatprep.subr.mxu0 0.0
        %6713 = vmatpush1.msra.mxu0 %v6669
        %6714 = vmatprep.subr.mxu0 0.0
        %6715 = vmatpush1.msra.mxu0 %v6670
        %6716 = vmatprep.subr.mxu0 0.0
        %6717 = vmatpush1.msra.mxu0 %v6671
        %6718 = vmatprep.subr.mxu0 0.0
        %6719 = vmatpush1.msra.mxu0 %v6672
        %6720 = vmatprep.subr.mxu0 0.0
        %6721 = vmatpush1.msra.mxu0 %v6673
        %6722 = vmatprep.subr.mxu0 0.0
        %6723 = vmatpush1.msra.mxu0 %v6674
        %6724 = vmatprep.subr.mxu0 0.0
        %6725 = vmatpush1.msra.mxu0 %v6675
        %6726 = vmatprep.subr.mxu0 0.0
        %6727 = vmatpush1.msra.mxu0 %v6676
        %6728 = vmatprep.subr.mxu0 0.0
        %6729 = vmatpush1.msra.mxu0 %v6677
        %6730 = vmatprep.subr.mxu0 0.0
        %6731 = vmatpush1.msra.mxu0 %v6678
        %6732 = vmatprep.subr.mxu0 0.0
        %6733 = vmatpush1.msra.mxu0 %v6679
        %6734 = vmatprep.subr.mxu0 0.0
        %6735 = vmatpush1.msra.mxu0 %v6680
        %6736 = vmatprep.subr.mxu0 0.0
        %6737 = vmatpush1.msra.mxu0 %v6681
        %6738 = vmatprep.subr.mxu0 0.0
        %6739 = vmatpush1.msra.mxu0 %v6682
        %6740 = vmatprep.subr.mxu0 0.0
        %6741 = vmatpush1.msra.mxu0 %v6683
        %6742 = vmatprep.subr.mxu0 0.0
        %6743 = vmatpush1.msra.mxu0 %v6684
        %6744 = vmatprep.subr.mxu0 0.0
        %6745 = vmatpush1.msra.mxu0 %v6685
        %6746 = vmatprep.subr.mxu0 0.0
        %6747 = vmatpush1.msra.mxu0 %v6686
        %6748 = vmatprep.subr.mxu0 0.0
        %6749 = vmatpush1.msra.mxu0 %v6687
        %6750 = vmatprep.subr.mxu0 0.0
        %6751 = vmatpush1.msra.mxu0 %v6688
        %6752 = vmatprep.subr.mxu0 0.0
        %6753 = vmatpush1.msra.mxu0 %v6689
        %6754 = vmatprep.subr.mxu0 0.0
        %6755 = vmatpush1.msra.mxu0 %v6690
        %6756 = vmatprep.mubr.f32.mxu0 %v6549
        %6757 = vmatmul.mubr.f32.gmra.mrb[0].mxu0 %v6548
        %v6758 = vpop.f32.mrb[0].mxu0
        %v6759 = vadd.f32 %v6691, %v6758
        %v6760 = vpop.f32.mrb[0].mxu0
        %6761 = vdwg.mxu0
        %v6762 = vxor.u32 %v6759, 2147483648
        %v6763 = vmul.f32 %v6762, 1.442695
        %v6764 = vpow.pop %v6763
        %v6765 = vadd.f32 %v6764, 1.0
        %v6766 = vrcp.pop %v6765
        %v6767 = vmul.f32 1.0, %v6766
        %v6768 = vld [vmem:[#allocation29] sm:$0xff]
        %v6769 = vld [vmem:[#allocation29 + $0x8] sm:$0xff]
        %v6770 = vld [vmem:[#allocation29 + $0x10] sm:$0xff]
        %v6771 = vld [vmem:[#allocation29 + $0x18] sm:$0xff]
        %v6772 = vld [vmem:[#allocation29 + $0x20] sm:$0xff]
        %v6773 = vld [vmem:[#allocation29 + $0x28] sm:$0xff]
        %v6774 = vld [vmem:[#allocation29 + $0x30] sm:$0xff]
        %v6775 = vld [vmem:[#allocation29 + $0x38] sm:$0xff]
        %v6776 = vld [vmem:[#allocation29 + $0x40] sm:$0xff]
        %v6777 = vld [vmem:[#allocation29 + $0x48] sm:$0xff]
        %v6778 = vld [vmem:[#allocation29 + $0x50] sm:$0xff]
        %v6779 = vld [vmem:[#allocation29 + $0x58] sm:$0xff]
        %v6780 = vld [vmem:[#allocation29 + $0x60] sm:$0xff]
        %v6781 = vld [vmem:[#allocation29 + $0x68] sm:$0xff]
        %v6782 = vld [vmem:[#allocation29 + $0x70] sm:$0xff]
        %v6783 = vld [vmem:[#allocation29 + $0x78] sm:$0xff]
        %v6784 = vld [vmem:[#allocation29 + $0x80] sm:$0xff]
        %v6785 = vld [vmem:[#allocation29 + $0x88] sm:$0xff]
        %v6786 = vld [vmem:[#allocation29 + $0x90] sm:$0xff]
        %v6787 = vld [vmem:[#allocation29 + $0x98] sm:$0xff]
        %v6788 = vld [vmem:[#allocation29 + $0xa0] sm:$0xff]
        %v6789 = vld [vmem:[#allocation29 + $0xa8] sm:$0xff]
        %v6790 = vld [vmem:[#allocation29 + $0xb0] sm:$0xff]
        %v6791 = vld [vmem:[#allocation29 + $0xb8] sm:$0xff]
        %v6792 = vld [vmem:[#allocation29 + $0xc0] sm:$0xff]
        %v6793 = vld [vmem:[#allocation29 + $0xc8] sm:$0xff]
        %v6794 = vld [vmem:[#allocation29 + $0xd0] sm:$0xff]
        %v6795 = vld [vmem:[#allocation29 + $0xd8] sm:$0xff]
        %v6796 = vld [vmem:[#allocation29 + $0xe0] sm:$0xff]
        %v6797 = vld [vmem:[#allocation29 + $0xe8] sm:$0xff]
        %v6798 = vld [vmem:[#allocation29 + $0xf0] sm:$0xff]
        %v6799 = vld [vmem:[#allocation29 + $0xf8] sm:$0xff]
        %v6800 = vld [vmem:[#allocation30] sm:$0x3]
        %6802 = vset.pattern.permute.xlu0 0
        %6803 = vperm.xlu0 %6802, %v6767
        %v6804 = vpop.permute.xlu0 %6803
        %v6807 = vlaneseq
        %v6808 = vshrl.u32 %v6807, 7
        %v6809 = vsub.s32 0, %v6808
        %v6810 = vrot.slane %v6800, %v6809
        %v6811 = vlaneseq
        %v6812 = vshrl.u32 %v6811, 7
        %v6813 = vsub.s32 1, %v6812
        %v6814 = vrot.slane %v6800, %v6813
        %v6817 = vmul.f32 %v6804, %v6810
        %v6818 = vmul.f32 %v6804, %v6814
        %6819 = vmatprep.subr.mxu0 %v6769
        %6820 = vmatpush1.msra.mxu0 %v6768
        %6821 = vmatprep.subr.mxu0 %v6771
        %6822 = vmatpush1.msra.mxu0 %v6770
        %6823 = vmatprep.subr.mxu0 %v6773
        %6824 = vmatpush1.msra.mxu0 %v6772
        %6825 = vmatprep.subr.mxu0 %v6775
        %6826 = vmatpush1.msra.mxu0 %v6774
        %6827 = vmatprep.subr.mxu0 %v6777
        %6828 = vmatpush1.msra.mxu0 %v6776
        %6829 = vmatprep.subr.mxu0 %v6779
        %6830 = vmatpush1.msra.mxu0 %v6778
        %6831 = vmatprep.subr.mxu0 %v6781
        %6832 = vmatpush1.msra.mxu0 %v6780
        %6833 = vmatprep.subr.mxu0 %v6783
        %6834 = vmatpush1.msra.mxu0 %v6782
        %6835 = vmatprep.subr.mxu0 %v6785
        %6836 = vmatpush1.msra.mxu0 %v6784
        %6837 = vmatprep.subr.mxu0 %v6787
        %6838 = vmatpush1.msra.mxu0 %v6786
        %6839 = vmatprep.subr.mxu0 %v6789
        %6840 = vmatpush1.msra.mxu0 %v6788
        %6841 = vmatprep.subr.mxu0 %v6791
        %6842 = vmatpush1.msra.mxu0 %v6790
        %6843 = vmatprep.subr.mxu0 %v6793
        %6844 = vmatpush1.msra.mxu0 %v6792
        %6845 = vmatprep.subr.mxu0 %v6795
        %6846 = vmatpush1.msra.mxu0 %v6794
        %6847 = vmatprep.subr.mxu0 %v6797
        %6848 = vmatpush1.msra.mxu0 %v6796
        %6849 = vmatprep.subr.mxu0 %v6799
        %6850 = vmatpush1.msra.mxu0 %v6798
        %6851 = vmatprep.subr.mxu0 0.0
        %6852 = vmatpush1.msra.mxu0 0.0
        %6853 = vmatprep.subr.mxu0 0.0
        %6854 = vmatpush1.msra.mxu0 0.0
        %6855 = vmatprep.subr.mxu0 0.0
        %6856 = vmatpush1.msra.mxu0 0.0
        %6857 = vmatprep.subr.mxu0 0.0
        %6858 = vmatpush1.msra.mxu0 0.0
        %6859 = vmatprep.subr.mxu0 0.0
        %6860 = vmatpush1.msra.mxu0 0.0
        %6861 = vmatprep.subr.mxu0 0.0
        %6862 = vmatpush1.msra.mxu0 0.0
        %6863 = vmatprep.subr.mxu0 0.0
        %6864 = vmatpush1.msra.mxu0 0.0
        %6865 = vmatprep.subr.mxu0 0.0
        %6866 = vmatpush1.msra.mxu0 0.0
        %6867 = vmatprep.subr.mxu0 0.0
        %6868 = vmatpush1.msra.mxu0 0.0
        %6869 = vmatprep.subr.mxu0 0.0
        %6870 = vmatpush1.msra.mxu0 0.0
        %6871 = vmatprep.subr.mxu0 0.0
        %6872 = vmatpush1.msra.mxu0 0.0
        %6873 = vmatprep.subr.mxu0 0.0
        %6874 = vmatpush1.msra.mxu0 0.0
        %6875 = vmatprep.subr.mxu0 0.0
        %6876 = vmatpush1.msra.mxu0 0.0
        %6877 = vmatprep.subr.mxu0 0.0
        %6878 = vmatpush1.msra.mxu0 0.0
        %6879 = vmatprep.subr.mxu0 0.0
        %6880 = vmatpush1.msra.mxu0 0.0
        %6881 = vmatprep.subr.mxu0 0.0
        %6882 = vmatpush1.msra.mxu0 0.0
        %6883 = vmatprep.mubr.f32.mxu0 0.0
        %6884 = vmatmul.mubr.f32.gmra.mrb[0].mxu0 %v5780
        %v6885 = vpop.f32.mrb[0].mxu0
        %v6886 = vadd.f32 %v6817, %v6885
        %v6887 = vpop.f32.mrb[0].mxu0
        %v6888 = vadd.f32 %v6818, %v6887
        %6889 = vdwg.mxu0
        %v6890 = vld [vmem:[#allocation32] sm:$0x3]
        %v6892 = vlaneseq
        %v6893 = vshrl.u32 %v6892, 7
        %v6894 = vsub.s32 0, %v6893
        %v6895 = vrot.slane %v6890, %v6894
        %v6896 = vlaneseq
        %v6897 = vshrl.u32 %v6896, 7
        %v6898 = vsub.s32 1, %v6897
        %v6899 = vrot.slane %v6890, %v6898
        %v6902 = vadd.f32 %v6886, %v6895
        %v6903 = vadd.f32 %v6888, %v6899
        %v6904 = vmax.f32 %v6902, 0.0
        %v6905 = vmax.f32 %v6903, 0.0
        %v6906 = vld [vmem:[%s26] sm:$0xff]
        %v6907 = vld [vmem:[%s26 + $0x8] sm:$0xff]
        %v6908 = vld [vmem:[%s26 + $0x10] sm:$0xff]
        %v6909 = vld [vmem:[%s26 + $0x18] sm:$0xff]
        %v6910 = vld [vmem:[%s26 + $0x20] sm:$0xff]
        %v6911 = vld [vmem:[%s26 + $0x28] sm:$0xff]
        %v6912 = vld [vmem:[%s26 + $0x30] sm:$0xff]
        %v6913 = vld [vmem:[%s26 + $0x38] sm:$0xff]
        %v6914 = vld [vmem:[%s26 + $0x40] sm:$0xff]
        %v6915 = vld [vmem:[%s26 + $0x48] sm:$0xff]
        %v6916 = vld [vmem:[%s26 + $0x50] sm:$0xff]
        %v6917 = vld [vmem:[%s26 + $0x58] sm:$0xff]
        %v6918 = vld [vmem:[%s26 + $0x60] sm:$0xff]
        %v6919 = vld [vmem:[%s26 + $0x68] sm:$0xff]
        %v6920 = vld [vmem:[%s26 + $0x70] sm:$0xff]
        %v6921 = vld [vmem:[%s26 + $0x78] sm:$0xff]
        %v6922 = vld [vmem:[%s26 + $0x80] sm:$0xff]
        %v6923 = vld [vmem:[%s26 + $0x88] sm:$0xff]
        %v6924 = vld [vmem:[%s26 + $0x90] sm:$0xff]
        %v6925 = vld [vmem:[%s26 + $0x98] sm:$0xff]
        %v6926 = vld [vmem:[%s26 + $0xa0] sm:$0xff]
        %v6927 = vld [vmem:[%s26 + $0xa8] sm:$0xff]
        %v6928 = vld [vmem:[%s26 + $0xb0] sm:$0xff]
        %v6929 = vld [vmem:[%s26 + $0xb8] sm:$0xff]
        %v6930 = vld [vmem:[%s26 + $0xc0] sm:$0xff]
        %v6931 = vld [vmem:[%s26 + $0xc8] sm:$0xff]
        %v6932 = vld [vmem:[%s26 + $0xd0] sm:$0xff]
        %v6933 = vld [vmem:[%s26 + $0xd8] sm:$0xff]
        %v6934 = vld [vmem:[%s26 + $0xe0] sm:$0xff]
        %v6935 = vld [vmem:[%s26 + $0xe8] sm:$0xff]
        %v6936 = vld [vmem:[%s26 + $0xf0] sm:$0xff]
        %v6937 = vld [vmem:[%s26 + $0xf8] sm:$0xff]
        %v6938 = vld [vmem:[#allocation33] sm:$0x1]
        %6939 = vmatprep.subr.mxu0 0.0
        %6940 = vmatpush1.msra.mxu0 %v6906
        %6941 = vmatprep.subr.mxu0 0.0
        %6942 = vmatpush1.msra.mxu0 %v6907
        %6943 = vmatprep.subr.mxu0 0.0
        %6944 = vmatpush1.msra.mxu0 %v6908
        %6945 = vmatprep.subr.mxu0 0.0
        %6946 = vmatpush1.msra.mxu0 %v6909
        %6947 = vmatprep.subr.mxu0 0.0
        %6948 = vmatpush1.msra.mxu0 %v6910
        %6949 = vmatprep.subr.mxu0 0.0
        %6950 = vmatpush1.msra.mxu0 %v6911
        %6951 = vmatprep.subr.mxu0 0.0
        %6952 = vmatpush1.msra.mxu0 %v6912
        %6953 = vmatprep.subr.mxu0 0.0
        %6954 = vmatpush1.msra.mxu0 %v6913
        %6955 = vmatprep.subr.mxu0 0.0
        %6956 = vmatpush1.msra.mxu0 %v6914
        %6957 = vmatprep.subr.mxu0 0.0
        %6958 = vmatpush1.msra.mxu0 %v6915
        %6959 = vmatprep.subr.mxu0 0.0
        %6960 = vmatpush1.msra.mxu0 %v6916
        %6961 = vmatprep.subr.mxu0 0.0
        %6962 = vmatpush1.msra.mxu0 %v6917
        %6963 = vmatprep.subr.mxu0 0.0
        %6964 = vmatpush1.msra.mxu0 %v6918
        %6965 = vmatprep.subr.mxu0 0.0
        %6966 = vmatpush1.msra.mxu0 %v6919
        %6967 = vmatprep.subr.mxu0 0.0
        %6968 = vmatpush1.msra.mxu0 %v6920
        %6969 = vmatprep.subr.mxu0 0.0
        %6970 = vmatpush1.msra.mxu0 %v6921
        %6971 = vmatprep.subr.mxu0 0.0
        %6972 = vmatpush1.msra.mxu0 %v6922
        %6973 = vmatprep.subr.mxu0 0.0
        %6974 = vmatpush1.msra.mxu0 %v6923
        %6975 = vmatprep.subr.mxu0 0.0
        %6976 = vmatpush1.msra.mxu0 %v6924
        %6977 = vmatprep.subr.mxu0 0.0
        %6978 = vmatpush1.msra.mxu0 %v6925
        %6979 = vmatprep.subr.mxu0 0.0
        %6980 = vmatpush1.msra.mxu0 %v6926
        %6981 = vmatprep.subr.mxu0 0.0
        %6982 = vmatpush1.msra.mxu0 %v6927
        %6983 = vmatprep.subr.mxu0 0.0
        %6984 = vmatpush1.msra.mxu0 %v6928
        %6985 = vmatprep.subr.mxu0 0.0
        %6986 = vmatpush1.msra.mxu0 %v6929
        %6987 = vmatprep.subr.mxu0 0.0
        %6988 = vmatpush1.msra.mxu0 %v6930
        %6989 = vmatprep.subr.mxu0 0.0
        %6990 = vmatpush1.msra.mxu0 %v6931
        %6991 = vmatprep.subr.mxu0 0.0
        %6992 = vmatpush1.msra.mxu0 %v6932
        %6993 = vmatprep.subr.mxu0 0.0
        %6994 = vmatpush1.msra.mxu0 %v6933
        %6995 = vmatprep.subr.mxu0 0.0
        %6996 = vmatpush1.msra.mxu0 %v6934
        %6997 = vmatprep.subr.mxu0 0.0
        %6998 = vmatpush1.msra.mxu0 %v6935
        %6999 = vmatprep.subr.mxu0 0.0
        %7000 = vmatpush1.msra.mxu0 %v6936
        %7001 = vmatprep.subr.mxu0 0.0
        %7002 = vmatpush1.msra.mxu0 %v6937
        %7003 = vmatprep.mubr.f32.mxu0 %v6905
        %7004 = vmatmul.mubr.f32.gmra.mrb[0].mxu0 %v6904
        %v7005 = vpop.f32.mrb[0].mxu0
        %v7006 = vadd.f32 %v6938, %v7005
        %v7007 = vpop.f32.mrb[0].mxu0
        %7008 = vdwg.mxu0
        %v7009 = vmul.f32 %v7006, %v6804
        %v7010 = vlaneseq
        %v7011 = vshrl.u32 %v7010, 7
        %v7012 = vlaneseq
        %v7013 = vand.u32 %v7012, 127
        %vm7014 = vcmp.eq.s32.totalorder %v7011, %v7013
        %v7015 = vsel %vm7014, 1, 0
        %v7016 = vcvt.s32.f32 %v7015
        %v7018 = vrot.slane %v7016, 3
        %v7020 = vsel %vm3419, %v7009, 0
        %v7022 = vsel %vm2541, %v7018, 0
        %7024 = vmatprep.subr.mxu0 0.0
        %7025 = vmatpush1.msra.mxu0 %v7022
        %7026 = vmatprep.subr.mxu0 0.0
        %7027 = vmatpush1.msra.mxu0 0.0
        %7028 = vmatprep.subr.mxu0 0.0
        %7029 = vmatpush1.msra.mxu0 0.0
        %7030 = vmatprep.subr.mxu0 0.0
        %7031 = vmatpush1.msra.mxu0 0.0
        %7032 = vmatprep.subr.mxu0 0.0
        %7033 = vmatpush1.msra.mxu0 0.0
        %7034 = vmatprep.subr.mxu0 0.0
        %7035 = vmatpush1.msra.mxu0 0.0
        %7036 = vmatprep.subr.mxu0 0.0
        %7037 = vmatpush1.msra.mxu0 0.0
        %7038 = vmatprep.subr.mxu0 0.0
        %7039 = vmatpush1.msra.mxu0 0.0
        %7040 = vmatprep.subr.mxu0 0.0
        %7041 = vmatpush1.msra.mxu0 0.0
        %7042 = vmatprep.subr.mxu0 0.0
        %7043 = vmatpush1.msra.mxu0 0.0
        %7044 = vmatprep.subr.mxu0 0.0
        %7045 = vmatpush1.msra.mxu0 0.0
        %7046 = vmatprep.subr.mxu0 0.0
        %7047 = vmatpush1.msra.mxu0 0.0
        %7048 = vmatprep.subr.mxu0 0.0
        %7049 = vmatpush1.msra.mxu0 0.0
        %7050 = vmatprep.subr.mxu0 0.0
        %7051 = vmatpush1.msra.mxu0 0.0
        %7052 = vmatprep.subr.mxu0 0.0
        %7053 = vmatpush1.msra.mxu0 0.0
        %7054 = vmatprep.subr.mxu0 0.0
        %7055 = vmatpush1.msra.mxu0 0.0
        %7056 = vmatprep.subr.mxu0 0.0
        %7057 = vmatpush1.msra.mxu0 0.0
        %7058 = vmatprep.subr.mxu0 0.0
        %7059 = vmatpush1.msra.mxu0 0.0
        %7060 = vmatprep.subr.mxu0 0.0
        %7061 = vmatpush1.msra.mxu0 0.0
        %7062 = vmatprep.subr.mxu0 0.0
        %7063 = vmatpush1.msra.mxu0 0.0
        %7064 = vmatprep.subr.mxu0 0.0
        %7065 = vmatpush1.msra.mxu0 0.0
        %7066 = vmatprep.subr.mxu0 0.0
        %7067 = vmatpush1.msra.mxu0 0.0
        %7068 = vmatprep.subr.mxu0 0.0
        %7069 = vmatpush1.msra.mxu0 0.0
        %7070 = vmatprep.subr.mxu0 0.0
        %7071 = vmatpush1.msra.mxu0 0.0
        %7072 = vmatprep.subr.mxu0 0.0
        %7073 = vmatpush1.msra.mxu0 0.0
        %7074 = vmatprep.subr.mxu0 0.0
        %7075 = vmatpush1.msra.mxu0 0.0
        %7076 = vmatprep.subr.mxu0 0.0
        %7077 = vmatpush1.msra.mxu0 0.0
        %7078 = vmatprep.subr.mxu0 0.0
        %7079 = vmatpush1.msra.mxu0 0.0
        %7080 = vmatprep.subr.mxu0 0.0
        %7081 = vmatpush1.msra.mxu0 0.0
        %7082 = vmatprep.subr.mxu0 0.0
        %7083 = vmatpush1.msra.mxu0 0.0
        %7084 = vmatprep.subr.mxu0 0.0
        %7085 = vmatpush1.msra.mxu0 0.0
        %7086 = vmatprep.subr.mxu0 0.0
        %7087 = vmatpush1.msra.mxu0 0.0
        %7088 = vmatprep.mubr.f32.mxu0 0.0
        %7089 = vmatmul.mubr.f32.gmra.mrb[0].mxu0 %v7020
        %v7090 = vpop.f32.mrb[0].mxu0
        %v7091 = vadd.f32 0.0, %v7090
        %v7092 = vpop.f32.mrb[0].mxu0
        %7093 = vdwg.mxu0
        %vm7094 = vcmask 23552
        %v7096 = vsel %vm7094, %v6658, 0
        %vm7098 = vcmask 1042432
        %v7099 = vsel %vm7098, %v7016, 0
        %7101 = vmatprep.subr.mxu0 0.0
        %7102 = vmatpush1.msra.mxu0 %v7099
        %7103 = vmatprep.subr.mxu0 0.0
        %7104 = vmatpush1.msra.mxu0 0.0
        %7105 = vmatprep.subr.mxu0 0.0
        %7106 = vmatpush1.msra.mxu0 0.0
        %7107 = vmatprep.subr.mxu0 0.0
        %7108 = vmatpush1.msra.mxu0 0.0
        %7109 = vmatprep.subr.mxu0 0.0
        %7110 = vmatpush1.msra.mxu0 0.0
        %7111 = vmatprep.subr.mxu0 0.0
        %7112 = vmatpush1.msra.mxu0 0.0
        %7113 = vmatprep.subr.mxu0 0.0
        %7114 = vmatpush1.msra.mxu0 0.0
        %7115 = vmatprep.subr.mxu0 0.0
        %7116 = vmatpush1.msra.mxu0 0.0
        %7117 = vmatprep.subr.mxu0 0.0
        %7118 = vmatpush1.msra.mxu0 0.0
        %7119 = vmatprep.subr.mxu0 0.0
        %7120 = vmatpush1.msra.mxu0 0.0
        %7121 = vmatprep.subr.mxu0 0.0
        %7122 = vmatpush1.msra.mxu0 0.0
        %7123 = vmatprep.subr.mxu0 0.0
        %7124 = vmatpush1.msra.mxu0 0.0
        %7125 = vmatprep.subr.mxu0 0.0
        %7126 = vmatpush1.msra.mxu0 0.0
        %7127 = vmatprep.subr.mxu0 0.0
        %7128 = vmatpush1.msra.mxu0 0.0
        %7129 = vmatprep.subr.mxu0 0.0
        %7130 = vmatpush1.msra.mxu0 0.0
        %7131 = vmatprep.subr.mxu0 0.0
        %7132 = vmatpush1.msra.mxu0 0.0
        %7133 = vmatprep.subr.mxu0 0.0
        %7134 = vmatpush1.msra.mxu0 0.0
        %7135 = vmatprep.subr.mxu0 0.0
        %7136 = vmatpush1.msra.mxu0 0.0
        %7137 = vmatprep.subr.mxu0 0.0
        %7138 = vmatpush1.msra.mxu0 0.0
        %7139 = vmatprep.subr.mxu0 0.0
        %7140 = vmatpush1.msra.mxu0 0.0
        %7141 = vmatprep.subr.mxu0 0.0
        %7142 = vmatpush1.msra.mxu0 0.0
        %7143 = vmatprep.subr.mxu0 0.0
        %7144 = vmatpush1.msra.mxu0 0.0
        %7145 = vmatprep.subr.mxu0 0.0
        %7146 = vmatpush1.msra.mxu0 0.0
        %7147 = vmatprep.subr.mxu0 0.0
        %7148 = vmatpush1.msra.mxu0 0.0
        %7149 = vmatprep.subr.mxu0 0.0
        %7150 = vmatpush1.msra.mxu0 0.0
        %7151 = vmatprep.subr.mxu0 0.0
        %7152 = vmatpush1.msra.mxu0 0.0
        %7153 = vmatprep.subr.mxu0 0.0
        %7154 = vmatpush1.msra.mxu0 0.0
        %7155 = vmatprep.subr.mxu0 0.0
        %7156 = vmatpush1.msra.mxu0 0.0
        %7157 = vmatprep.subr.mxu0 0.0
        %7158 = vmatpush1.msra.mxu0 0.0
        %7159 = vmatprep.subr.mxu0 0.0
        %7160 = vmatpush1.msra.mxu0 0.0
        %7161 = vmatprep.subr.mxu0 0.0
        %7162 = vmatpush1.msra.mxu0 0.0
        %7163 = vmatprep.subr.mxu0 0.0
        %7164 = vmatpush1.msra.mxu0 0.0
        %7165 = vmatprep.mubr.f32.mxu0 0.0
        %7166 = vmatmul.mubr.f32.gmra.mrb[0].mxu0 %v7096
        %v7167 = vpop.f32.mrb[0].mxu0
        %v7168 = vadd.f32 %v7091, %v7167
        %v7169 = vpop.f32.mrb[0].mxu0
        %7170 = vdwg.mxu0
        %v7171 = vrot.slane %v7016, 5
        %v7173 = vmul.f32 %v6804, %v7171
        %v7174 = vadd.f32 %v7168, %v7173
        %vm7175 = vcmask 40960
        %7176 = vst.msk [vmem:[%s1104] sm:$0x1] %vm7175, %v7174
        %s7177 = sand.u32 %s656, 1
        %s7178 = scalar_lea.sflag [#allocation5], %s7177
        %s7179 = sand.u32 %s656, 1
        %s7180 = scalar_lea.vmem [#allocation35], %s7179
        // Predicated region
        $region213: #{two_stage_forward.1} parent=131 // pred_check
          %p7181 = pneg %p666
        $region214: #{two_stage_forward.1} parent=131 // pred_check_branch
          %7183 = sbr.rel (%p7181) target = $region216
        $region215: #{two_stage_forward.1} parent=131 // pred_region
          %s7185 = ssub.s32 16, 16
          %7186 = vsyncadd %s7178, %s7185
          %s7187 = smul.addr %s55, 16
          %s7188 = scalar_lea.hbm %s28, %s7187
          %s7190 = sshll.u32 %s7180, 4
          %s7191 = int_to_ptr.vmem [resolvable:$true] %s7190
          %7193 = dma.vmem_to_hbm [thread:$0]  %s7191, 16, %s7188, %s7178
        $region216: #{two_stage_forward.1} parent=131 // pred_fallthru
          _
      $region132: #{two_stage_forward.1} parent=5 // pred_fallthru
        _
      %p7194 = scmp.le.s32.totalorder 2, %s50
      // Predicated region
      $region217: #{two_stage_forward.1} parent=5 // pred_check
        %p7195 = pneg %p7194
      $region218: #{two_stage_forward.1} parent=5 // pred_check_branch
        %7197 = sbr.rel (%p7195) target = $region220
      $region219: #{two_stage_forward.1} parent=5 // pred_region
        %s7198 = ssub.s32 %s50, 2
        // Predicated region
        $region221: #{two_stage_forward.1} parent=219 // pred_check
          %p7199 = pneg %p672
        $region222: #{two_stage_forward.1} parent=219 // pred_check_branch
          %7201 = sbr.rel (%p7199) target = $region224
        $region223: #{two_stage_forward.1} parent=219 // pred_region
          %s7202 = sand.u32 %s657, 1
          %s7203 = scalar_lea.sflag [#allocation5], %s7202
          %s7204 = sand.u32 %s657, 1
          %s7205 = scalar_lea.vmem [#allocation35], %s7204
          %7206 = dma.done %s7203, 16
        $region224: #{two_stage_forward.1} parent=219 // pred_fallthru
          _
      $region220: #{two_stage_forward.1} parent=5 // pred_fallthru
        _
    $region6: #{two_stage_forward.1} parent=1 // loop_footer
      %s54 = sadd.s32 1, %s50
    $region7: #{two_stage_forward.1} parent=1 // loop_footer_branch
      %49 = sbr.rel target = $region3
    $region8: #{two_stage_forward.1} parent=1 // loop_exit
      _
    %7207 = vsyncpa [#allocation4], 1
    %s7208 = scalar_lea.sflag [#allocation4], 1
    %7209 = vsyncpa %s7208, 1
    %7210 = vsyncpa [#allocation7], 1
    %7211 = vsyncpa [#allocation10], 1
    %7212 = vsyncpa [#allocation13], 1
    %7213 = vsyncpa [#allocation16], 1
    %7214 = vsyncpa [#allocation19], 1
    %7215 = vsyncpa [#allocation22], 1
    %7216 = vsyncpa [#allocation25], 1
    %7217 = vsyncpa [#allocation28], 1
    %7218 = vsyncpa [#allocation31], 1
    %7219 = vsyncpa [#allocation34], 1
    %7220 = vsyncpa [#allocation5], 1
    %s7221 = scalar_lea.sflag [#allocation5], 1
    %7222 = vsyncpa %s7221, 1

</llo_original>
